<compile_context>
chip_gen: v6e
topology: v6e:2x2x1
jax: 0.10.0
libtpu: 0.0.40
codegen_flags: <defaults>
</compile_context>

<pallas_src>
import functools

import numpy as np
import jax
import jax.numpy as jnp
from jax.experimental import pallas as pl
from jax.experimental.pallas import tpu as pltpu


def _window_attn_kernel(x_ref, wqkv_ref, bqkv_ref, wproj_ref, bproj_ref,
                        relb_ref, *rest, num_heads, head_dim, has_mask):
    if has_mask:
        mask_ref, o_ref = rest
    else:
        mask_ref = None
        (o_ref,) = rest

    TB, N, C = x_ref.shape
    x2d = x_ref[...].reshape(TB * N, C)                      # leading-dim merge (free)

    # Fused QKV projection: one (TB*N, C) @ (C, 3C) MXU matmul.
    qkv = jnp.dot(x2d, wqkv_ref[...], preferred_element_type=jnp.float32)
    qkv = qkv + bqkv_ref[0]                                  # scale already folded into Q cols

    relb = relb_ref[...]                                     # (H, N, N), VMEM resident
    mask = mask_ref[...] if has_mask else None               # (TB, N, N), VMEM resident

    head_outs = []
    for h in range(num_heads):                               # static unroll over heads
        lo = h * head_dim
        q = qkv[:, lo:lo + head_dim].reshape(TB, N, head_dim)
        k = qkv[:, C + lo:C + lo + head_dim].reshape(TB, N, head_dim)
        v = qkv[:, 2 * C + lo:2 * C + lo + head_dim].reshape(TB, N, head_dim)

        # window-batched attention scores: (TB, N, N)
        s = jnp.einsum('tnd,tmd->tnm', q, k, preferred_element_type=jnp.float32)
        s = s + relb[h][None]
        if has_mask:
            s = s + mask

        # numerically-stable softmax; denominator via EUP approximate reciprocal
        s = s - jnp.max(s, axis=-1, keepdims=True)
        p = jnp.exp(s)
        p = p * pl.reciprocal(jnp.sum(p, axis=-1, keepdims=True), approx=True)

        o_h = jnp.einsum('tnm,tmd->tnd', p, v, preferred_element_type=jnp.float32)
        head_outs.append(o_h.reshape(TB * N, head_dim))

    # Single fused output projection with K = C (instead of H rank-head_dim matmuls).
    o_cat = jnp.concatenate(head_outs, axis=-1)              # (TB*N, C)
    out = jnp.dot(o_cat, wproj_ref[...], preferred_element_type=jnp.float32)
    out = out + bproj_ref[0]
    o_ref[...] = out.reshape(TB, N, C)


def _choose_block_windows(B_, N, nW):
    """Pick TB: divides B_, multiple of nW (if masked), TB*N >= 128 when possible."""
    step = nW if nW else 1
    cands = [t for t in range(step, B_ + 1, step) if B_ % t == 0]
    good = [t for t in cands if t * N <= 1024]               # bound per-block VMEM
    pref = [t for t in good if t * N >= 128]                 # fill the MXU M dimension
    if pref:
        return min(pref)                                     # keep grid length for 2-TC chips
    if good:
        return max(good)
    return min(cands)


def window_attention(x, params, num_heads, window_size, mask=None, block_windows=None):
    """x: (B_, N, C) float32.  mask: (nW, N, N) or None."""
    B_, N, C = x.shape
    head_dim = C // num_heads
    scale = head_dim ** (-0.5)

    wqkv, bqkv, wproj, bproj, rel_bias_table, rel_pos_index = params

    # Fold the softmax scale into the Q weights/bias (host-side, tiny).
    col_scale = jnp.concatenate([jnp.full((C,), scale, jnp.float32),
                                 jnp.ones((2 * C,), jnp.float32)])
    wqkv_s = (wqkv * col_scale[None, :]).astype(jnp.float32)
    bqkv_s = (bqkv * col_scale).astype(jnp.float32)

    # Relative position bias: (N*N, H) gather -> (H, N, N); VMEM resident in the kernel.
    rel_bias = rel_bias_table[rel_pos_index.reshape(-1)]
    rel_bias = rel_bias.reshape(N, N, num_heads).transpose(2, 0, 1).astype(jnp.float32)

    nW = 0 if mask is None else mask.shape[0]
    if mask is not None:
        assert B_ % nW == 0, "B_ must be a multiple of the number of windows"
    TB = block_windows or _choose_block_windows(B_, N, nW)
    assert B_ % TB == 0

    inputs = [x, wqkv_s, bqkv_s.reshape(1, -1), wproj, bproj.reshape(1, -1), rel_bias]
    in_specs = [
        pl.BlockSpec((TB, N, C), lambda b: (b, 0, 0)),                 # x (streamed)
        pl.BlockSpec((C, 3 * C), lambda b: (0, 0)),                    # Wqkv (resident)
        pl.BlockSpec((1, 3 * C), lambda b: (0, 0)),                    # bqkv
        pl.BlockSpec((C, C), lambda b: (0, 0)),                        # Wproj
        pl.BlockSpec((1, C), lambda b: (0, 0)),                        # bproj
        pl.BlockSpec((num_heads, N, N), lambda b: (0, 0, 0)),          # rel-pos bias
    ]
    if mask is not None:
        # Window ids inside a block are (b*TB + t) % nW == t % nW (TB % nW == 0),
        # so a single (TB, N, N) tile of the mask serves every grid step.
        mask_tile = jnp.tile(mask.astype(jnp.float32), (TB // nW, 1, 1))
        inputs.append(mask_tile)
        in_specs.append(pl.BlockSpec((TB, N, N), lambda b: (0, 0, 0)))

    kernel = functools.partial(_window_attn_kernel,
                               num_heads=num_heads,
                               head_dim=head_dim,
                               has_mask=mask is not None)

    return pl.pallas_call(
        kernel,
        out_shape=jax.ShapeDtypeStruct((B_, N, C), jnp.float32),
        grid_spec=pltpu.PrefetchScalarGridSpec(
            num_scalar_prefetch=0,
            grid=(B_ // TB,),
            in_specs=in_specs,
            out_specs=pl.BlockSpec((TB, N, C), lambda b: (b, 0, 0)),
        ),
        compiler_params=pltpu.CompilerParams(
            dimension_semantics=("parallel",),
            vmem_limit_bytes=64 * 1024 * 1024),
    )(*inputs)


def make_relative_position_index(window_size):
    """Same construction as the PyTorch module (numpy, 'ij' meshgrid)."""
    Wh, Ww = window_size
    coords_h = np.arange(Wh)
    coords_w = np.arange(Ww)
    coords = np.stack(np.meshgrid(coords_h, coords_w, indexing="ij"))   # (2, Wh, Ww)
    coords_flatten = coords.reshape(2, -1)                              # (2, Wh*Ww)
    rel = coords_flatten[:, :, None] - coords_flatten[:, None, :]       # (2, N, N)
    rel = rel.transpose(1, 2, 0).copy()                                 # (N, N, 2)
    rel[:, :, 0] += Wh - 1
    rel[:, :, 1] += Ww - 1
    rel[:, :, 0] *= 2 * Ww - 1
    return jnp.asarray(rel.sum(-1), dtype=jnp.int32)                    # (N, N)


def init_params(key, dim, window_size, num_heads):
    Wh, Ww = window_size
    k1, k2, k3, k4, k5, k6 = jax.random.split(key, 6)
    wqkv = jax.random.normal(k1, (dim, 3 * dim), jnp.float32) * 0.02
    bqkv = jax.random.normal(k2, (3 * dim,), jnp.float32) * 0.02
    wproj = jax.random.normal(k3, (dim, dim), jnp.float32) * 0.02
    bproj = jax.random.normal(k4, (dim,), jnp.float32) * 0.02
    tbl = 0.02 * jax.random.truncated_normal(
        k5, -2.0, 2.0, ((2 * Wh - 1) * (2 * Ww - 1), num_heads), jnp.float32)
    rel_pos_index = make_relative_position_index(window_size)
    return (wqkv, bqkv, wproj, bproj, tbl, rel_pos_index), k6


def reference(x, params, num_heads, window_size, mask=None):
    """Pure-JAX reference mirroring the PyTorch forward."""
    wqkv, bqkv, wproj, bproj, tbl, rp_idx = params
    B_, N, C = x.shape
    D = C // num_heads
    scale = D ** (-0.5)
    qkv = (x @ wqkv + bqkv).reshape(B_, N, 3, num_heads, D).transpose(2, 0, 3, 1, 4)
    q, k, v = qkv[0] * scale, qkv[1], qkv[2]
    attn = jnp.einsum("bhnd,bhmd->bhnm", q, k)
    rel_bias = tbl[rp_idx.reshape(-1)].reshape(N, N, num_heads).transpose(2, 0, 1)
    attn = attn + rel_bias[None]
    if mask is not None:
        nW = mask.shape[0]
        attn = attn.reshape(B_ // nW, nW, num_heads, N, N) + mask[None, :, None]
        attn = attn.reshape(B_, num_heads, N, N)
    attn = jax.nn.softmax(attn, axis=-1)
    out = jnp.einsum("bhnm,bhmd->bhnd", attn, v).transpose(0, 2, 1, 3).reshape(B_, N, C)
    return out @ wproj + bproj


if __name__ == "__main__":
    dim = 32
    num_heads = 4
    window_size = (4, 4)
    N = window_size[0] * window_size[1]   # 16
    B_ = 8                                # num_windows * batch

    key = jax.random.PRNGKey(0)
    params, key = init_params(key, dim, window_size, num_heads)
    key, xk, mk = jax.random.split(key, 3)
    x = jax.random.normal(xk, (B_, N, dim), jnp.float32)

    # Tolerance 2e-3: the only approximation vs the f32 reference is the EUP
    # approximate reciprocal in the softmax denominator.
    tol = dict(rtol=2e-3, atol=2e-3)

    # Plain W-MSA (no shift mask).
    out = jax.block_until_ready(window_attention(x, params, num_heads, window_size))
    ref = reference(x, params, num_heads, window_size)
    np.testing.assert_allclose(np.asarray(out), np.asarray(ref), **tol)

    # Shifted-window path (0 / -100 mask), nW = 4 windows.
    nW = 4
    bits = jax.random.bernoulli(mk, 0.5, (nW, N, N))
    mask = jnp.where(bits, 0.0, -100.0).astype(jnp.float32)
    out_m = jax.block_until_ready(
        window_attention(x, params, num_heads, window_size, mask=mask))
    ref_m = reference(x, params, num_heads, window_size, mask=mask)
    np.testing.assert_allclose(np.asarray(out_m), np.asarray(ref_m), **tol)

    print("KERNEL_OK")
</pallas_src>

<mosaic_0001>
module attributes {stable_mosaic.version = 11 : i64} {
  func.func @_window_attn_kernel(%arg0: i32, %arg1: memref<8x16x32xf32, #tpu.memory_space<vmem>>, %arg2: memref<32x96xf32, #tpu.memory_space<vmem>>, %arg3: memref<1x96xf32, #tpu.memory_space<vmem>>, %arg4: memref<32x32xf32, #tpu.memory_space<vmem>>, %arg5: memref<1x32xf32, #tpu.memory_space<vmem>>, %arg6: memref<4x16x16xf32, #tpu.memory_space<vmem>>, %arg7: memref<8x16x32xf32, #tpu.memory_space<vmem>>) attributes {dimension_semantics = [#tpu.dimension_semantics<parallel>], iteration_bounds = array<i64: 1>, scalar_prefetch = 0 : i64, scratch_operands = 0 : i64, tpu.core_type = #tpu.core_type<tc>, window_params = [{transform_indices = @transform_0, window_bounds = array<i64: 8, 16, 32>}, {pipeline_mode = #tpu.pipeline_mode<synchronous>, transform_indices = @transform_1, window_bounds = array<i64: 32, 96>}, {pipeline_mode = #tpu.pipeline_mode<synchronous>, transform_indices = @transform_2, window_bounds = array<i64: 1, 96>}, {pipeline_mode = #tpu.pipeline_mode<synchronous>, transform_indices = @transform_3, window_bounds = array<i64: 32, 32>}, {pipeline_mode = #tpu.pipeline_mode<synchronous>, transform_indices = @transform_4, window_bounds = array<i64: 1, 32>}, {pipeline_mode = #tpu.pipeline_mode<synchronous>, transform_indices = @transform_5, window_bounds = array<i64: 4, 16, 16>}, {transform_indices = @transform_6, window_bounds = array<i64: 8, 16, 32>}]} {
    %c0 = arith.constant 0 : index
    %c0_0 = arith.constant 0 : index
    %c0_1 = arith.constant 0 : index
    %0 = vector.load %arg1[%c0, %c0_0, %c0_1] : memref<8x16x32xf32, #tpu.memory_space<vmem>>, vector<8x16x32xf32>
    %1 = vector.shape_cast %0 : vector<8x16x32xf32> to vector<128x32xf32>
    %c0_2 = arith.constant 0 : index
    %c0_3 = arith.constant 0 : index
    %2 = vector.load %arg2[%c0_2, %c0_3] : memref<32x96xf32, #tpu.memory_space<vmem>>, vector<32x96xf32>
    %cst = arith.constant dense<0.000000e+00> : vector<128x96xf32>
    %3 = tpu.matmul %1, %2, %cst {dimension_numbers = #tpu.dot_dimension_numbers<[1], [0], [0], [1], [0, 0, 1, 1], [], []>} : vector<128x32xf32>, vector<32x96xf32>, vector<128x96xf32> -> vector<128x96xf32>
    %c0_4 = arith.constant 0 : index
    %c0_5 = arith.constant 0 : index
    %4 = vector.load %arg3[%c0_4, %c0_5] : memref<1x96xf32, #tpu.memory_space<vmem>>, vector<1x96xf32>
    %5 = vector.shape_cast %4 : vector<1x96xf32> to vector<96xf32>
    %6 = vector.shape_cast %5 : vector<96xf32> to vector<1x96xf32>
    %7 = vector.broadcast %6 : vector<1x96xf32> to vector<128x96xf32>
    %8 = arith.addf %3, %7 : vector<128x96xf32>
    %c0_6 = arith.constant 0 : index
    %c0_7 = arith.constant 0 : index
    %c0_8 = arith.constant 0 : index
    %9 = vector.load %arg6[%c0_6, %c0_7, %c0_8] : memref<4x16x16xf32, #tpu.memory_space<vmem>>, vector<4x16x16xf32>
    %10 = vector.extract_strided_slice %8 {offsets = [0, 0], sizes = [128, 8], strides = [1, 1]} : vector<128x96xf32> to vector<128x8xf32>
    %11 = vector.shape_cast %10 : vector<128x8xf32> to vector<8x16x8xf32>
    %12 = vector.extract_strided_slice %8 {offsets = [0, 32], sizes = [128, 8], strides = [1, 1]} : vector<128x96xf32> to vector<128x8xf32>
    %13 = vector.shape_cast %12 : vector<128x8xf32> to vector<8x16x8xf32>
    %14 = vector.extract_strided_slice %8 {offsets = [0, 64], sizes = [128, 8], strides = [1, 1]} : vector<128x96xf32> to vector<128x8xf32>
    %15 = vector.shape_cast %14 : vector<128x8xf32> to vector<8x16x8xf32>
    "tpu.trace_start"() <{level = 10 : i32, message = "tnd,tmd->tnm"}> : () -> ()
    %cst_9 = arith.constant dense<0.000000e+00> : vector<8x16x16xf32>
    %16 = tpu.matmul %11, %13, %cst_9 {dimension_numbers = #tpu.dot_dimension_numbers<[2], [2], [1], [1], [0, 0, 0, 1, 1, 1], [0], [0]>} : vector<8x16x8xf32>, vector<8x16x8xf32>, vector<8x16x16xf32> -> vector<8x16x16xf32>
    "tpu.trace_stop"() : () -> ()
    %17 = vector.extract_strided_slice %9 {offsets = [0, 0, 0], sizes = [1, 16, 16], strides = [1, 1, 1]} : vector<4x16x16xf32> to vector<1x16x16xf32>
    %18 = vector.shape_cast %17 : vector<1x16x16xf32> to vector<16x16xf32>
    %19 = vector.shape_cast %18 : vector<16x16xf32> to vector<1x16x16xf32>
    %20 = vector.broadcast %19 : vector<1x16x16xf32> to vector<8x16x16xf32>
    %21 = arith.addf %16, %20 : vector<8x16x16xf32>
    %cst_10 = arith.constant dense<0xFF800000> : vector<8x16xf32>
    %22 = vector.multi_reduction <maximumf>, %21, %cst_10 [2] : vector<8x16x16xf32> to vector<8x16xf32>
    %23 = vector.shape_cast %22 : vector<8x16xf32> to vector<8x16x1xf32>
    %24 = vector.broadcast %23 : vector<8x16x1xf32> to vector<8x16x16xf32>
    %25 = arith.subf %21, %24 : vector<8x16x16xf32>
    %26 = math.exp %25 : vector<8x16x16xf32>
    %cst_11 = arith.constant dense<0.000000e+00> : vector<8x16xf32>
    %27 = vector.multi_reduction <add>, %26, %cst_11 [2] : vector<8x16x16xf32> to vector<8x16xf32>
    %28 = vector.shape_cast %27 : vector<8x16xf32> to vector<8x16x1xf32>
    %29 = tpu.reciprocal %28 {approx = true} : vector<8x16x1xf32> -> vector<8x16x1xf32>
    %30 = vector.broadcast %29 : vector<8x16x1xf32> to vector<8x16x16xf32>
    %31 = arith.mulf %26, %30 : vector<8x16x16xf32>
    "tpu.trace_start"() <{level = 10 : i32, message = "tnm,tmd->tnd"}> : () -> ()
    %cst_12 = arith.constant dense<0.000000e+00> : vector<8x16x8xf32>
    %32 = tpu.matmul %31, %15, %cst_12 {dimension_numbers = #tpu.dot_dimension_numbers<[2], [1], [1], [2], [0, 0, 0, 1, 1, 2], [0], [0]>} : vector<8x16x16xf32>, vector<8x16x8xf32>, vector<8x16x8xf32> -> vector<8x16x8xf32>
    "tpu.trace_stop"() : () -> ()
    %33 = vector.shape_cast %32 : vector<8x16x8xf32> to vector<128x8xf32>
    %34 = vector.extract_strided_slice %8 {offsets = [0, 8], sizes = [128, 8], strides = [1, 1]} : vector<128x96xf32> to vector<128x8xf32>
    %35 = vector.shape_cast %34 : vector<128x8xf32> to vector<8x16x8xf32>
    %36 = vector.extract_strided_slice %8 {offsets = [0, 40], sizes = [128, 8], strides = [1, 1]} : vector<128x96xf32> to vector<128x8xf32>
    %37 = vector.shape_cast %36 : vector<128x8xf32> to vector<8x16x8xf32>
    %38 = vector.extract_strided_slice %8 {offsets = [0, 72], sizes = [128, 8], strides = [1, 1]} : vector<128x96xf32> to vector<128x8xf32>
    %39 = vector.shape_cast %38 : vector<128x8xf32> to vector<8x16x8xf32>
    "tpu.trace_start"() <{level = 10 : i32, message = "tnd,tmd->tnm"}> : () -> ()
    %cst_13 = arith.constant dense<0.000000e+00> : vector<8x16x16xf32>
    %40 = tpu.matmul %35, %37, %cst_13 {dimension_numbers = #tpu.dot_dimension_numbers<[2], [2], [1], [1], [0, 0, 0, 1, 1, 1], [0], [0]>} : vector<8x16x8xf32>, vector<8x16x8xf32>, vector<8x16x16xf32> -> vector<8x16x16xf32>
    "tpu.trace_stop"() : () -> ()
    %41 = vector.extract_strided_slice %9 {offsets = [1, 0, 0], sizes = [1, 16, 16], strides = [1, 1, 1]} : vector<4x16x16xf32> to vector<1x16x16xf32>
    %42 = vector.shape_cast %41 : vector<1x16x16xf32> to vector<16x16xf32>
    %43 = vector.shape_cast %42 : vector<16x16xf32> to vector<1x16x16xf32>
    %44 = vector.broadcast %43 : vector<1x16x16xf32> to vector<8x16x16xf32>
    %45 = arith.addf %40, %44 : vector<8x16x16xf32>
    %cst_14 = arith.constant dense<0xFF800000> : vector<8x16xf32>
    %46 = vector.multi_reduction <maximumf>, %45, %cst_14 [2] : vector<8x16x16xf32> to vector<8x16xf32>
    %47 = vector.shape_cast %46 : vector<8x16xf32> to vector<8x16x1xf32>
    %48 = vector.broadcast %47 : vector<8x16x1xf32> to vector<8x16x16xf32>
    %49 = arith.subf %45, %48 : vector<8x16x16xf32>
    %50 = math.exp %49 : vector<8x16x16xf32>
    %cst_15 = arith.constant dense<0.000000e+00> : vector<8x16xf32>
    %51 = vector.multi_reduction <add>, %50, %cst_15 [2] : vector<8x16x16xf32> to vector<8x16xf32>
    %52 = vector.shape_cast %51 : vector<8x16xf32> to vector<8x16x1xf32>
    %53 = tpu.reciprocal %52 {approx = true} : vector<8x16x1xf32> -> vector<8x16x1xf32>
    %54 = vector.broadcast %53 : vector<8x16x1xf32> to vector<8x16x16xf32>
    %55 = arith.mulf %50, %54 : vector<8x16x16xf32>
    "tpu.trace_start"() <{level = 10 : i32, message = "tnm,tmd->tnd"}> : () -> ()
    %cst_16 = arith.constant dense<0.000000e+00> : vector<8x16x8xf32>
    %56 = tpu.matmul %55, %39, %cst_16 {dimension_numbers = #tpu.dot_dimension_numbers<[2], [1], [1], [2], [0, 0, 0, 1, 1, 2], [0], [0]>} : vector<8x16x16xf32>, vector<8x16x8xf32>, vector<8x16x8xf32> -> vector<8x16x8xf32>
    "tpu.trace_stop"() : () -> ()
    %57 = vector.shape_cast %56 : vector<8x16x8xf32> to vector<128x8xf32>
    %58 = vector.extract_strided_slice %8 {offsets = [0, 16], sizes = [128, 8], strides = [1, 1]} : vector<128x96xf32> to vector<128x8xf32>
    %59 = vector.shape_cast %58 : vector<128x8xf32> to vector<8x16x8xf32>
    %60 = vector.extract_strided_slice %8 {offsets = [0, 48], sizes = [128, 8], strides = [1, 1]} : vector<128x96xf32> to vector<128x8xf32>
    %61 = vector.shape_cast %60 : vector<128x8xf32> to vector<8x16x8xf32>
    %62 = vector.extract_strided_slice %8 {offsets = [0, 80], sizes = [128, 8], strides = [1, 1]} : vector<128x96xf32> to vector<128x8xf32>
    %63 = vector.shape_cast %62 : vector<128x8xf32> to vector<8x16x8xf32>
    "tpu.trace_start"() <{level = 10 : i32, message = "tnd,tmd->tnm"}> : () -> ()
    %cst_17 = arith.constant dense<0.000000e+00> : vector<8x16x16xf32>
    %64 = tpu.matmul %59, %61, %cst_17 {dimension_numbers = #tpu.dot_dimension_numbers<[2], [2], [1], [1], [0, 0, 0, 1, 1, 1], [0], [0]>} : vector<8x16x8xf32>, vector<8x16x8xf32>, vector<8x16x16xf32> -> vector<8x16x16xf32>
    "tpu.trace_stop"() : () -> ()
    %65 = vector.extract_strided_slice %9 {offsets = [2, 0, 0], sizes = [1, 16, 16], strides = [1, 1, 1]} : vector<4x16x16xf32> to vector<1x16x16xf32>
    %66 = vector.shape_cast %65 : vector<1x16x16xf32> to vector<16x16xf32>
    %67 = vector.shape_cast %66 : vector<16x16xf32> to vector<1x16x16xf32>
    %68 = vector.broadcast %67 : vector<1x16x16xf32> to vector<8x16x16xf32>
    %69 = arith.addf %64, %68 : vector<8x16x16xf32>
    %cst_18 = arith.constant dense<0xFF800000> : vector<8x16xf32>
    %70 = vector.multi_reduction <maximumf>, %69, %cst_18 [2] : vector<8x16x16xf32> to vector<8x16xf32>
    %71 = vector.shape_cast %70 : vector<8x16xf32> to vector<8x16x1xf32>
    %72 = vector.broadcast %71 : vector<8x16x1xf32> to vector<8x16x16xf32>
    %73 = arith.subf %69, %72 : vector<8x16x16xf32>
    %74 = math.exp %73 : vector<8x16x16xf32>
    %cst_19 = arith.constant dense<0.000000e+00> : vector<8x16xf32>
    %75 = vector.multi_reduction <add>, %74, %cst_19 [2] : vector<8x16x16xf32> to vector<8x16xf32>
    %76 = vector.shape_cast %75 : vector<8x16xf32> to vector<8x16x1xf32>
    %77 = tpu.reciprocal %76 {approx = true} : vector<8x16x1xf32> -> vector<8x16x1xf32>
    %78 = vector.broadcast %77 : vector<8x16x1xf32> to vector<8x16x16xf32>
    %79 = arith.mulf %74, %78 : vector<8x16x16xf32>
    "tpu.trace_start"() <{level = 10 : i32, message = "tnm,tmd->tnd"}> : () -> ()
    %cst_20 = arith.constant dense<0.000000e+00> : vector<8x16x8xf32>
    %80 = tpu.matmul %79, %63, %cst_20 {dimension_numbers = #tpu.dot_dimension_numbers<[2], [1], [1], [2], [0, 0, 0, 1, 1, 2], [0], [0]>} : vector<8x16x16xf32>, vector<8x16x8xf32>, vector<8x16x8xf32> -> vector<8x16x8xf32>
    "tpu.trace_stop"() : () -> ()
    %81 = vector.shape_cast %80 : vector<8x16x8xf32> to vector<128x8xf32>
    %82 = vector.extract_strided_slice %8 {offsets = [0, 24], sizes = [128, 8], strides = [1, 1]} : vector<128x96xf32> to vector<128x8xf32>
    %83 = vector.shape_cast %82 : vector<128x8xf32> to vector<8x16x8xf32>
    %84 = vector.extract_strided_slice %8 {offsets = [0, 56], sizes = [128, 8], strides = [1, 1]} : vector<128x96xf32> to vector<128x8xf32>
    %85 = vector.shape_cast %84 : vector<128x8xf32> to vector<8x16x8xf32>
    %86 = vector.extract_strided_slice %8 {offsets = [0, 88], sizes = [128, 8], strides = [1, 1]} : vector<128x96xf32> to vector<128x8xf32>
    %87 = vector.shape_cast %86 : vector<128x8xf32> to vector<8x16x8xf32>
    "tpu.trace_start"() <{level = 10 : i32, message = "tnd,tmd->tnm"}> : () -> ()
    %cst_21 = arith.constant dense<0.000000e+00> : vector<8x16x16xf32>
    %88 = tpu.matmul %83, %85, %cst_21 {dimension_numbers = #tpu.dot_dimension_numbers<[2], [2], [1], [1], [0, 0, 0, 1, 1, 1], [0], [0]>} : vector<8x16x8xf32>, vector<8x16x8xf32>, vector<8x16x16xf32> -> vector<8x16x16xf32>
    "tpu.trace_stop"() : () -> ()
    %89 = vector.extract_strided_slice %9 {offsets = [3, 0, 0], sizes = [1, 16, 16], strides = [1, 1, 1]} : vector<4x16x16xf32> to vector<1x16x16xf32>
    %90 = vector.shape_cast %89 : vector<1x16x16xf32> to vector<16x16xf32>
    %91 = vector.shape_cast %90 : vector<16x16xf32> to vector<1x16x16xf32>
    %92 = vector.broadcast %91 : vector<1x16x16xf32> to vector<8x16x16xf32>
    %93 = arith.addf %88, %92 : vector<8x16x16xf32>
    %cst_22 = arith.constant dense<0xFF800000> : vector<8x16xf32>
    %94 = vector.multi_reduction <maximumf>, %93, %cst_22 [2] : vector<8x16x16xf32> to vector<8x16xf32>
    %95 = vector.shape_cast %94 : vector<8x16xf32> to vector<8x16x1xf32>
    %96 = vector.broadcast %95 : vector<8x16x1xf32> to vector<8x16x16xf32>
    %97 = arith.subf %93, %96 : vector<8x16x16xf32>
    %98 = math.exp %97 : vector<8x16x16xf32>
    %cst_23 = arith.constant dense<0.000000e+00> : vector<8x16xf32>
    %99 = vector.multi_reduction <add>, %98, %cst_23 [2] : vector<8x16x16xf32> to vector<8x16xf32>
    %100 = vector.shape_cast %99 : vector<8x16xf32> to vector<8x16x1xf32>
    %101 = tpu.reciprocal %100 {approx = true} : vector<8x16x1xf32> -> vector<8x16x1xf32>
    %102 = vector.broadcast %101 : vector<8x16x1xf32> to vector<8x16x16xf32>
    %103 = arith.mulf %98, %102 : vector<8x16x16xf32>
    "tpu.trace_start"() <{level = 10 : i32, message = "tnm,tmd->tnd"}> : () -> ()
    %cst_24 = arith.constant dense<0.000000e+00> : vector<8x16x8xf32>
    %104 = tpu.matmul %103, %87, %cst_24 {dimension_numbers = #tpu.dot_dimension_numbers<[2], [1], [1], [2], [0, 0, 0, 1, 1, 2], [0], [0]>} : vector<8x16x16xf32>, vector<8x16x8xf32>, vector<8x16x8xf32> -> vector<8x16x8xf32>
    "tpu.trace_stop"() : () -> ()
    %105 = vector.shape_cast %104 : vector<8x16x8xf32> to vector<128x8xf32>
    %106 = tpu.concatenate %33, %57, %81, %105 in 1 : vector<128x8xf32>, vector<128x8xf32>, vector<128x8xf32>, vector<128x8xf32> -> vector<128x32xf32>
    %c0_25 = arith.constant 0 : index
    %c0_26 = arith.constant 0 : index
    %107 = vector.load %arg4[%c0_25, %c0_26] : memref<32x32xf32, #tpu.memory_space<vmem>>, vector<32x32xf32>
    %cst_27 = arith.constant dense<0.000000e+00> : vector<128x32xf32>
    %108 = tpu.matmul %106, %107, %cst_27 {dimension_numbers = #tpu.dot_dimension_numbers<[1], [0], [0], [1], [0, 0, 1, 1], [], []>} : vector<128x32xf32>, vector<32x32xf32>, vector<128x32xf32> -> vector<128x32xf32>
    %c0_28 = arith.constant 0 : index
    %c0_29 = arith.constant 0 : index
    %109 = vector.load %arg5[%c0_28, %c0_29] : memref<1x32xf32, #tpu.memory_space<vmem>>, vector<1x32xf32>
    %110 = vector.shape_cast %109 : vector<1x32xf32> to vector<32xf32>
    %111 = vector.shape_cast %110 : vector<32xf32> to vector<1x32xf32>
    %112 = vector.broadcast %111 : vector<1x32xf32> to vector<128x32xf32>
    %113 = arith.addf %108, %112 : vector<128x32xf32>
    %114 = vector.shape_cast %113 : vector<128x32xf32> to vector<8x16x32xf32>
    %c0_30 = arith.constant 0 : index
    %c0_31 = arith.constant 0 : index
    %c0_32 = arith.constant 0 : index
    %115 = vector.load %arg7[%c0_30, %c0_31, %c0_32] : memref<8x16x32xf32, #tpu.memory_space<vmem>>, vector<8x16x32xf32>
    tpu.vector_store %arg7[%c0_30, %c0_31, %c0_32], %114 {strides = array<i32>} : memref<8x16x32xf32, #tpu.memory_space<vmem>>, vector<8x16x32xf32>,
    return
  }
  func.func @transform_0(%arg0: i32) -> (i32, i32, i32) {
    %c0_i32 = arith.constant 0 : i32
    %c0_i32_0 = arith.constant 0 : i32
    %c0_i32_1 = arith.constant 0 : i32
    return %arg0, %c0_i32, %c0_i32_0 : i32, i32, i32
  }
  func.func @transform_1(%arg0: i32) -> (i32, i32) {
    %c0_i32 = arith.constant 0 : i32
    %c0_i32_0 = arith.constant 0 : i32
    %c0_i32_1 = arith.constant 0 : i32
    return %c0_i32, %c0_i32_0 : i32, i32
  }
  func.func @transform_2(%arg0: i32) -> (i32, i32) {
    %c0_i32 = arith.constant 0 : i32
    %c0_i32_0 = arith.constant 0 : i32
    %c0_i32_1 = arith.constant 0 : i32
    return %c0_i32, %c0_i32_0 : i32, i32
  }
  func.func @transform_3(%arg0: i32) -> (i32, i32) {
    %c0_i32 = arith.constant 0 : i32
    %c0_i32_0 = arith.constant 0 : i32
    %c0_i32_1 = arith.constant 0 : i32
    return %c0_i32, %c0_i32_0 : i32, i32
  }
  func.func @transform_4(%arg0: i32) -> (i32, i32) {
    %c0_i32 = arith.constant 0 : i32
    %c0_i32_0 = arith.constant 0 : i32
    %c0_i32_1 = arith.constant 0 : i32
    return %c0_i32, %c0_i32_0 : i32, i32
  }
  func.func @transform_5(%arg0: i32) -> (i32, i32, i32) {
    %c0_i32 = arith.constant 0 : i32
    %c0_i32_0 = arith.constant 0 : i32
    %c0_i32_1 = arith.constant 0 : i32
    %c0_i32_2 = arith.constant 0 : i32
    return %c0_i32, %c0_i32_0, %c0_i32_1 : i32, i32, i32
  }
  func.func @transform_6(%arg0: i32) -> (i32, i32, i32) {
    %c0_i32 = arith.constant 0 : i32
    %c0_i32_0 = arith.constant 0 : i32
    %c0_i32_1 = arith.constant 0 : i32
    return %arg0, %c0_i32, %c0_i32_0 : i32, i32, i32
  }
}

</mosaic_0001>

<llo_original>
// kernel: tpu_custom_call.1
$region0: #{tpu_custom_call.1}
  #allocation0 [shape = 'u32[]', space=smem, size = 0x4, offset = 0x4, fixed_abs, tag = 'smem constant byte address 0x4 - core index']
  #allocation1 [shape = 'u32[144,128]{1,0:T(1,128)}', space=vmem, size = 0x12000, scoped, tag = 'internal scratch']
  %s0 = inlined_call_operand.hbm [shape: f32[8,16,32], index: 0, kind: input, shape index: {}]
  %s1 = inlined_call_operand.hbm [shape: f32[32,96], index: 1, kind: input, shape index: {}]
  %s2 = inlined_call_operand.vmem [shape: f32[1,96], index: 2, kind: input, shape index: {}]
  %s3 = inlined_call_operand.hbm [shape: f32[32,32], index: 3, kind: input, shape index: {}]
  %s4 = inlined_call_operand.vmem [shape: f32[1,32], index: 4, kind: input, shape index: {}]
  %s5 = inlined_call_operand.hbm [shape: f32[4,16,16], index: 5, kind: input, shape index: {}]
  %s6 = inlined_call_operand.hbm [shape: f32[8,16,32], index: 6, kind: output, shape index: {}]
  %s7 = sld [smem:[#allocation0]]
  $region50: #{tpu_custom_call.1} parent=0
    _
  %s9 = ssub.s32 1, %s7
  %s10 = scalar_select 0, %s9, %s7
  $region1: #{tpu_custom_call.1} parent=0
    #allocation2 [shape = 'u8[65536]{0}', space=vmem, size = 0x10000, scoped, tag = 'input window, operand 0, single buffered']
    #allocation3 [shape = 's32[1]{0}', space=sflag, size = 0x4, scoped, tag = 'scoped memory for tpu_custom_call.1']
    #allocation4 [shape = 's32[1]{0}', space=sflag, size = 0x4, scoped, tag = 'scoped memory for tpu_custom_call.1']
    #allocation5 [shape = 'u8[16384]{0}', space=vmem, size = 0x4000, scoped, tag = 'input window, operand 1, single buffered']
    #allocation6 [shape = 's32[1]{0}', space=sflag, size = 0x4, scoped, tag = 'scoped memory for tpu_custom_call.1']
    #allocation7 [shape = 'u8[16384]{0}', space=vmem, size = 0x4000, scoped, tag = 'input window, operand 3, single buffered']
    #allocation8 [shape = 'u8[32768]{0}', space=vmem, size = 0x8000, scoped, tag = 'input window, operand 5, single buffered']
    #allocation9 [shape = 's32[1]{0}', space=sflag, size = 0x4, scoped, tag = 'scoped memory for tpu_custom_call.1']
    #allocation10 [shape = 'u8[65536]{0}', space=vmem, size = 0x10000, scoped, tag = 'output window, operand 0, single buffered']
    %11 = vsyncpa [#allocation3], 0
    %12 = vsyncpa [#allocation6], 0
    %13 = vsyncpa [#allocation9], 0
    %14 = vsyncpa [#allocation4], 0
    // Predicated region
    $region2: #{tpu_custom_call.1} parent=1 // pred_check
      _
    $region3: #{tpu_custom_call.1} parent=1 // pred_check_branch
      %16 = sbr.rel (0) target = $region5
    $region4: #{tpu_custom_call.1} parent=1 // pred_region
      %s18 = ssub.s32 2048, 2048
      %19 = vsyncadd [#allocation3], %s18
      %s20 = sshll.u32 [#allocation2], 4
      %s21 = int_to_ptr.vmem [resolvable:$true] %s20
      %26 = dma.hbm_to_vmem [thread:$0]  %s0, 2048, %s21, [#allocation3], 128, 128, 8
    $region5: #{tpu_custom_call.1} parent=1 // pred_fallthru
      _
    // Predicated region
    $region6: #{tpu_custom_call.1} parent=1 // pred_check
      _
    $region7: #{tpu_custom_call.1} parent=1 // pred_check_branch
      %28 = sbr.rel (0) target = $region9
    $region8: #{tpu_custom_call.1} parent=1 // pred_region
      %s30 = ssub.s32 512, 512
      %31 = vsyncadd [#allocation6], %s30
      %s32 = sshll.u32 [#allocation5], 4
      %s33 = int_to_ptr.vmem [resolvable:$true] %s32
      %38 = dma.hbm_to_vmem [thread:$0]  %s1, 512, %s33, [#allocation6], 128, 128, 8
    $region9: #{tpu_custom_call.1} parent=1 // pred_fallthru
      _
    // Predicated region
    $region10: #{tpu_custom_call.1} parent=1 // pred_check
      _
    $region11: #{tpu_custom_call.1} parent=1 // pred_check_branch
      %40 = sbr.rel (0) target = $region13
    $region12: #{tpu_custom_call.1} parent=1 // pred_region
      _
    $region13: #{tpu_custom_call.1} parent=1 // pred_fallthru
      _
    // Predicated region
    $region14: #{tpu_custom_call.1} parent=1 // pred_check
      _
    $region15: #{tpu_custom_call.1} parent=1 // pred_check_branch
      %42 = sbr.rel (0) target = $region17
    $region16: #{tpu_custom_call.1} parent=1 // pred_region
      %s44 = ssub.s32 512, 512
      %45 = vsyncadd [#allocation6], %s44
      %s46 = sshll.u32 [#allocation7], 4
      %s47 = int_to_ptr.vmem [resolvable:$true] %s46
      %52 = dma.hbm_to_vmem [thread:$0]  %s3, 512, %s47, [#allocation6], 128, 128, 8
    $region17: #{tpu_custom_call.1} parent=1 // pred_fallthru
      _
    // Predicated region
    $region18: #{tpu_custom_call.1} parent=1 // pred_check
      _
    $region19: #{tpu_custom_call.1} parent=1 // pred_check_branch
      %54 = sbr.rel (0) target = $region21
    $region20: #{tpu_custom_call.1} parent=1 // pred_region
      _
    $region21: #{tpu_custom_call.1} parent=1 // pred_fallthru
      _
    // Predicated region
    $region22: #{tpu_custom_call.1} parent=1 // pred_check
      _
    $region23: #{tpu_custom_call.1} parent=1 // pred_check_branch
      %56 = sbr.rel (0) target = $region25
    $region24: #{tpu_custom_call.1} parent=1 // pred_region
      %s58 = ssub.s32 1024, 1024
      %59 = vsyncadd [#allocation9], %s58
      %s60 = sshll.u32 [#allocation8], 4
      %s61 = int_to_ptr.vmem [resolvable:$true] %s60
      %66 = dma.hbm_to_vmem [thread:$0]  %s5, 1024, %s61, [#allocation9], 128, 128, 8
    $region25: #{tpu_custom_call.1} parent=1 // pred_fallthru
      _
    // Predicated region
    $region26: #{tpu_custom_call.1} parent=1 // pred_check
      _
    $region27: #{tpu_custom_call.1} parent=1 // pred_check_branch
      %68 = sbr.rel (0) target = $region29
    $region28: #{tpu_custom_call.1} parent=1 // pred_region
      %69 = dma.done [#allocation3], 2048
    $region29: #{tpu_custom_call.1} parent=1 // pred_fallthru
      _
    // Predicated region
    $region30: #{tpu_custom_call.1} parent=1 // pred_check
      _
    $region31: #{tpu_custom_call.1} parent=1 // pred_check_branch
      %71 = sbr.rel (0) target = $region33
    $region32: #{tpu_custom_call.1} parent=1 // pred_region
      %72 = dma.done [#allocation6], 512
    $region33: #{tpu_custom_call.1} parent=1 // pred_fallthru
      _
    // Predicated region
    $region34: #{tpu_custom_call.1} parent=1 // pred_check
      _
    $region35: #{tpu_custom_call.1} parent=1 // pred_check_branch
      %74 = sbr.rel (0) target = $region37
    $region36: #{tpu_custom_call.1} parent=1 // pred_region
      %75 = dma.done [#allocation6], 512
    $region37: #{tpu_custom_call.1} parent=1 // pred_fallthru
      _
    // Predicated region
    $region38: #{tpu_custom_call.1} parent=1 // pred_check
      _
    $region39: #{tpu_custom_call.1} parent=1 // pred_check_branch
      %77 = sbr.rel (0) target = $region41
    $region40: #{tpu_custom_call.1} parent=1 // pred_region
      %78 = dma.done [#allocation9], 1024
    $region41: #{tpu_custom_call.1} parent=1 // pred_fallthru
      _
    %v79 = vld [vmem:[#allocation2] sm:$0xff]
    %v80 = vld [vmem:[#allocation2 + $0x8] sm:$0xff]
    %v81 = vld [vmem:[#allocation2 + $0x10] sm:$0xff]
    %v82 = vld [vmem:[#allocation2 + $0x18] sm:$0xff]
    %v83 = vld [vmem:[#allocation2 + $0x20] sm:$0xff]
    %v84 = vld [vmem:[#allocation2 + $0x28] sm:$0xff]
    %v85 = vld [vmem:[#allocation2 + $0x30] sm:$0xff]
    %v86 = vld [vmem:[#allocation2 + $0x38] sm:$0xff]
    %v87 = vld [vmem:[#allocation2 + $0x40] sm:$0xff]
    %v88 = vld [vmem:[#allocation2 + $0x48] sm:$0xff]
    %v89 = vld [vmem:[#allocation2 + $0x50] sm:$0xff]
    %v90 = vld [vmem:[#allocation2 + $0x58] sm:$0xff]
    %v91 = vld [vmem:[#allocation2 + $0x60] sm:$0xff]
    %v92 = vld [vmem:[#allocation2 + $0x68] sm:$0xff]
    %v93 = vld [vmem:[#allocation2 + $0x70] sm:$0xff]
    %v94 = vld [vmem:[#allocation2 + $0x78] sm:$0xff]
    %v95 = vld [vmem:[#allocation5] sm:$0xff]
    %v96 = vld [vmem:[#allocation5 + $0x8] sm:$0xff]
    %v97 = vld [vmem:[#allocation5 + $0x10] sm:$0xff]
    %v98 = vld [vmem:[#allocation5 + $0x18] sm:$0xff]
    %v99 = vld [vmem:[%s2] sm:$0x1]
    %v101 = vlaneseq
    %v102 = vshrl.u32 %v101, 7
    %v103 = vsub.s32 0, %v102
    %v104 = vrot.slane %v99, %v103
    %vm106 = vcmask 261120
    %v108 = vsel %vm106, %v79, 0
    %v111 = vsel %vm106, %v80, 0
    %v114 = vsel %vm106, %v81, 0
    %v117 = vsel %vm106, %v82, 0
    %v120 = vsel %vm106, %v83, 0
    %v123 = vsel %vm106, %v84, 0
    %v126 = vsel %vm106, %v85, 0
    %v129 = vsel %vm106, %v86, 0
    %v132 = vsel %vm106, %v87, 0
    %v135 = vsel %vm106, %v88, 0
    %v138 = vsel %vm106, %v89, 0
    %v141 = vsel %vm106, %v90, 0
    %v144 = vsel %vm106, %v91, 0
    %v147 = vsel %vm106, %v92, 0
    %v150 = vsel %vm106, %v93, 0
    %v153 = vsel %vm106, %v94, 0
    %155 = vmatprep.subr.mxu0 0.0
    %156 = vmatpush1.msra.mxu0 0.0
    %157 = vmatprep.subr.mxu0 0.0
    %158 = vmatpush1.msra.mxu0 0.0
    %159 = vmatprep.subr.mxu0 0.0
    %160 = vmatpush1.msra.mxu0 0.0
    %161 = vmatprep.subr.mxu0 0.0
    %162 = vmatpush1.msra.mxu0 0.0
    %163 = vmatprep.subr.mxu0 0.0
    %164 = vmatpush1.msra.mxu0 0.0
    %165 = vmatprep.subr.mxu0 0.0
    %166 = vmatpush1.msra.mxu0 0.0
    %167 = vmatprep.subr.mxu0 0.0
    %168 = vmatpush1.msra.mxu0 0.0
    %169 = vmatprep.subr.mxu0 0.0
    %170 = vmatpush1.msra.mxu0 0.0
    %171 = vmatprep.subr.mxu0 0.0
    %172 = vmatpush1.msra.mxu0 0.0
    %173 = vmatprep.subr.mxu0 0.0
    %174 = vmatpush1.msra.mxu0 0.0
    %175 = vmatprep.subr.mxu0 0.0
    %176 = vmatpush1.msra.mxu0 0.0
    %177 = vmatprep.subr.mxu0 0.0
    %178 = vmatpush1.msra.mxu0 0.0
    %179 = vmatprep.subr.mxu0 0.0
    %180 = vmatpush1.msra.mxu0 %v98
    %181 = vmatprep.subr.mxu0 0.0
    %182 = vmatpush1.msra.mxu0 %v97
    %183 = vmatprep.subr.mxu0 0.0
    %184 = vmatpush1.msra.mxu0 %v96
    %185 = vmatprep.subr.mxu0 0.0
    %186 = vmatpush1.msra.mxu0 %v95
    %187 = vmatprep.subr.mxu0 0.0
    %188 = vmatpush2.msra.mxu0 0.0
    %189 = vmatprep.subr.mxu0 0.0
    %190 = vmatpush2.msra.mxu0 0.0
    %191 = vmatprep.subr.mxu0 0.0
    %192 = vmatpush2.msra.mxu0 0.0
    %193 = vmatprep.subr.mxu0 0.0
    %194 = vmatpush2.msra.mxu0 0.0
    %195 = vmatprep.subr.mxu0 0.0
    %196 = vmatpush2.msra.mxu0 0.0
    %197 = vmatprep.subr.mxu0 0.0
    %198 = vmatpush2.msra.mxu0 0.0
    %199 = vmatprep.subr.mxu0 0.0
    %200 = vmatpush2.msra.mxu0 0.0
    %201 = vmatprep.subr.mxu0 0.0
    %202 = vmatpush2.msra.mxu0 0.0
    %203 = vmatprep.subr.mxu0 0.0
    %204 = vmatpush2.msra.mxu0 0.0
    %205 = vmatprep.subr.mxu0 0.0
    %206 = vmatpush2.msra.mxu0 0.0
    %207 = vmatprep.subr.mxu0 0.0
    %208 = vmatpush2.msra.mxu0 0.0
    %209 = vmatprep.subr.mxu0 0.0
    %210 = vmatpush2.msra.mxu0 0.0
    %211 = vmatprep.subr.mxu0 0.0
    %212 = vmatpush2.msra.mxu0 0.0
    %213 = vmatprep.subr.mxu0 0.0
    %214 = vmatpush2.msra.mxu0 0.0
    %215 = vmatprep.subr.mxu0 0.0
    %216 = vmatpush2.msra.mxu0 0.0
    %217 = vmatprep.subr.mxu0 0.0
    %218 = vmatpush2.msra.mxu0 0.0
    %219 = vmatprep.mubr.f32.mxu0 0.0
    %220 = vmatmul.mubr.f32.gmra.mxu0 %v108
    %v221 = vpop.f32.mrf.mxu0
    %v222 = vadd.f32 %v104, %v221
    %v223 = vpop.f32.mrf.mxu0
    %224 = vmatprep.mubr.f32.mxu0 0.0
    %225 = vmatmul.mubr.f32.gmra.mxu0 %v111
    %v226 = vpop.f32.mrf.mxu0
    %v227 = vadd.f32 %v104, %v226
    %v228 = vpop.f32.mrf.mxu0
    %229 = vmatprep.mubr.f32.mxu0 0.0
    %230 = vmatmul.mubr.f32.gmra.mxu0 %v114
    %v231 = vpop.f32.mrf.mxu0
    %v232 = vadd.f32 %v104, %v231
    %v233 = vpop.f32.mrf.mxu0
    %234 = vmatprep.mubr.f32.mxu0 0.0
    %235 = vmatmul.mubr.f32.gmra.mxu0 %v117
    %v236 = vpop.f32.mrf.mxu0
    %v237 = vadd.f32 %v104, %v236
    %v238 = vpop.f32.mrf.mxu0
    %239 = vmatprep.mubr.f32.mxu0 0.0
    %240 = vmatmul.mubr.f32.gmra.mxu0 %v120
    %v241 = vpop.f32.mrf.mxu0
    %v242 = vadd.f32 %v104, %v241
    %v243 = vpop.f32.mrf.mxu0
    %244 = vmatprep.mubr.f32.mxu0 0.0
    %245 = vmatmul.mubr.f32.gmra.mxu0 %v123
    %v246 = vpop.f32.mrf.mxu0
    %v247 = vadd.f32 %v104, %v246
    %v248 = vpop.f32.mrf.mxu0
    %249 = vmatprep.mubr.f32.mxu0 0.0
    %250 = vmatmul.mubr.f32.gmra.mxu0 %v126
    %v251 = vpop.f32.mrf.mxu0
    %v252 = vadd.f32 %v104, %v251
    %v253 = vpop.f32.mrf.mxu0
    %254 = vmatprep.mubr.f32.mxu0 0.0
    %255 = vmatmul.mubr.f32.gmra.mxu0 %v129
    %v256 = vpop.f32.mrf.mxu0
    %v257 = vadd.f32 %v104, %v256
    %v258 = vpop.f32.mrf.mxu0
    %259 = vmatprep.mubr.f32.mxu0 0.0
    %260 = vmatmul.mubr.f32.gmra.mxu0 %v132
    %v261 = vpop.f32.mrf.mxu0
    %v262 = vadd.f32 %v104, %v261
    %v263 = vpop.f32.mrf.mxu0
    %264 = vmatprep.mubr.f32.mxu0 0.0
    %265 = vmatmul.mubr.f32.gmra.mxu0 %v135
    %v266 = vpop.f32.mrf.mxu0
    %v267 = vadd.f32 %v104, %v266
    %v268 = vpop.f32.mrf.mxu0
    %269 = vmatprep.mubr.f32.mxu0 0.0
    %270 = vmatmul.mubr.f32.gmra.mxu0 %v138
    %v271 = vpop.f32.mrf.mxu0
    %v272 = vadd.f32 %v104, %v271
    %v273 = vpop.f32.mrf.mxu0
    %274 = vmatprep.mubr.f32.mxu0 0.0
    %275 = vmatmul.mubr.f32.gmra.mxu0 %v141
    %v276 = vpop.f32.mrf.mxu0
    %v277 = vadd.f32 %v104, %v276
    %v278 = vpop.f32.mrf.mxu0
    %279 = vmatprep.mubr.f32.mxu0 0.0
    %280 = vmatmul.mubr.f32.gmra.mxu0 %v144
    %v281 = vpop.f32.mrf.mxu0
    %v282 = vadd.f32 %v104, %v281
    %v283 = vpop.f32.mrf.mxu0
    %284 = vmatprep.mubr.f32.mxu0 0.0
    %285 = vmatmul.mubr.f32.gmra.mxu0 %v147
    %v286 = vpop.f32.mrf.mxu0
    %v287 = vadd.f32 %v104, %v286
    %v288 = vpop.f32.mrf.mxu0
    %289 = vmatprep.mubr.f32.mxu0 0.0
    %290 = vmatmul.mubr.f32.gmra.mxu0 %v150
    %v291 = vpop.f32.mrf.mxu0
    %v292 = vadd.f32 %v104, %v291
    %v293 = vpop.f32.mrf.mxu0
    %294 = vmatprep.mubr.f32.mxu0 0.0
    %295 = vmatmul.mubr.f32.gmra.mxu0 %v153
    %v296 = vpop.f32.mrf.mxu0
    %v297 = vadd.f32 %v104, %v296
    %v298 = vpop.f32.mrf.mxu0
    %299 = vdwg.mxu0
    %v300 = vld [vmem:[#allocation8] sm:$0xff]
    %v301 = vld [vmem:[#allocation8 + $0x8] sm:$0xff]
    %v302 = vld [vmem:[#allocation8 + $0x10] sm:$0xff]
    %v303 = vld [vmem:[#allocation8 + $0x18] sm:$0xff]
    %v304 = vld [vmem:[#allocation8 + $0x20] sm:$0xff]
    %v305 = vld [vmem:[#allocation8 + $0x28] sm:$0xff]
    %v306 = vld [vmem:[#allocation8 + $0x30] sm:$0xff]
    %v307 = vld [vmem:[#allocation8 + $0x38] sm:$0xff]
    %310 = vrot.lane.b32.xlu0 %v222, 96
    %v311 = vpop.permute.xlu0 %310
    %312 = vrot.lane.b32.xlu0 %v227, 96
    %v313 = vpop.permute.xlu0 %312
    %vm314 = vcmask 64512
    %v315 = vsel %vm314, %v222, 0
    %v317 = vsel %vm314, %v227, 0
    %v319 = vsel %vm314, %v311, 0
    %v321 = vsel %vm314, %v313, 0
    %323 = vmatprep.subr.mxu0 0.0
    %324 = vmatpush1.xpose.msra.mxu0 0.0
    %325 = vmatprep.subr.mxu0 0.0
    %326 = vmatpush1.xpose.msra.mxu0 0.0
    %327 = vmatprep.subr.mxu0 0.0
    %328 = vmatpush1.xpose.msra.mxu0 0.0
    %329 = vmatprep.subr.mxu0 0.0
    %330 = vmatpush1.xpose.msra.mxu0 0.0
    %331 = vmatprep.subr.mxu0 0.0
    %332 = vmatpush1.xpose.msra.mxu0 0.0
    %333 = vmatprep.subr.mxu0 0.0
    %334 = vmatpush1.xpose.msra.mxu0 0.0
    %335 = vmatprep.subr.mxu0 0.0
    %336 = vmatpush1.xpose.msra.mxu0 0.0
    %337 = vmatprep.subr.mxu0 0.0
    %338 = vmatpush1.xpose.msra.mxu0 0.0
    %339 = vmatprep.subr.mxu0 0.0
    %340 = vmatpush1.xpose.msra.mxu0 0.0
    %341 = vmatprep.subr.mxu0 0.0
    %342 = vmatpush1.xpose.msra.mxu0 0.0
    %343 = vmatprep.subr.mxu0 0.0
    %344 = vmatpush1.xpose.msra.mxu0 0.0
    %345 = vmatprep.subr.mxu0 0.0
    %346 = vmatpush1.xpose.msra.mxu0 0.0
    %347 = vmatprep.subr.mxu0 0.0
    %348 = vmatpush1.xpose.msra.mxu0 0.0
    %349 = vmatprep.subr.mxu0 0.0
    %350 = vmatpush1.xpose.msra.mxu0 0.0
    %351 = vmatprep.subr.mxu0 0.0
    %352 = vmatpush1.xpose.msra.mxu0 %v321
    %353 = vmatprep.subr.mxu0 0.0
    %354 = vmatpush1.xpose.msra.mxu0 %v319
    %355 = vmatprep.subr.mxu0 0.0
    %356 = vmatpush2.xpose.msra.mxu0 0.0
    %357 = vmatprep.subr.mxu0 0.0
    %358 = vmatpush2.xpose.msra.mxu0 0.0
    %359 = vmatprep.subr.mxu0 0.0
    %360 = vmatpush2.xpose.msra.mxu0 0.0
    %361 = vmatprep.subr.mxu0 0.0
    %362 = vmatpush2.xpose.msra.mxu0 0.0
    %363 = vmatprep.subr.mxu0 0.0
    %364 = vmatpush2.xpose.msra.mxu0 0.0
    %365 = vmatprep.subr.mxu0 0.0
    %366 = vmatpush2.xpose.msra.mxu0 0.0
    %367 = vmatprep.subr.mxu0 0.0
    %368 = vmatpush2.xpose.msra.mxu0 0.0
    %369 = vmatprep.subr.mxu0 0.0
    %370 = vmatpush2.xpose.msra.mxu0 0.0
    %371 = vmatprep.subr.mxu0 0.0
    %372 = vmatpush2.xpose.msra.mxu0 0.0
    %373 = vmatprep.subr.mxu0 0.0
    %374 = vmatpush2.xpose.msra.mxu0 0.0
    %375 = vmatprep.subr.mxu0 0.0
    %376 = vmatpush2.xpose.msra.mxu0 0.0
    %377 = vmatprep.subr.mxu0 0.0
    %378 = vmatpush2.xpose.msra.mxu0 0.0
    %379 = vmatprep.subr.mxu0 0.0
    %380 = vmatpush2.xpose.msra.mxu0 0.0
    %381 = vmatprep.subr.mxu0 0.0
    %382 = vmatpush2.xpose.msra.mxu0 0.0
    %383 = vmatprep.subr.mxu0 0.0
    %384 = vmatpush2.xpose.msra.mxu0 0.0
    %385 = vmatprep.subr.mxu0 0.0
    %386 = vmatpush2.xpose.msra.mxu0 0.0
    %387 = vmatprep.mubr.f32.mxu0 0.0
    %388 = vmatmul.mubr.f32.gmra.mxu0 %v315
    %v389 = vpop.f32.mrf.mxu0
    %v390 = vadd.f32 %v300, %v389
    %v391 = vpop.f32.mrf.mxu0
    %392 = vmatprep.mubr.f32.mxu0 0.0
    %393 = vmatmul.mubr.f32.gmra.mxu0 %v317
    %v394 = vpop.f32.mrf.mxu0
    %v395 = vadd.f32 %v301, %v394
    %v396 = vpop.f32.mrf.mxu0
    %397 = vdwg.mxu0
    %400 = vrot.lane.b32.xlu0 %v232, 96
    %v401 = vpop.permute.xlu0 %400
    %402 = vrot.lane.b32.xlu0 %v237, 96
    %v403 = vpop.permute.xlu0 %402
    %v404 = vsel %vm314, %v232, 0
    %v406 = vsel %vm314, %v237, 0
    %v408 = vsel %vm314, %v401, 0
    %v410 = vsel %vm314, %v403, 0
    %412 = vmatprep.subr.mxu0 0.0
    %413 = vmatpush1.xpose.msra.mxu0 0.0
    %414 = vmatprep.subr.mxu0 0.0
    %415 = vmatpush1.xpose.msra.mxu0 0.0
    %416 = vmatprep.subr.mxu0 0.0
    %417 = vmatpush1.xpose.msra.mxu0 0.0
    %418 = vmatprep.subr.mxu0 0.0
    %419 = vmatpush1.xpose.msra.mxu0 0.0
    %420 = vmatprep.subr.mxu0 0.0
    %421 = vmatpush1.xpose.msra.mxu0 0.0
    %422 = vmatprep.subr.mxu0 0.0
    %423 = vmatpush1.xpose.msra.mxu0 0.0
    %424 = vmatprep.subr.mxu0 0.0
    %425 = vmatpush1.xpose.msra.mxu0 0.0
    %426 = vmatprep.subr.mxu0 0.0
    %427 = vmatpush1.xpose.msra.mxu0 0.0
    %428 = vmatprep.subr.mxu0 0.0
    %429 = vmatpush1.xpose.msra.mxu0 0.0
    %430 = vmatprep.subr.mxu0 0.0
    %431 = vmatpush1.xpose.msra.mxu0 0.0
    %432 = vmatprep.subr.mxu0 0.0
    %433 = vmatpush1.xpose.msra.mxu0 0.0
    %434 = vmatprep.subr.mxu0 0.0
    %435 = vmatpush1.xpose.msra.mxu0 0.0
    %436 = vmatprep.subr.mxu0 0.0
    %437 = vmatpush1.xpose.msra.mxu0 0.0
    %438 = vmatprep.subr.mxu0 0.0
    %439 = vmatpush1.xpose.msra.mxu0 0.0
    %440 = vmatprep.subr.mxu0 0.0
    %441 = vmatpush1.xpose.msra.mxu0 %v410
    %442 = vmatprep.subr.mxu0 0.0
    %443 = vmatpush1.xpose.msra.mxu0 %v408
    %444 = vmatprep.subr.mxu0 0.0
    %445 = vmatpush2.xpose.msra.mxu0 0.0
    %446 = vmatprep.subr.mxu0 0.0
    %447 = vmatpush2.xpose.msra.mxu0 0.0
    %448 = vmatprep.subr.mxu0 0.0
    %449 = vmatpush2.xpose.msra.mxu0 0.0
    %450 = vmatprep.subr.mxu0 0.0
    %451 = vmatpush2.xpose.msra.mxu0 0.0
    %452 = vmatprep.subr.mxu0 0.0
    %453 = vmatpush2.xpose.msra.mxu0 0.0
    %454 = vmatprep.subr.mxu0 0.0
    %455 = vmatpush2.xpose.msra.mxu0 0.0
    %456 = vmatprep.subr.mxu0 0.0
    %457 = vmatpush2.xpose.msra.mxu0 0.0
    %458 = vmatprep.subr.mxu0 0.0
    %459 = vmatpush2.xpose.msra.mxu0 0.0
    %460 = vmatprep.subr.mxu0 0.0
    %461 = vmatpush2.xpose.msra.mxu0 0.0
    %462 = vmatprep.subr.mxu0 0.0
    %463 = vmatpush2.xpose.msra.mxu0 0.0
    %464 = vmatprep.subr.mxu0 0.0
    %465 = vmatpush2.xpose.msra.mxu0 0.0
    %466 = vmatprep.subr.mxu0 0.0
    %467 = vmatpush2.xpose.msra.mxu0 0.0
    %468 = vmatprep.subr.mxu0 0.0
    %469 = vmatpush2.xpose.msra.mxu0 0.0
    %470 = vmatprep.subr.mxu0 0.0
    %471 = vmatpush2.xpose.msra.mxu0 0.0
    %472 = vmatprep.subr.mxu0 0.0
    %473 = vmatpush2.xpose.msra.mxu0 0.0
    %474 = vmatprep.subr.mxu0 0.0
    %475 = vmatpush2.xpose.msra.mxu0 0.0
    %476 = vmatprep.mubr.f32.mxu0 0.0
    %477 = vmatmul.mubr.f32.gmra.mxu0 %v404
    %v478 = vpop.f32.mrf.mxu0
    %v479 = vadd.f32 %v300, %v478
    %v480 = vpop.f32.mrf.mxu0
    %481 = vmatprep.mubr.f32.mxu0 0.0
    %482 = vmatmul.mubr.f32.gmra.mxu0 %v406
    %v483 = vpop.f32.mrf.mxu0
    %v484 = vadd.f32 %v301, %v483
    %v485 = vpop.f32.mrf.mxu0
    %486 = vdwg.mxu0
    %489 = vrot.lane.b32.xlu0 %v242, 96
    %v490 = vpop.permute.xlu0 %489
    %491 = vrot.lane.b32.xlu0 %v247, 96
    %v492 = vpop.permute.xlu0 %491
    %v493 = vsel %vm314, %v242, 0
    %v495 = vsel %vm314, %v247, 0
    %v497 = vsel %vm314, %v490, 0
    %v499 = vsel %vm314, %v492, 0
    %501 = vmatprep.subr.mxu0 0.0
    %502 = vmatpush1.xpose.msra.mxu0 0.0
    %503 = vmatprep.subr.mxu0 0.0
    %504 = vmatpush1.xpose.msra.mxu0 0.0
    %505 = vmatprep.subr.mxu0 0.0
    %506 = vmatpush1.xpose.msra.mxu0 0.0
    %507 = vmatprep.subr.mxu0 0.0
    %508 = vmatpush1.xpose.msra.mxu0 0.0
    %509 = vmatprep.subr.mxu0 0.0
    %510 = vmatpush1.xpose.msra.mxu0 0.0
    %511 = vmatprep.subr.mxu0 0.0
    %512 = vmatpush1.xpose.msra.mxu0 0.0
    %513 = vmatprep.subr.mxu0 0.0
    %514 = vmatpush1.xpose.msra.mxu0 0.0
    %515 = vmatprep.subr.mxu0 0.0
    %516 = vmatpush1.xpose.msra.mxu0 0.0
    %517 = vmatprep.subr.mxu0 0.0
    %518 = vmatpush1.xpose.msra.mxu0 0.0
    %519 = vmatprep.subr.mxu0 0.0
    %520 = vmatpush1.xpose.msra.mxu0 0.0
    %521 = vmatprep.subr.mxu0 0.0
    %522 = vmatpush1.xpose.msra.mxu0 0.0
    %523 = vmatprep.subr.mxu0 0.0
    %524 = vmatpush1.xpose.msra.mxu0 0.0
    %525 = vmatprep.subr.mxu0 0.0
    %526 = vmatpush1.xpose.msra.mxu0 0.0
    %527 = vmatprep.subr.mxu0 0.0
    %528 = vmatpush1.xpose.msra.mxu0 0.0
    %529 = vmatprep.subr.mxu0 0.0
    %530 = vmatpush1.xpose.msra.mxu0 %v499
    %531 = vmatprep.subr.mxu0 0.0
    %532 = vmatpush1.xpose.msra.mxu0 %v497
    %533 = vmatprep.subr.mxu0 0.0
    %534 = vmatpush2.xpose.msra.mxu0 0.0
    %535 = vmatprep.subr.mxu0 0.0
    %536 = vmatpush2.xpose.msra.mxu0 0.0
    %537 = vmatprep.subr.mxu0 0.0
    %538 = vmatpush2.xpose.msra.mxu0 0.0
    %539 = vmatprep.subr.mxu0 0.0
    %540 = vmatpush2.xpose.msra.mxu0 0.0
    %541 = vmatprep.subr.mxu0 0.0
    %542 = vmatpush2.xpose.msra.mxu0 0.0
    %543 = vmatprep.subr.mxu0 0.0
    %544 = vmatpush2.xpose.msra.mxu0 0.0
    %545 = vmatprep.subr.mxu0 0.0
    %546 = vmatpush2.xpose.msra.mxu0 0.0
    %547 = vmatprep.subr.mxu0 0.0
    %548 = vmatpush2.xpose.msra.mxu0 0.0
    %549 = vmatprep.subr.mxu0 0.0
    %550 = vmatpush2.xpose.msra.mxu0 0.0
    %551 = vmatprep.subr.mxu0 0.0
    %552 = vmatpush2.xpose.msra.mxu0 0.0
    %553 = vmatprep.subr.mxu0 0.0
    %554 = vmatpush2.xpose.msra.mxu0 0.0
    %555 = vmatprep.subr.mxu0 0.0
    %556 = vmatpush2.xpose.msra.mxu0 0.0
    %557 = vmatprep.subr.mxu0 0.0
    %558 = vmatpush2.xpose.msra.mxu0 0.0
    %559 = vmatprep.subr.mxu0 0.0
    %560 = vmatpush2.xpose.msra.mxu0 0.0
    %561 = vmatprep.subr.mxu0 0.0
    %562 = vmatpush2.xpose.msra.mxu0 0.0
    %563 = vmatprep.subr.mxu0 0.0
    %564 = vmatpush2.xpose.msra.mxu0 0.0
    %565 = vmatprep.mubr.f32.mxu0 0.0
    %566 = vmatmul.mubr.f32.gmra.mxu0 %v493
    %v567 = vpop.f32.mrf.mxu0
    %v568 = vadd.f32 %v300, %v567
    %v569 = vpop.f32.mrf.mxu0
    %570 = vmatprep.mubr.f32.mxu0 0.0
    %571 = vmatmul.mubr.f32.gmra.mxu0 %v495
    %v572 = vpop.f32.mrf.mxu0
    %v573 = vadd.f32 %v301, %v572
    %v574 = vpop.f32.mrf.mxu0
    %575 = vdwg.mxu0
    %578 = vrot.lane.b32.xlu0 %v252, 96
    %v579 = vpop.permute.xlu0 %578
    %580 = vrot.lane.b32.xlu0 %v257, 96
    %v581 = vpop.permute.xlu0 %580
    %v582 = vsel %vm314, %v252, 0
    %v584 = vsel %vm314, %v257, 0
    %v586 = vsel %vm314, %v579, 0
    %v588 = vsel %vm314, %v581, 0
    %590 = vmatprep.subr.mxu0 0.0
    %591 = vmatpush1.xpose.msra.mxu0 0.0
    %592 = vmatprep.subr.mxu0 0.0
    %593 = vmatpush1.xpose.msra.mxu0 0.0
    %594 = vmatprep.subr.mxu0 0.0
    %595 = vmatpush1.xpose.msra.mxu0 0.0
    %596 = vmatprep.subr.mxu0 0.0
    %597 = vmatpush1.xpose.msra.mxu0 0.0
    %598 = vmatprep.subr.mxu0 0.0
    %599 = vmatpush1.xpose.msra.mxu0 0.0
    %600 = vmatprep.subr.mxu0 0.0
    %601 = vmatpush1.xpose.msra.mxu0 0.0
    %602 = vmatprep.subr.mxu0 0.0
    %603 = vmatpush1.xpose.msra.mxu0 0.0
    %604 = vmatprep.subr.mxu0 0.0
    %605 = vmatpush1.xpose.msra.mxu0 0.0
    %606 = vmatprep.subr.mxu0 0.0
    %607 = vmatpush1.xpose.msra.mxu0 0.0
    %608 = vmatprep.subr.mxu0 0.0
    %609 = vmatpush1.xpose.msra.mxu0 0.0
    %610 = vmatprep.subr.mxu0 0.0
    %611 = vmatpush1.xpose.msra.mxu0 0.0
    %612 = vmatprep.subr.mxu0 0.0
    %613 = vmatpush1.xpose.msra.mxu0 0.0
    %614 = vmatprep.subr.mxu0 0.0
    %615 = vmatpush1.xpose.msra.mxu0 0.0
    %616 = vmatprep.subr.mxu0 0.0
    %617 = vmatpush1.xpose.msra.mxu0 0.0
    %618 = vmatprep.subr.mxu0 0.0
    %619 = vmatpush1.xpose.msra.mxu0 %v588
    %620 = vmatprep.subr.mxu0 0.0
    %621 = vmatpush1.xpose.msra.mxu0 %v586
    %622 = vmatprep.subr.mxu0 0.0
    %623 = vmatpush2.xpose.msra.mxu0 0.0
    %624 = vmatprep.subr.mxu0 0.0
    %625 = vmatpush2.xpose.msra.mxu0 0.0
    %626 = vmatprep.subr.mxu0 0.0
    %627 = vmatpush2.xpose.msra.mxu0 0.0
    %628 = vmatprep.subr.mxu0 0.0
    %629 = vmatpush2.xpose.msra.mxu0 0.0
    %630 = vmatprep.subr.mxu0 0.0
    %631 = vmatpush2.xpose.msra.mxu0 0.0
    %632 = vmatprep.subr.mxu0 0.0
    %633 = vmatpush2.xpose.msra.mxu0 0.0
    %634 = vmatprep.subr.mxu0 0.0
    %635 = vmatpush2.xpose.msra.mxu0 0.0
    %636 = vmatprep.subr.mxu0 0.0
    %637 = vmatpush2.xpose.msra.mxu0 0.0
    %638 = vmatprep.subr.mxu0 0.0
    %639 = vmatpush2.xpose.msra.mxu0 0.0
    %640 = vmatprep.subr.mxu0 0.0
    %641 = vmatpush2.xpose.msra.mxu0 0.0
    %642 = vmatprep.subr.mxu0 0.0
    %643 = vmatpush2.xpose.msra.mxu0 0.0
    %644 = vmatprep.subr.mxu0 0.0
    %645 = vmatpush2.xpose.msra.mxu0 0.0
    %646 = vmatprep.subr.mxu0 0.0
    %647 = vmatpush2.xpose.msra.mxu0 0.0
    %648 = vmatprep.subr.mxu0 0.0
    %649 = vmatpush2.xpose.msra.mxu0 0.0
    %650 = vmatprep.subr.mxu0 0.0
    %651 = vmatpush2.xpose.msra.mxu0 0.0
    %652 = vmatprep.subr.mxu0 0.0
    %653 = vmatpush2.xpose.msra.mxu0 0.0
    %654 = vmatprep.mubr.f32.mxu0 0.0
    %655 = vmatmul.mubr.f32.gmra.mxu0 %v582
    %v656 = vpop.f32.mrf.mxu0
    %v657 = vadd.f32 %v300, %v656
    %v658 = vpop.f32.mrf.mxu0
    %659 = vmatprep.mubr.f32.mxu0 0.0
    %660 = vmatmul.mubr.f32.gmra.mxu0 %v584
    %v661 = vpop.f32.mrf.mxu0
    %v662 = vadd.f32 %v301, %v661
    %v663 = vpop.f32.mrf.mxu0
    %664 = vdwg.mxu0
    %667 = vrot.lane.b32.xlu0 %v262, 96
    %v668 = vpop.permute.xlu0 %667
    %669 = vrot.lane.b32.xlu0 %v267, 96
    %v670 = vpop.permute.xlu0 %669
    %v671 = vsel %vm314, %v262, 0
    %v673 = vsel %vm314, %v267, 0
    %v675 = vsel %vm314, %v668, 0
    %v677 = vsel %vm314, %v670, 0
    %679 = vmatprep.subr.mxu0 0.0
    %680 = vmatpush1.xpose.msra.mxu0 0.0
    %681 = vmatprep.subr.mxu0 0.0
    %682 = vmatpush1.xpose.msra.mxu0 0.0
    %683 = vmatprep.subr.mxu0 0.0
    %684 = vmatpush1.xpose.msra.mxu0 0.0
    %685 = vmatprep.subr.mxu0 0.0
    %686 = vmatpush1.xpose.msra.mxu0 0.0
    %687 = vmatprep.subr.mxu0 0.0
    %688 = vmatpush1.xpose.msra.mxu0 0.0
    %689 = vmatprep.subr.mxu0 0.0
    %690 = vmatpush1.xpose.msra.mxu0 0.0
    %691 = vmatprep.subr.mxu0 0.0
    %692 = vmatpush1.xpose.msra.mxu0 0.0
    %693 = vmatprep.subr.mxu0 0.0
    %694 = vmatpush1.xpose.msra.mxu0 0.0
    %695 = vmatprep.subr.mxu0 0.0
    %696 = vmatpush1.xpose.msra.mxu0 0.0
    %697 = vmatprep.subr.mxu0 0.0
    %698 = vmatpush1.xpose.msra.mxu0 0.0
    %699 = vmatprep.subr.mxu0 0.0
    %700 = vmatpush1.xpose.msra.mxu0 0.0
    %701 = vmatprep.subr.mxu0 0.0
    %702 = vmatpush1.xpose.msra.mxu0 0.0
    %703 = vmatprep.subr.mxu0 0.0
    %704 = vmatpush1.xpose.msra.mxu0 0.0
    %705 = vmatprep.subr.mxu0 0.0
    %706 = vmatpush1.xpose.msra.mxu0 0.0
    %707 = vmatprep.subr.mxu0 0.0
    %708 = vmatpush1.xpose.msra.mxu0 %v677
    %709 = vmatprep.subr.mxu0 0.0
    %710 = vmatpush1.xpose.msra.mxu0 %v675
    %711 = vmatprep.subr.mxu0 0.0
    %712 = vmatpush2.xpose.msra.mxu0 0.0
    %713 = vmatprep.subr.mxu0 0.0
    %714 = vmatpush2.xpose.msra.mxu0 0.0
    %715 = vmatprep.subr.mxu0 0.0
    %716 = vmatpush2.xpose.msra.mxu0 0.0
    %717 = vmatprep.subr.mxu0 0.0
    %718 = vmatpush2.xpose.msra.mxu0 0.0
    %719 = vmatprep.subr.mxu0 0.0
    %720 = vmatpush2.xpose.msra.mxu0 0.0
    %721 = vmatprep.subr.mxu0 0.0
    %722 = vmatpush2.xpose.msra.mxu0 0.0
    %723 = vmatprep.subr.mxu0 0.0
    %724 = vmatpush2.xpose.msra.mxu0 0.0
    %725 = vmatprep.subr.mxu0 0.0
    %726 = vmatpush2.xpose.msra.mxu0 0.0
    %727 = vmatprep.subr.mxu0 0.0
    %728 = vmatpush2.xpose.msra.mxu0 0.0
    %729 = vmatprep.subr.mxu0 0.0
    %730 = vmatpush2.xpose.msra.mxu0 0.0
    %731 = vmatprep.subr.mxu0 0.0
    %732 = vmatpush2.xpose.msra.mxu0 0.0
    %733 = vmatprep.subr.mxu0 0.0
    %734 = vmatpush2.xpose.msra.mxu0 0.0
    %735 = vmatprep.subr.mxu0 0.0
    %736 = vmatpush2.xpose.msra.mxu0 0.0
    %737 = vmatprep.subr.mxu0 0.0
    %738 = vmatpush2.xpose.msra.mxu0 0.0
    %739 = vmatprep.subr.mxu0 0.0
    %740 = vmatpush2.xpose.msra.mxu0 0.0
    %741 = vmatprep.subr.mxu0 0.0
    %742 = vmatpush2.xpose.msra.mxu0 0.0
    %743 = vmatprep.mubr.f32.mxu0 0.0
    %744 = vmatmul.mubr.f32.gmra.mxu0 %v671
    %v745 = vpop.f32.mrf.mxu0
    %v746 = vadd.f32 %v300, %v745
    %v747 = vpop.f32.mrf.mxu0
    %748 = vmatprep.mubr.f32.mxu0 0.0
    %749 = vmatmul.mubr.f32.gmra.mxu0 %v673
    %v750 = vpop.f32.mrf.mxu0
    %v751 = vadd.f32 %v301, %v750
    %v752 = vpop.f32.mrf.mxu0
    %753 = vdwg.mxu0
    %756 = vrot.lane.b32.xlu0 %v272, 96
    %v757 = vpop.permute.xlu0 %756
    %758 = vrot.lane.b32.xlu0 %v277, 96
    %v759 = vpop.permute.xlu0 %758
    %v760 = vsel %vm314, %v272, 0
    %v762 = vsel %vm314, %v277, 0
    %v764 = vsel %vm314, %v757, 0
    %v766 = vsel %vm314, %v759, 0
    %768 = vmatprep.subr.mxu0 0.0
    %769 = vmatpush1.xpose.msra.mxu0 0.0
    %770 = vmatprep.subr.mxu0 0.0
    %771 = vmatpush1.xpose.msra.mxu0 0.0
    %772 = vmatprep.subr.mxu0 0.0
    %773 = vmatpush1.xpose.msra.mxu0 0.0
    %774 = vmatprep.subr.mxu0 0.0
    %775 = vmatpush1.xpose.msra.mxu0 0.0
    %776 = vmatprep.subr.mxu0 0.0
    %777 = vmatpush1.xpose.msra.mxu0 0.0
    %778 = vmatprep.subr.mxu0 0.0
    %779 = vmatpush1.xpose.msra.mxu0 0.0
    %780 = vmatprep.subr.mxu0 0.0
    %781 = vmatpush1.xpose.msra.mxu0 0.0
    %782 = vmatprep.subr.mxu0 0.0
    %783 = vmatpush1.xpose.msra.mxu0 0.0
    %784 = vmatprep.subr.mxu0 0.0
    %785 = vmatpush1.xpose.msra.mxu0 0.0
    %786 = vmatprep.subr.mxu0 0.0
    %787 = vmatpush1.xpose.msra.mxu0 0.0
    %788 = vmatprep.subr.mxu0 0.0
    %789 = vmatpush1.xpose.msra.mxu0 0.0
    %790 = vmatprep.subr.mxu0 0.0
    %791 = vmatpush1.xpose.msra.mxu0 0.0
    %792 = vmatprep.subr.mxu0 0.0
    %793 = vmatpush1.xpose.msra.mxu0 0.0
    %794 = vmatprep.subr.mxu0 0.0
    %795 = vmatpush1.xpose.msra.mxu0 0.0
    %796 = vmatprep.subr.mxu0 0.0
    %797 = vmatpush1.xpose.msra.mxu0 %v766
    %798 = vmatprep.subr.mxu0 0.0
    %799 = vmatpush1.xpose.msra.mxu0 %v764
    %800 = vmatprep.subr.mxu0 0.0
    %801 = vmatpush2.xpose.msra.mxu0 0.0
    %802 = vmatprep.subr.mxu0 0.0
    %803 = vmatpush2.xpose.msra.mxu0 0.0
    %804 = vmatprep.subr.mxu0 0.0
    %805 = vmatpush2.xpose.msra.mxu0 0.0
    %806 = vmatprep.subr.mxu0 0.0
    %807 = vmatpush2.xpose.msra.mxu0 0.0
    %808 = vmatprep.subr.mxu0 0.0
    %809 = vmatpush2.xpose.msra.mxu0 0.0
    %810 = vmatprep.subr.mxu0 0.0
    %811 = vmatpush2.xpose.msra.mxu0 0.0
    %812 = vmatprep.subr.mxu0 0.0
    %813 = vmatpush2.xpose.msra.mxu0 0.0
    %814 = vmatprep.subr.mxu0 0.0
    %815 = vmatpush2.xpose.msra.mxu0 0.0
    %816 = vmatprep.subr.mxu0 0.0
    %817 = vmatpush2.xpose.msra.mxu0 0.0
    %818 = vmatprep.subr.mxu0 0.0
    %819 = vmatpush2.xpose.msra.mxu0 0.0
    %820 = vmatprep.subr.mxu0 0.0
    %821 = vmatpush2.xpose.msra.mxu0 0.0
    %822 = vmatprep.subr.mxu0 0.0
    %823 = vmatpush2.xpose.msra.mxu0 0.0
    %824 = vmatprep.subr.mxu0 0.0
    %825 = vmatpush2.xpose.msra.mxu0 0.0
    %826 = vmatprep.subr.mxu0 0.0
    %827 = vmatpush2.xpose.msra.mxu0 0.0
    %828 = vmatprep.subr.mxu0 0.0
    %829 = vmatpush2.xpose.msra.mxu0 0.0
    %830 = vmatprep.subr.mxu0 0.0
    %831 = vmatpush2.xpose.msra.mxu0 0.0
    %832 = vmatprep.mubr.f32.mxu0 0.0
    %833 = vmatmul.mubr.f32.gmra.mxu0 %v760
    %v834 = vpop.f32.mrf.mxu0
    %v835 = vadd.f32 %v300, %v834
    %v836 = vpop.f32.mrf.mxu0
    %837 = vmatprep.mubr.f32.mxu0 0.0
    %838 = vmatmul.mubr.f32.gmra.mxu0 %v762
    %v839 = vpop.f32.mrf.mxu0
    %v840 = vadd.f32 %v301, %v839
    %v841 = vpop.f32.mrf.mxu0
    %842 = vdwg.mxu0
    %845 = vrot.lane.b32.xlu0 %v282, 96
    %v846 = vpop.permute.xlu0 %845
    %847 = vrot.lane.b32.xlu0 %v287, 96
    %v848 = vpop.permute.xlu0 %847
    %v849 = vsel %vm314, %v282, 0
    %v851 = vsel %vm314, %v287, 0
    %v853 = vsel %vm314, %v846, 0
    %v855 = vsel %vm314, %v848, 0
    %857 = vmatprep.subr.mxu0 0.0
    %858 = vmatpush1.xpose.msra.mxu0 0.0
    %859 = vmatprep.subr.mxu0 0.0
    %860 = vmatpush1.xpose.msra.mxu0 0.0
    %861 = vmatprep.subr.mxu0 0.0
    %862 = vmatpush1.xpose.msra.mxu0 0.0
    %863 = vmatprep.subr.mxu0 0.0
    %864 = vmatpush1.xpose.msra.mxu0 0.0
    %865 = vmatprep.subr.mxu0 0.0
    %866 = vmatpush1.xpose.msra.mxu0 0.0
    %867 = vmatprep.subr.mxu0 0.0
    %868 = vmatpush1.xpose.msra.mxu0 0.0
    %869 = vmatprep.subr.mxu0 0.0
    %870 = vmatpush1.xpose.msra.mxu0 0.0
    %871 = vmatprep.subr.mxu0 0.0
    %872 = vmatpush1.xpose.msra.mxu0 0.0
    %873 = vmatprep.subr.mxu0 0.0
    %874 = vmatpush1.xpose.msra.mxu0 0.0
    %875 = vmatprep.subr.mxu0 0.0
    %876 = vmatpush1.xpose.msra.mxu0 0.0
    %877 = vmatprep.subr.mxu0 0.0
    %878 = vmatpush1.xpose.msra.mxu0 0.0
    %879 = vmatprep.subr.mxu0 0.0
    %880 = vmatpush1.xpose.msra.mxu0 0.0
    %881 = vmatprep.subr.mxu0 0.0
    %882 = vmatpush1.xpose.msra.mxu0 0.0
    %883 = vmatprep.subr.mxu0 0.0
    %884 = vmatpush1.xpose.msra.mxu0 0.0
    %885 = vmatprep.subr.mxu0 0.0
    %886 = vmatpush1.xpose.msra.mxu0 %v855
    %887 = vmatprep.subr.mxu0 0.0
    %888 = vmatpush1.xpose.msra.mxu0 %v853
    %889 = vmatprep.subr.mxu0 0.0
    %890 = vmatpush2.xpose.msra.mxu0 0.0
    %891 = vmatprep.subr.mxu0 0.0
    %892 = vmatpush2.xpose.msra.mxu0 0.0
    %893 = vmatprep.subr.mxu0 0.0
    %894 = vmatpush2.xpose.msra.mxu0 0.0
    %895 = vmatprep.subr.mxu0 0.0
    %896 = vmatpush2.xpose.msra.mxu0 0.0
    %897 = vmatprep.subr.mxu0 0.0
    %898 = vmatpush2.xpose.msra.mxu0 0.0
    %899 = vmatprep.subr.mxu0 0.0
    %900 = vmatpush2.xpose.msra.mxu0 0.0
    %901 = vmatprep.subr.mxu0 0.0
    %902 = vmatpush2.xpose.msra.mxu0 0.0
    %903 = vmatprep.subr.mxu0 0.0
    %904 = vmatpush2.xpose.msra.mxu0 0.0
    %905 = vmatprep.subr.mxu0 0.0
    %906 = vmatpush2.xpose.msra.mxu0 0.0
    %907 = vmatprep.subr.mxu0 0.0
    %908 = vmatpush2.xpose.msra.mxu0 0.0
    %909 = vmatprep.subr.mxu0 0.0
    %910 = vmatpush2.xpose.msra.mxu0 0.0
    %911 = vmatprep.subr.mxu0 0.0
    %912 = vmatpush2.xpose.msra.mxu0 0.0
    %913 = vmatprep.subr.mxu0 0.0
    %914 = vmatpush2.xpose.msra.mxu0 0.0
    %915 = vmatprep.subr.mxu0 0.0
    %916 = vmatpush2.xpose.msra.mxu0 0.0
    %917 = vmatprep.subr.mxu0 0.0
    %918 = vmatpush2.xpose.msra.mxu0 0.0
    %919 = vmatprep.subr.mxu0 0.0
    %920 = vmatpush2.xpose.msra.mxu0 0.0
    %921 = vmatprep.mubr.f32.mxu0 0.0
    %922 = vmatmul.mubr.f32.gmra.mxu0 %v849
    %v923 = vpop.f32.mrf.mxu0
    %v924 = vadd.f32 %v300, %v923
    %v925 = vpop.f32.mrf.mxu0
    %926 = vmatprep.mubr.f32.mxu0 0.0
    %927 = vmatmul.mubr.f32.gmra.mxu0 %v851
    %v928 = vpop.f32.mrf.mxu0
    %v929 = vadd.f32 %v301, %v928
    %v930 = vpop.f32.mrf.mxu0
    %931 = vdwg.mxu0
    %934 = vrot.lane.b32.xlu0 %v292, 96
    %v935 = vpop.permute.xlu0 %934
    %936 = vrot.lane.b32.xlu0 %v297, 96
    %v937 = vpop.permute.xlu0 %936
    %v938 = vsel %vm314, %v292, 0
    %v940 = vsel %vm314, %v297, 0
    %v942 = vsel %vm314, %v935, 0
    %v944 = vsel %vm314, %v937, 0
    %946 = vmatprep.subr.mxu0 0.0
    %947 = vmatpush1.xpose.msra.mxu0 0.0
    %948 = vmatprep.subr.mxu0 0.0
    %949 = vmatpush1.xpose.msra.mxu0 0.0
    %950 = vmatprep.subr.mxu0 0.0
    %951 = vmatpush1.xpose.msra.mxu0 0.0
    %952 = vmatprep.subr.mxu0 0.0
    %953 = vmatpush1.xpose.msra.mxu0 0.0
    %954 = vmatprep.subr.mxu0 0.0
    %955 = vmatpush1.xpose.msra.mxu0 0.0
    %956 = vmatprep.subr.mxu0 0.0
    %957 = vmatpush1.xpose.msra.mxu0 0.0
    %958 = vmatprep.subr.mxu0 0.0
    %959 = vmatpush1.xpose.msra.mxu0 0.0
    %960 = vmatprep.subr.mxu0 0.0
    %961 = vmatpush1.xpose.msra.mxu0 0.0
    %962 = vmatprep.subr.mxu0 0.0
    %963 = vmatpush1.xpose.msra.mxu0 0.0
    %964 = vmatprep.subr.mxu0 0.0
    %965 = vmatpush1.xpose.msra.mxu0 0.0
    %966 = vmatprep.subr.mxu0 0.0
    %967 = vmatpush1.xpose.msra.mxu0 0.0
    %968 = vmatprep.subr.mxu0 0.0
    %969 = vmatpush1.xpose.msra.mxu0 0.0
    %970 = vmatprep.subr.mxu0 0.0
    %971 = vmatpush1.xpose.msra.mxu0 0.0
    %972 = vmatprep.subr.mxu0 0.0
    %973 = vmatpush1.xpose.msra.mxu0 0.0
    %974 = vmatprep.subr.mxu0 0.0
    %975 = vmatpush1.xpose.msra.mxu0 %v944
    %976 = vmatprep.subr.mxu0 0.0
    %977 = vmatpush1.xpose.msra.mxu0 %v942
    %978 = vmatprep.subr.mxu0 0.0
    %979 = vmatpush2.xpose.msra.mxu0 0.0
    %980 = vmatprep.subr.mxu0 0.0
    %981 = vmatpush2.xpose.msra.mxu0 0.0
    %982 = vmatprep.subr.mxu0 0.0
    %983 = vmatpush2.xpose.msra.mxu0 0.0
    %984 = vmatprep.subr.mxu0 0.0
    %985 = vmatpush2.xpose.msra.mxu0 0.0
    %986 = vmatprep.subr.mxu0 0.0
    %987 = vmatpush2.xpose.msra.mxu0 0.0
    %988 = vmatprep.subr.mxu0 0.0
    %989 = vmatpush2.xpose.msra.mxu0 0.0
    %990 = vmatprep.subr.mxu0 0.0
    %991 = vmatpush2.xpose.msra.mxu0 0.0
    %992 = vmatprep.subr.mxu0 0.0
    %993 = vmatpush2.xpose.msra.mxu0 0.0
    %994 = vmatprep.subr.mxu0 0.0
    %995 = vmatpush2.xpose.msra.mxu0 0.0
    %996 = vmatprep.subr.mxu0 0.0
    %997 = vmatpush2.xpose.msra.mxu0 0.0
    %998 = vmatprep.subr.mxu0 0.0
    %999 = vmatpush2.xpose.msra.mxu0 0.0
    %1000 = vmatprep.subr.mxu0 0.0
    %1001 = vmatpush2.xpose.msra.mxu0 0.0
    %1002 = vmatprep.subr.mxu0 0.0
    %1003 = vmatpush2.xpose.msra.mxu0 0.0
    %1004 = vmatprep.subr.mxu0 0.0
    %1005 = vmatpush2.xpose.msra.mxu0 0.0
    %1006 = vmatprep.subr.mxu0 0.0
    %1007 = vmatpush2.xpose.msra.mxu0 0.0
    %1008 = vmatprep.subr.mxu0 0.0
    %1009 = vmatpush2.xpose.msra.mxu0 0.0
    %1010 = vmatprep.mubr.f32.mxu0 0.0
    %1011 = vmatmul.mubr.f32.gmra.mxu0 %v938
    %v1012 = vpop.f32.mrf.mxu0
    %v1013 = vadd.f32 %v300, %v1012
    %v1014 = vpop.f32.mrf.mxu0
    %1015 = vmatprep.mubr.f32.mxu0 0.0
    %1016 = vmatmul.mubr.f32.gmra.mxu0 %v940
    %v1017 = vpop.f32.mrf.mxu0
    %v1018 = vadd.f32 %v301, %v1017
    %v1019 = vpop.f32.mrf.mxu0
    %1020 = vdwg.mxu0
    %vm1021 = vcmask 130048
    %v1022 = vsel %vm1021, %v390, -inf
    %1023 = vmax.xlane.f32.xlu0 %v1022
    %v1024 = vpop.xlane.xlu0 %1023
    %v1025 = vsel %vm1021, %v395, -inf
    %1026 = vmax.xlane.f32.xlu0 %v1025
    %v1027 = vpop.xlane.xlu0 %1026
    %v1028 = vsel %vm1021, %v479, -inf
    %1029 = vmax.xlane.f32.xlu0 %v1028
    %v1030 = vpop.xlane.xlu0 %1029
    %v1031 = vsel %vm1021, %v484, -inf
    %1032 = vmax.xlane.f32.xlu0 %v1031
    %v1033 = vpop.xlane.xlu0 %1032
    %v1034 = vsel %vm1021, %v568, -inf
    %1035 = vmax.xlane.f32.xlu0 %v1034
    %v1036 = vpop.xlane.xlu0 %1035
    %v1037 = vsel %vm1021, %v573, -inf
    %1038 = vmax.xlane.f32.xlu0 %v1037
    %v1039 = vpop.xlane.xlu0 %1038
    %v1040 = vsel %vm1021, %v657, -inf
    %1041 = vmax.xlane.f32.xlu0 %v1040
    %v1042 = vpop.xlane.xlu0 %1041
    %v1043 = vsel %vm1021, %v662, -inf
    %1044 = vmax.xlane.f32.xlu0 %v1043
    %v1045 = vpop.xlane.xlu0 %1044
    %v1046 = vsel %vm1021, %v746, -inf
    %1047 = vmax.xlane.f32.xlu0 %v1046
    %v1048 = vpop.xlane.xlu0 %1047
    %v1049 = vsel %vm1021, %v751, -inf
    %1050 = vmax.xlane.f32.xlu0 %v1049
    %v1051 = vpop.xlane.xlu0 %1050
    %v1052 = vsel %vm1021, %v835, -inf
    %1053 = vmax.xlane.f32.xlu0 %v1052
    %v1054 = vpop.xlane.xlu0 %1053
    %v1055 = vsel %vm1021, %v840, -inf
    %1056 = vmax.xlane.f32.xlu0 %v1055
    %v1057 = vpop.xlane.xlu0 %1056
    %v1058 = vsel %vm1021, %v924, -inf
    %1059 = vmax.xlane.f32.xlu0 %v1058
    %v1060 = vpop.xlane.xlu0 %1059
    %v1061 = vsel %vm1021, %v929, -inf
    %1062 = vmax.xlane.f32.xlu0 %v1061
    %v1063 = vpop.xlane.xlu0 %1062
    %v1064 = vsel %vm1021, %v1013, -inf
    %1065 = vmax.xlane.f32.xlu0 %v1064
    %v1066 = vpop.xlane.xlu0 %1065
    %v1067 = vsel %vm1021, %v1018, -inf
    %1068 = vmax.xlane.f32.xlu0 %v1067
    %v1069 = vpop.xlane.xlu0 %1068
    %v1070 = vsub.f32 %v390, %v1024
    %v1071 = vsub.f32 %v395, %v1027
    %v1072 = vsub.f32 %v479, %v1030
    %v1073 = vsub.f32 %v484, %v1033
    %v1074 = vsub.f32 %v568, %v1036
    %v1075 = vsub.f32 %v573, %v1039
    %v1076 = vsub.f32 %v657, %v1042
    %v1077 = vsub.f32 %v662, %v1045
    %v1078 = vsub.f32 %v746, %v1048
    %v1079 = vsub.f32 %v751, %v1051
    %v1080 = vsub.f32 %v835, %v1054
    %v1081 = vsub.f32 %v840, %v1057
    %v1082 = vsub.f32 %v924, %v1060
    %v1083 = vsub.f32 %v929, %v1063
    %v1084 = vsub.f32 %v1013, %v1066
    %v1085 = vsub.f32 %v1018, %v1069
    %v1086 = vmul.f32 %v1070, 1.442695
    %v1087 = vpow.pop %v1086
    %v1088 = vmul.f32 %v1071, 1.442695
    %v1089 = vpow.pop %v1088
    %v1090 = vmul.f32 %v1072, 1.442695
    %v1091 = vpow.pop %v1090
    %v1092 = vmul.f32 %v1073, 1.442695
    %v1093 = vpow.pop %v1092
    %v1094 = vmul.f32 %v1074, 1.442695
    %v1095 = vpow.pop %v1094
    %v1096 = vmul.f32 %v1075, 1.442695
    %v1097 = vpow.pop %v1096
    %v1098 = vmul.f32 %v1076, 1.442695
    %v1099 = vpow.pop %v1098
    %v1100 = vmul.f32 %v1077, 1.442695
    %v1101 = vpow.pop %v1100
    %v1102 = vmul.f32 %v1078, 1.442695
    %v1103 = vpow.pop %v1102
    %v1104 = vmul.f32 %v1079, 1.442695
    %v1105 = vpow.pop %v1104
    %v1106 = vmul.f32 %v1080, 1.442695
    %v1107 = vpow.pop %v1106
    %v1108 = vmul.f32 %v1081, 1.442695
    %v1109 = vpow.pop %v1108
    %v1110 = vmul.f32 %v1082, 1.442695
    %v1111 = vpow.pop %v1110
    %v1112 = vmul.f32 %v1083, 1.442695
    %v1113 = vpow.pop %v1112
    %v1114 = vmul.f32 %v1084, 1.442695
    %v1115 = vpow.pop %v1114
    %v1116 = vmul.f32 %v1085, 1.442695
    %v1117 = vpow.pop %v1116
    %v1118 = vsel %vm1021, %v1087, 0.0
    %1119 = vadd.xlane.f32.xlu0 %v1118
    %v1120 = vpop.xlane.xlu0 %1119
    %v1121 = vsel %vm1021, %v1089, 0.0
    %1122 = vadd.xlane.f32.xlu0 %v1121
    %v1123 = vpop.xlane.xlu0 %1122
    %v1124 = vsel %vm1021, %v1091, 0.0
    %1125 = vadd.xlane.f32.xlu0 %v1124
    %v1126 = vpop.xlane.xlu0 %1125
    %v1127 = vsel %vm1021, %v1093, 0.0
    %1128 = vadd.xlane.f32.xlu0 %v1127
    %v1129 = vpop.xlane.xlu0 %1128
    %v1130 = vsel %vm1021, %v1095, 0.0
    %1131 = vadd.xlane.f32.xlu0 %v1130
    %v1132 = vpop.xlane.xlu0 %1131
    %v1133 = vsel %vm1021, %v1097, 0.0
    %1134 = vadd.xlane.f32.xlu0 %v1133
    %v1135 = vpop.xlane.xlu0 %1134
    %v1136 = vsel %vm1021, %v1099, 0.0
    %1137 = vadd.xlane.f32.xlu0 %v1136
    %v1138 = vpop.xlane.xlu0 %1137
    %v1139 = vsel %vm1021, %v1101, 0.0
    %1140 = vadd.xlane.f32.xlu0 %v1139
    %v1141 = vpop.xlane.xlu0 %1140
    %v1142 = vsel %vm1021, %v1103, 0.0
    %1143 = vadd.xlane.f32.xlu0 %v1142
    %v1144 = vpop.xlane.xlu0 %1143
    %v1145 = vsel %vm1021, %v1105, 0.0
    %1146 = vadd.xlane.f32.xlu0 %v1145
    %v1147 = vpop.xlane.xlu0 %1146
    %v1148 = vsel %vm1021, %v1107, 0.0
    %1149 = vadd.xlane.f32.xlu0 %v1148
    %v1150 = vpop.xlane.xlu0 %1149
    %v1151 = vsel %vm1021, %v1109, 0.0
    %1152 = vadd.xlane.f32.xlu0 %v1151
    %v1153 = vpop.xlane.xlu0 %1152
    %v1154 = vsel %vm1021, %v1111, 0.0
    %1155 = vadd.xlane.f32.xlu0 %v1154
    %v1156 = vpop.xlane.xlu0 %1155
    %v1157 = vsel %vm1021, %v1113, 0.0
    %1158 = vadd.xlane.f32.xlu0 %v1157
    %v1159 = vpop.xlane.xlu0 %1158
    %v1160 = vsel %vm1021, %v1115, 0.0
    %1161 = vadd.xlane.f32.xlu0 %v1160
    %v1162 = vpop.xlane.xlu0 %1161
    %v1163 = vsel %vm1021, %v1117, 0.0
    %1164 = vadd.xlane.f32.xlu0 %v1163
    %v1165 = vpop.xlane.xlu0 %1164
    %v1166 = vrcp.pop %v1120
    %v1167 = vrcp.pop %v1123
    %v1168 = vrcp.pop %v1126
    %v1169 = vrcp.pop %v1129
    %v1170 = vrcp.pop %v1132
    %v1171 = vrcp.pop %v1135
    %v1172 = vrcp.pop %v1138
    %v1173 = vrcp.pop %v1141
    %v1174 = vrcp.pop %v1144
    %v1175 = vrcp.pop %v1147
    %v1176 = vrcp.pop %v1150
    %v1177 = vrcp.pop %v1153
    %v1178 = vrcp.pop %v1156
    %v1179 = vrcp.pop %v1159
    %v1180 = vrcp.pop %v1162
    %v1181 = vrcp.pop %v1165
    %v1182 = vmul.f32 %v1087, %v1166
    %v1183 = vmul.f32 %v1089, %v1167
    %v1184 = vmul.f32 %v1091, %v1168
    %v1185 = vmul.f32 %v1093, %v1169
    %v1186 = vmul.f32 %v1095, %v1170
    %v1187 = vmul.f32 %v1097, %v1171
    %v1188 = vmul.f32 %v1099, %v1172
    %v1189 = vmul.f32 %v1101, %v1173
    %v1190 = vmul.f32 %v1103, %v1174
    %v1191 = vmul.f32 %v1105, %v1175
    %v1192 = vmul.f32 %v1107, %v1176
    %v1193 = vmul.f32 %v1109, %v1177
    %v1194 = vmul.f32 %v1111, %v1178
    %v1195 = vmul.f32 %v1113, %v1179
    %v1196 = vmul.f32 %v1115, %v1180
    %v1197 = vmul.f32 %v1117, %v1181
    %1198 = vrot.lane.b32.xlu0 %v222, 64
    %v1199 = vpop.permute.xlu0 %1198
    %1200 = vrot.lane.b32.xlu0 %v227, 64
    %v1201 = vpop.permute.xlu0 %1200
    %v1205 = vsel %vm1021, %v1182, 0
    %v1208 = vsel %vm1021, %v1183, 0
    %1210 = vmatprep.subr.mxu0 0.0
    %1211 = vmatpush1.msra.mxu0 0.0
    %1212 = vmatprep.subr.mxu0 0.0
    %1213 = vmatpush1.msra.mxu0 0.0
    %1214 = vmatprep.subr.mxu0 0.0
    %1215 = vmatpush1.msra.mxu0 0.0
    %1216 = vmatprep.subr.mxu0 0.0
    %1217 = vmatpush1.msra.mxu0 0.0
    %1218 = vmatprep.subr.mxu0 0.0
    %1219 = vmatpush1.msra.mxu0 0.0
    %1220 = vmatprep.subr.mxu0 0.0
    %1221 = vmatpush1.msra.mxu0 0.0
    %1222 = vmatprep.subr.mxu0 0.0
    %1223 = vmatpush1.msra.mxu0 0.0
    %1224 = vmatprep.subr.mxu0 0.0
    %1225 = vmatpush1.msra.mxu0 0.0
    %1226 = vmatprep.subr.mxu0 0.0
    %1227 = vmatpush1.msra.mxu0 0.0
    %1228 = vmatprep.subr.mxu0 0.0
    %1229 = vmatpush1.msra.mxu0 0.0
    %1230 = vmatprep.subr.mxu0 0.0
    %1231 = vmatpush1.msra.mxu0 0.0
    %1232 = vmatprep.subr.mxu0 0.0
    %1233 = vmatpush1.msra.mxu0 0.0
    %1234 = vmatprep.subr.mxu0 0.0
    %1235 = vmatpush1.msra.mxu0 0.0
    %1236 = vmatprep.subr.mxu0 0.0
    %1237 = vmatpush1.msra.mxu0 0.0
    %1238 = vmatprep.subr.mxu0 0.0
    %1239 = vmatpush1.msra.mxu0 %v1201
    %1240 = vmatprep.subr.mxu0 0.0
    %1241 = vmatpush1.msra.mxu0 %v1199
    %1242 = vmatprep.subr.mxu0 0.0
    %1243 = vmatpush2.msra.mxu0 0.0
    %1244 = vmatprep.subr.mxu0 0.0
    %1245 = vmatpush2.msra.mxu0 0.0
    %1246 = vmatprep.subr.mxu0 0.0
    %1247 = vmatpush2.msra.mxu0 0.0
    %1248 = vmatprep.subr.mxu0 0.0
    %1249 = vmatpush2.msra.mxu0 0.0
    %1250 = vmatprep.subr.mxu0 0.0
    %1251 = vmatpush2.msra.mxu0 0.0
    %1252 = vmatprep.subr.mxu0 0.0
    %1253 = vmatpush2.msra.mxu0 0.0
    %1254 = vmatprep.subr.mxu0 0.0
    %1255 = vmatpush2.msra.mxu0 0.0
    %1256 = vmatprep.subr.mxu0 0.0
    %1257 = vmatpush2.msra.mxu0 0.0
    %1258 = vmatprep.subr.mxu0 0.0
    %1259 = vmatpush2.msra.mxu0 0.0
    %1260 = vmatprep.subr.mxu0 0.0
    %1261 = vmatpush2.msra.mxu0 0.0
    %1262 = vmatprep.subr.mxu0 0.0
    %1263 = vmatpush2.msra.mxu0 0.0
    %1264 = vmatprep.subr.mxu0 0.0
    %1265 = vmatpush2.msra.mxu0 0.0
    %1266 = vmatprep.subr.mxu0 0.0
    %1267 = vmatpush2.msra.mxu0 0.0
    %1268 = vmatprep.subr.mxu0 0.0
    %1269 = vmatpush2.msra.mxu0 0.0
    %1270 = vmatprep.subr.mxu0 0.0
    %1271 = vmatpush2.msra.mxu0 0.0
    %1272 = vmatprep.subr.mxu0 0.0
    %1273 = vmatpush2.msra.mxu0 0.0
    %1274 = vmatprep.mubr.f32.mxu0 0.0
    %1275 = vmatmul.mubr.f32.gmra.mxu0 %v1205
    %v1276 = vpop.f32.mrf.mxu0
    %v1277 = vadd.f32 0.0, %v1276
    %v1278 = vpop.f32.mrf.mxu0
    %1279 = vmatprep.mubr.f32.mxu0 0.0
    %1280 = vmatmul.mubr.f32.gmra.mxu0 %v1208
    %v1281 = vpop.f32.mrf.mxu0
    %v1282 = vadd.f32 0.0, %v1281
    %v1283 = vpop.f32.mrf.mxu0
    %1284 = vdwg.mxu0
    %1285 = vrot.lane.b32.xlu0 %v232, 64
    %v1286 = vpop.permute.xlu0 %1285
    %1287 = vrot.lane.b32.xlu0 %v237, 64
    %v1288 = vpop.permute.xlu0 %1287
    %v1292 = vsel %vm1021, %v1184, 0
    %v1295 = vsel %vm1021, %v1185, 0
    %1297 = vmatprep.subr.mxu0 0.0
    %1298 = vmatpush1.msra.mxu0 0.0
    %1299 = vmatprep.subr.mxu0 0.0
    %1300 = vmatpush1.msra.mxu0 0.0
    %1301 = vmatprep.subr.mxu0 0.0
    %1302 = vmatpush1.msra.mxu0 0.0
    %1303 = vmatprep.subr.mxu0 0.0
    %1304 = vmatpush1.msra.mxu0 0.0
    %1305 = vmatprep.subr.mxu0 0.0
    %1306 = vmatpush1.msra.mxu0 0.0
    %1307 = vmatprep.subr.mxu0 0.0
    %1308 = vmatpush1.msra.mxu0 0.0
    %1309 = vmatprep.subr.mxu0 0.0
    %1310 = vmatpush1.msra.mxu0 0.0
    %1311 = vmatprep.subr.mxu0 0.0
    %1312 = vmatpush1.msra.mxu0 0.0
    %1313 = vmatprep.subr.mxu0 0.0
    %1314 = vmatpush1.msra.mxu0 0.0
    %1315 = vmatprep.subr.mxu0 0.0
    %1316 = vmatpush1.msra.mxu0 0.0
    %1317 = vmatprep.subr.mxu0 0.0
    %1318 = vmatpush1.msra.mxu0 0.0
    %1319 = vmatprep.subr.mxu0 0.0
    %1320 = vmatpush1.msra.mxu0 0.0
    %1321 = vmatprep.subr.mxu0 0.0
    %1322 = vmatpush1.msra.mxu0 0.0
    %1323 = vmatprep.subr.mxu0 0.0
    %1324 = vmatpush1.msra.mxu0 0.0
    %1325 = vmatprep.subr.mxu0 0.0
    %1326 = vmatpush1.msra.mxu0 %v1288
    %1327 = vmatprep.subr.mxu0 0.0
    %1328 = vmatpush1.msra.mxu0 %v1286
    %1329 = vmatprep.subr.mxu0 0.0
    %1330 = vmatpush2.msra.mxu0 0.0
    %1331 = vmatprep.subr.mxu0 0.0
    %1332 = vmatpush2.msra.mxu0 0.0
    %1333 = vmatprep.subr.mxu0 0.0
    %1334 = vmatpush2.msra.mxu0 0.0
    %1335 = vmatprep.subr.mxu0 0.0
    %1336 = vmatpush2.msra.mxu0 0.0
    %1337 = vmatprep.subr.mxu0 0.0
    %1338 = vmatpush2.msra.mxu0 0.0
    %1339 = vmatprep.subr.mxu0 0.0
    %1340 = vmatpush2.msra.mxu0 0.0
    %1341 = vmatprep.subr.mxu0 0.0
    %1342 = vmatpush2.msra.mxu0 0.0
    %1343 = vmatprep.subr.mxu0 0.0
    %1344 = vmatpush2.msra.mxu0 0.0
    %1345 = vmatprep.subr.mxu0 0.0
    %1346 = vmatpush2.msra.mxu0 0.0
    %1347 = vmatprep.subr.mxu0 0.0
    %1348 = vmatpush2.msra.mxu0 0.0
    %1349 = vmatprep.subr.mxu0 0.0
    %1350 = vmatpush2.msra.mxu0 0.0
    %1351 = vmatprep.subr.mxu0 0.0
    %1352 = vmatpush2.msra.mxu0 0.0
    %1353 = vmatprep.subr.mxu0 0.0
    %1354 = vmatpush2.msra.mxu0 0.0
    %1355 = vmatprep.subr.mxu0 0.0
    %1356 = vmatpush2.msra.mxu0 0.0
    %1357 = vmatprep.subr.mxu0 0.0
    %1358 = vmatpush2.msra.mxu0 0.0
    %1359 = vmatprep.subr.mxu0 0.0
    %1360 = vmatpush2.msra.mxu0 0.0
    %1361 = vmatprep.mubr.f32.mxu0 0.0
    %1362 = vmatmul.mubr.f32.gmra.mxu0 %v1292
    %v1363 = vpop.f32.mrf.mxu0
    %v1364 = vadd.f32 0.0, %v1363
    %v1365 = vpop.f32.mrf.mxu0
    %1366 = vmatprep.mubr.f32.mxu0 0.0
    %1367 = vmatmul.mubr.f32.gmra.mxu0 %v1295
    %v1368 = vpop.f32.mrf.mxu0
    %v1369 = vadd.f32 0.0, %v1368
    %v1370 = vpop.f32.mrf.mxu0
    %1371 = vdwg.mxu0
    %1372 = vrot.lane.b32.xlu0 %v242, 64
    %v1373 = vpop.permute.xlu0 %1372
    %1374 = vrot.lane.b32.xlu0 %v247, 64
    %v1375 = vpop.permute.xlu0 %1374
    %v1379 = vsel %vm1021, %v1186, 0
    %v1382 = vsel %vm1021, %v1187, 0
    %1384 = vmatprep.subr.mxu0 0.0
    %1385 = vmatpush1.msra.mxu0 0.0
    %1386 = vmatprep.subr.mxu0 0.0
    %1387 = vmatpush1.msra.mxu0 0.0
    %1388 = vmatprep.subr.mxu0 0.0
    %1389 = vmatpush1.msra.mxu0 0.0
    %1390 = vmatprep.subr.mxu0 0.0
    %1391 = vmatpush1.msra.mxu0 0.0
    %1392 = vmatprep.subr.mxu0 0.0
    %1393 = vmatpush1.msra.mxu0 0.0
    %1394 = vmatprep.subr.mxu0 0.0
    %1395 = vmatpush1.msra.mxu0 0.0
    %1396 = vmatprep.subr.mxu0 0.0
    %1397 = vmatpush1.msra.mxu0 0.0
    %1398 = vmatprep.subr.mxu0 0.0
    %1399 = vmatpush1.msra.mxu0 0.0
    %1400 = vmatprep.subr.mxu0 0.0
    %1401 = vmatpush1.msra.mxu0 0.0
    %1402 = vmatprep.subr.mxu0 0.0
    %1403 = vmatpush1.msra.mxu0 0.0
    %1404 = vmatprep.subr.mxu0 0.0
    %1405 = vmatpush1.msra.mxu0 0.0
    %1406 = vmatprep.subr.mxu0 0.0
    %1407 = vmatpush1.msra.mxu0 0.0
    %1408 = vmatprep.subr.mxu0 0.0
    %1409 = vmatpush1.msra.mxu0 0.0
    %1410 = vmatprep.subr.mxu0 0.0
    %1411 = vmatpush1.msra.mxu0 0.0
    %1412 = vmatprep.subr.mxu0 0.0
    %1413 = vmatpush1.msra.mxu0 %v1375
    %1414 = vmatprep.subr.mxu0 0.0
    %1415 = vmatpush1.msra.mxu0 %v1373
    %1416 = vmatprep.subr.mxu0 0.0
    %1417 = vmatpush2.msra.mxu0 0.0
    %1418 = vmatprep.subr.mxu0 0.0
    %1419 = vmatpush2.msra.mxu0 0.0
    %1420 = vmatprep.subr.mxu0 0.0
    %1421 = vmatpush2.msra.mxu0 0.0
    %1422 = vmatprep.subr.mxu0 0.0
    %1423 = vmatpush2.msra.mxu0 0.0
    %1424 = vmatprep.subr.mxu0 0.0
    %1425 = vmatpush2.msra.mxu0 0.0
    %1426 = vmatprep.subr.mxu0 0.0
    %1427 = vmatpush2.msra.mxu0 0.0
    %1428 = vmatprep.subr.mxu0 0.0
    %1429 = vmatpush2.msra.mxu0 0.0
    %1430 = vmatprep.subr.mxu0 0.0
    %1431 = vmatpush2.msra.mxu0 0.0
    %1432 = vmatprep.subr.mxu0 0.0
    %1433 = vmatpush2.msra.mxu0 0.0
    %1434 = vmatprep.subr.mxu0 0.0
    %1435 = vmatpush2.msra.mxu0 0.0
    %1436 = vmatprep.subr.mxu0 0.0
    %1437 = vmatpush2.msra.mxu0 0.0
    %1438 = vmatprep.subr.mxu0 0.0
    %1439 = vmatpush2.msra.mxu0 0.0
    %1440 = vmatprep.subr.mxu0 0.0
    %1441 = vmatpush2.msra.mxu0 0.0
    %1442 = vmatprep.subr.mxu0 0.0
    %1443 = vmatpush2.msra.mxu0 0.0
    %1444 = vmatprep.subr.mxu0 0.0
    %1445 = vmatpush2.msra.mxu0 0.0
    %1446 = vmatprep.subr.mxu0 0.0
    %1447 = vmatpush2.msra.mxu0 0.0
    %1448 = vmatprep.mubr.f32.mxu0 0.0
    %1449 = vmatmul.mubr.f32.gmra.mxu0 %v1379
    %v1450 = vpop.f32.mrf.mxu0
    %v1451 = vadd.f32 0.0, %v1450
    %v1452 = vpop.f32.mrf.mxu0
    %1453 = vmatprep.mubr.f32.mxu0 0.0
    %1454 = vmatmul.mubr.f32.gmra.mxu0 %v1382
    %v1455 = vpop.f32.mrf.mxu0
    %v1456 = vadd.f32 0.0, %v1455
    %v1457 = vpop.f32.mrf.mxu0
    %1458 = vdwg.mxu0
    %1459 = vrot.lane.b32.xlu0 %v252, 64
    %v1460 = vpop.permute.xlu0 %1459
    %1461 = vrot.lane.b32.xlu0 %v257, 64
    %v1462 = vpop.permute.xlu0 %1461
    %v1466 = vsel %vm1021, %v1188, 0
    %v1469 = vsel %vm1021, %v1189, 0
    %1471 = vmatprep.subr.mxu0 0.0
    %1472 = vmatpush1.msra.mxu0 0.0
    %1473 = vmatprep.subr.mxu0 0.0
    %1474 = vmatpush1.msra.mxu0 0.0
    %1475 = vmatprep.subr.mxu0 0.0
    %1476 = vmatpush1.msra.mxu0 0.0
    %1477 = vmatprep.subr.mxu0 0.0
    %1478 = vmatpush1.msra.mxu0 0.0
    %1479 = vmatprep.subr.mxu0 0.0
    %1480 = vmatpush1.msra.mxu0 0.0
    %1481 = vmatprep.subr.mxu0 0.0
    %1482 = vmatpush1.msra.mxu0 0.0
    %1483 = vmatprep.subr.mxu0 0.0
    %1484 = vmatpush1.msra.mxu0 0.0
    %1485 = vmatprep.subr.mxu0 0.0
    %1486 = vmatpush1.msra.mxu0 0.0
    %1487 = vmatprep.subr.mxu0 0.0
    %1488 = vmatpush1.msra.mxu0 0.0
    %1489 = vmatprep.subr.mxu0 0.0
    %1490 = vmatpush1.msra.mxu0 0.0
    %1491 = vmatprep.subr.mxu0 0.0
    %1492 = vmatpush1.msra.mxu0 0.0
    %1493 = vmatprep.subr.mxu0 0.0
    %1494 = vmatpush1.msra.mxu0 0.0
    %1495 = vmatprep.subr.mxu0 0.0
    %1496 = vmatpush1.msra.mxu0 0.0
    %1497 = vmatprep.subr.mxu0 0.0
    %1498 = vmatpush1.msra.mxu0 0.0
    %1499 = vmatprep.subr.mxu0 0.0
    %1500 = vmatpush1.msra.mxu0 %v1462
    %1501 = vmatprep.subr.mxu0 0.0
    %1502 = vmatpush1.msra.mxu0 %v1460
    %1503 = vmatprep.subr.mxu0 0.0
    %1504 = vmatpush2.msra.mxu0 0.0
    %1505 = vmatprep.subr.mxu0 0.0
    %1506 = vmatpush2.msra.mxu0 0.0
    %1507 = vmatprep.subr.mxu0 0.0
    %1508 = vmatpush2.msra.mxu0 0.0
    %1509 = vmatprep.subr.mxu0 0.0
    %1510 = vmatpush2.msra.mxu0 0.0
    %1511 = vmatprep.subr.mxu0 0.0
    %1512 = vmatpush2.msra.mxu0 0.0
    %1513 = vmatprep.subr.mxu0 0.0
    %1514 = vmatpush2.msra.mxu0 0.0
    %1515 = vmatprep.subr.mxu0 0.0
    %1516 = vmatpush2.msra.mxu0 0.0
    %1517 = vmatprep.subr.mxu0 0.0
    %1518 = vmatpush2.msra.mxu0 0.0
    %1519 = vmatprep.subr.mxu0 0.0
    %1520 = vmatpush2.msra.mxu0 0.0
    %1521 = vmatprep.subr.mxu0 0.0
    %1522 = vmatpush2.msra.mxu0 0.0
    %1523 = vmatprep.subr.mxu0 0.0
    %1524 = vmatpush2.msra.mxu0 0.0
    %1525 = vmatprep.subr.mxu0 0.0
    %1526 = vmatpush2.msra.mxu0 0.0
    %1527 = vmatprep.subr.mxu0 0.0
    %1528 = vmatpush2.msra.mxu0 0.0
    %1529 = vmatprep.subr.mxu0 0.0
    %1530 = vmatpush2.msra.mxu0 0.0
    %1531 = vmatprep.subr.mxu0 0.0
    %1532 = vmatpush2.msra.mxu0 0.0
    %1533 = vmatprep.subr.mxu0 0.0
    %1534 = vmatpush2.msra.mxu0 0.0
    %1535 = vmatprep.mubr.f32.mxu0 0.0
    %1536 = vmatmul.mubr.f32.gmra.mxu0 %v1466
    %v1537 = vpop.f32.mrf.mxu0
    %v1538 = vadd.f32 0.0, %v1537
    %v1539 = vpop.f32.mrf.mxu0
    %1540 = vmatprep.mubr.f32.mxu0 0.0
    %1541 = vmatmul.mubr.f32.gmra.mxu0 %v1469
    %v1542 = vpop.f32.mrf.mxu0
    %v1543 = vadd.f32 0.0, %v1542
    %v1544 = vpop.f32.mrf.mxu0
    %1545 = vdwg.mxu0
    %1546 = vrot.lane.b32.xlu0 %v262, 64
    %v1547 = vpop.permute.xlu0 %1546
    %1548 = vrot.lane.b32.xlu0 %v267, 64
    %v1549 = vpop.permute.xlu0 %1548
    %v1553 = vsel %vm1021, %v1190, 0
    %v1556 = vsel %vm1021, %v1191, 0
    %1558 = vmatprep.subr.mxu0 0.0
    %1559 = vmatpush1.msra.mxu0 0.0
    %1560 = vmatprep.subr.mxu0 0.0
    %1561 = vmatpush1.msra.mxu0 0.0
    %1562 = vmatprep.subr.mxu0 0.0
    %1563 = vmatpush1.msra.mxu0 0.0
    %1564 = vmatprep.subr.mxu0 0.0
    %1565 = vmatpush1.msra.mxu0 0.0
    %1566 = vmatprep.subr.mxu0 0.0
    %1567 = vmatpush1.msra.mxu0 0.0
    %1568 = vmatprep.subr.mxu0 0.0
    %1569 = vmatpush1.msra.mxu0 0.0
    %1570 = vmatprep.subr.mxu0 0.0
    %1571 = vmatpush1.msra.mxu0 0.0
    %1572 = vmatprep.subr.mxu0 0.0
    %1573 = vmatpush1.msra.mxu0 0.0
    %1574 = vmatprep.subr.mxu0 0.0
    %1575 = vmatpush1.msra.mxu0 0.0
    %1576 = vmatprep.subr.mxu0 0.0
    %1577 = vmatpush1.msra.mxu0 0.0
    %1578 = vmatprep.subr.mxu0 0.0
    %1579 = vmatpush1.msra.mxu0 0.0
    %1580 = vmatprep.subr.mxu0 0.0
    %1581 = vmatpush1.msra.mxu0 0.0
    %1582 = vmatprep.subr.mxu0 0.0
    %1583 = vmatpush1.msra.mxu0 0.0
    %1584 = vmatprep.subr.mxu0 0.0
    %1585 = vmatpush1.msra.mxu0 0.0
    %1586 = vmatprep.subr.mxu0 0.0
    %1587 = vmatpush1.msra.mxu0 %v1549
    %1588 = vmatprep.subr.mxu0 0.0
    %1589 = vmatpush1.msra.mxu0 %v1547
    %1590 = vmatprep.subr.mxu0 0.0
    %1591 = vmatpush2.msra.mxu0 0.0
    %1592 = vmatprep.subr.mxu0 0.0
    %1593 = vmatpush2.msra.mxu0 0.0
    %1594 = vmatprep.subr.mxu0 0.0
    %1595 = vmatpush2.msra.mxu0 0.0
    %1596 = vmatprep.subr.mxu0 0.0
    %1597 = vmatpush2.msra.mxu0 0.0
    %1598 = vmatprep.subr.mxu0 0.0
    %1599 = vmatpush2.msra.mxu0 0.0
    %1600 = vmatprep.subr.mxu0 0.0
    %1601 = vmatpush2.msra.mxu0 0.0
    %1602 = vmatprep.subr.mxu0 0.0
    %1603 = vmatpush2.msra.mxu0 0.0
    %1604 = vmatprep.subr.mxu0 0.0
    %1605 = vmatpush2.msra.mxu0 0.0
    %1606 = vmatprep.subr.mxu0 0.0
    %1607 = vmatpush2.msra.mxu0 0.0
    %1608 = vmatprep.subr.mxu0 0.0
    %1609 = vmatpush2.msra.mxu0 0.0
    %1610 = vmatprep.subr.mxu0 0.0
    %1611 = vmatpush2.msra.mxu0 0.0
    %1612 = vmatprep.subr.mxu0 0.0
    %1613 = vmatpush2.msra.mxu0 0.0
    %1614 = vmatprep.subr.mxu0 0.0
    %1615 = vmatpush2.msra.mxu0 0.0
    %1616 = vmatprep.subr.mxu0 0.0
    %1617 = vmatpush2.msra.mxu0 0.0
    %1618 = vmatprep.subr.mxu0 0.0
    %1619 = vmatpush2.msra.mxu0 0.0
    %1620 = vmatprep.subr.mxu0 0.0
    %1621 = vmatpush2.msra.mxu0 0.0
    %1622 = vmatprep.mubr.f32.mxu0 0.0
    %1623 = vmatmul.mubr.f32.gmra.mxu0 %v1553
    %v1624 = vpop.f32.mrf.mxu0
    %v1625 = vadd.f32 0.0, %v1624
    %v1626 = vpop.f32.mrf.mxu0
    %1627 = vmatprep.mubr.f32.mxu0 0.0
    %1628 = vmatmul.mubr.f32.gmra.mxu0 %v1556
    %v1629 = vpop.f32.mrf.mxu0
    %v1630 = vadd.f32 0.0, %v1629
    %v1631 = vpop.f32.mrf.mxu0
    %1632 = vdwg.mxu0
    %1633 = vrot.lane.b32.xlu0 %v272, 64
    %v1634 = vpop.permute.xlu0 %1633
    %1635 = vrot.lane.b32.xlu0 %v277, 64
    %v1636 = vpop.permute.xlu0 %1635
    %v1640 = vsel %vm1021, %v1192, 0
    %v1643 = vsel %vm1021, %v1193, 0
    %1645 = vmatprep.subr.mxu0 0.0
    %1646 = vmatpush1.msra.mxu0 0.0
    %1647 = vmatprep.subr.mxu0 0.0
    %1648 = vmatpush1.msra.mxu0 0.0
    %1649 = vmatprep.subr.mxu0 0.0
    %1650 = vmatpush1.msra.mxu0 0.0
    %1651 = vmatprep.subr.mxu0 0.0
    %1652 = vmatpush1.msra.mxu0 0.0
    %1653 = vmatprep.subr.mxu0 0.0
    %1654 = vmatpush1.msra.mxu0 0.0
    %1655 = vmatprep.subr.mxu0 0.0
    %1656 = vmatpush1.msra.mxu0 0.0
    %1657 = vmatprep.subr.mxu0 0.0
    %1658 = vmatpush1.msra.mxu0 0.0
    %1659 = vmatprep.subr.mxu0 0.0
    %1660 = vmatpush1.msra.mxu0 0.0
    %1661 = vmatprep.subr.mxu0 0.0
    %1662 = vmatpush1.msra.mxu0 0.0
    %1663 = vmatprep.subr.mxu0 0.0
    %1664 = vmatpush1.msra.mxu0 0.0
    %1665 = vmatprep.subr.mxu0 0.0
    %1666 = vmatpush1.msra.mxu0 0.0
    %1667 = vmatprep.subr.mxu0 0.0
    %1668 = vmatpush1.msra.mxu0 0.0
    %1669 = vmatprep.subr.mxu0 0.0
    %1670 = vmatpush1.msra.mxu0 0.0
    %1671 = vmatprep.subr.mxu0 0.0
    %1672 = vmatpush1.msra.mxu0 0.0
    %1673 = vmatprep.subr.mxu0 0.0
    %1674 = vmatpush1.msra.mxu0 %v1636
    %1675 = vmatprep.subr.mxu0 0.0
    %1676 = vmatpush1.msra.mxu0 %v1634
    %1677 = vmatprep.subr.mxu0 0.0
    %1678 = vmatpush2.msra.mxu0 0.0
    %1679 = vmatprep.subr.mxu0 0.0
    %1680 = vmatpush2.msra.mxu0 0.0
    %1681 = vmatprep.subr.mxu0 0.0
    %1682 = vmatpush2.msra.mxu0 0.0
    %1683 = vmatprep.subr.mxu0 0.0
    %1684 = vmatpush2.msra.mxu0 0.0
    %1685 = vmatprep.subr.mxu0 0.0
    %1686 = vmatpush2.msra.mxu0 0.0
    %1687 = vmatprep.subr.mxu0 0.0
    %1688 = vmatpush2.msra.mxu0 0.0
    %1689 = vmatprep.subr.mxu0 0.0
    %1690 = vmatpush2.msra.mxu0 0.0
    %1691 = vmatprep.subr.mxu0 0.0
    %1692 = vmatpush2.msra.mxu0 0.0
    %1693 = vmatprep.subr.mxu0 0.0
    %1694 = vmatpush2.msra.mxu0 0.0
    %1695 = vmatprep.subr.mxu0 0.0
    %1696 = vmatpush2.msra.mxu0 0.0
    %1697 = vmatprep.subr.mxu0 0.0
    %1698 = vmatpush2.msra.mxu0 0.0
    %1699 = vmatprep.subr.mxu0 0.0
    %1700 = vmatpush2.msra.mxu0 0.0
    %1701 = vmatprep.subr.mxu0 0.0
    %1702 = vmatpush2.msra.mxu0 0.0
    %1703 = vmatprep.subr.mxu0 0.0
    %1704 = vmatpush2.msra.mxu0 0.0
    %1705 = vmatprep.subr.mxu0 0.0
    %1706 = vmatpush2.msra.mxu0 0.0
    %1707 = vmatprep.subr.mxu0 0.0
    %1708 = vmatpush2.msra.mxu0 0.0
    %1709 = vmatprep.mubr.f32.mxu0 0.0
    %1710 = vmatmul.mubr.f32.gmra.mxu0 %v1640
    %v1711 = vpop.f32.mrf.mxu0
    %v1712 = vadd.f32 0.0, %v1711
    %v1713 = vpop.f32.mrf.mxu0
    %1714 = vmatprep.mubr.f32.mxu0 0.0
    %1715 = vmatmul.mubr.f32.gmra.mxu0 %v1643
    %v1716 = vpop.f32.mrf.mxu0
    %v1717 = vadd.f32 0.0, %v1716
    %v1718 = vpop.f32.mrf.mxu0
    %1719 = vdwg.mxu0
    %1720 = vrot.lane.b32.xlu0 %v282, 64
    %v1721 = vpop.permute.xlu0 %1720
    %1722 = vrot.lane.b32.xlu0 %v287, 64
    %v1723 = vpop.permute.xlu0 %1722
    %v1727 = vsel %vm1021, %v1194, 0
    %v1730 = vsel %vm1021, %v1195, 0
    %1732 = vmatprep.subr.mxu0 0.0
    %1733 = vmatpush1.msra.mxu0 0.0
    %1734 = vmatprep.subr.mxu0 0.0
    %1735 = vmatpush1.msra.mxu0 0.0
    %1736 = vmatprep.subr.mxu0 0.0
    %1737 = vmatpush1.msra.mxu0 0.0
    %1738 = vmatprep.subr.mxu0 0.0
    %1739 = vmatpush1.msra.mxu0 0.0
    %1740 = vmatprep.subr.mxu0 0.0
    %1741 = vmatpush1.msra.mxu0 0.0
    %1742 = vmatprep.subr.mxu0 0.0
    %1743 = vmatpush1.msra.mxu0 0.0
    %1744 = vmatprep.subr.mxu0 0.0
    %1745 = vmatpush1.msra.mxu0 0.0
    %1746 = vmatprep.subr.mxu0 0.0
    %1747 = vmatpush1.msra.mxu0 0.0
    %1748 = vmatprep.subr.mxu0 0.0
    %1749 = vmatpush1.msra.mxu0 0.0
    %1750 = vmatprep.subr.mxu0 0.0
    %1751 = vmatpush1.msra.mxu0 0.0
    %1752 = vmatprep.subr.mxu0 0.0
    %1753 = vmatpush1.msra.mxu0 0.0
    %1754 = vmatprep.subr.mxu0 0.0
    %1755 = vmatpush1.msra.mxu0 0.0
    %1756 = vmatprep.subr.mxu0 0.0
    %1757 = vmatpush1.msra.mxu0 0.0
    %1758 = vmatprep.subr.mxu0 0.0
    %1759 = vmatpush1.msra.mxu0 0.0
    %1760 = vmatprep.subr.mxu0 0.0
    %1761 = vmatpush1.msra.mxu0 %v1723
    %1762 = vmatprep.subr.mxu0 0.0
    %1763 = vmatpush1.msra.mxu0 %v1721
    %1764 = vmatprep.subr.mxu0 0.0
    %1765 = vmatpush2.msra.mxu0 0.0
    %1766 = vmatprep.subr.mxu0 0.0
    %1767 = vmatpush2.msra.mxu0 0.0
    %1768 = vmatprep.subr.mxu0 0.0
    %1769 = vmatpush2.msra.mxu0 0.0
    %1770 = vmatprep.subr.mxu0 0.0
    %1771 = vmatpush2.msra.mxu0 0.0
    %1772 = vmatprep.subr.mxu0 0.0
    %1773 = vmatpush2.msra.mxu0 0.0
    %1774 = vmatprep.subr.mxu0 0.0
    %1775 = vmatpush2.msra.mxu0 0.0
    %1776 = vmatprep.subr.mxu0 0.0
    %1777 = vmatpush2.msra.mxu0 0.0
    %1778 = vmatprep.subr.mxu0 0.0
    %1779 = vmatpush2.msra.mxu0 0.0
    %1780 = vmatprep.subr.mxu0 0.0
    %1781 = vmatpush2.msra.mxu0 0.0
    %1782 = vmatprep.subr.mxu0 0.0
    %1783 = vmatpush2.msra.mxu0 0.0
    %1784 = vmatprep.subr.mxu0 0.0
    %1785 = vmatpush2.msra.mxu0 0.0
    %1786 = vmatprep.subr.mxu0 0.0
    %1787 = vmatpush2.msra.mxu0 0.0
    %1788 = vmatprep.subr.mxu0 0.0
    %1789 = vmatpush2.msra.mxu0 0.0
    %1790 = vmatprep.subr.mxu0 0.0
    %1791 = vmatpush2.msra.mxu0 0.0
    %1792 = vmatprep.subr.mxu0 0.0
    %1793 = vmatpush2.msra.mxu0 0.0
    %1794 = vmatprep.subr.mxu0 0.0
    %1795 = vmatpush2.msra.mxu0 0.0
    %1796 = vmatprep.mubr.f32.mxu0 0.0
    %1797 = vmatmul.mubr.f32.gmra.mxu0 %v1727
    %v1798 = vpop.f32.mrf.mxu0
    %v1799 = vadd.f32 0.0, %v1798
    %v1800 = vpop.f32.mrf.mxu0
    %1801 = vmatprep.mubr.f32.mxu0 0.0
    %1802 = vmatmul.mubr.f32.gmra.mxu0 %v1730
    %v1803 = vpop.f32.mrf.mxu0
    %v1804 = vadd.f32 0.0, %v1803
    %v1805 = vpop.f32.mrf.mxu0
    %1806 = vdwg.mxu0
    %1807 = vrot.lane.b32.xlu0 %v292, 64
    %v1808 = vpop.permute.xlu0 %1807
    %1809 = vrot.lane.b32.xlu0 %v297, 64
    %v1810 = vpop.permute.xlu0 %1809
    %v1814 = vsel %vm1021, %v1196, 0
    %v1817 = vsel %vm1021, %v1197, 0
    %1819 = vmatprep.subr.mxu0 0.0
    %1820 = vmatpush1.msra.mxu0 0.0
    %1821 = vmatprep.subr.mxu0 0.0
    %1822 = vmatpush1.msra.mxu0 0.0
    %1823 = vmatprep.subr.mxu0 0.0
    %1824 = vmatpush1.msra.mxu0 0.0
    %1825 = vmatprep.subr.mxu0 0.0
    %1826 = vmatpush1.msra.mxu0 0.0
    %1827 = vmatprep.subr.mxu0 0.0
    %1828 = vmatpush1.msra.mxu0 0.0
    %1829 = vmatprep.subr.mxu0 0.0
    %1830 = vmatpush1.msra.mxu0 0.0
    %1831 = vmatprep.subr.mxu0 0.0
    %1832 = vmatpush1.msra.mxu0 0.0
    %1833 = vmatprep.subr.mxu0 0.0
    %1834 = vmatpush1.msra.mxu0 0.0
    %1835 = vmatprep.subr.mxu0 0.0
    %1836 = vmatpush1.msra.mxu0 0.0
    %1837 = vmatprep.subr.mxu0 0.0
    %1838 = vmatpush1.msra.mxu0 0.0
    %1839 = vmatprep.subr.mxu0 0.0
    %1840 = vmatpush1.msra.mxu0 0.0
    %1841 = vmatprep.subr.mxu0 0.0
    %1842 = vmatpush1.msra.mxu0 0.0
    %1843 = vmatprep.subr.mxu0 0.0
    %1844 = vmatpush1.msra.mxu0 0.0
    %1845 = vmatprep.subr.mxu0 0.0
    %1846 = vmatpush1.msra.mxu0 0.0
    %1847 = vmatprep.subr.mxu0 0.0
    %1848 = vmatpush1.msra.mxu0 %v1810
    %1849 = vmatprep.subr.mxu0 0.0
    %1850 = vmatpush1.msra.mxu0 %v1808
    %1851 = vmatprep.subr.mxu0 0.0
    %1852 = vmatpush2.msra.mxu0 0.0
    %1853 = vmatprep.subr.mxu0 0.0
    %1854 = vmatpush2.msra.mxu0 0.0
    %1855 = vmatprep.subr.mxu0 0.0
    %1856 = vmatpush2.msra.mxu0 0.0
    %1857 = vmatprep.subr.mxu0 0.0
    %1858 = vmatpush2.msra.mxu0 0.0
    %1859 = vmatprep.subr.mxu0 0.0
    %1860 = vmatpush2.msra.mxu0 0.0
    %1861 = vmatprep.subr.mxu0 0.0
    %1862 = vmatpush2.msra.mxu0 0.0
    %1863 = vmatprep.subr.mxu0 0.0
    %1864 = vmatpush2.msra.mxu0 0.0
    %1865 = vmatprep.subr.mxu0 0.0
    %1866 = vmatpush2.msra.mxu0 0.0
    %1867 = vmatprep.subr.mxu0 0.0
    %1868 = vmatpush2.msra.mxu0 0.0
    %1869 = vmatprep.subr.mxu0 0.0
    %1870 = vmatpush2.msra.mxu0 0.0
    %1871 = vmatprep.subr.mxu0 0.0
    %1872 = vmatpush2.msra.mxu0 0.0
    %1873 = vmatprep.subr.mxu0 0.0
    %1874 = vmatpush2.msra.mxu0 0.0
    %1875 = vmatprep.subr.mxu0 0.0
    %1876 = vmatpush2.msra.mxu0 0.0
    %1877 = vmatprep.subr.mxu0 0.0
    %1878 = vmatpush2.msra.mxu0 0.0
    %1879 = vmatprep.subr.mxu0 0.0
    %1880 = vmatpush2.msra.mxu0 0.0
    %1881 = vmatprep.subr.mxu0 0.0
    %1882 = vmatpush2.msra.mxu0 0.0
    %1883 = vmatprep.mubr.f32.mxu0 0.0
    %1884 = vmatmul.mubr.f32.gmra.mxu0 %v1814
    %v1885 = vpop.f32.mrf.mxu0
    %v1886 = vadd.f32 0.0, %v1885
    %v1887 = vpop.f32.mrf.mxu0
    %1888 = vmatprep.mubr.f32.mxu0 0.0
    %1889 = vmatmul.mubr.f32.gmra.mxu0 %v1817
    %v1890 = vpop.f32.mrf.mxu0
    %v1891 = vadd.f32 0.0, %v1890
    %v1892 = vpop.f32.mrf.mxu0
    %1893 = vdwg.mxu0
    %1894 = vrot.lane.b32.xlu0 %v222, 120
    %v1895 = vpop.permute.xlu0 %1894
    %1896 = vrot.lane.b32.xlu0 %v227, 120
    %v1897 = vpop.permute.xlu0 %1896
    %1898 = vrot.lane.b32.xlu0 %v222, 88
    %v1899 = vpop.permute.xlu0 %1898
    %1900 = vrot.lane.b32.xlu0 %v227, 88
    %v1901 = vpop.permute.xlu0 %1900
    %v1902 = vsel %vm314, %v1895, 0
    %v1904 = vsel %vm314, %v1897, 0
    %v1906 = vsel %vm314, %v1899, 0
    %v1908 = vsel %vm314, %v1901, 0
    %1910 = vmatprep.subr.mxu0 0.0
    %1911 = vmatpush1.xpose.msra.mxu0 0.0
    %1912 = vmatprep.subr.mxu0 0.0
    %1913 = vmatpush1.xpose.msra.mxu0 0.0
    %1914 = vmatprep.subr.mxu0 0.0
    %1915 = vmatpush1.xpose.msra.mxu0 0.0
    %1916 = vmatprep.subr.mxu0 0.0
    %1917 = vmatpush1.xpose.msra.mxu0 0.0
    %1918 = vmatprep.subr.mxu0 0.0
    %1919 = vmatpush1.xpose.msra.mxu0 0.0
    %1920 = vmatprep.subr.mxu0 0.0
    %1921 = vmatpush1.xpose.msra.mxu0 0.0
    %1922 = vmatprep.subr.mxu0 0.0
    %1923 = vmatpush1.xpose.msra.mxu0 0.0
    %1924 = vmatprep.subr.mxu0 0.0
    %1925 = vmatpush1.xpose.msra.mxu0 0.0
    %1926 = vmatprep.subr.mxu0 0.0
    %1927 = vmatpush1.xpose.msra.mxu0 0.0
    %1928 = vmatprep.subr.mxu0 0.0
    %1929 = vmatpush1.xpose.msra.mxu0 0.0
    %1930 = vmatprep.subr.mxu0 0.0
    %1931 = vmatpush1.xpose.msra.mxu0 0.0
    %1932 = vmatprep.subr.mxu0 0.0
    %1933 = vmatpush1.xpose.msra.mxu0 0.0
    %1934 = vmatprep.subr.mxu0 0.0
    %1935 = vmatpush1.xpose.msra.mxu0 0.0
    %1936 = vmatprep.subr.mxu0 0.0
    %1937 = vmatpush1.xpose.msra.mxu0 0.0
    %1938 = vmatprep.subr.mxu0 0.0
    %1939 = vmatpush1.xpose.msra.mxu0 %v1908
    %1940 = vmatprep.subr.mxu0 0.0
    %1941 = vmatpush1.xpose.msra.mxu0 %v1906
    %1942 = vmatprep.subr.mxu0 0.0
    %1943 = vmatpush2.xpose.msra.mxu0 0.0
    %1944 = vmatprep.subr.mxu0 0.0
    %1945 = vmatpush2.xpose.msra.mxu0 0.0
    %1946 = vmatprep.subr.mxu0 0.0
    %1947 = vmatpush2.xpose.msra.mxu0 0.0
    %1948 = vmatprep.subr.mxu0 0.0
    %1949 = vmatpush2.xpose.msra.mxu0 0.0
    %1950 = vmatprep.subr.mxu0 0.0
    %1951 = vmatpush2.xpose.msra.mxu0 0.0
    %1952 = vmatprep.subr.mxu0 0.0
    %1953 = vmatpush2.xpose.msra.mxu0 0.0
    %1954 = vmatprep.subr.mxu0 0.0
    %1955 = vmatpush2.xpose.msra.mxu0 0.0
    %1956 = vmatprep.subr.mxu0 0.0
    %1957 = vmatpush2.xpose.msra.mxu0 0.0
    %1958 = vmatprep.subr.mxu0 0.0
    %1959 = vmatpush2.xpose.msra.mxu0 0.0
    %1960 = vmatprep.subr.mxu0 0.0
    %1961 = vmatpush2.xpose.msra.mxu0 0.0
    %1962 = vmatprep.subr.mxu0 0.0
    %1963 = vmatpush2.xpose.msra.mxu0 0.0
    %1964 = vmatprep.subr.mxu0 0.0
    %1965 = vmatpush2.xpose.msra.mxu0 0.0
    %1966 = vmatprep.subr.mxu0 0.0
    %1967 = vmatpush2.xpose.msra.mxu0 0.0
    %1968 = vmatprep.subr.mxu0 0.0
    %1969 = vmatpush2.xpose.msra.mxu0 0.0
    %1970 = vmatprep.subr.mxu0 0.0
    %1971 = vmatpush2.xpose.msra.mxu0 0.0
    %1972 = vmatprep.subr.mxu0 0.0
    %1973 = vmatpush2.xpose.msra.mxu0 0.0
    %1974 = vmatprep.mubr.f32.mxu0 0.0
    %1975 = vmatmul.mubr.f32.gmra.mxu0 %v1902
    %v1976 = vpop.f32.mrf.mxu0
    %v1977 = vadd.f32 %v302, %v1976
    %v1978 = vpop.f32.mrf.mxu0
    %1979 = vmatprep.mubr.f32.mxu0 0.0
    %1980 = vmatmul.mubr.f32.gmra.mxu0 %v1904
    %v1981 = vpop.f32.mrf.mxu0
    %v1982 = vadd.f32 %v303, %v1981
    %v1983 = vpop.f32.mrf.mxu0
    %1984 = vdwg.mxu0
    %1985 = vrot.lane.b32.xlu0 %v232, 120
    %v1986 = vpop.permute.xlu0 %1985
    %1987 = vrot.lane.b32.xlu0 %v237, 120
    %v1988 = vpop.permute.xlu0 %1987
    %1989 = vrot.lane.b32.xlu0 %v232, 88
    %v1990 = vpop.permute.xlu0 %1989
    %1991 = vrot.lane.b32.xlu0 %v237, 88
    %v1992 = vpop.permute.xlu0 %1991
    %v1993 = vsel %vm314, %v1986, 0
    %v1995 = vsel %vm314, %v1988, 0
    %v1997 = vsel %vm314, %v1990, 0
    %v1999 = vsel %vm314, %v1992, 0
    %2001 = vmatprep.subr.mxu0 0.0
    %2002 = vmatpush1.xpose.msra.mxu0 0.0
    %2003 = vmatprep.subr.mxu0 0.0
    %2004 = vmatpush1.xpose.msra.mxu0 0.0
    %2005 = vmatprep.subr.mxu0 0.0
    %2006 = vmatpush1.xpose.msra.mxu0 0.0
    %2007 = vmatprep.subr.mxu0 0.0
    %2008 = vmatpush1.xpose.msra.mxu0 0.0
    %2009 = vmatprep.subr.mxu0 0.0
    %2010 = vmatpush1.xpose.msra.mxu0 0.0
    %2011 = vmatprep.subr.mxu0 0.0
    %2012 = vmatpush1.xpose.msra.mxu0 0.0
    %2013 = vmatprep.subr.mxu0 0.0
    %2014 = vmatpush1.xpose.msra.mxu0 0.0
    %2015 = vmatprep.subr.mxu0 0.0
    %2016 = vmatpush1.xpose.msra.mxu0 0.0
    %2017 = vmatprep.subr.mxu0 0.0
    %2018 = vmatpush1.xpose.msra.mxu0 0.0
    %2019 = vmatprep.subr.mxu0 0.0
    %2020 = vmatpush1.xpose.msra.mxu0 0.0
    %2021 = vmatprep.subr.mxu0 0.0
    %2022 = vmatpush1.xpose.msra.mxu0 0.0
    %2023 = vmatprep.subr.mxu0 0.0
    %2024 = vmatpush1.xpose.msra.mxu0 0.0
    %2025 = vmatprep.subr.mxu0 0.0
    %2026 = vmatpush1.xpose.msra.mxu0 0.0
    %2027 = vmatprep.subr.mxu0 0.0
    %2028 = vmatpush1.xpose.msra.mxu0 0.0
    %2029 = vmatprep.subr.mxu0 0.0
    %2030 = vmatpush1.xpose.msra.mxu0 %v1999
    %2031 = vmatprep.subr.mxu0 0.0
    %2032 = vmatpush1.xpose.msra.mxu0 %v1997
    %2033 = vmatprep.subr.mxu0 0.0
    %2034 = vmatpush2.xpose.msra.mxu0 0.0
    %2035 = vmatprep.subr.mxu0 0.0
    %2036 = vmatpush2.xpose.msra.mxu0 0.0
    %2037 = vmatprep.subr.mxu0 0.0
    %2038 = vmatpush2.xpose.msra.mxu0 0.0
    %2039 = vmatprep.subr.mxu0 0.0
    %2040 = vmatpush2.xpose.msra.mxu0 0.0
    %2041 = vmatprep.subr.mxu0 0.0
    %2042 = vmatpush2.xpose.msra.mxu0 0.0
    %2043 = vmatprep.subr.mxu0 0.0
    %2044 = vmatpush2.xpose.msra.mxu0 0.0
    %2045 = vmatprep.subr.mxu0 0.0
    %2046 = vmatpush2.xpose.msra.mxu0 0.0
    %2047 = vmatprep.subr.mxu0 0.0
    %2048 = vmatpush2.xpose.msra.mxu0 0.0
    %2049 = vmatprep.subr.mxu0 0.0
    %2050 = vmatpush2.xpose.msra.mxu0 0.0
    %2051 = vmatprep.subr.mxu0 0.0
    %2052 = vmatpush2.xpose.msra.mxu0 0.0
    %2053 = vmatprep.subr.mxu0 0.0
    %2054 = vmatpush2.xpose.msra.mxu0 0.0
    %2055 = vmatprep.subr.mxu0 0.0
    %2056 = vmatpush2.xpose.msra.mxu0 0.0
    %2057 = vmatprep.subr.mxu0 0.0
    %2058 = vmatpush2.xpose.msra.mxu0 0.0
    %2059 = vmatprep.subr.mxu0 0.0
    %2060 = vmatpush2.xpose.msra.mxu0 0.0
    %2061 = vmatprep.subr.mxu0 0.0
    %2062 = vmatpush2.xpose.msra.mxu0 0.0
    %2063 = vmatprep.subr.mxu0 0.0
    %2064 = vmatpush2.xpose.msra.mxu0 0.0
    %2065 = vmatprep.mubr.f32.mxu0 0.0
    %2066 = vmatmul.mubr.f32.gmra.mxu0 %v1993
    %v2067 = vpop.f32.mrf.mxu0
    %v2068 = vadd.f32 %v302, %v2067
    %v2069 = vpop.f32.mrf.mxu0
    %2070 = vmatprep.mubr.f32.mxu0 0.0
    %2071 = vmatmul.mubr.f32.gmra.mxu0 %v1995
    %v2072 = vpop.f32.mrf.mxu0
    %v2073 = vadd.f32 %v303, %v2072
    %v2074 = vpop.f32.mrf.mxu0
    %2075 = vdwg.mxu0
    %2076 = vrot.lane.b32.xlu0 %v242, 120
    %v2077 = vpop.permute.xlu0 %2076
    %2078 = vrot.lane.b32.xlu0 %v247, 120
    %v2079 = vpop.permute.xlu0 %2078
    %2080 = vrot.lane.b32.xlu0 %v242, 88
    %v2081 = vpop.permute.xlu0 %2080
    %2082 = vrot.lane.b32.xlu0 %v247, 88
    %v2083 = vpop.permute.xlu0 %2082
    %v2084 = vsel %vm314, %v2077, 0
    %v2086 = vsel %vm314, %v2079, 0
    %v2088 = vsel %vm314, %v2081, 0
    %v2090 = vsel %vm314, %v2083, 0
    %2092 = vmatprep.subr.mxu0 0.0
    %2093 = vmatpush1.xpose.msra.mxu0 0.0
    %2094 = vmatprep.subr.mxu0 0.0
    %2095 = vmatpush1.xpose.msra.mxu0 0.0
    %2096 = vmatprep.subr.mxu0 0.0
    %2097 = vmatpush1.xpose.msra.mxu0 0.0
    %2098 = vmatprep.subr.mxu0 0.0
    %2099 = vmatpush1.xpose.msra.mxu0 0.0
    %2100 = vmatprep.subr.mxu0 0.0
    %2101 = vmatpush1.xpose.msra.mxu0 0.0
    %2102 = vmatprep.subr.mxu0 0.0
    %2103 = vmatpush1.xpose.msra.mxu0 0.0
    %2104 = vmatprep.subr.mxu0 0.0
    %2105 = vmatpush1.xpose.msra.mxu0 0.0
    %2106 = vmatprep.subr.mxu0 0.0
    %2107 = vmatpush1.xpose.msra.mxu0 0.0
    %2108 = vmatprep.subr.mxu0 0.0
    %2109 = vmatpush1.xpose.msra.mxu0 0.0
    %2110 = vmatprep.subr.mxu0 0.0
    %2111 = vmatpush1.xpose.msra.mxu0 0.0
    %2112 = vmatprep.subr.mxu0 0.0
    %2113 = vmatpush1.xpose.msra.mxu0 0.0
    %2114 = vmatprep.subr.mxu0 0.0
    %2115 = vmatpush1.xpose.msra.mxu0 0.0
    %2116 = vmatprep.subr.mxu0 0.0
    %2117 = vmatpush1.xpose.msra.mxu0 0.0
    %2118 = vmatprep.subr.mxu0 0.0
    %2119 = vmatpush1.xpose.msra.mxu0 0.0
    %2120 = vmatprep.subr.mxu0 0.0
    %2121 = vmatpush1.xpose.msra.mxu0 %v2090
    %2122 = vmatprep.subr.mxu0 0.0
    %2123 = vmatpush1.xpose.msra.mxu0 %v2088
    %2124 = vmatprep.subr.mxu0 0.0
    %2125 = vmatpush2.xpose.msra.mxu0 0.0
    %2126 = vmatprep.subr.mxu0 0.0
    %2127 = vmatpush2.xpose.msra.mxu0 0.0
    %2128 = vmatprep.subr.mxu0 0.0
    %2129 = vmatpush2.xpose.msra.mxu0 0.0
    %2130 = vmatprep.subr.mxu0 0.0
    %2131 = vmatpush2.xpose.msra.mxu0 0.0
    %2132 = vmatprep.subr.mxu0 0.0
    %2133 = vmatpush2.xpose.msra.mxu0 0.0
    %2134 = vmatprep.subr.mxu0 0.0
    %2135 = vmatpush2.xpose.msra.mxu0 0.0
    %2136 = vmatprep.subr.mxu0 0.0
    %2137 = vmatpush2.xpose.msra.mxu0 0.0
    %2138 = vmatprep.subr.mxu0 0.0
    %2139 = vmatpush2.xpose.msra.mxu0 0.0
    %2140 = vmatprep.subr.mxu0 0.0
    %2141 = vmatpush2.xpose.msra.mxu0 0.0
    %2142 = vmatprep.subr.mxu0 0.0
    %2143 = vmatpush2.xpose.msra.mxu0 0.0
    %2144 = vmatprep.subr.mxu0 0.0
    %2145 = vmatpush2.xpose.msra.mxu0 0.0
    %2146 = vmatprep.subr.mxu0 0.0
    %2147 = vmatpush2.xpose.msra.mxu0 0.0
    %2148 = vmatprep.subr.mxu0 0.0
    %2149 = vmatpush2.xpose.msra.mxu0 0.0
    %2150 = vmatprep.subr.mxu0 0.0
    %2151 = vmatpush2.xpose.msra.mxu0 0.0
    %2152 = vmatprep.subr.mxu0 0.0
    %2153 = vmatpush2.xpose.msra.mxu0 0.0
    %2154 = vmatprep.subr.mxu0 0.0
    %2155 = vmatpush2.xpose.msra.mxu0 0.0
    %2156 = vmatprep.mubr.f32.mxu0 0.0
    %2157 = vmatmul.mubr.f32.gmra.mxu0 %v2084
    %v2158 = vpop.f32.mrf.mxu0
    %v2159 = vadd.f32 %v302, %v2158
    %v2160 = vpop.f32.mrf.mxu0
    %2161 = vmatprep.mubr.f32.mxu0 0.0
    %2162 = vmatmul.mubr.f32.gmra.mxu0 %v2086
    %v2163 = vpop.f32.mrf.mxu0
    %v2164 = vadd.f32 %v303, %v2163
    %v2165 = vpop.f32.mrf.mxu0
    %2166 = vdwg.mxu0
    %2167 = vrot.lane.b32.xlu0 %v252, 120
    %v2168 = vpop.permute.xlu0 %2167
    %2169 = vrot.lane.b32.xlu0 %v257, 120
    %v2170 = vpop.permute.xlu0 %2169
    %2171 = vrot.lane.b32.xlu0 %v252, 88
    %v2172 = vpop.permute.xlu0 %2171
    %2173 = vrot.lane.b32.xlu0 %v257, 88
    %v2174 = vpop.permute.xlu0 %2173
    %v2175 = vsel %vm314, %v2168, 0
    %v2177 = vsel %vm314, %v2170, 0
    %v2179 = vsel %vm314, %v2172, 0
    %v2181 = vsel %vm314, %v2174, 0
    %2183 = vmatprep.subr.mxu0 0.0
    %2184 = vmatpush1.xpose.msra.mxu0 0.0
    %2185 = vmatprep.subr.mxu0 0.0
    %2186 = vmatpush1.xpose.msra.mxu0 0.0
    %2187 = vmatprep.subr.mxu0 0.0
    %2188 = vmatpush1.xpose.msra.mxu0 0.0
    %2189 = vmatprep.subr.mxu0 0.0
    %2190 = vmatpush1.xpose.msra.mxu0 0.0
    %2191 = vmatprep.subr.mxu0 0.0
    %2192 = vmatpush1.xpose.msra.mxu0 0.0
    %2193 = vmatprep.subr.mxu0 0.0
    %2194 = vmatpush1.xpose.msra.mxu0 0.0
    %2195 = vmatprep.subr.mxu0 0.0
    %2196 = vmatpush1.xpose.msra.mxu0 0.0
    %2197 = vmatprep.subr.mxu0 0.0
    %2198 = vmatpush1.xpose.msra.mxu0 0.0
    %2199 = vmatprep.subr.mxu0 0.0
    %2200 = vmatpush1.xpose.msra.mxu0 0.0
    %2201 = vmatprep.subr.mxu0 0.0
    %2202 = vmatpush1.xpose.msra.mxu0 0.0
    %2203 = vmatprep.subr.mxu0 0.0
    %2204 = vmatpush1.xpose.msra.mxu0 0.0
    %2205 = vmatprep.subr.mxu0 0.0
    %2206 = vmatpush1.xpose.msra.mxu0 0.0
    %2207 = vmatprep.subr.mxu0 0.0
    %2208 = vmatpush1.xpose.msra.mxu0 0.0
    %2209 = vmatprep.subr.mxu0 0.0
    %2210 = vmatpush1.xpose.msra.mxu0 0.0
    %2211 = vmatprep.subr.mxu0 0.0
    %2212 = vmatpush1.xpose.msra.mxu0 %v2181
    %2213 = vmatprep.subr.mxu0 0.0
    %2214 = vmatpush1.xpose.msra.mxu0 %v2179
    %2215 = vmatprep.subr.mxu0 0.0
    %2216 = vmatpush2.xpose.msra.mxu0 0.0
    %2217 = vmatprep.subr.mxu0 0.0
    %2218 = vmatpush2.xpose.msra.mxu0 0.0
    %2219 = vmatprep.subr.mxu0 0.0
    %2220 = vmatpush2.xpose.msra.mxu0 0.0
    %2221 = vmatprep.subr.mxu0 0.0
    %2222 = vmatpush2.xpose.msra.mxu0 0.0
    %2223 = vmatprep.subr.mxu0 0.0
    %2224 = vmatpush2.xpose.msra.mxu0 0.0
    %2225 = vmatprep.subr.mxu0 0.0
    %2226 = vmatpush2.xpose.msra.mxu0 0.0
    %2227 = vmatprep.subr.mxu0 0.0
    %2228 = vmatpush2.xpose.msra.mxu0 0.0
    %2229 = vmatprep.subr.mxu0 0.0
    %2230 = vmatpush2.xpose.msra.mxu0 0.0
    %2231 = vmatprep.subr.mxu0 0.0
    %2232 = vmatpush2.xpose.msra.mxu0 0.0
    %2233 = vmatprep.subr.mxu0 0.0
    %2234 = vmatpush2.xpose.msra.mxu0 0.0
    %2235 = vmatprep.subr.mxu0 0.0
    %2236 = vmatpush2.xpose.msra.mxu0 0.0
    %2237 = vmatprep.subr.mxu0 0.0
    %2238 = vmatpush2.xpose.msra.mxu0 0.0
    %2239 = vmatprep.subr.mxu0 0.0
    %2240 = vmatpush2.xpose.msra.mxu0 0.0
    %2241 = vmatprep.subr.mxu0 0.0
    %2242 = vmatpush2.xpose.msra.mxu0 0.0
    %2243 = vmatprep.subr.mxu0 0.0
    %2244 = vmatpush2.xpose.msra.mxu0 0.0
    %2245 = vmatprep.subr.mxu0 0.0
    %2246 = vmatpush2.xpose.msra.mxu0 0.0
    %2247 = vmatprep.mubr.f32.mxu0 0.0
    %2248 = vmatmul.mubr.f32.gmra.mxu0 %v2175
    %v2249 = vpop.f32.mrf.mxu0
    %v2250 = vadd.f32 %v302, %v2249
    %v2251 = vpop.f32.mrf.mxu0
    %2252 = vmatprep.mubr.f32.mxu0 0.0
    %2253 = vmatmul.mubr.f32.gmra.mxu0 %v2177
    %v2254 = vpop.f32.mrf.mxu0
    %v2255 = vadd.f32 %v303, %v2254
    %v2256 = vpop.f32.mrf.mxu0
    %2257 = vdwg.mxu0
    %2258 = vrot.lane.b32.xlu0 %v262, 120
    %v2259 = vpop.permute.xlu0 %2258
    %2260 = vrot.lane.b32.xlu0 %v267, 120
    %v2261 = vpop.permute.xlu0 %2260
    %2262 = vrot.lane.b32.xlu0 %v262, 88
    %v2263 = vpop.permute.xlu0 %2262
    %2264 = vrot.lane.b32.xlu0 %v267, 88
    %v2265 = vpop.permute.xlu0 %2264
    %v2266 = vsel %vm314, %v2259, 0
    %v2268 = vsel %vm314, %v2261, 0
    %v2270 = vsel %vm314, %v2263, 0
    %v2272 = vsel %vm314, %v2265, 0
    %2274 = vmatprep.subr.mxu0 0.0
    %2275 = vmatpush1.xpose.msra.mxu0 0.0
    %2276 = vmatprep.subr.mxu0 0.0
    %2277 = vmatpush1.xpose.msra.mxu0 0.0
    %2278 = vmatprep.subr.mxu0 0.0
    %2279 = vmatpush1.xpose.msra.mxu0 0.0
    %2280 = vmatprep.subr.mxu0 0.0
    %2281 = vmatpush1.xpose.msra.mxu0 0.0
    %2282 = vmatprep.subr.mxu0 0.0
    %2283 = vmatpush1.xpose.msra.mxu0 0.0
    %2284 = vmatprep.subr.mxu0 0.0
    %2285 = vmatpush1.xpose.msra.mxu0 0.0
    %2286 = vmatprep.subr.mxu0 0.0
    %2287 = vmatpush1.xpose.msra.mxu0 0.0
    %2288 = vmatprep.subr.mxu0 0.0
    %2289 = vmatpush1.xpose.msra.mxu0 0.0
    %2290 = vmatprep.subr.mxu0 0.0
    %2291 = vmatpush1.xpose.msra.mxu0 0.0
    %2292 = vmatprep.subr.mxu0 0.0
    %2293 = vmatpush1.xpose.msra.mxu0 0.0
    %2294 = vmatprep.subr.mxu0 0.0
    %2295 = vmatpush1.xpose.msra.mxu0 0.0
    %2296 = vmatprep.subr.mxu0 0.0
    %2297 = vmatpush1.xpose.msra.mxu0 0.0
    %2298 = vmatprep.subr.mxu0 0.0
    %2299 = vmatpush1.xpose.msra.mxu0 0.0
    %2300 = vmatprep.subr.mxu0 0.0
    %2301 = vmatpush1.xpose.msra.mxu0 0.0
    %2302 = vmatprep.subr.mxu0 0.0
    %2303 = vmatpush1.xpose.msra.mxu0 %v2272
    %2304 = vmatprep.subr.mxu0 0.0
    %2305 = vmatpush1.xpose.msra.mxu0 %v2270
    %2306 = vmatprep.subr.mxu0 0.0
    %2307 = vmatpush2.xpose.msra.mxu0 0.0
    %2308 = vmatprep.subr.mxu0 0.0
    %2309 = vmatpush2.xpose.msra.mxu0 0.0
    %2310 = vmatprep.subr.mxu0 0.0
    %2311 = vmatpush2.xpose.msra.mxu0 0.0
    %2312 = vmatprep.subr.mxu0 0.0
    %2313 = vmatpush2.xpose.msra.mxu0 0.0
    %2314 = vmatprep.subr.mxu0 0.0
    %2315 = vmatpush2.xpose.msra.mxu0 0.0
    %2316 = vmatprep.subr.mxu0 0.0
    %2317 = vmatpush2.xpose.msra.mxu0 0.0
    %2318 = vmatprep.subr.mxu0 0.0
    %2319 = vmatpush2.xpose.msra.mxu0 0.0
    %2320 = vmatprep.subr.mxu0 0.0
    %2321 = vmatpush2.xpose.msra.mxu0 0.0
    %2322 = vmatprep.subr.mxu0 0.0
    %2323 = vmatpush2.xpose.msra.mxu0 0.0
    %2324 = vmatprep.subr.mxu0 0.0
    %2325 = vmatpush2.xpose.msra.mxu0 0.0
    %2326 = vmatprep.subr.mxu0 0.0
    %2327 = vmatpush2.xpose.msra.mxu0 0.0
    %2328 = vmatprep.subr.mxu0 0.0
    %2329 = vmatpush2.xpose.msra.mxu0 0.0
    %2330 = vmatprep.subr.mxu0 0.0
    %2331 = vmatpush2.xpose.msra.mxu0 0.0
    %2332 = vmatprep.subr.mxu0 0.0
    %2333 = vmatpush2.xpose.msra.mxu0 0.0
    %2334 = vmatprep.subr.mxu0 0.0
    %2335 = vmatpush2.xpose.msra.mxu0 0.0
    %2336 = vmatprep.subr.mxu0 0.0
    %2337 = vmatpush2.xpose.msra.mxu0 0.0
    %2338 = vmatprep.mubr.f32.mxu0 0.0
    %2339 = vmatmul.mubr.f32.gmra.mxu0 %v2266
    %v2340 = vpop.f32.mrf.mxu0
    %v2341 = vadd.f32 %v302, %v2340
    %v2342 = vpop.f32.mrf.mxu0
    %2343 = vmatprep.mubr.f32.mxu0 0.0
    %2344 = vmatmul.mubr.f32.gmra.mxu0 %v2268
    %v2345 = vpop.f32.mrf.mxu0
    %v2346 = vadd.f32 %v303, %v2345
    %v2347 = vpop.f32.mrf.mxu0
    %2348 = vdwg.mxu0
    %2349 = vrot.lane.b32.xlu0 %v272, 120
    %v2350 = vpop.permute.xlu0 %2349
    %2351 = vrot.lane.b32.xlu0 %v277, 120
    %v2352 = vpop.permute.xlu0 %2351
    %2353 = vrot.lane.b32.xlu0 %v272, 88
    %v2354 = vpop.permute.xlu0 %2353
    %2355 = vrot.lane.b32.xlu0 %v277, 88
    %v2356 = vpop.permute.xlu0 %2355
    %v2357 = vsel %vm314, %v2350, 0
    %v2359 = vsel %vm314, %v2352, 0
    %v2361 = vsel %vm314, %v2354, 0
    %v2363 = vsel %vm314, %v2356, 0
    %2365 = vmatprep.subr.mxu0 0.0
    %2366 = vmatpush1.xpose.msra.mxu0 0.0
    %2367 = vmatprep.subr.mxu0 0.0
    %2368 = vmatpush1.xpose.msra.mxu0 0.0
    %2369 = vmatprep.subr.mxu0 0.0
    %2370 = vmatpush1.xpose.msra.mxu0 0.0
    %2371 = vmatprep.subr.mxu0 0.0
    %2372 = vmatpush1.xpose.msra.mxu0 0.0
    %2373 = vmatprep.subr.mxu0 0.0
    %2374 = vmatpush1.xpose.msra.mxu0 0.0
    %2375 = vmatprep.subr.mxu0 0.0
    %2376 = vmatpush1.xpose.msra.mxu0 0.0
    %2377 = vmatprep.subr.mxu0 0.0
    %2378 = vmatpush1.xpose.msra.mxu0 0.0
    %2379 = vmatprep.subr.mxu0 0.0
    %2380 = vmatpush1.xpose.msra.mxu0 0.0
    %2381 = vmatprep.subr.mxu0 0.0
    %2382 = vmatpush1.xpose.msra.mxu0 0.0
    %2383 = vmatprep.subr.mxu0 0.0
    %2384 = vmatpush1.xpose.msra.mxu0 0.0
    %2385 = vmatprep.subr.mxu0 0.0
    %2386 = vmatpush1.xpose.msra.mxu0 0.0
    %2387 = vmatprep.subr.mxu0 0.0
    %2388 = vmatpush1.xpose.msra.mxu0 0.0
    %2389 = vmatprep.subr.mxu0 0.0
    %2390 = vmatpush1.xpose.msra.mxu0 0.0
    %2391 = vmatprep.subr.mxu0 0.0
    %2392 = vmatpush1.xpose.msra.mxu0 0.0
    %2393 = vmatprep.subr.mxu0 0.0
    %2394 = vmatpush1.xpose.msra.mxu0 %v2363
    %2395 = vmatprep.subr.mxu0 0.0
    %2396 = vmatpush1.xpose.msra.mxu0 %v2361
    %2397 = vmatprep.subr.mxu0 0.0
    %2398 = vmatpush2.xpose.msra.mxu0 0.0
    %2399 = vmatprep.subr.mxu0 0.0
    %2400 = vmatpush2.xpose.msra.mxu0 0.0
    %2401 = vmatprep.subr.mxu0 0.0
    %2402 = vmatpush2.xpose.msra.mxu0 0.0
    %2403 = vmatprep.subr.mxu0 0.0
    %2404 = vmatpush2.xpose.msra.mxu0 0.0
    %2405 = vmatprep.subr.mxu0 0.0
    %2406 = vmatpush2.xpose.msra.mxu0 0.0
    %2407 = vmatprep.subr.mxu0 0.0
    %2408 = vmatpush2.xpose.msra.mxu0 0.0
    %2409 = vmatprep.subr.mxu0 0.0
    %2410 = vmatpush2.xpose.msra.mxu0 0.0
    %2411 = vmatprep.subr.mxu0 0.0
    %2412 = vmatpush2.xpose.msra.mxu0 0.0
    %2413 = vmatprep.subr.mxu0 0.0
    %2414 = vmatpush2.xpose.msra.mxu0 0.0
    %2415 = vmatprep.subr.mxu0 0.0
    %2416 = vmatpush2.xpose.msra.mxu0 0.0
    %2417 = vmatprep.subr.mxu0 0.0
    %2418 = vmatpush2.xpose.msra.mxu0 0.0
    %2419 = vmatprep.subr.mxu0 0.0
    %2420 = vmatpush2.xpose.msra.mxu0 0.0
    %2421 = vmatprep.subr.mxu0 0.0
    %2422 = vmatpush2.xpose.msra.mxu0 0.0
    %2423 = vmatprep.subr.mxu0 0.0
    %2424 = vmatpush2.xpose.msra.mxu0 0.0
    %2425 = vmatprep.subr.mxu0 0.0
    %2426 = vmatpush2.xpose.msra.mxu0 0.0
    %2427 = vmatprep.subr.mxu0 0.0
    %2428 = vmatpush2.xpose.msra.mxu0 0.0
    %2429 = vmatprep.mubr.f32.mxu0 0.0
    %2430 = vmatmul.mubr.f32.gmra.mxu0 %v2357
    %v2431 = vpop.f32.mrf.mxu0
    %v2432 = vadd.f32 %v302, %v2431
    %v2433 = vpop.f32.mrf.mxu0
    %2434 = vmatprep.mubr.f32.mxu0 0.0
    %2435 = vmatmul.mubr.f32.gmra.mxu0 %v2359
    %v2436 = vpop.f32.mrf.mxu0
    %v2437 = vadd.f32 %v303, %v2436
    %v2438 = vpop.f32.mrf.mxu0
    %2439 = vdwg.mxu0
    %2440 = vrot.lane.b32.xlu0 %v282, 120
    %v2441 = vpop.permute.xlu0 %2440
    %2442 = vrot.lane.b32.xlu0 %v287, 120
    %v2443 = vpop.permute.xlu0 %2442
    %2444 = vrot.lane.b32.xlu0 %v282, 88
    %v2445 = vpop.permute.xlu0 %2444
    %2446 = vrot.lane.b32.xlu0 %v287, 88
    %v2447 = vpop.permute.xlu0 %2446
    %v2448 = vsel %vm314, %v2441, 0
    %v2450 = vsel %vm314, %v2443, 0
    %v2452 = vsel %vm314, %v2445, 0
    %v2454 = vsel %vm314, %v2447, 0
    %2456 = vmatprep.subr.mxu0 0.0
    %2457 = vmatpush1.xpose.msra.mxu0 0.0
    %2458 = vmatprep.subr.mxu0 0.0
    %2459 = vmatpush1.xpose.msra.mxu0 0.0
    %2460 = vmatprep.subr.mxu0 0.0
    %2461 = vmatpush1.xpose.msra.mxu0 0.0
    %2462 = vmatprep.subr.mxu0 0.0
    %2463 = vmatpush1.xpose.msra.mxu0 0.0
    %2464 = vmatprep.subr.mxu0 0.0
    %2465 = vmatpush1.xpose.msra.mxu0 0.0
    %2466 = vmatprep.subr.mxu0 0.0
    %2467 = vmatpush1.xpose.msra.mxu0 0.0
    %2468 = vmatprep.subr.mxu0 0.0
    %2469 = vmatpush1.xpose.msra.mxu0 0.0
    %2470 = vmatprep.subr.mxu0 0.0
    %2471 = vmatpush1.xpose.msra.mxu0 0.0
    %2472 = vmatprep.subr.mxu0 0.0
    %2473 = vmatpush1.xpose.msra.mxu0 0.0
    %2474 = vmatprep.subr.mxu0 0.0
    %2475 = vmatpush1.xpose.msra.mxu0 0.0
    %2476 = vmatprep.subr.mxu0 0.0
    %2477 = vmatpush1.xpose.msra.mxu0 0.0
    %2478 = vmatprep.subr.mxu0 0.0
    %2479 = vmatpush1.xpose.msra.mxu0 0.0
    %2480 = vmatprep.subr.mxu0 0.0
    %2481 = vmatpush1.xpose.msra.mxu0 0.0
    %2482 = vmatprep.subr.mxu0 0.0
    %2483 = vmatpush1.xpose.msra.mxu0 0.0
    %2484 = vmatprep.subr.mxu0 0.0
    %2485 = vmatpush1.xpose.msra.mxu0 %v2454
    %2486 = vmatprep.subr.mxu0 0.0
    %2487 = vmatpush1.xpose.msra.mxu0 %v2452
    %2488 = vmatprep.subr.mxu0 0.0
    %2489 = vmatpush2.xpose.msra.mxu0 0.0
    %2490 = vmatprep.subr.mxu0 0.0
    %2491 = vmatpush2.xpose.msra.mxu0 0.0
    %2492 = vmatprep.subr.mxu0 0.0
    %2493 = vmatpush2.xpose.msra.mxu0 0.0
    %2494 = vmatprep.subr.mxu0 0.0
    %2495 = vmatpush2.xpose.msra.mxu0 0.0
    %2496 = vmatprep.subr.mxu0 0.0
    %2497 = vmatpush2.xpose.msra.mxu0 0.0
    %2498 = vmatprep.subr.mxu0 0.0
    %2499 = vmatpush2.xpose.msra.mxu0 0.0
    %2500 = vmatprep.subr.mxu0 0.0
    %2501 = vmatpush2.xpose.msra.mxu0 0.0
    %2502 = vmatprep.subr.mxu0 0.0
    %2503 = vmatpush2.xpose.msra.mxu0 0.0
    %2504 = vmatprep.subr.mxu0 0.0
    %2505 = vmatpush2.xpose.msra.mxu0 0.0
    %2506 = vmatprep.subr.mxu0 0.0
    %2507 = vmatpush2.xpose.msra.mxu0 0.0
    %2508 = vmatprep.subr.mxu0 0.0
    %2509 = vmatpush2.xpose.msra.mxu0 0.0
    %2510 = vmatprep.subr.mxu0 0.0
    %2511 = vmatpush2.xpose.msra.mxu0 0.0
    %2512 = vmatprep.subr.mxu0 0.0
    %2513 = vmatpush2.xpose.msra.mxu0 0.0
    %2514 = vmatprep.subr.mxu0 0.0
    %2515 = vmatpush2.xpose.msra.mxu0 0.0
    %2516 = vmatprep.subr.mxu0 0.0
    %2517 = vmatpush2.xpose.msra.mxu0 0.0
    %2518 = vmatprep.subr.mxu0 0.0
    %2519 = vmatpush2.xpose.msra.mxu0 0.0
    %2520 = vmatprep.mubr.f32.mxu0 0.0
    %2521 = vmatmul.mubr.f32.gmra.mxu0 %v2448
    %v2522 = vpop.f32.mrf.mxu0
    %v2523 = vadd.f32 %v302, %v2522
    %v2524 = vpop.f32.mrf.mxu0
    %2525 = vmatprep.mubr.f32.mxu0 0.0
    %2526 = vmatmul.mubr.f32.gmra.mxu0 %v2450
    %v2527 = vpop.f32.mrf.mxu0
    %v2528 = vadd.f32 %v303, %v2527
    %v2529 = vpop.f32.mrf.mxu0
    %2530 = vdwg.mxu0
    %2531 = vrot.lane.b32.xlu0 %v292, 120
    %v2532 = vpop.permute.xlu0 %2531
    %2533 = vrot.lane.b32.xlu0 %v297, 120
    %v2534 = vpop.permute.xlu0 %2533
    %2535 = vrot.lane.b32.xlu0 %v292, 88
    %v2536 = vpop.permute.xlu0 %2535
    %2537 = vrot.lane.b32.xlu0 %v297, 88
    %v2538 = vpop.permute.xlu0 %2537
    %v2539 = vsel %vm314, %v2532, 0
    %v2541 = vsel %vm314, %v2534, 0
    %v2543 = vsel %vm314, %v2536, 0
    %v2545 = vsel %vm314, %v2538, 0
    %2547 = vmatprep.subr.mxu0 0.0
    %2548 = vmatpush1.xpose.msra.mxu0 0.0
    %2549 = vmatprep.subr.mxu0 0.0
    %2550 = vmatpush1.xpose.msra.mxu0 0.0
    %2551 = vmatprep.subr.mxu0 0.0
    %2552 = vmatpush1.xpose.msra.mxu0 0.0
    %2553 = vmatprep.subr.mxu0 0.0
    %2554 = vmatpush1.xpose.msra.mxu0 0.0
    %2555 = vmatprep.subr.mxu0 0.0
    %2556 = vmatpush1.xpose.msra.mxu0 0.0
    %2557 = vmatprep.subr.mxu0 0.0
    %2558 = vmatpush1.xpose.msra.mxu0 0.0
    %2559 = vmatprep.subr.mxu0 0.0
    %2560 = vmatpush1.xpose.msra.mxu0 0.0
    %2561 = vmatprep.subr.mxu0 0.0
    %2562 = vmatpush1.xpose.msra.mxu0 0.0
    %2563 = vmatprep.subr.mxu0 0.0
    %2564 = vmatpush1.xpose.msra.mxu0 0.0
    %2565 = vmatprep.subr.mxu0 0.0
    %2566 = vmatpush1.xpose.msra.mxu0 0.0
    %2567 = vmatprep.subr.mxu0 0.0
    %2568 = vmatpush1.xpose.msra.mxu0 0.0
    %2569 = vmatprep.subr.mxu0 0.0
    %2570 = vmatpush1.xpose.msra.mxu0 0.0
    %2571 = vmatprep.subr.mxu0 0.0
    %2572 = vmatpush1.xpose.msra.mxu0 0.0
    %2573 = vmatprep.subr.mxu0 0.0
    %2574 = vmatpush1.xpose.msra.mxu0 0.0
    %2575 = vmatprep.subr.mxu0 0.0
    %2576 = vmatpush1.xpose.msra.mxu0 %v2545
    %2577 = vmatprep.subr.mxu0 0.0
    %2578 = vmatpush1.xpose.msra.mxu0 %v2543
    %2579 = vmatprep.subr.mxu0 0.0
    %2580 = vmatpush2.xpose.msra.mxu0 0.0
    %2581 = vmatprep.subr.mxu0 0.0
    %2582 = vmatpush2.xpose.msra.mxu0 0.0
    %2583 = vmatprep.subr.mxu0 0.0
    %2584 = vmatpush2.xpose.msra.mxu0 0.0
    %2585 = vmatprep.subr.mxu0 0.0
    %2586 = vmatpush2.xpose.msra.mxu0 0.0
    %2587 = vmatprep.subr.mxu0 0.0
    %2588 = vmatpush2.xpose.msra.mxu0 0.0
    %2589 = vmatprep.subr.mxu0 0.0
    %2590 = vmatpush2.xpose.msra.mxu0 0.0
    %2591 = vmatprep.subr.mxu0 0.0
    %2592 = vmatpush2.xpose.msra.mxu0 0.0
    %2593 = vmatprep.subr.mxu0 0.0
    %2594 = vmatpush2.xpose.msra.mxu0 0.0
    %2595 = vmatprep.subr.mxu0 0.0
    %2596 = vmatpush2.xpose.msra.mxu0 0.0
    %2597 = vmatprep.subr.mxu0 0.0
    %2598 = vmatpush2.xpose.msra.mxu0 0.0
    %2599 = vmatprep.subr.mxu0 0.0
    %2600 = vmatpush2.xpose.msra.mxu0 0.0
    %2601 = vmatprep.subr.mxu0 0.0
    %2602 = vmatpush2.xpose.msra.mxu0 0.0
    %2603 = vmatprep.subr.mxu0 0.0
    %2604 = vmatpush2.xpose.msra.mxu0 0.0
    %2605 = vmatprep.subr.mxu0 0.0
    %2606 = vmatpush2.xpose.msra.mxu0 0.0
    %2607 = vmatprep.subr.mxu0 0.0
    %2608 = vmatpush2.xpose.msra.mxu0 0.0
    %2609 = vmatprep.subr.mxu0 0.0
    %2610 = vmatpush2.xpose.msra.mxu0 0.0
    %2611 = vmatprep.mubr.f32.mxu0 0.0
    %2612 = vmatmul.mubr.f32.gmra.mxu0 %v2539
    %v2613 = vpop.f32.mrf.mxu0
    %v2614 = vadd.f32 %v302, %v2613
    %v2615 = vpop.f32.mrf.mxu0
    %2616 = vmatprep.mubr.f32.mxu0 0.0
    %2617 = vmatmul.mubr.f32.gmra.mxu0 %v2541
    %v2618 = vpop.f32.mrf.mxu0
    %v2619 = vadd.f32 %v303, %v2618
    %v2620 = vpop.f32.mrf.mxu0
    %2621 = vdwg.mxu0
    %v2622 = vsel %vm1021, %v1977, -inf
    %2623 = vmax.xlane.f32.xlu0 %v2622
    %v2624 = vpop.xlane.xlu0 %2623
    %v2625 = vsel %vm1021, %v1982, -inf
    %2626 = vmax.xlane.f32.xlu0 %v2625
    %v2627 = vpop.xlane.xlu0 %2626
    %v2628 = vsel %vm1021, %v2068, -inf
    %2629 = vmax.xlane.f32.xlu0 %v2628
    %v2630 = vpop.xlane.xlu0 %2629
    %v2631 = vsel %vm1021, %v2073, -inf
    %2632 = vmax.xlane.f32.xlu0 %v2631
    %v2633 = vpop.xlane.xlu0 %2632
    %v2634 = vsel %vm1021, %v2159, -inf
    %2635 = vmax.xlane.f32.xlu0 %v2634
    %v2636 = vpop.xlane.xlu0 %2635
    %v2637 = vsel %vm1021, %v2164, -inf
    %2638 = vmax.xlane.f32.xlu0 %v2637
    %v2639 = vpop.xlane.xlu0 %2638
    %v2640 = vsel %vm1021, %v2250, -inf
    %2641 = vmax.xlane.f32.xlu0 %v2640
    %v2642 = vpop.xlane.xlu0 %2641
    %v2643 = vsel %vm1021, %v2255, -inf
    %2644 = vmax.xlane.f32.xlu0 %v2643
    %v2645 = vpop.xlane.xlu0 %2644
    %v2646 = vsel %vm1021, %v2341, -inf
    %2647 = vmax.xlane.f32.xlu0 %v2646
    %v2648 = vpop.xlane.xlu0 %2647
    %v2649 = vsel %vm1021, %v2346, -inf
    %2650 = vmax.xlane.f32.xlu0 %v2649
    %v2651 = vpop.xlane.xlu0 %2650
    %v2652 = vsel %vm1021, %v2432, -inf
    %2653 = vmax.xlane.f32.xlu0 %v2652
    %v2654 = vpop.xlane.xlu0 %2653
    %v2655 = vsel %vm1021, %v2437, -inf
    %2656 = vmax.xlane.f32.xlu0 %v2655
    %v2657 = vpop.xlane.xlu0 %2656
    %v2658 = vsel %vm1021, %v2523, -inf
    %2659 = vmax.xlane.f32.xlu0 %v2658
    %v2660 = vpop.xlane.xlu0 %2659
    %v2661 = vsel %vm1021, %v2528, -inf
    %2662 = vmax.xlane.f32.xlu0 %v2661
    %v2663 = vpop.xlane.xlu0 %2662
    %v2664 = vsel %vm1021, %v2614, -inf
    %2665 = vmax.xlane.f32.xlu0 %v2664
    %v2666 = vpop.xlane.xlu0 %2665
    %v2667 = vsel %vm1021, %v2619, -inf
    %2668 = vmax.xlane.f32.xlu0 %v2667
    %v2669 = vpop.xlane.xlu0 %2668
    %v2670 = vsub.f32 %v1977, %v2624
    %v2671 = vsub.f32 %v1982, %v2627
    %v2672 = vsub.f32 %v2068, %v2630
    %v2673 = vsub.f32 %v2073, %v2633
    %v2674 = vsub.f32 %v2159, %v2636
    %v2675 = vsub.f32 %v2164, %v2639
    %v2676 = vsub.f32 %v2250, %v2642
    %v2677 = vsub.f32 %v2255, %v2645
    %v2678 = vsub.f32 %v2341, %v2648
    %v2679 = vsub.f32 %v2346, %v2651
    %v2680 = vsub.f32 %v2432, %v2654
    %v2681 = vsub.f32 %v2437, %v2657
    %v2682 = vsub.f32 %v2523, %v2660
    %v2683 = vsub.f32 %v2528, %v2663
    %v2684 = vsub.f32 %v2614, %v2666
    %v2685 = vsub.f32 %v2619, %v2669
    %v2686 = vmul.f32 %v2670, 1.442695
    %v2687 = vpow.pop %v2686
    %v2688 = vmul.f32 %v2671, 1.442695
    %v2689 = vpow.pop %v2688
    %v2690 = vmul.f32 %v2672, 1.442695
    %v2691 = vpow.pop %v2690
    %v2692 = vmul.f32 %v2673, 1.442695
    %v2693 = vpow.pop %v2692
    %v2694 = vmul.f32 %v2674, 1.442695
    %v2695 = vpow.pop %v2694
    %v2696 = vmul.f32 %v2675, 1.442695
    %v2697 = vpow.pop %v2696
    %v2698 = vmul.f32 %v2676, 1.442695
    %v2699 = vpow.pop %v2698
    %v2700 = vmul.f32 %v2677, 1.442695
    %v2701 = vpow.pop %v2700
    %v2702 = vmul.f32 %v2678, 1.442695
    %v2703 = vpow.pop %v2702
    %v2704 = vmul.f32 %v2679, 1.442695
    %v2705 = vpow.pop %v2704
    %v2706 = vmul.f32 %v2680, 1.442695
    %v2707 = vpow.pop %v2706
    %v2708 = vmul.f32 %v2681, 1.442695
    %v2709 = vpow.pop %v2708
    %v2710 = vmul.f32 %v2682, 1.442695
    %v2711 = vpow.pop %v2710
    %v2712 = vmul.f32 %v2683, 1.442695
    %v2713 = vpow.pop %v2712
    %v2714 = vmul.f32 %v2684, 1.442695
    %v2715 = vpow.pop %v2714
    %v2716 = vmul.f32 %v2685, 1.442695
    %v2717 = vpow.pop %v2716
    %v2718 = vsel %vm1021, %v2687, 0.0
    %2719 = vadd.xlane.f32.xlu0 %v2718
    %v2720 = vpop.xlane.xlu0 %2719
    %v2721 = vsel %vm1021, %v2689, 0.0
    %2722 = vadd.xlane.f32.xlu0 %v2721
    %v2723 = vpop.xlane.xlu0 %2722
    %v2724 = vsel %vm1021, %v2691, 0.0
    %2725 = vadd.xlane.f32.xlu0 %v2724
    %v2726 = vpop.xlane.xlu0 %2725
    %v2727 = vsel %vm1021, %v2693, 0.0
    %2728 = vadd.xlane.f32.xlu0 %v2727
    %v2729 = vpop.xlane.xlu0 %2728
    %v2730 = vsel %vm1021, %v2695, 0.0
    %2731 = vadd.xlane.f32.xlu0 %v2730
    %v2732 = vpop.xlane.xlu0 %2731
    %v2733 = vsel %vm1021, %v2697, 0.0
    %2734 = vadd.xlane.f32.xlu0 %v2733
    %v2735 = vpop.xlane.xlu0 %2734
    %v2736 = vsel %vm1021, %v2699, 0.0
    %2737 = vadd.xlane.f32.xlu0 %v2736
    %v2738 = vpop.xlane.xlu0 %2737
    %v2739 = vsel %vm1021, %v2701, 0.0
    %2740 = vadd.xlane.f32.xlu0 %v2739
    %v2741 = vpop.xlane.xlu0 %2740
    %v2742 = vsel %vm1021, %v2703, 0.0
    %2743 = vadd.xlane.f32.xlu0 %v2742
    %v2744 = vpop.xlane.xlu0 %2743
    %v2745 = vsel %vm1021, %v2705, 0.0
    %2746 = vadd.xlane.f32.xlu0 %v2745
    %v2747 = vpop.xlane.xlu0 %2746
    %v2748 = vsel %vm1021, %v2707, 0.0
    %2749 = vadd.xlane.f32.xlu0 %v2748
    %v2750 = vpop.xlane.xlu0 %2749
    %v2751 = vsel %vm1021, %v2709, 0.0
    %2752 = vadd.xlane.f32.xlu0 %v2751
    %v2753 = vpop.xlane.xlu0 %2752
    %v2754 = vsel %vm1021, %v2711, 0.0
    %2755 = vadd.xlane.f32.xlu0 %v2754
    %v2756 = vpop.xlane.xlu0 %2755
    %v2757 = vsel %vm1021, %v2713, 0.0
    %2758 = vadd.xlane.f32.xlu0 %v2757
    %v2759 = vpop.xlane.xlu0 %2758
    %v2760 = vsel %vm1021, %v2715, 0.0
    %2761 = vadd.xlane.f32.xlu0 %v2760
    %v2762 = vpop.xlane.xlu0 %2761
    %v2763 = vsel %vm1021, %v2717, 0.0
    %2764 = vadd.xlane.f32.xlu0 %v2763
    %v2765 = vpop.xlane.xlu0 %2764
    %v2766 = vrcp.pop %v2720
    %v2767 = vrcp.pop %v2723
    %v2768 = vrcp.pop %v2726
    %v2769 = vrcp.pop %v2729
    %v2770 = vrcp.pop %v2732
    %v2771 = vrcp.pop %v2735
    %v2772 = vrcp.pop %v2738
    %v2773 = vrcp.pop %v2741
    %v2774 = vrcp.pop %v2744
    %v2775 = vrcp.pop %v2747
    %v2776 = vrcp.pop %v2750
    %v2777 = vrcp.pop %v2753
    %v2778 = vrcp.pop %v2756
    %v2779 = vrcp.pop %v2759
    %v2780 = vrcp.pop %v2762
    %v2781 = vrcp.pop %v2765
    %v2782 = vmul.f32 %v2687, %v2766
    %v2783 = vmul.f32 %v2689, %v2767
    %v2784 = vmul.f32 %v2691, %v2768
    %v2785 = vmul.f32 %v2693, %v2769
    %v2786 = vmul.f32 %v2695, %v2770
    %v2787 = vmul.f32 %v2697, %v2771
    %v2788 = vmul.f32 %v2699, %v2772
    %v2789 = vmul.f32 %v2701, %v2773
    %v2790 = vmul.f32 %v2703, %v2774
    %v2791 = vmul.f32 %v2705, %v2775
    %v2792 = vmul.f32 %v2707, %v2776
    %v2793 = vmul.f32 %v2709, %v2777
    %v2794 = vmul.f32 %v2711, %v2778
    %v2795 = vmul.f32 %v2713, %v2779
    %v2796 = vmul.f32 %v2715, %v2780
    %v2797 = vmul.f32 %v2717, %v2781
    %2798 = vrot.lane.b32.xlu0 %v222, 56
    %v2799 = vpop.permute.xlu0 %2798
    %2800 = vrot.lane.b32.xlu0 %v227, 56
    %v2801 = vpop.permute.xlu0 %2800
    %v2805 = vsel %vm1021, %v2782, 0
    %v2808 = vsel %vm1021, %v2783, 0
    %2810 = vmatprep.subr.mxu0 0.0
    %2811 = vmatpush1.msra.mxu0 0.0
    %2812 = vmatprep.subr.mxu0 0.0
    %2813 = vmatpush1.msra.mxu0 0.0
    %2814 = vmatprep.subr.mxu0 0.0
    %2815 = vmatpush1.msra.mxu0 0.0
    %2816 = vmatprep.subr.mxu0 0.0
    %2817 = vmatpush1.msra.mxu0 0.0
    %2818 = vmatprep.subr.mxu0 0.0
    %2819 = vmatpush1.msra.mxu0 0.0
    %2820 = vmatprep.subr.mxu0 0.0
    %2821 = vmatpush1.msra.mxu0 0.0
    %2822 = vmatprep.subr.mxu0 0.0
    %2823 = vmatpush1.msra.mxu0 0.0
    %2824 = vmatprep.subr.mxu0 0.0
    %2825 = vmatpush1.msra.mxu0 0.0
    %2826 = vmatprep.subr.mxu0 0.0
    %2827 = vmatpush1.msra.mxu0 0.0
    %2828 = vmatprep.subr.mxu0 0.0
    %2829 = vmatpush1.msra.mxu0 0.0
    %2830 = vmatprep.subr.mxu0 0.0
    %2831 = vmatpush1.msra.mxu0 0.0
    %2832 = vmatprep.subr.mxu0 0.0
    %2833 = vmatpush1.msra.mxu0 0.0
    %2834 = vmatprep.subr.mxu0 0.0
    %2835 = vmatpush1.msra.mxu0 0.0
    %2836 = vmatprep.subr.mxu0 0.0
    %2837 = vmatpush1.msra.mxu0 0.0
    %2838 = vmatprep.subr.mxu0 0.0
    %2839 = vmatpush1.msra.mxu0 %v2801
    %2840 = vmatprep.subr.mxu0 0.0
    %2841 = vmatpush1.msra.mxu0 %v2799
    %2842 = vmatprep.subr.mxu0 0.0
    %2843 = vmatpush2.msra.mxu0 0.0
    %2844 = vmatprep.subr.mxu0 0.0
    %2845 = vmatpush2.msra.mxu0 0.0
    %2846 = vmatprep.subr.mxu0 0.0
    %2847 = vmatpush2.msra.mxu0 0.0
    %2848 = vmatprep.subr.mxu0 0.0
    %2849 = vmatpush2.msra.mxu0 0.0
    %2850 = vmatprep.subr.mxu0 0.0
    %2851 = vmatpush2.msra.mxu0 0.0
    %2852 = vmatprep.subr.mxu0 0.0
    %2853 = vmatpush2.msra.mxu0 0.0
    %2854 = vmatprep.subr.mxu0 0.0
    %2855 = vmatpush2.msra.mxu0 0.0
    %2856 = vmatprep.subr.mxu0 0.0
    %2857 = vmatpush2.msra.mxu0 0.0
    %2858 = vmatprep.subr.mxu0 0.0
    %2859 = vmatpush2.msra.mxu0 0.0
    %2860 = vmatprep.subr.mxu0 0.0
    %2861 = vmatpush2.msra.mxu0 0.0
    %2862 = vmatprep.subr.mxu0 0.0
    %2863 = vmatpush2.msra.mxu0 0.0
    %2864 = vmatprep.subr.mxu0 0.0
    %2865 = vmatpush2.msra.mxu0 0.0
    %2866 = vmatprep.subr.mxu0 0.0
    %2867 = vmatpush2.msra.mxu0 0.0
    %2868 = vmatprep.subr.mxu0 0.0
    %2869 = vmatpush2.msra.mxu0 0.0
    %2870 = vmatprep.subr.mxu0 0.0
    %2871 = vmatpush2.msra.mxu0 0.0
    %2872 = vmatprep.subr.mxu0 0.0
    %2873 = vmatpush2.msra.mxu0 0.0
    %2874 = vmatprep.mubr.f32.mxu0 0.0
    %2875 = vmatmul.mubr.f32.gmra.mxu0 %v2805
    %v2876 = vpop.f32.mrf.mxu0
    %v2877 = vadd.f32 0.0, %v2876
    %v2878 = vpop.f32.mrf.mxu0
    %2879 = vmatprep.mubr.f32.mxu0 0.0
    %2880 = vmatmul.mubr.f32.gmra.mxu0 %v2808
    %v2881 = vpop.f32.mrf.mxu0
    %v2882 = vadd.f32 0.0, %v2881
    %v2883 = vpop.f32.mrf.mxu0
    %2884 = vdwg.mxu0
    %2885 = vrot.lane.b32.xlu0 %v232, 56
    %v2886 = vpop.permute.xlu0 %2885
    %2887 = vrot.lane.b32.xlu0 %v237, 56
    %v2888 = vpop.permute.xlu0 %2887
    %v2892 = vsel %vm1021, %v2784, 0
    %v2895 = vsel %vm1021, %v2785, 0
    %2897 = vmatprep.subr.mxu0 0.0
    %2898 = vmatpush1.msra.mxu0 0.0
    %2899 = vmatprep.subr.mxu0 0.0
    %2900 = vmatpush1.msra.mxu0 0.0
    %2901 = vmatprep.subr.mxu0 0.0
    %2902 = vmatpush1.msra.mxu0 0.0
    %2903 = vmatprep.subr.mxu0 0.0
    %2904 = vmatpush1.msra.mxu0 0.0
    %2905 = vmatprep.subr.mxu0 0.0
    %2906 = vmatpush1.msra.mxu0 0.0
    %2907 = vmatprep.subr.mxu0 0.0
    %2908 = vmatpush1.msra.mxu0 0.0
    %2909 = vmatprep.subr.mxu0 0.0
    %2910 = vmatpush1.msra.mxu0 0.0
    %2911 = vmatprep.subr.mxu0 0.0
    %2912 = vmatpush1.msra.mxu0 0.0
    %2913 = vmatprep.subr.mxu0 0.0
    %2914 = vmatpush1.msra.mxu0 0.0
    %2915 = vmatprep.subr.mxu0 0.0
    %2916 = vmatpush1.msra.mxu0 0.0
    %2917 = vmatprep.subr.mxu0 0.0
    %2918 = vmatpush1.msra.mxu0 0.0
    %2919 = vmatprep.subr.mxu0 0.0
    %2920 = vmatpush1.msra.mxu0 0.0
    %2921 = vmatprep.subr.mxu0 0.0
    %2922 = vmatpush1.msra.mxu0 0.0
    %2923 = vmatprep.subr.mxu0 0.0
    %2924 = vmatpush1.msra.mxu0 0.0
    %2925 = vmatprep.subr.mxu0 0.0
    %2926 = vmatpush1.msra.mxu0 %v2888
    %2927 = vmatprep.subr.mxu0 0.0
    %2928 = vmatpush1.msra.mxu0 %v2886
    %2929 = vmatprep.subr.mxu0 0.0
    %2930 = vmatpush2.msra.mxu0 0.0
    %2931 = vmatprep.subr.mxu0 0.0
    %2932 = vmatpush2.msra.mxu0 0.0
    %2933 = vmatprep.subr.mxu0 0.0
    %2934 = vmatpush2.msra.mxu0 0.0
    %2935 = vmatprep.subr.mxu0 0.0
    %2936 = vmatpush2.msra.mxu0 0.0
    %2937 = vmatprep.subr.mxu0 0.0
    %2938 = vmatpush2.msra.mxu0 0.0
    %2939 = vmatprep.subr.mxu0 0.0
    %2940 = vmatpush2.msra.mxu0 0.0
    %2941 = vmatprep.subr.mxu0 0.0
    %2942 = vmatpush2.msra.mxu0 0.0
    %2943 = vmatprep.subr.mxu0 0.0
    %2944 = vmatpush2.msra.mxu0 0.0
    %2945 = vmatprep.subr.mxu0 0.0
    %2946 = vmatpush2.msra.mxu0 0.0
    %2947 = vmatprep.subr.mxu0 0.0
    %2948 = vmatpush2.msra.mxu0 0.0
    %2949 = vmatprep.subr.mxu0 0.0
    %2950 = vmatpush2.msra.mxu0 0.0
    %2951 = vmatprep.subr.mxu0 0.0
    %2952 = vmatpush2.msra.mxu0 0.0
    %2953 = vmatprep.subr.mxu0 0.0
    %2954 = vmatpush2.msra.mxu0 0.0
    %2955 = vmatprep.subr.mxu0 0.0
    %2956 = vmatpush2.msra.mxu0 0.0
    %2957 = vmatprep.subr.mxu0 0.0
    %2958 = vmatpush2.msra.mxu0 0.0
    %2959 = vmatprep.subr.mxu0 0.0
    %2960 = vmatpush2.msra.mxu0 0.0
    %2961 = vmatprep.mubr.f32.mxu0 0.0
    %2962 = vmatmul.mubr.f32.gmra.mxu0 %v2892
    %v2963 = vpop.f32.mrf.mxu0
    %v2964 = vadd.f32 0.0, %v2963
    %v2965 = vpop.f32.mrf.mxu0
    %2966 = vmatprep.mubr.f32.mxu0 0.0
    %2967 = vmatmul.mubr.f32.gmra.mxu0 %v2895
    %v2968 = vpop.f32.mrf.mxu0
    %v2969 = vadd.f32 0.0, %v2968
    %v2970 = vpop.f32.mrf.mxu0
    %2971 = vdwg.mxu0
    %2972 = vrot.lane.b32.xlu0 %v242, 56
    %v2973 = vpop.permute.xlu0 %2972
    %2974 = vrot.lane.b32.xlu0 %v247, 56
    %v2975 = vpop.permute.xlu0 %2974
    %v2979 = vsel %vm1021, %v2786, 0
    %v2982 = vsel %vm1021, %v2787, 0
    %2984 = vmatprep.subr.mxu0 0.0
    %2985 = vmatpush1.msra.mxu0 0.0
    %2986 = vmatprep.subr.mxu0 0.0
    %2987 = vmatpush1.msra.mxu0 0.0
    %2988 = vmatprep.subr.mxu0 0.0
    %2989 = vmatpush1.msra.mxu0 0.0
    %2990 = vmatprep.subr.mxu0 0.0
    %2991 = vmatpush1.msra.mxu0 0.0
    %2992 = vmatprep.subr.mxu0 0.0
    %2993 = vmatpush1.msra.mxu0 0.0
    %2994 = vmatprep.subr.mxu0 0.0
    %2995 = vmatpush1.msra.mxu0 0.0
    %2996 = vmatprep.subr.mxu0 0.0
    %2997 = vmatpush1.msra.mxu0 0.0
    %2998 = vmatprep.subr.mxu0 0.0
    %2999 = vmatpush1.msra.mxu0 0.0
    %3000 = vmatprep.subr.mxu0 0.0
    %3001 = vmatpush1.msra.mxu0 0.0
    %3002 = vmatprep.subr.mxu0 0.0
    %3003 = vmatpush1.msra.mxu0 0.0
    %3004 = vmatprep.subr.mxu0 0.0
    %3005 = vmatpush1.msra.mxu0 0.0
    %3006 = vmatprep.subr.mxu0 0.0
    %3007 = vmatpush1.msra.mxu0 0.0
    %3008 = vmatprep.subr.mxu0 0.0
    %3009 = vmatpush1.msra.mxu0 0.0
    %3010 = vmatprep.subr.mxu0 0.0
    %3011 = vmatpush1.msra.mxu0 0.0
    %3012 = vmatprep.subr.mxu0 0.0
    %3013 = vmatpush1.msra.mxu0 %v2975
    %3014 = vmatprep.subr.mxu0 0.0
    %3015 = vmatpush1.msra.mxu0 %v2973
    %3016 = vmatprep.subr.mxu0 0.0
    %3017 = vmatpush2.msra.mxu0 0.0
    %3018 = vmatprep.subr.mxu0 0.0
    %3019 = vmatpush2.msra.mxu0 0.0
    %3020 = vmatprep.subr.mxu0 0.0
    %3021 = vmatpush2.msra.mxu0 0.0
    %3022 = vmatprep.subr.mxu0 0.0
    %3023 = vmatpush2.msra.mxu0 0.0
    %3024 = vmatprep.subr.mxu0 0.0
    %3025 = vmatpush2.msra.mxu0 0.0
    %3026 = vmatprep.subr.mxu0 0.0
    %3027 = vmatpush2.msra.mxu0 0.0
    %3028 = vmatprep.subr.mxu0 0.0
    %3029 = vmatpush2.msra.mxu0 0.0
    %3030 = vmatprep.subr.mxu0 0.0
    %3031 = vmatpush2.msra.mxu0 0.0
    %3032 = vmatprep.subr.mxu0 0.0
    %3033 = vmatpush2.msra.mxu0 0.0
    %3034 = vmatprep.subr.mxu0 0.0
    %3035 = vmatpush2.msra.mxu0 0.0
    %3036 = vmatprep.subr.mxu0 0.0
    %3037 = vmatpush2.msra.mxu0 0.0
    %3038 = vmatprep.subr.mxu0 0.0
    %3039 = vmatpush2.msra.mxu0 0.0
    %3040 = vmatprep.subr.mxu0 0.0
    %3041 = vmatpush2.msra.mxu0 0.0
    %3042 = vmatprep.subr.mxu0 0.0
    %3043 = vmatpush2.msra.mxu0 0.0
    %3044 = vmatprep.subr.mxu0 0.0
    %3045 = vmatpush2.msra.mxu0 0.0
    %3046 = vmatprep.subr.mxu0 0.0
    %3047 = vmatpush2.msra.mxu0 0.0
    %3048 = vmatprep.mubr.f32.mxu0 0.0
    %3049 = vmatmul.mubr.f32.gmra.mxu0 %v2979
    %v3050 = vpop.f32.mrf.mxu0
    %v3051 = vadd.f32 0.0, %v3050
    %v3052 = vpop.f32.mrf.mxu0
    %3053 = vmatprep.mubr.f32.mxu0 0.0
    %3054 = vmatmul.mubr.f32.gmra.mxu0 %v2982
    %v3055 = vpop.f32.mrf.mxu0
    %v3056 = vadd.f32 0.0, %v3055
    %v3057 = vpop.f32.mrf.mxu0
    %3058 = vdwg.mxu0
    %3059 = vrot.lane.b32.xlu0 %v252, 56
    %v3060 = vpop.permute.xlu0 %3059
    %3061 = vrot.lane.b32.xlu0 %v257, 56
    %v3062 = vpop.permute.xlu0 %3061
    %v3066 = vsel %vm1021, %v2788, 0
    %v3069 = vsel %vm1021, %v2789, 0
    %3071 = vmatprep.subr.mxu0 0.0
    %3072 = vmatpush1.msra.mxu0 0.0
    %3073 = vmatprep.subr.mxu0 0.0
    %3074 = vmatpush1.msra.mxu0 0.0
    %3075 = vmatprep.subr.mxu0 0.0
    %3076 = vmatpush1.msra.mxu0 0.0
    %3077 = vmatprep.subr.mxu0 0.0
    %3078 = vmatpush1.msra.mxu0 0.0
    %3079 = vmatprep.subr.mxu0 0.0
    %3080 = vmatpush1.msra.mxu0 0.0
    %3081 = vmatprep.subr.mxu0 0.0
    %3082 = vmatpush1.msra.mxu0 0.0
    %3083 = vmatprep.subr.mxu0 0.0
    %3084 = vmatpush1.msra.mxu0 0.0
    %3085 = vmatprep.subr.mxu0 0.0
    %3086 = vmatpush1.msra.mxu0 0.0
    %3087 = vmatprep.subr.mxu0 0.0
    %3088 = vmatpush1.msra.mxu0 0.0
    %3089 = vmatprep.subr.mxu0 0.0
    %3090 = vmatpush1.msra.mxu0 0.0
    %3091 = vmatprep.subr.mxu0 0.0
    %3092 = vmatpush1.msra.mxu0 0.0
    %3093 = vmatprep.subr.mxu0 0.0
    %3094 = vmatpush1.msra.mxu0 0.0
    %3095 = vmatprep.subr.mxu0 0.0
    %3096 = vmatpush1.msra.mxu0 0.0
    %3097 = vmatprep.subr.mxu0 0.0
    %3098 = vmatpush1.msra.mxu0 0.0
    %3099 = vmatprep.subr.mxu0 0.0
    %3100 = vmatpush1.msra.mxu0 %v3062
    %3101 = vmatprep.subr.mxu0 0.0
    %3102 = vmatpush1.msra.mxu0 %v3060
    %3103 = vmatprep.subr.mxu0 0.0
    %3104 = vmatpush2.msra.mxu0 0.0
    %3105 = vmatprep.subr.mxu0 0.0
    %3106 = vmatpush2.msra.mxu0 0.0
    %3107 = vmatprep.subr.mxu0 0.0
    %3108 = vmatpush2.msra.mxu0 0.0
    %3109 = vmatprep.subr.mxu0 0.0
    %3110 = vmatpush2.msra.mxu0 0.0
    %3111 = vmatprep.subr.mxu0 0.0
    %3112 = vmatpush2.msra.mxu0 0.0
    %3113 = vmatprep.subr.mxu0 0.0
    %3114 = vmatpush2.msra.mxu0 0.0
    %3115 = vmatprep.subr.mxu0 0.0
    %3116 = vmatpush2.msra.mxu0 0.0
    %3117 = vmatprep.subr.mxu0 0.0
    %3118 = vmatpush2.msra.mxu0 0.0
    %3119 = vmatprep.subr.mxu0 0.0
    %3120 = vmatpush2.msra.mxu0 0.0
    %3121 = vmatprep.subr.mxu0 0.0
    %3122 = vmatpush2.msra.mxu0 0.0
    %3123 = vmatprep.subr.mxu0 0.0
    %3124 = vmatpush2.msra.mxu0 0.0
    %3125 = vmatprep.subr.mxu0 0.0
    %3126 = vmatpush2.msra.mxu0 0.0
    %3127 = vmatprep.subr.mxu0 0.0
    %3128 = vmatpush2.msra.mxu0 0.0
    %3129 = vmatprep.subr.mxu0 0.0
    %3130 = vmatpush2.msra.mxu0 0.0
    %3131 = vmatprep.subr.mxu0 0.0
    %3132 = vmatpush2.msra.mxu0 0.0
    %3133 = vmatprep.subr.mxu0 0.0
    %3134 = vmatpush2.msra.mxu0 0.0
    %3135 = vmatprep.mubr.f32.mxu0 0.0
    %3136 = vmatmul.mubr.f32.gmra.mxu0 %v3066
    %v3137 = vpop.f32.mrf.mxu0
    %v3138 = vadd.f32 0.0, %v3137
    %v3139 = vpop.f32.mrf.mxu0
    %3140 = vmatprep.mubr.f32.mxu0 0.0
    %3141 = vmatmul.mubr.f32.gmra.mxu0 %v3069
    %v3142 = vpop.f32.mrf.mxu0
    %v3143 = vadd.f32 0.0, %v3142
    %v3144 = vpop.f32.mrf.mxu0
    %3145 = vdwg.mxu0
    %3146 = vrot.lane.b32.xlu0 %v262, 56
    %v3147 = vpop.permute.xlu0 %3146
    %3148 = vrot.lane.b32.xlu0 %v267, 56
    %v3149 = vpop.permute.xlu0 %3148
    %v3153 = vsel %vm1021, %v2790, 0
    %v3156 = vsel %vm1021, %v2791, 0
    %3158 = vmatprep.subr.mxu0 0.0
    %3159 = vmatpush1.msra.mxu0 0.0
    %3160 = vmatprep.subr.mxu0 0.0
    %3161 = vmatpush1.msra.mxu0 0.0
    %3162 = vmatprep.subr.mxu0 0.0
    %3163 = vmatpush1.msra.mxu0 0.0
    %3164 = vmatprep.subr.mxu0 0.0
    %3165 = vmatpush1.msra.mxu0 0.0
    %3166 = vmatprep.subr.mxu0 0.0
    %3167 = vmatpush1.msra.mxu0 0.0
    %3168 = vmatprep.subr.mxu0 0.0
    %3169 = vmatpush1.msra.mxu0 0.0
    %3170 = vmatprep.subr.mxu0 0.0
    %3171 = vmatpush1.msra.mxu0 0.0
    %3172 = vmatprep.subr.mxu0 0.0
    %3173 = vmatpush1.msra.mxu0 0.0
    %3174 = vmatprep.subr.mxu0 0.0
    %3175 = vmatpush1.msra.mxu0 0.0
    %3176 = vmatprep.subr.mxu0 0.0
    %3177 = vmatpush1.msra.mxu0 0.0
    %3178 = vmatprep.subr.mxu0 0.0
    %3179 = vmatpush1.msra.mxu0 0.0
    %3180 = vmatprep.subr.mxu0 0.0
    %3181 = vmatpush1.msra.mxu0 0.0
    %3182 = vmatprep.subr.mxu0 0.0
    %3183 = vmatpush1.msra.mxu0 0.0
    %3184 = vmatprep.subr.mxu0 0.0
    %3185 = vmatpush1.msra.mxu0 0.0
    %3186 = vmatprep.subr.mxu0 0.0
    %3187 = vmatpush1.msra.mxu0 %v3149
    %3188 = vmatprep.subr.mxu0 0.0
    %3189 = vmatpush1.msra.mxu0 %v3147
    %3190 = vmatprep.subr.mxu0 0.0
    %3191 = vmatpush2.msra.mxu0 0.0
    %3192 = vmatprep.subr.mxu0 0.0
    %3193 = vmatpush2.msra.mxu0 0.0
    %3194 = vmatprep.subr.mxu0 0.0
    %3195 = vmatpush2.msra.mxu0 0.0
    %3196 = vmatprep.subr.mxu0 0.0
    %3197 = vmatpush2.msra.mxu0 0.0
    %3198 = vmatprep.subr.mxu0 0.0
    %3199 = vmatpush2.msra.mxu0 0.0
    %3200 = vmatprep.subr.mxu0 0.0
    %3201 = vmatpush2.msra.mxu0 0.0
    %3202 = vmatprep.subr.mxu0 0.0
    %3203 = vmatpush2.msra.mxu0 0.0
    %3204 = vmatprep.subr.mxu0 0.0
    %3205 = vmatpush2.msra.mxu0 0.0
    %3206 = vmatprep.subr.mxu0 0.0
    %3207 = vmatpush2.msra.mxu0 0.0
    %3208 = vmatprep.subr.mxu0 0.0
    %3209 = vmatpush2.msra.mxu0 0.0
    %3210 = vmatprep.subr.mxu0 0.0
    %3211 = vmatpush2.msra.mxu0 0.0
    %3212 = vmatprep.subr.mxu0 0.0
    %3213 = vmatpush2.msra.mxu0 0.0
    %3214 = vmatprep.subr.mxu0 0.0
    %3215 = vmatpush2.msra.mxu0 0.0
    %3216 = vmatprep.subr.mxu0 0.0
    %3217 = vmatpush2.msra.mxu0 0.0
    %3218 = vmatprep.subr.mxu0 0.0
    %3219 = vmatpush2.msra.mxu0 0.0
    %3220 = vmatprep.subr.mxu0 0.0
    %3221 = vmatpush2.msra.mxu0 0.0
    %3222 = vmatprep.mubr.f32.mxu0 0.0
    %3223 = vmatmul.mubr.f32.gmra.mxu0 %v3153
    %v3224 = vpop.f32.mrf.mxu0
    %v3225 = vadd.f32 0.0, %v3224
    %v3226 = vpop.f32.mrf.mxu0
    %3227 = vmatprep.mubr.f32.mxu0 0.0
    %3228 = vmatmul.mubr.f32.gmra.mxu0 %v3156
    %v3229 = vpop.f32.mrf.mxu0
    %v3230 = vadd.f32 0.0, %v3229
    %v3231 = vpop.f32.mrf.mxu0
    %3232 = vdwg.mxu0
    %3233 = vrot.lane.b32.xlu0 %v272, 56
    %v3234 = vpop.permute.xlu0 %3233
    %3235 = vrot.lane.b32.xlu0 %v277, 56
    %v3236 = vpop.permute.xlu0 %3235
    %v3240 = vsel %vm1021, %v2792, 0
    %v3243 = vsel %vm1021, %v2793, 0
    %3245 = vmatprep.subr.mxu0 0.0
    %3246 = vmatpush1.msra.mxu0 0.0
    %3247 = vmatprep.subr.mxu0 0.0
    %3248 = vmatpush1.msra.mxu0 0.0
    %3249 = vmatprep.subr.mxu0 0.0
    %3250 = vmatpush1.msra.mxu0 0.0
    %3251 = vmatprep.subr.mxu0 0.0
    %3252 = vmatpush1.msra.mxu0 0.0
    %3253 = vmatprep.subr.mxu0 0.0
    %3254 = vmatpush1.msra.mxu0 0.0
    %3255 = vmatprep.subr.mxu0 0.0
    %3256 = vmatpush1.msra.mxu0 0.0
    %3257 = vmatprep.subr.mxu0 0.0
    %3258 = vmatpush1.msra.mxu0 0.0
    %3259 = vmatprep.subr.mxu0 0.0
    %3260 = vmatpush1.msra.mxu0 0.0
    %3261 = vmatprep.subr.mxu0 0.0
    %3262 = vmatpush1.msra.mxu0 0.0
    %3263 = vmatprep.subr.mxu0 0.0
    %3264 = vmatpush1.msra.mxu0 0.0
    %3265 = vmatprep.subr.mxu0 0.0
    %3266 = vmatpush1.msra.mxu0 0.0
    %3267 = vmatprep.subr.mxu0 0.0
    %3268 = vmatpush1.msra.mxu0 0.0
    %3269 = vmatprep.subr.mxu0 0.0
    %3270 = vmatpush1.msra.mxu0 0.0
    %3271 = vmatprep.subr.mxu0 0.0
    %3272 = vmatpush1.msra.mxu0 0.0
    %3273 = vmatprep.subr.mxu0 0.0
    %3274 = vmatpush1.msra.mxu0 %v3236
    %3275 = vmatprep.subr.mxu0 0.0
    %3276 = vmatpush1.msra.mxu0 %v3234
    %3277 = vmatprep.subr.mxu0 0.0
    %3278 = vmatpush2.msra.mxu0 0.0
    %3279 = vmatprep.subr.mxu0 0.0
    %3280 = vmatpush2.msra.mxu0 0.0
    %3281 = vmatprep.subr.mxu0 0.0
    %3282 = vmatpush2.msra.mxu0 0.0
    %3283 = vmatprep.subr.mxu0 0.0
    %3284 = vmatpush2.msra.mxu0 0.0
    %3285 = vmatprep.subr.mxu0 0.0
    %3286 = vmatpush2.msra.mxu0 0.0
    %3287 = vmatprep.subr.mxu0 0.0
    %3288 = vmatpush2.msra.mxu0 0.0
    %3289 = vmatprep.subr.mxu0 0.0
    %3290 = vmatpush2.msra.mxu0 0.0
    %3291 = vmatprep.subr.mxu0 0.0
    %3292 = vmatpush2.msra.mxu0 0.0
    %3293 = vmatprep.subr.mxu0 0.0
    %3294 = vmatpush2.msra.mxu0 0.0
    %3295 = vmatprep.subr.mxu0 0.0
    %3296 = vmatpush2.msra.mxu0 0.0
    %3297 = vmatprep.subr.mxu0 0.0
    %3298 = vmatpush2.msra.mxu0 0.0
    %3299 = vmatprep.subr.mxu0 0.0
    %3300 = vmatpush2.msra.mxu0 0.0
    %3301 = vmatprep.subr.mxu0 0.0
    %3302 = vmatpush2.msra.mxu0 0.0
    %3303 = vmatprep.subr.mxu0 0.0
    %3304 = vmatpush2.msra.mxu0 0.0
    %3305 = vmatprep.subr.mxu0 0.0
    %3306 = vmatpush2.msra.mxu0 0.0
    %3307 = vmatprep.subr.mxu0 0.0
    %3308 = vmatpush2.msra.mxu0 0.0
    %3309 = vmatprep.mubr.f32.mxu0 0.0
    %3310 = vmatmul.mubr.f32.gmra.mxu0 %v3240
    %v3311 = vpop.f32.mrf.mxu0
    %v3312 = vadd.f32 0.0, %v3311
    %v3313 = vpop.f32.mrf.mxu0
    %3314 = vmatprep.mubr.f32.mxu0 0.0
    %3315 = vmatmul.mubr.f32.gmra.mxu0 %v3243
    %v3316 = vpop.f32.mrf.mxu0
    %v3317 = vadd.f32 0.0, %v3316
    %v3318 = vpop.f32.mrf.mxu0
    %3319 = vdwg.mxu0
    %3320 = vrot.lane.b32.xlu0 %v282, 56
    %v3321 = vpop.permute.xlu0 %3320
    %3322 = vrot.lane.b32.xlu0 %v287, 56
    %v3323 = vpop.permute.xlu0 %3322
    %v3327 = vsel %vm1021, %v2794, 0
    %v3330 = vsel %vm1021, %v2795, 0
    %3332 = vmatprep.subr.mxu0 0.0
    %3333 = vmatpush1.msra.mxu0 0.0
    %3334 = vmatprep.subr.mxu0 0.0
    %3335 = vmatpush1.msra.mxu0 0.0
    %3336 = vmatprep.subr.mxu0 0.0
    %3337 = vmatpush1.msra.mxu0 0.0
    %3338 = vmatprep.subr.mxu0 0.0
    %3339 = vmatpush1.msra.mxu0 0.0
    %3340 = vmatprep.subr.mxu0 0.0
    %3341 = vmatpush1.msra.mxu0 0.0
    %3342 = vmatprep.subr.mxu0 0.0
    %3343 = vmatpush1.msra.mxu0 0.0
    %3344 = vmatprep.subr.mxu0 0.0
    %3345 = vmatpush1.msra.mxu0 0.0
    %3346 = vmatprep.subr.mxu0 0.0
    %3347 = vmatpush1.msra.mxu0 0.0
    %3348 = vmatprep.subr.mxu0 0.0
    %3349 = vmatpush1.msra.mxu0 0.0
    %3350 = vmatprep.subr.mxu0 0.0
    %3351 = vmatpush1.msra.mxu0 0.0
    %3352 = vmatprep.subr.mxu0 0.0
    %3353 = vmatpush1.msra.mxu0 0.0
    %3354 = vmatprep.subr.mxu0 0.0
    %3355 = vmatpush1.msra.mxu0 0.0
    %3356 = vmatprep.subr.mxu0 0.0
    %3357 = vmatpush1.msra.mxu0 0.0
    %3358 = vmatprep.subr.mxu0 0.0
    %3359 = vmatpush1.msra.mxu0 0.0
    %3360 = vmatprep.subr.mxu0 0.0
    %3361 = vmatpush1.msra.mxu0 %v3323
    %3362 = vmatprep.subr.mxu0 0.0
    %3363 = vmatpush1.msra.mxu0 %v3321
    %3364 = vmatprep.subr.mxu0 0.0
    %3365 = vmatpush2.msra.mxu0 0.0
    %3366 = vmatprep.subr.mxu0 0.0
    %3367 = vmatpush2.msra.mxu0 0.0
    %3368 = vmatprep.subr.mxu0 0.0
    %3369 = vmatpush2.msra.mxu0 0.0
    %3370 = vmatprep.subr.mxu0 0.0
    %3371 = vmatpush2.msra.mxu0 0.0
    %3372 = vmatprep.subr.mxu0 0.0
    %3373 = vmatpush2.msra.mxu0 0.0
    %3374 = vmatprep.subr.mxu0 0.0
    %3375 = vmatpush2.msra.mxu0 0.0
    %3376 = vmatprep.subr.mxu0 0.0
    %3377 = vmatpush2.msra.mxu0 0.0
    %3378 = vmatprep.subr.mxu0 0.0
    %3379 = vmatpush2.msra.mxu0 0.0
    %3380 = vmatprep.subr.mxu0 0.0
    %3381 = vmatpush2.msra.mxu0 0.0
    %3382 = vmatprep.subr.mxu0 0.0
    %3383 = vmatpush2.msra.mxu0 0.0
    %3384 = vmatprep.subr.mxu0 0.0
    %3385 = vmatpush2.msra.mxu0 0.0
    %3386 = vmatprep.subr.mxu0 0.0
    %3387 = vmatpush2.msra.mxu0 0.0
    %3388 = vmatprep.subr.mxu0 0.0
    %3389 = vmatpush2.msra.mxu0 0.0
    %3390 = vmatprep.subr.mxu0 0.0
    %3391 = vmatpush2.msra.mxu0 0.0
    %3392 = vmatprep.subr.mxu0 0.0
    %3393 = vmatpush2.msra.mxu0 0.0
    %3394 = vmatprep.subr.mxu0 0.0
    %3395 = vmatpush2.msra.mxu0 0.0
    %3396 = vmatprep.mubr.f32.mxu0 0.0
    %3397 = vmatmul.mubr.f32.gmra.mxu0 %v3327
    %v3398 = vpop.f32.mrf.mxu0
    %v3399 = vadd.f32 0.0, %v3398
    %v3400 = vpop.f32.mrf.mxu0
    %3401 = vmatprep.mubr.f32.mxu0 0.0
    %3402 = vmatmul.mubr.f32.gmra.mxu0 %v3330
    %v3403 = vpop.f32.mrf.mxu0
    %v3404 = vadd.f32 0.0, %v3403
    %v3405 = vpop.f32.mrf.mxu0
    %3406 = vdwg.mxu0
    %3407 = vrot.lane.b32.xlu0 %v292, 56
    %v3408 = vpop.permute.xlu0 %3407
    %3409 = vrot.lane.b32.xlu0 %v297, 56
    %v3410 = vpop.permute.xlu0 %3409
    %v3414 = vsel %vm1021, %v2796, 0
    %v3417 = vsel %vm1021, %v2797, 0
    %3419 = vmatprep.subr.mxu0 0.0
    %3420 = vmatpush1.msra.mxu0 0.0
    %3421 = vmatprep.subr.mxu0 0.0
    %3422 = vmatpush1.msra.mxu0 0.0
    %3423 = vmatprep.subr.mxu0 0.0
    %3424 = vmatpush1.msra.mxu0 0.0
    %3425 = vmatprep.subr.mxu0 0.0
    %3426 = vmatpush1.msra.mxu0 0.0
    %3427 = vmatprep.subr.mxu0 0.0
    %3428 = vmatpush1.msra.mxu0 0.0
    %3429 = vmatprep.subr.mxu0 0.0
    %3430 = vmatpush1.msra.mxu0 0.0
    %3431 = vmatprep.subr.mxu0 0.0
    %3432 = vmatpush1.msra.mxu0 0.0
    %3433 = vmatprep.subr.mxu0 0.0
    %3434 = vmatpush1.msra.mxu0 0.0
    %3435 = vmatprep.subr.mxu0 0.0
    %3436 = vmatpush1.msra.mxu0 0.0
    %3437 = vmatprep.subr.mxu0 0.0
    %3438 = vmatpush1.msra.mxu0 0.0
    %3439 = vmatprep.subr.mxu0 0.0
    %3440 = vmatpush1.msra.mxu0 0.0
    %3441 = vmatprep.subr.mxu0 0.0
    %3442 = vmatpush1.msra.mxu0 0.0
    %3443 = vmatprep.subr.mxu0 0.0
    %3444 = vmatpush1.msra.mxu0 0.0
    %3445 = vmatprep.subr.mxu0 0.0
    %3446 = vmatpush1.msra.mxu0 0.0
    %3447 = vmatprep.subr.mxu0 0.0
    %3448 = vmatpush1.msra.mxu0 %v3410
    %3449 = vmatprep.subr.mxu0 0.0
    %3450 = vmatpush1.msra.mxu0 %v3408
    %3451 = vmatprep.subr.mxu0 0.0
    %3452 = vmatpush2.msra.mxu0 0.0
    %3453 = vmatprep.subr.mxu0 0.0
    %3454 = vmatpush2.msra.mxu0 0.0
    %3455 = vmatprep.subr.mxu0 0.0
    %3456 = vmatpush2.msra.mxu0 0.0
    %3457 = vmatprep.subr.mxu0 0.0
    %3458 = vmatpush2.msra.mxu0 0.0
    %3459 = vmatprep.subr.mxu0 0.0
    %3460 = vmatpush2.msra.mxu0 0.0
    %3461 = vmatprep.subr.mxu0 0.0
    %3462 = vmatpush2.msra.mxu0 0.0
    %3463 = vmatprep.subr.mxu0 0.0
    %3464 = vmatpush2.msra.mxu0 0.0
    %3465 = vmatprep.subr.mxu0 0.0
    %3466 = vmatpush2.msra.mxu0 0.0
    %3467 = vmatprep.subr.mxu0 0.0
    %3468 = vmatpush2.msra.mxu0 0.0
    %3469 = vmatprep.subr.mxu0 0.0
    %3470 = vmatpush2.msra.mxu0 0.0
    %3471 = vmatprep.subr.mxu0 0.0
    %3472 = vmatpush2.msra.mxu0 0.0
    %3473 = vmatprep.subr.mxu0 0.0
    %3474 = vmatpush2.msra.mxu0 0.0
    %3475 = vmatprep.subr.mxu0 0.0
    %3476 = vmatpush2.msra.mxu0 0.0
    %3477 = vmatprep.subr.mxu0 0.0
    %3478 = vmatpush2.msra.mxu0 0.0
    %3479 = vmatprep.subr.mxu0 0.0
    %3480 = vmatpush2.msra.mxu0 0.0
    %3481 = vmatprep.subr.mxu0 0.0
    %3482 = vmatpush2.msra.mxu0 0.0
    %3483 = vmatprep.mubr.f32.mxu0 0.0
    %3484 = vmatmul.mubr.f32.gmra.mxu0 %v3414
    %v3485 = vpop.f32.mrf.mxu0
    %v3486 = vadd.f32 0.0, %v3485
    %v3487 = vpop.f32.mrf.mxu0
    %3488 = vmatprep.mubr.f32.mxu0 0.0
    %3489 = vmatmul.mubr.f32.gmra.mxu0 %v3417
    %v3490 = vpop.f32.mrf.mxu0
    %v3491 = vadd.f32 0.0, %v3490
    %v3492 = vpop.f32.mrf.mxu0
    %3493 = vdwg.mxu0
    %3494 = vrot.lane.b32.xlu0 %v222, 112
    %v3495 = vpop.permute.xlu0 %3494
    %3496 = vrot.lane.b32.xlu0 %v227, 112
    %v3497 = vpop.permute.xlu0 %3496
    %3498 = vrot.lane.b32.xlu0 %v222, 80
    %v3499 = vpop.permute.xlu0 %3498
    %3500 = vrot.lane.b32.xlu0 %v227, 80
    %v3501 = vpop.permute.xlu0 %3500
    %v3502 = vsel %vm314, %v3495, 0
    %v3504 = vsel %vm314, %v3497, 0
    %v3506 = vsel %vm314, %v3499, 0
    %v3508 = vsel %vm314, %v3501, 0
    %3510 = vmatprep.subr.mxu0 0.0
    %3511 = vmatpush1.xpose.msra.mxu0 0.0
    %3512 = vmatprep.subr.mxu0 0.0
    %3513 = vmatpush1.xpose.msra.mxu0 0.0
    %3514 = vmatprep.subr.mxu0 0.0
    %3515 = vmatpush1.xpose.msra.mxu0 0.0
    %3516 = vmatprep.subr.mxu0 0.0
    %3517 = vmatpush1.xpose.msra.mxu0 0.0
    %3518 = vmatprep.subr.mxu0 0.0
    %3519 = vmatpush1.xpose.msra.mxu0 0.0
    %3520 = vmatprep.subr.mxu0 0.0
    %3521 = vmatpush1.xpose.msra.mxu0 0.0
    %3522 = vmatprep.subr.mxu0 0.0
    %3523 = vmatpush1.xpose.msra.mxu0 0.0
    %3524 = vmatprep.subr.mxu0 0.0
    %3525 = vmatpush1.xpose.msra.mxu0 0.0
    %3526 = vmatprep.subr.mxu0 0.0
    %3527 = vmatpush1.xpose.msra.mxu0 0.0
    %3528 = vmatprep.subr.mxu0 0.0
    %3529 = vmatpush1.xpose.msra.mxu0 0.0
    %3530 = vmatprep.subr.mxu0 0.0
    %3531 = vmatpush1.xpose.msra.mxu0 0.0
    %3532 = vmatprep.subr.mxu0 0.0
    %3533 = vmatpush1.xpose.msra.mxu0 0.0
    %3534 = vmatprep.subr.mxu0 0.0
    %3535 = vmatpush1.xpose.msra.mxu0 0.0
    %3536 = vmatprep.subr.mxu0 0.0
    %3537 = vmatpush1.xpose.msra.mxu0 0.0
    %3538 = vmatprep.subr.mxu0 0.0
    %3539 = vmatpush1.xpose.msra.mxu0 %v3508
    %3540 = vmatprep.subr.mxu0 0.0
    %3541 = vmatpush1.xpose.msra.mxu0 %v3506
    %3542 = vmatprep.subr.mxu0 0.0
    %3543 = vmatpush2.xpose.msra.mxu0 0.0
    %3544 = vmatprep.subr.mxu0 0.0
    %3545 = vmatpush2.xpose.msra.mxu0 0.0
    %3546 = vmatprep.subr.mxu0 0.0
    %3547 = vmatpush2.xpose.msra.mxu0 0.0
    %3548 = vmatprep.subr.mxu0 0.0
    %3549 = vmatpush2.xpose.msra.mxu0 0.0
    %3550 = vmatprep.subr.mxu0 0.0
    %3551 = vmatpush2.xpose.msra.mxu0 0.0
    %3552 = vmatprep.subr.mxu0 0.0
    %3553 = vmatpush2.xpose.msra.mxu0 0.0
    %3554 = vmatprep.subr.mxu0 0.0
    %3555 = vmatpush2.xpose.msra.mxu0 0.0
    %3556 = vmatprep.subr.mxu0 0.0
    %3557 = vmatpush2.xpose.msra.mxu0 0.0
    %3558 = vmatprep.subr.mxu0 0.0
    %3559 = vmatpush2.xpose.msra.mxu0 0.0
    %3560 = vmatprep.subr.mxu0 0.0
    %3561 = vmatpush2.xpose.msra.mxu0 0.0
    %3562 = vmatprep.subr.mxu0 0.0
    %3563 = vmatpush2.xpose.msra.mxu0 0.0
    %3564 = vmatprep.subr.mxu0 0.0
    %3565 = vmatpush2.xpose.msra.mxu0 0.0
    %3566 = vmatprep.subr.mxu0 0.0
    %3567 = vmatpush2.xpose.msra.mxu0 0.0
    %3568 = vmatprep.subr.mxu0 0.0
    %3569 = vmatpush2.xpose.msra.mxu0 0.0
    %3570 = vmatprep.subr.mxu0 0.0
    %3571 = vmatpush2.xpose.msra.mxu0 0.0
    %3572 = vmatprep.subr.mxu0 0.0
    %3573 = vmatpush2.xpose.msra.mxu0 0.0
    %3574 = vmatprep.mubr.f32.mxu0 0.0
    %3575 = vmatmul.mubr.f32.gmra.mxu0 %v3502
    %v3576 = vpop.f32.mrf.mxu0
    %v3577 = vadd.f32 %v304, %v3576
    %v3578 = vpop.f32.mrf.mxu0
    %3579 = vmatprep.mubr.f32.mxu0 0.0
    %3580 = vmatmul.mubr.f32.gmra.mxu0 %v3504
    %v3581 = vpop.f32.mrf.mxu0
    %v3582 = vadd.f32 %v305, %v3581
    %v3583 = vpop.f32.mrf.mxu0
    %3584 = vdwg.mxu0
    %3585 = vrot.lane.b32.xlu0 %v232, 112
    %v3586 = vpop.permute.xlu0 %3585
    %3587 = vrot.lane.b32.xlu0 %v237, 112
    %v3588 = vpop.permute.xlu0 %3587
    %3589 = vrot.lane.b32.xlu0 %v232, 80
    %v3590 = vpop.permute.xlu0 %3589
    %3591 = vrot.lane.b32.xlu0 %v237, 80
    %v3592 = vpop.permute.xlu0 %3591
    %v3593 = vsel %vm314, %v3586, 0
    %v3595 = vsel %vm314, %v3588, 0
    %v3597 = vsel %vm314, %v3590, 0
    %v3599 = vsel %vm314, %v3592, 0
    %3601 = vmatprep.subr.mxu0 0.0
    %3602 = vmatpush1.xpose.msra.mxu0 0.0
    %3603 = vmatprep.subr.mxu0 0.0
    %3604 = vmatpush1.xpose.msra.mxu0 0.0
    %3605 = vmatprep.subr.mxu0 0.0
    %3606 = vmatpush1.xpose.msra.mxu0 0.0
    %3607 = vmatprep.subr.mxu0 0.0
    %3608 = vmatpush1.xpose.msra.mxu0 0.0
    %3609 = vmatprep.subr.mxu0 0.0
    %3610 = vmatpush1.xpose.msra.mxu0 0.0
    %3611 = vmatprep.subr.mxu0 0.0
    %3612 = vmatpush1.xpose.msra.mxu0 0.0
    %3613 = vmatprep.subr.mxu0 0.0
    %3614 = vmatpush1.xpose.msra.mxu0 0.0
    %3615 = vmatprep.subr.mxu0 0.0
    %3616 = vmatpush1.xpose.msra.mxu0 0.0
    %3617 = vmatprep.subr.mxu0 0.0
    %3618 = vmatpush1.xpose.msra.mxu0 0.0
    %3619 = vmatprep.subr.mxu0 0.0
    %3620 = vmatpush1.xpose.msra.mxu0 0.0
    %3621 = vmatprep.subr.mxu0 0.0
    %3622 = vmatpush1.xpose.msra.mxu0 0.0
    %3623 = vmatprep.subr.mxu0 0.0
    %3624 = vmatpush1.xpose.msra.mxu0 0.0
    %3625 = vmatprep.subr.mxu0 0.0
    %3626 = vmatpush1.xpose.msra.mxu0 0.0
    %3627 = vmatprep.subr.mxu0 0.0
    %3628 = vmatpush1.xpose.msra.mxu0 0.0
    %3629 = vmatprep.subr.mxu0 0.0
    %3630 = vmatpush1.xpose.msra.mxu0 %v3599
    %3631 = vmatprep.subr.mxu0 0.0
    %3632 = vmatpush1.xpose.msra.mxu0 %v3597
    %3633 = vmatprep.subr.mxu0 0.0
    %3634 = vmatpush2.xpose.msra.mxu0 0.0
    %3635 = vmatprep.subr.mxu0 0.0
    %3636 = vmatpush2.xpose.msra.mxu0 0.0
    %3637 = vmatprep.subr.mxu0 0.0
    %3638 = vmatpush2.xpose.msra.mxu0 0.0
    %3639 = vmatprep.subr.mxu0 0.0
    %3640 = vmatpush2.xpose.msra.mxu0 0.0
    %3641 = vmatprep.subr.mxu0 0.0
    %3642 = vmatpush2.xpose.msra.mxu0 0.0
    %3643 = vmatprep.subr.mxu0 0.0
    %3644 = vmatpush2.xpose.msra.mxu0 0.0
    %3645 = vmatprep.subr.mxu0 0.0
    %3646 = vmatpush2.xpose.msra.mxu0 0.0
    %3647 = vmatprep.subr.mxu0 0.0
    %3648 = vmatpush2.xpose.msra.mxu0 0.0
    %3649 = vmatprep.subr.mxu0 0.0
    %3650 = vmatpush2.xpose.msra.mxu0 0.0
    %3651 = vmatprep.subr.mxu0 0.0
    %3652 = vmatpush2.xpose.msra.mxu0 0.0
    %3653 = vmatprep.subr.mxu0 0.0
    %3654 = vmatpush2.xpose.msra.mxu0 0.0
    %3655 = vmatprep.subr.mxu0 0.0
    %3656 = vmatpush2.xpose.msra.mxu0 0.0
    %3657 = vmatprep.subr.mxu0 0.0
    %3658 = vmatpush2.xpose.msra.mxu0 0.0
    %3659 = vmatprep.subr.mxu0 0.0
    %3660 = vmatpush2.xpose.msra.mxu0 0.0
    %3661 = vmatprep.subr.mxu0 0.0
    %3662 = vmatpush2.xpose.msra.mxu0 0.0
    %3663 = vmatprep.subr.mxu0 0.0
    %3664 = vmatpush2.xpose.msra.mxu0 0.0
    %3665 = vmatprep.mubr.f32.mxu0 0.0
    %3666 = vmatmul.mubr.f32.gmra.mxu0 %v3593
    %v3667 = vpop.f32.mrf.mxu0
    %v3668 = vadd.f32 %v304, %v3667
    %v3669 = vpop.f32.mrf.mxu0
    %3670 = vmatprep.mubr.f32.mxu0 0.0
    %3671 = vmatmul.mubr.f32.gmra.mxu0 %v3595
    %v3672 = vpop.f32.mrf.mxu0
    %v3673 = vadd.f32 %v305, %v3672
    %v3674 = vpop.f32.mrf.mxu0
    %3675 = vdwg.mxu0
    %3676 = vrot.lane.b32.xlu0 %v242, 112
    %v3677 = vpop.permute.xlu0 %3676
    %3678 = vrot.lane.b32.xlu0 %v247, 112
    %v3679 = vpop.permute.xlu0 %3678
    %3680 = vrot.lane.b32.xlu0 %v242, 80
    %v3681 = vpop.permute.xlu0 %3680
    %3682 = vrot.lane.b32.xlu0 %v247, 80
    %v3683 = vpop.permute.xlu0 %3682
    %v3684 = vsel %vm314, %v3677, 0
    %v3686 = vsel %vm314, %v3679, 0
    %v3688 = vsel %vm314, %v3681, 0
    %v3690 = vsel %vm314, %v3683, 0
    %3692 = vmatprep.subr.mxu0 0.0
    %3693 = vmatpush1.xpose.msra.mxu0 0.0
    %3694 = vmatprep.subr.mxu0 0.0
    %3695 = vmatpush1.xpose.msra.mxu0 0.0
    %3696 = vmatprep.subr.mxu0 0.0
    %3697 = vmatpush1.xpose.msra.mxu0 0.0
    %3698 = vmatprep.subr.mxu0 0.0
    %3699 = vmatpush1.xpose.msra.mxu0 0.0
    %3700 = vmatprep.subr.mxu0 0.0
    %3701 = vmatpush1.xpose.msra.mxu0 0.0
    %3702 = vmatprep.subr.mxu0 0.0
    %3703 = vmatpush1.xpose.msra.mxu0 0.0
    %3704 = vmatprep.subr.mxu0 0.0
    %3705 = vmatpush1.xpose.msra.mxu0 0.0
    %3706 = vmatprep.subr.mxu0 0.0
    %3707 = vmatpush1.xpose.msra.mxu0 0.0
    %3708 = vmatprep.subr.mxu0 0.0
    %3709 = vmatpush1.xpose.msra.mxu0 0.0
    %3710 = vmatprep.subr.mxu0 0.0
    %3711 = vmatpush1.xpose.msra.mxu0 0.0
    %3712 = vmatprep.subr.mxu0 0.0
    %3713 = vmatpush1.xpose.msra.mxu0 0.0
    %3714 = vmatprep.subr.mxu0 0.0
    %3715 = vmatpush1.xpose.msra.mxu0 0.0
    %3716 = vmatprep.subr.mxu0 0.0
    %3717 = vmatpush1.xpose.msra.mxu0 0.0
    %3718 = vmatprep.subr.mxu0 0.0
    %3719 = vmatpush1.xpose.msra.mxu0 0.0
    %3720 = vmatprep.subr.mxu0 0.0
    %3721 = vmatpush1.xpose.msra.mxu0 %v3690
    %3722 = vmatprep.subr.mxu0 0.0
    %3723 = vmatpush1.xpose.msra.mxu0 %v3688
    %3724 = vmatprep.subr.mxu0 0.0
    %3725 = vmatpush2.xpose.msra.mxu0 0.0
    %3726 = vmatprep.subr.mxu0 0.0
    %3727 = vmatpush2.xpose.msra.mxu0 0.0
    %3728 = vmatprep.subr.mxu0 0.0
    %3729 = vmatpush2.xpose.msra.mxu0 0.0
    %3730 = vmatprep.subr.mxu0 0.0
    %3731 = vmatpush2.xpose.msra.mxu0 0.0
    %3732 = vmatprep.subr.mxu0 0.0
    %3733 = vmatpush2.xpose.msra.mxu0 0.0
    %3734 = vmatprep.subr.mxu0 0.0
    %3735 = vmatpush2.xpose.msra.mxu0 0.0
    %3736 = vmatprep.subr.mxu0 0.0
    %3737 = vmatpush2.xpose.msra.mxu0 0.0
    %3738 = vmatprep.subr.mxu0 0.0
    %3739 = vmatpush2.xpose.msra.mxu0 0.0
    %3740 = vmatprep.subr.mxu0 0.0
    %3741 = vmatpush2.xpose.msra.mxu0 0.0
    %3742 = vmatprep.subr.mxu0 0.0
    %3743 = vmatpush2.xpose.msra.mxu0 0.0
    %3744 = vmatprep.subr.mxu0 0.0
    %3745 = vmatpush2.xpose.msra.mxu0 0.0
    %3746 = vmatprep.subr.mxu0 0.0
    %3747 = vmatpush2.xpose.msra.mxu0 0.0
    %3748 = vmatprep.subr.mxu0 0.0
    %3749 = vmatpush2.xpose.msra.mxu0 0.0
    %3750 = vmatprep.subr.mxu0 0.0
    %3751 = vmatpush2.xpose.msra.mxu0 0.0
    %3752 = vmatprep.subr.mxu0 0.0
    %3753 = vmatpush2.xpose.msra.mxu0 0.0
    %3754 = vmatprep.subr.mxu0 0.0
    %3755 = vmatpush2.xpose.msra.mxu0 0.0
    %3756 = vmatprep.mubr.f32.mxu0 0.0
    %3757 = vmatmul.mubr.f32.gmra.mxu0 %v3684
    %v3758 = vpop.f32.mrf.mxu0
    %v3759 = vadd.f32 %v304, %v3758
    %v3760 = vpop.f32.mrf.mxu0
    %3761 = vmatprep.mubr.f32.mxu0 0.0
    %3762 = vmatmul.mubr.f32.gmra.mxu0 %v3686
    %v3763 = vpop.f32.mrf.mxu0
    %v3764 = vadd.f32 %v305, %v3763
    %v3765 = vpop.f32.mrf.mxu0
    %3766 = vdwg.mxu0
    %3767 = vrot.lane.b32.xlu0 %v252, 112
    %v3768 = vpop.permute.xlu0 %3767
    %3769 = vrot.lane.b32.xlu0 %v257, 112
    %v3770 = vpop.permute.xlu0 %3769
    %3771 = vrot.lane.b32.xlu0 %v252, 80
    %v3772 = vpop.permute.xlu0 %3771
    %3773 = vrot.lane.b32.xlu0 %v257, 80
    %v3774 = vpop.permute.xlu0 %3773
    %v3775 = vsel %vm314, %v3768, 0
    %v3777 = vsel %vm314, %v3770, 0
    %v3779 = vsel %vm314, %v3772, 0
    %v3781 = vsel %vm314, %v3774, 0
    %3783 = vmatprep.subr.mxu0 0.0
    %3784 = vmatpush1.xpose.msra.mxu0 0.0
    %3785 = vmatprep.subr.mxu0 0.0
    %3786 = vmatpush1.xpose.msra.mxu0 0.0
    %3787 = vmatprep.subr.mxu0 0.0
    %3788 = vmatpush1.xpose.msra.mxu0 0.0
    %3789 = vmatprep.subr.mxu0 0.0
    %3790 = vmatpush1.xpose.msra.mxu0 0.0
    %3791 = vmatprep.subr.mxu0 0.0
    %3792 = vmatpush1.xpose.msra.mxu0 0.0
    %3793 = vmatprep.subr.mxu0 0.0
    %3794 = vmatpush1.xpose.msra.mxu0 0.0
    %3795 = vmatprep.subr.mxu0 0.0
    %3796 = vmatpush1.xpose.msra.mxu0 0.0
    %3797 = vmatprep.subr.mxu0 0.0
    %3798 = vmatpush1.xpose.msra.mxu0 0.0
    %3799 = vmatprep.subr.mxu0 0.0
    %3800 = vmatpush1.xpose.msra.mxu0 0.0
    %3801 = vmatprep.subr.mxu0 0.0
    %3802 = vmatpush1.xpose.msra.mxu0 0.0
    %3803 = vmatprep.subr.mxu0 0.0
    %3804 = vmatpush1.xpose.msra.mxu0 0.0
    %3805 = vmatprep.subr.mxu0 0.0
    %3806 = vmatpush1.xpose.msra.mxu0 0.0
    %3807 = vmatprep.subr.mxu0 0.0
    %3808 = vmatpush1.xpose.msra.mxu0 0.0
    %3809 = vmatprep.subr.mxu0 0.0
    %3810 = vmatpush1.xpose.msra.mxu0 0.0
    %3811 = vmatprep.subr.mxu0 0.0
    %3812 = vmatpush1.xpose.msra.mxu0 %v3781
    %3813 = vmatprep.subr.mxu0 0.0
    %3814 = vmatpush1.xpose.msra.mxu0 %v3779
    %3815 = vmatprep.subr.mxu0 0.0
    %3816 = vmatpush2.xpose.msra.mxu0 0.0
    %3817 = vmatprep.subr.mxu0 0.0
    %3818 = vmatpush2.xpose.msra.mxu0 0.0
    %3819 = vmatprep.subr.mxu0 0.0
    %3820 = vmatpush2.xpose.msra.mxu0 0.0
    %3821 = vmatprep.subr.mxu0 0.0
    %3822 = vmatpush2.xpose.msra.mxu0 0.0
    %3823 = vmatprep.subr.mxu0 0.0
    %3824 = vmatpush2.xpose.msra.mxu0 0.0
    %3825 = vmatprep.subr.mxu0 0.0
    %3826 = vmatpush2.xpose.msra.mxu0 0.0
    %3827 = vmatprep.subr.mxu0 0.0
    %3828 = vmatpush2.xpose.msra.mxu0 0.0
    %3829 = vmatprep.subr.mxu0 0.0
    %3830 = vmatpush2.xpose.msra.mxu0 0.0
    %3831 = vmatprep.subr.mxu0 0.0
    %3832 = vmatpush2.xpose.msra.mxu0 0.0
    %3833 = vmatprep.subr.mxu0 0.0
    %3834 = vmatpush2.xpose.msra.mxu0 0.0
    %3835 = vmatprep.subr.mxu0 0.0
    %3836 = vmatpush2.xpose.msra.mxu0 0.0
    %3837 = vmatprep.subr.mxu0 0.0
    %3838 = vmatpush2.xpose.msra.mxu0 0.0
    %3839 = vmatprep.subr.mxu0 0.0
    %3840 = vmatpush2.xpose.msra.mxu0 0.0
    %3841 = vmatprep.subr.mxu0 0.0
    %3842 = vmatpush2.xpose.msra.mxu0 0.0
    %3843 = vmatprep.subr.mxu0 0.0
    %3844 = vmatpush2.xpose.msra.mxu0 0.0
    %3845 = vmatprep.subr.mxu0 0.0
    %3846 = vmatpush2.xpose.msra.mxu0 0.0
    %3847 = vmatprep.mubr.f32.mxu0 0.0
    %3848 = vmatmul.mubr.f32.gmra.mxu0 %v3775
    %v3849 = vpop.f32.mrf.mxu0
    %v3850 = vadd.f32 %v304, %v3849
    %v3851 = vpop.f32.mrf.mxu0
    %3852 = vmatprep.mubr.f32.mxu0 0.0
    %3853 = vmatmul.mubr.f32.gmra.mxu0 %v3777
    %v3854 = vpop.f32.mrf.mxu0
    %v3855 = vadd.f32 %v305, %v3854
    %v3856 = vpop.f32.mrf.mxu0
    %3857 = vdwg.mxu0
    %3858 = vrot.lane.b32.xlu0 %v262, 112
    %v3859 = vpop.permute.xlu0 %3858
    %3860 = vrot.lane.b32.xlu0 %v267, 112
    %v3861 = vpop.permute.xlu0 %3860
    %3862 = vrot.lane.b32.xlu0 %v262, 80
    %v3863 = vpop.permute.xlu0 %3862
    %3864 = vrot.lane.b32.xlu0 %v267, 80
    %v3865 = vpop.permute.xlu0 %3864
    %v3866 = vsel %vm314, %v3859, 0
    %v3868 = vsel %vm314, %v3861, 0
    %v3870 = vsel %vm314, %v3863, 0
    %v3872 = vsel %vm314, %v3865, 0
    %3874 = vmatprep.subr.mxu0 0.0
    %3875 = vmatpush1.xpose.msra.mxu0 0.0
    %3876 = vmatprep.subr.mxu0 0.0
    %3877 = vmatpush1.xpose.msra.mxu0 0.0
    %3878 = vmatprep.subr.mxu0 0.0
    %3879 = vmatpush1.xpose.msra.mxu0 0.0
    %3880 = vmatprep.subr.mxu0 0.0
    %3881 = vmatpush1.xpose.msra.mxu0 0.0
    %3882 = vmatprep.subr.mxu0 0.0
    %3883 = vmatpush1.xpose.msra.mxu0 0.0
    %3884 = vmatprep.subr.mxu0 0.0
    %3885 = vmatpush1.xpose.msra.mxu0 0.0
    %3886 = vmatprep.subr.mxu0 0.0
    %3887 = vmatpush1.xpose.msra.mxu0 0.0
    %3888 = vmatprep.subr.mxu0 0.0
    %3889 = vmatpush1.xpose.msra.mxu0 0.0
    %3890 = vmatprep.subr.mxu0 0.0
    %3891 = vmatpush1.xpose.msra.mxu0 0.0
    %3892 = vmatprep.subr.mxu0 0.0
    %3893 = vmatpush1.xpose.msra.mxu0 0.0
    %3894 = vmatprep.subr.mxu0 0.0
    %3895 = vmatpush1.xpose.msra.mxu0 0.0
    %3896 = vmatprep.subr.mxu0 0.0
    %3897 = vmatpush1.xpose.msra.mxu0 0.0
    %3898 = vmatprep.subr.mxu0 0.0
    %3899 = vmatpush1.xpose.msra.mxu0 0.0
    %3900 = vmatprep.subr.mxu0 0.0
    %3901 = vmatpush1.xpose.msra.mxu0 0.0
    %3902 = vmatprep.subr.mxu0 0.0
    %3903 = vmatpush1.xpose.msra.mxu0 %v3872
    %3904 = vmatprep.subr.mxu0 0.0
    %3905 = vmatpush1.xpose.msra.mxu0 %v3870
    %3906 = vmatprep.subr.mxu0 0.0
    %3907 = vmatpush2.xpose.msra.mxu0 0.0
    %3908 = vmatprep.subr.mxu0 0.0
    %3909 = vmatpush2.xpose.msra.mxu0 0.0
    %3910 = vmatprep.subr.mxu0 0.0
    %3911 = vmatpush2.xpose.msra.mxu0 0.0
    %3912 = vmatprep.subr.mxu0 0.0
    %3913 = vmatpush2.xpose.msra.mxu0 0.0
    %3914 = vmatprep.subr.mxu0 0.0
    %3915 = vmatpush2.xpose.msra.mxu0 0.0
    %3916 = vmatprep.subr.mxu0 0.0
    %3917 = vmatpush2.xpose.msra.mxu0 0.0
    %3918 = vmatprep.subr.mxu0 0.0
    %3919 = vmatpush2.xpose.msra.mxu0 0.0
    %3920 = vmatprep.subr.mxu0 0.0
    %3921 = vmatpush2.xpose.msra.mxu0 0.0
    %3922 = vmatprep.subr.mxu0 0.0
    %3923 = vmatpush2.xpose.msra.mxu0 0.0
    %3924 = vmatprep.subr.mxu0 0.0
    %3925 = vmatpush2.xpose.msra.mxu0 0.0
    %3926 = vmatprep.subr.mxu0 0.0
    %3927 = vmatpush2.xpose.msra.mxu0 0.0
    %3928 = vmatprep.subr.mxu0 0.0
    %3929 = vmatpush2.xpose.msra.mxu0 0.0
    %3930 = vmatprep.subr.mxu0 0.0
    %3931 = vmatpush2.xpose.msra.mxu0 0.0
    %3932 = vmatprep.subr.mxu0 0.0
    %3933 = vmatpush2.xpose.msra.mxu0 0.0
    %3934 = vmatprep.subr.mxu0 0.0
    %3935 = vmatpush2.xpose.msra.mxu0 0.0
    %3936 = vmatprep.subr.mxu0 0.0
    %3937 = vmatpush2.xpose.msra.mxu0 0.0
    %3938 = vmatprep.mubr.f32.mxu0 0.0
    %3939 = vmatmul.mubr.f32.gmra.mxu0 %v3866
    %v3940 = vpop.f32.mrf.mxu0
    %v3941 = vadd.f32 %v304, %v3940
    %v3942 = vpop.f32.mrf.mxu0
    %3943 = vmatprep.mubr.f32.mxu0 0.0
    %3944 = vmatmul.mubr.f32.gmra.mxu0 %v3868
    %v3945 = vpop.f32.mrf.mxu0
    %v3946 = vadd.f32 %v305, %v3945
    %v3947 = vpop.f32.mrf.mxu0
    %3948 = vdwg.mxu0
    %3949 = vrot.lane.b32.xlu0 %v272, 112
    %v3950 = vpop.permute.xlu0 %3949
    %3951 = vrot.lane.b32.xlu0 %v277, 112
    %v3952 = vpop.permute.xlu0 %3951
    %3953 = vrot.lane.b32.xlu0 %v272, 80
    %v3954 = vpop.permute.xlu0 %3953
    %3955 = vrot.lane.b32.xlu0 %v277, 80
    %v3956 = vpop.permute.xlu0 %3955
    %v3957 = vsel %vm314, %v3950, 0
    %v3959 = vsel %vm314, %v3952, 0
    %v3961 = vsel %vm314, %v3954, 0
    %v3963 = vsel %vm314, %v3956, 0
    %3965 = vmatprep.subr.mxu0 0.0
    %3966 = vmatpush1.xpose.msra.mxu0 0.0
    %3967 = vmatprep.subr.mxu0 0.0
    %3968 = vmatpush1.xpose.msra.mxu0 0.0
    %3969 = vmatprep.subr.mxu0 0.0
    %3970 = vmatpush1.xpose.msra.mxu0 0.0
    %3971 = vmatprep.subr.mxu0 0.0
    %3972 = vmatpush1.xpose.msra.mxu0 0.0
    %3973 = vmatprep.subr.mxu0 0.0
    %3974 = vmatpush1.xpose.msra.mxu0 0.0
    %3975 = vmatprep.subr.mxu0 0.0
    %3976 = vmatpush1.xpose.msra.mxu0 0.0
    %3977 = vmatprep.subr.mxu0 0.0
    %3978 = vmatpush1.xpose.msra.mxu0 0.0
    %3979 = vmatprep.subr.mxu0 0.0
    %3980 = vmatpush1.xpose.msra.mxu0 0.0
    %3981 = vmatprep.subr.mxu0 0.0
    %3982 = vmatpush1.xpose.msra.mxu0 0.0
    %3983 = vmatprep.subr.mxu0 0.0
    %3984 = vmatpush1.xpose.msra.mxu0 0.0
    %3985 = vmatprep.subr.mxu0 0.0
    %3986 = vmatpush1.xpose.msra.mxu0 0.0
    %3987 = vmatprep.subr.mxu0 0.0
    %3988 = vmatpush1.xpose.msra.mxu0 0.0
    %3989 = vmatprep.subr.mxu0 0.0
    %3990 = vmatpush1.xpose.msra.mxu0 0.0
    %3991 = vmatprep.subr.mxu0 0.0
    %3992 = vmatpush1.xpose.msra.mxu0 0.0
    %3993 = vmatprep.subr.mxu0 0.0
    %3994 = vmatpush1.xpose.msra.mxu0 %v3963
    %3995 = vmatprep.subr.mxu0 0.0
    %3996 = vmatpush1.xpose.msra.mxu0 %v3961
    %3997 = vmatprep.subr.mxu0 0.0
    %3998 = vmatpush2.xpose.msra.mxu0 0.0
    %3999 = vmatprep.subr.mxu0 0.0
    %4000 = vmatpush2.xpose.msra.mxu0 0.0
    %4001 = vmatprep.subr.mxu0 0.0
    %4002 = vmatpush2.xpose.msra.mxu0 0.0
    %4003 = vmatprep.subr.mxu0 0.0
    %4004 = vmatpush2.xpose.msra.mxu0 0.0
    %4005 = vmatprep.subr.mxu0 0.0
    %4006 = vmatpush2.xpose.msra.mxu0 0.0
    %4007 = vmatprep.subr.mxu0 0.0
    %4008 = vmatpush2.xpose.msra.mxu0 0.0
    %4009 = vmatprep.subr.mxu0 0.0
    %4010 = vmatpush2.xpose.msra.mxu0 0.0
    %4011 = vmatprep.subr.mxu0 0.0
    %4012 = vmatpush2.xpose.msra.mxu0 0.0
    %4013 = vmatprep.subr.mxu0 0.0
    %4014 = vmatpush2.xpose.msra.mxu0 0.0
    %4015 = vmatprep.subr.mxu0 0.0
    %4016 = vmatpush2.xpose.msra.mxu0 0.0
    %4017 = vmatprep.subr.mxu0 0.0
    %4018 = vmatpush2.xpose.msra.mxu0 0.0
    %4019 = vmatprep.subr.mxu0 0.0
    %4020 = vmatpush2.xpose.msra.mxu0 0.0
    %4021 = vmatprep.subr.mxu0 0.0
    %4022 = vmatpush2.xpose.msra.mxu0 0.0
    %4023 = vmatprep.subr.mxu0 0.0
    %4024 = vmatpush2.xpose.msra.mxu0 0.0
    %4025 = vmatprep.subr.mxu0 0.0
    %4026 = vmatpush2.xpose.msra.mxu0 0.0
    %4027 = vmatprep.subr.mxu0 0.0
    %4028 = vmatpush2.xpose.msra.mxu0 0.0
    %4029 = vmatprep.mubr.f32.mxu0 0.0
    %4030 = vmatmul.mubr.f32.gmra.mxu0 %v3957
    %v4031 = vpop.f32.mrf.mxu0
    %v4032 = vadd.f32 %v304, %v4031
    %v4033 = vpop.f32.mrf.mxu0
    %4034 = vmatprep.mubr.f32.mxu0 0.0
    %4035 = vmatmul.mubr.f32.gmra.mxu0 %v3959
    %v4036 = vpop.f32.mrf.mxu0
    %v4037 = vadd.f32 %v305, %v4036
    %v4038 = vpop.f32.mrf.mxu0
    %4039 = vdwg.mxu0
    %4040 = vrot.lane.b32.xlu0 %v282, 112
    %v4041 = vpop.permute.xlu0 %4040
    %4042 = vrot.lane.b32.xlu0 %v287, 112
    %v4043 = vpop.permute.xlu0 %4042
    %4044 = vrot.lane.b32.xlu0 %v282, 80
    %v4045 = vpop.permute.xlu0 %4044
    %4046 = vrot.lane.b32.xlu0 %v287, 80
    %v4047 = vpop.permute.xlu0 %4046
    %v4048 = vsel %vm314, %v4041, 0
    %v4050 = vsel %vm314, %v4043, 0
    %v4052 = vsel %vm314, %v4045, 0
    %v4054 = vsel %vm314, %v4047, 0
    %4056 = vmatprep.subr.mxu0 0.0
    %4057 = vmatpush1.xpose.msra.mxu0 0.0
    %4058 = vmatprep.subr.mxu0 0.0
    %4059 = vmatpush1.xpose.msra.mxu0 0.0
    %4060 = vmatprep.subr.mxu0 0.0
    %4061 = vmatpush1.xpose.msra.mxu0 0.0
    %4062 = vmatprep.subr.mxu0 0.0
    %4063 = vmatpush1.xpose.msra.mxu0 0.0
    %4064 = vmatprep.subr.mxu0 0.0
    %4065 = vmatpush1.xpose.msra.mxu0 0.0
    %4066 = vmatprep.subr.mxu0 0.0
    %4067 = vmatpush1.xpose.msra.mxu0 0.0
    %4068 = vmatprep.subr.mxu0 0.0
    %4069 = vmatpush1.xpose.msra.mxu0 0.0
    %4070 = vmatprep.subr.mxu0 0.0
    %4071 = vmatpush1.xpose.msra.mxu0 0.0
    %4072 = vmatprep.subr.mxu0 0.0
    %4073 = vmatpush1.xpose.msra.mxu0 0.0
    %4074 = vmatprep.subr.mxu0 0.0
    %4075 = vmatpush1.xpose.msra.mxu0 0.0
    %4076 = vmatprep.subr.mxu0 0.0
    %4077 = vmatpush1.xpose.msra.mxu0 0.0
    %4078 = vmatprep.subr.mxu0 0.0
    %4079 = vmatpush1.xpose.msra.mxu0 0.0
    %4080 = vmatprep.subr.mxu0 0.0
    %4081 = vmatpush1.xpose.msra.mxu0 0.0
    %4082 = vmatprep.subr.mxu0 0.0
    %4083 = vmatpush1.xpose.msra.mxu0 0.0
    %4084 = vmatprep.subr.mxu0 0.0
    %4085 = vmatpush1.xpose.msra.mxu0 %v4054
    %4086 = vmatprep.subr.mxu0 0.0
    %4087 = vmatpush1.xpose.msra.mxu0 %v4052
    %4088 = vmatprep.subr.mxu0 0.0
    %4089 = vmatpush2.xpose.msra.mxu0 0.0
    %4090 = vmatprep.subr.mxu0 0.0
    %4091 = vmatpush2.xpose.msra.mxu0 0.0
    %4092 = vmatprep.subr.mxu0 0.0
    %4093 = vmatpush2.xpose.msra.mxu0 0.0
    %4094 = vmatprep.subr.mxu0 0.0
    %4095 = vmatpush2.xpose.msra.mxu0 0.0
    %4096 = vmatprep.subr.mxu0 0.0
    %4097 = vmatpush2.xpose.msra.mxu0 0.0
    %4098 = vmatprep.subr.mxu0 0.0
    %4099 = vmatpush2.xpose.msra.mxu0 0.0
    %4100 = vmatprep.subr.mxu0 0.0
    %4101 = vmatpush2.xpose.msra.mxu0 0.0
    %4102 = vmatprep.subr.mxu0 0.0
    %4103 = vmatpush2.xpose.msra.mxu0 0.0
    %4104 = vmatprep.subr.mxu0 0.0
    %4105 = vmatpush2.xpose.msra.mxu0 0.0
    %4106 = vmatprep.subr.mxu0 0.0
    %4107 = vmatpush2.xpose.msra.mxu0 0.0
    %4108 = vmatprep.subr.mxu0 0.0
    %4109 = vmatpush2.xpose.msra.mxu0 0.0
    %4110 = vmatprep.subr.mxu0 0.0
    %4111 = vmatpush2.xpose.msra.mxu0 0.0
    %4112 = vmatprep.subr.mxu0 0.0
    %4113 = vmatpush2.xpose.msra.mxu0 0.0
    %4114 = vmatprep.subr.mxu0 0.0
    %4115 = vmatpush2.xpose.msra.mxu0 0.0
    %4116 = vmatprep.subr.mxu0 0.0
    %4117 = vmatpush2.xpose.msra.mxu0 0.0
    %4118 = vmatprep.subr.mxu0 0.0
    %4119 = vmatpush2.xpose.msra.mxu0 0.0
    %4120 = vmatprep.mubr.f32.mxu0 0.0
    %4121 = vmatmul.mubr.f32.gmra.mxu0 %v4048
    %v4122 = vpop.f32.mrf.mxu0
    %v4123 = vadd.f32 %v304, %v4122
    %v4124 = vpop.f32.mrf.mxu0
    %4125 = vmatprep.mubr.f32.mxu0 0.0
    %4126 = vmatmul.mubr.f32.gmra.mxu0 %v4050
    %v4127 = vpop.f32.mrf.mxu0
    %v4128 = vadd.f32 %v305, %v4127
    %v4129 = vpop.f32.mrf.mxu0
    %4130 = vdwg.mxu0
    %4131 = vrot.lane.b32.xlu0 %v292, 112
    %v4132 = vpop.permute.xlu0 %4131
    %4133 = vrot.lane.b32.xlu0 %v297, 112
    %v4134 = vpop.permute.xlu0 %4133
    %4135 = vrot.lane.b32.xlu0 %v292, 80
    %v4136 = vpop.permute.xlu0 %4135
    %4137 = vrot.lane.b32.xlu0 %v297, 80
    %v4138 = vpop.permute.xlu0 %4137
    %v4139 = vsel %vm314, %v4132, 0
    %v4141 = vsel %vm314, %v4134, 0
    %v4143 = vsel %vm314, %v4136, 0
    %v4145 = vsel %vm314, %v4138, 0
    %4147 = vmatprep.subr.mxu0 0.0
    %4148 = vmatpush1.xpose.msra.mxu0 0.0
    %4149 = vmatprep.subr.mxu0 0.0
    %4150 = vmatpush1.xpose.msra.mxu0 0.0
    %4151 = vmatprep.subr.mxu0 0.0
    %4152 = vmatpush1.xpose.msra.mxu0 0.0
    %4153 = vmatprep.subr.mxu0 0.0
    %4154 = vmatpush1.xpose.msra.mxu0 0.0
    %4155 = vmatprep.subr.mxu0 0.0
    %4156 = vmatpush1.xpose.msra.mxu0 0.0
    %4157 = vmatprep.subr.mxu0 0.0
    %4158 = vmatpush1.xpose.msra.mxu0 0.0
    %4159 = vmatprep.subr.mxu0 0.0
    %4160 = vmatpush1.xpose.msra.mxu0 0.0
    %4161 = vmatprep.subr.mxu0 0.0
    %4162 = vmatpush1.xpose.msra.mxu0 0.0
    %4163 = vmatprep.subr.mxu0 0.0
    %4164 = vmatpush1.xpose.msra.mxu0 0.0
    %4165 = vmatprep.subr.mxu0 0.0
    %4166 = vmatpush1.xpose.msra.mxu0 0.0
    %4167 = vmatprep.subr.mxu0 0.0
    %4168 = vmatpush1.xpose.msra.mxu0 0.0
    %4169 = vmatprep.subr.mxu0 0.0
    %4170 = vmatpush1.xpose.msra.mxu0 0.0
    %4171 = vmatprep.subr.mxu0 0.0
    %4172 = vmatpush1.xpose.msra.mxu0 0.0
    %4173 = vmatprep.subr.mxu0 0.0
    %4174 = vmatpush1.xpose.msra.mxu0 0.0
    %4175 = vmatprep.subr.mxu0 0.0
    %4176 = vmatpush1.xpose.msra.mxu0 %v4145
    %4177 = vmatprep.subr.mxu0 0.0
    %4178 = vmatpush1.xpose.msra.mxu0 %v4143
    %4179 = vmatprep.subr.mxu0 0.0
    %4180 = vmatpush2.xpose.msra.mxu0 0.0
    %4181 = vmatprep.subr.mxu0 0.0
    %4182 = vmatpush2.xpose.msra.mxu0 0.0
    %4183 = vmatprep.subr.mxu0 0.0
    %4184 = vmatpush2.xpose.msra.mxu0 0.0
    %4185 = vmatprep.subr.mxu0 0.0
    %4186 = vmatpush2.xpose.msra.mxu0 0.0
    %4187 = vmatprep.subr.mxu0 0.0
    %4188 = vmatpush2.xpose.msra.mxu0 0.0
    %4189 = vmatprep.subr.mxu0 0.0
    %4190 = vmatpush2.xpose.msra.mxu0 0.0
    %4191 = vmatprep.subr.mxu0 0.0
    %4192 = vmatpush2.xpose.msra.mxu0 0.0
    %4193 = vmatprep.subr.mxu0 0.0
    %4194 = vmatpush2.xpose.msra.mxu0 0.0
    %4195 = vmatprep.subr.mxu0 0.0
    %4196 = vmatpush2.xpose.msra.mxu0 0.0
    %4197 = vmatprep.subr.mxu0 0.0
    %4198 = vmatpush2.xpose.msra.mxu0 0.0
    %4199 = vmatprep.subr.mxu0 0.0
    %4200 = vmatpush2.xpose.msra.mxu0 0.0
    %4201 = vmatprep.subr.mxu0 0.0
    %4202 = vmatpush2.xpose.msra.mxu0 0.0
    %4203 = vmatprep.subr.mxu0 0.0
    %4204 = vmatpush2.xpose.msra.mxu0 0.0
    %4205 = vmatprep.subr.mxu0 0.0
    %4206 = vmatpush2.xpose.msra.mxu0 0.0
    %4207 = vmatprep.subr.mxu0 0.0
    %4208 = vmatpush2.xpose.msra.mxu0 0.0
    %4209 = vmatprep.subr.mxu0 0.0
    %4210 = vmatpush2.xpose.msra.mxu0 0.0
    %4211 = vmatprep.mubr.f32.mxu0 0.0
    %4212 = vmatmul.mubr.f32.gmra.mxu0 %v4139
    %v4213 = vpop.f32.mrf.mxu0
    %v4214 = vadd.f32 %v304, %v4213
    %v4215 = vpop.f32.mrf.mxu0
    %4216 = vmatprep.mubr.f32.mxu0 0.0
    %4217 = vmatmul.mubr.f32.gmra.mxu0 %v4141
    %v4218 = vpop.f32.mrf.mxu0
    %v4219 = vadd.f32 %v305, %v4218
    %v4220 = vpop.f32.mrf.mxu0
    %4221 = vdwg.mxu0
    %v4222 = vsel %vm1021, %v3577, -inf
    %4223 = vmax.xlane.f32.xlu0 %v4222
    %v4224 = vpop.xlane.xlu0 %4223
    %v4225 = vsel %vm1021, %v3582, -inf
    %4226 = vmax.xlane.f32.xlu0 %v4225
    %v4227 = vpop.xlane.xlu0 %4226
    %v4228 = vsel %vm1021, %v3668, -inf
    %4229 = vmax.xlane.f32.xlu0 %v4228
    %v4230 = vpop.xlane.xlu0 %4229
    %v4231 = vsel %vm1021, %v3673, -inf
    %4232 = vmax.xlane.f32.xlu0 %v4231
    %v4233 = vpop.xlane.xlu0 %4232
    %v4234 = vsel %vm1021, %v3759, -inf
    %4235 = vmax.xlane.f32.xlu0 %v4234
    %v4236 = vpop.xlane.xlu0 %4235
    %v4237 = vsel %vm1021, %v3764, -inf
    %4238 = vmax.xlane.f32.xlu0 %v4237
    %v4239 = vpop.xlane.xlu0 %4238
    %v4240 = vsel %vm1021, %v3850, -inf
    %4241 = vmax.xlane.f32.xlu0 %v4240
    %v4242 = vpop.xlane.xlu0 %4241
    %v4243 = vsel %vm1021, %v3855, -inf
    %4244 = vmax.xlane.f32.xlu0 %v4243
    %v4245 = vpop.xlane.xlu0 %4244
    %v4246 = vsel %vm1021, %v3941, -inf
    %4247 = vmax.xlane.f32.xlu0 %v4246
    %v4248 = vpop.xlane.xlu0 %4247
    %v4249 = vsel %vm1021, %v3946, -inf
    %4250 = vmax.xlane.f32.xlu0 %v4249
    %v4251 = vpop.xlane.xlu0 %4250
    %v4252 = vsel %vm1021, %v4032, -inf
    %4253 = vmax.xlane.f32.xlu0 %v4252
    %v4254 = vpop.xlane.xlu0 %4253
    %v4255 = vsel %vm1021, %v4037, -inf
    %4256 = vmax.xlane.f32.xlu0 %v4255
    %v4257 = vpop.xlane.xlu0 %4256
    %v4258 = vsel %vm1021, %v4123, -inf
    %4259 = vmax.xlane.f32.xlu0 %v4258
    %v4260 = vpop.xlane.xlu0 %4259
    %v4261 = vsel %vm1021, %v4128, -inf
    %4262 = vmax.xlane.f32.xlu0 %v4261
    %v4263 = vpop.xlane.xlu0 %4262
    %v4264 = vsel %vm1021, %v4214, -inf
    %4265 = vmax.xlane.f32.xlu0 %v4264
    %v4266 = vpop.xlane.xlu0 %4265
    %v4267 = vsel %vm1021, %v4219, -inf
    %4268 = vmax.xlane.f32.xlu0 %v4267
    %v4269 = vpop.xlane.xlu0 %4268
    %v4270 = vsub.f32 %v3577, %v4224
    %v4271 = vsub.f32 %v3582, %v4227
    %v4272 = vsub.f32 %v3668, %v4230
    %v4273 = vsub.f32 %v3673, %v4233
    %v4274 = vsub.f32 %v3759, %v4236
    %v4275 = vsub.f32 %v3764, %v4239
    %v4276 = vsub.f32 %v3850, %v4242
    %v4277 = vsub.f32 %v3855, %v4245
    %v4278 = vsub.f32 %v3941, %v4248
    %v4279 = vsub.f32 %v3946, %v4251
    %v4280 = vsub.f32 %v4032, %v4254
    %v4281 = vsub.f32 %v4037, %v4257
    %v4282 = vsub.f32 %v4123, %v4260
    %v4283 = vsub.f32 %v4128, %v4263
    %v4284 = vsub.f32 %v4214, %v4266
    %v4285 = vsub.f32 %v4219, %v4269
    %v4286 = vmul.f32 %v4270, 1.442695
    %v4287 = vpow.pop %v4286
    %v4288 = vmul.f32 %v4271, 1.442695
    %v4289 = vpow.pop %v4288
    %v4290 = vmul.f32 %v4272, 1.442695
    %v4291 = vpow.pop %v4290
    %v4292 = vmul.f32 %v4273, 1.442695
    %v4293 = vpow.pop %v4292
    %v4294 = vmul.f32 %v4274, 1.442695
    %v4295 = vpow.pop %v4294
    %v4296 = vmul.f32 %v4275, 1.442695
    %v4297 = vpow.pop %v4296
    %v4298 = vmul.f32 %v4276, 1.442695
    %v4299 = vpow.pop %v4298
    %v4300 = vmul.f32 %v4277, 1.442695
    %v4301 = vpow.pop %v4300
    %v4302 = vmul.f32 %v4278, 1.442695
    %v4303 = vpow.pop %v4302
    %v4304 = vmul.f32 %v4279, 1.442695
    %v4305 = vpow.pop %v4304
    %v4306 = vmul.f32 %v4280, 1.442695
    %v4307 = vpow.pop %v4306
    %v4308 = vmul.f32 %v4281, 1.442695
    %v4309 = vpow.pop %v4308
    %v4310 = vmul.f32 %v4282, 1.442695
    %v4311 = vpow.pop %v4310
    %v4312 = vmul.f32 %v4283, 1.442695
    %v4313 = vpow.pop %v4312
    %v4314 = vmul.f32 %v4284, 1.442695
    %v4315 = vpow.pop %v4314
    %v4316 = vmul.f32 %v4285, 1.442695
    %v4317 = vpow.pop %v4316
    %v4318 = vsel %vm1021, %v4287, 0.0
    %4319 = vadd.xlane.f32.xlu0 %v4318
    %v4320 = vpop.xlane.xlu0 %4319
    %v4321 = vsel %vm1021, %v4289, 0.0
    %4322 = vadd.xlane.f32.xlu0 %v4321
    %v4323 = vpop.xlane.xlu0 %4322
    %v4324 = vsel %vm1021, %v4291, 0.0
    %4325 = vadd.xlane.f32.xlu0 %v4324
    %v4326 = vpop.xlane.xlu0 %4325
    %v4327 = vsel %vm1021, %v4293, 0.0
    %4328 = vadd.xlane.f32.xlu0 %v4327
    %v4329 = vpop.xlane.xlu0 %4328
    %v4330 = vsel %vm1021, %v4295, 0.0
    %4331 = vadd.xlane.f32.xlu0 %v4330
    %v4332 = vpop.xlane.xlu0 %4331
    %v4333 = vsel %vm1021, %v4297, 0.0
    %4334 = vadd.xlane.f32.xlu0 %v4333
    %v4335 = vpop.xlane.xlu0 %4334
    %v4336 = vsel %vm1021, %v4299, 0.0
    %4337 = vadd.xlane.f32.xlu0 %v4336
    %v4338 = vpop.xlane.xlu0 %4337
    %v4339 = vsel %vm1021, %v4301, 0.0
    %4340 = vadd.xlane.f32.xlu0 %v4339
    %v4341 = vpop.xlane.xlu0 %4340
    %v4342 = vsel %vm1021, %v4303, 0.0
    %4343 = vadd.xlane.f32.xlu0 %v4342
    %v4344 = vpop.xlane.xlu0 %4343
    %v4345 = vsel %vm1021, %v4305, 0.0
    %4346 = vadd.xlane.f32.xlu0 %v4345
    %v4347 = vpop.xlane.xlu0 %4346
    %v4348 = vsel %vm1021, %v4307, 0.0
    %4349 = vadd.xlane.f32.xlu0 %v4348
    %v4350 = vpop.xlane.xlu0 %4349
    %v4351 = vsel %vm1021, %v4309, 0.0
    %4352 = vadd.xlane.f32.xlu0 %v4351
    %v4353 = vpop.xlane.xlu0 %4352
    %v4354 = vsel %vm1021, %v4311, 0.0
    %4355 = vadd.xlane.f32.xlu0 %v4354
    %v4356 = vpop.xlane.xlu0 %4355
    %v4357 = vsel %vm1021, %v4313, 0.0
    %4358 = vadd.xlane.f32.xlu0 %v4357
    %v4359 = vpop.xlane.xlu0 %4358
    %v4360 = vsel %vm1021, %v4315, 0.0
    %4361 = vadd.xlane.f32.xlu0 %v4360
    %v4362 = vpop.xlane.xlu0 %4361
    %v4363 = vsel %vm1021, %v4317, 0.0
    %4364 = vadd.xlane.f32.xlu0 %v4363
    %v4365 = vpop.xlane.xlu0 %4364
    %v4366 = vrcp.pop %v4320
    %v4367 = vrcp.pop %v4323
    %v4368 = vrcp.pop %v4326
    %v4369 = vrcp.pop %v4329
    %v4370 = vrcp.pop %v4332
    %v4371 = vrcp.pop %v4335
    %v4372 = vrcp.pop %v4338
    %v4373 = vrcp.pop %v4341
    %v4374 = vrcp.pop %v4344
    %v4375 = vrcp.pop %v4347
    %v4376 = vrcp.pop %v4350
    %v4377 = vrcp.pop %v4353
    %v4378 = vrcp.pop %v4356
    %v4379 = vrcp.pop %v4359
    %v4380 = vrcp.pop %v4362
    %v4381 = vrcp.pop %v4365
    %v4382 = vmul.f32 %v4287, %v4366
    %v4383 = vmul.f32 %v4289, %v4367
    %v4384 = vmul.f32 %v4291, %v4368
    %v4385 = vmul.f32 %v4293, %v4369
    %v4386 = vmul.f32 %v4295, %v4370
    %v4387 = vmul.f32 %v4297, %v4371
    %v4388 = vmul.f32 %v4299, %v4372
    %v4389 = vmul.f32 %v4301, %v4373
    %v4390 = vmul.f32 %v4303, %v4374
    %v4391 = vmul.f32 %v4305, %v4375
    %v4392 = vmul.f32 %v4307, %v4376
    %v4393 = vmul.f32 %v4309, %v4377
    %v4394 = vmul.f32 %v4311, %v4378
    %v4395 = vmul.f32 %v4313, %v4379
    %v4396 = vmul.f32 %v4315, %v4380
    %v4397 = vmul.f32 %v4317, %v4381
    %4398 = vrot.lane.b32.xlu0 %v222, 48
    %v4399 = vpop.permute.xlu0 %4398
    %4400 = vrot.lane.b32.xlu0 %v227, 48
    %v4401 = vpop.permute.xlu0 %4400
    %v4405 = vsel %vm1021, %v4382, 0
    %v4408 = vsel %vm1021, %v4383, 0
    %4410 = vmatprep.subr.mxu0 0.0
    %4411 = vmatpush1.msra.mxu0 0.0
    %4412 = vmatprep.subr.mxu0 0.0
    %4413 = vmatpush1.msra.mxu0 0.0
    %4414 = vmatprep.subr.mxu0 0.0
    %4415 = vmatpush1.msra.mxu0 0.0
    %4416 = vmatprep.subr.mxu0 0.0
    %4417 = vmatpush1.msra.mxu0 0.0
    %4418 = vmatprep.subr.mxu0 0.0
    %4419 = vmatpush1.msra.mxu0 0.0
    %4420 = vmatprep.subr.mxu0 0.0
    %4421 = vmatpush1.msra.mxu0 0.0
    %4422 = vmatprep.subr.mxu0 0.0
    %4423 = vmatpush1.msra.mxu0 0.0
    %4424 = vmatprep.subr.mxu0 0.0
    %4425 = vmatpush1.msra.mxu0 0.0
    %4426 = vmatprep.subr.mxu0 0.0
    %4427 = vmatpush1.msra.mxu0 0.0
    %4428 = vmatprep.subr.mxu0 0.0
    %4429 = vmatpush1.msra.mxu0 0.0
    %4430 = vmatprep.subr.mxu0 0.0
    %4431 = vmatpush1.msra.mxu0 0.0
    %4432 = vmatprep.subr.mxu0 0.0
    %4433 = vmatpush1.msra.mxu0 0.0
    %4434 = vmatprep.subr.mxu0 0.0
    %4435 = vmatpush1.msra.mxu0 0.0
    %4436 = vmatprep.subr.mxu0 0.0
    %4437 = vmatpush1.msra.mxu0 0.0
    %4438 = vmatprep.subr.mxu0 0.0
    %4439 = vmatpush1.msra.mxu0 %v4401
    %4440 = vmatprep.subr.mxu0 0.0
    %4441 = vmatpush1.msra.mxu0 %v4399
    %4442 = vmatprep.subr.mxu0 0.0
    %4443 = vmatpush2.msra.mxu0 0.0
    %4444 = vmatprep.subr.mxu0 0.0
    %4445 = vmatpush2.msra.mxu0 0.0
    %4446 = vmatprep.subr.mxu0 0.0
    %4447 = vmatpush2.msra.mxu0 0.0
    %4448 = vmatprep.subr.mxu0 0.0
    %4449 = vmatpush2.msra.mxu0 0.0
    %4450 = vmatprep.subr.mxu0 0.0
    %4451 = vmatpush2.msra.mxu0 0.0
    %4452 = vmatprep.subr.mxu0 0.0
    %4453 = vmatpush2.msra.mxu0 0.0
    %4454 = vmatprep.subr.mxu0 0.0
    %4455 = vmatpush2.msra.mxu0 0.0
    %4456 = vmatprep.subr.mxu0 0.0
    %4457 = vmatpush2.msra.mxu0 0.0
    %4458 = vmatprep.subr.mxu0 0.0
    %4459 = vmatpush2.msra.mxu0 0.0
    %4460 = vmatprep.subr.mxu0 0.0
    %4461 = vmatpush2.msra.mxu0 0.0
    %4462 = vmatprep.subr.mxu0 0.0
    %4463 = vmatpush2.msra.mxu0 0.0
    %4464 = vmatprep.subr.mxu0 0.0
    %4465 = vmatpush2.msra.mxu0 0.0
    %4466 = vmatprep.subr.mxu0 0.0
    %4467 = vmatpush2.msra.mxu0 0.0
    %4468 = vmatprep.subr.mxu0 0.0
    %4469 = vmatpush2.msra.mxu0 0.0
    %4470 = vmatprep.subr.mxu0 0.0
    %4471 = vmatpush2.msra.mxu0 0.0
    %4472 = vmatprep.subr.mxu0 0.0
    %4473 = vmatpush2.msra.mxu0 0.0
    %4474 = vmatprep.mubr.f32.mxu0 0.0
    %4475 = vmatmul.mubr.f32.gmra.mxu0 %v4405
    %v4476 = vpop.f32.mrf.mxu0
    %v4477 = vadd.f32 0.0, %v4476
    %v4478 = vpop.f32.mrf.mxu0
    %4479 = vmatprep.mubr.f32.mxu0 0.0
    %4480 = vmatmul.mubr.f32.gmra.mxu0 %v4408
    %v4481 = vpop.f32.mrf.mxu0
    %v4482 = vadd.f32 0.0, %v4481
    %v4483 = vpop.f32.mrf.mxu0
    %4484 = vdwg.mxu0
    %4485 = vrot.lane.b32.xlu0 %v232, 48
    %v4486 = vpop.permute.xlu0 %4485
    %4487 = vrot.lane.b32.xlu0 %v237, 48
    %v4488 = vpop.permute.xlu0 %4487
    %v4492 = vsel %vm1021, %v4384, 0
    %v4495 = vsel %vm1021, %v4385, 0
    %4497 = vmatprep.subr.mxu0 0.0
    %4498 = vmatpush1.msra.mxu0 0.0
    %4499 = vmatprep.subr.mxu0 0.0
    %4500 = vmatpush1.msra.mxu0 0.0
    %4501 = vmatprep.subr.mxu0 0.0
    %4502 = vmatpush1.msra.mxu0 0.0
    %4503 = vmatprep.subr.mxu0 0.0
    %4504 = vmatpush1.msra.mxu0 0.0
    %4505 = vmatprep.subr.mxu0 0.0
    %4506 = vmatpush1.msra.mxu0 0.0
    %4507 = vmatprep.subr.mxu0 0.0
    %4508 = vmatpush1.msra.mxu0 0.0
    %4509 = vmatprep.subr.mxu0 0.0
    %4510 = vmatpush1.msra.mxu0 0.0
    %4511 = vmatprep.subr.mxu0 0.0
    %4512 = vmatpush1.msra.mxu0 0.0
    %4513 = vmatprep.subr.mxu0 0.0
    %4514 = vmatpush1.msra.mxu0 0.0
    %4515 = vmatprep.subr.mxu0 0.0
    %4516 = vmatpush1.msra.mxu0 0.0
    %4517 = vmatprep.subr.mxu0 0.0
    %4518 = vmatpush1.msra.mxu0 0.0
    %4519 = vmatprep.subr.mxu0 0.0
    %4520 = vmatpush1.msra.mxu0 0.0
    %4521 = vmatprep.subr.mxu0 0.0
    %4522 = vmatpush1.msra.mxu0 0.0
    %4523 = vmatprep.subr.mxu0 0.0
    %4524 = vmatpush1.msra.mxu0 0.0
    %4525 = vmatprep.subr.mxu0 0.0
    %4526 = vmatpush1.msra.mxu0 %v4488
    %4527 = vmatprep.subr.mxu0 0.0
    %4528 = vmatpush1.msra.mxu0 %v4486
    %4529 = vmatprep.subr.mxu0 0.0
    %4530 = vmatpush2.msra.mxu0 0.0
    %4531 = vmatprep.subr.mxu0 0.0
    %4532 = vmatpush2.msra.mxu0 0.0
    %4533 = vmatprep.subr.mxu0 0.0
    %4534 = vmatpush2.msra.mxu0 0.0
    %4535 = vmatprep.subr.mxu0 0.0
    %4536 = vmatpush2.msra.mxu0 0.0
    %4537 = vmatprep.subr.mxu0 0.0
    %4538 = vmatpush2.msra.mxu0 0.0
    %4539 = vmatprep.subr.mxu0 0.0
    %4540 = vmatpush2.msra.mxu0 0.0
    %4541 = vmatprep.subr.mxu0 0.0
    %4542 = vmatpush2.msra.mxu0 0.0
    %4543 = vmatprep.subr.mxu0 0.0
    %4544 = vmatpush2.msra.mxu0 0.0
    %4545 = vmatprep.subr.mxu0 0.0
    %4546 = vmatpush2.msra.mxu0 0.0
    %4547 = vmatprep.subr.mxu0 0.0
    %4548 = vmatpush2.msra.mxu0 0.0
    %4549 = vmatprep.subr.mxu0 0.0
    %4550 = vmatpush2.msra.mxu0 0.0
    %4551 = vmatprep.subr.mxu0 0.0
    %4552 = vmatpush2.msra.mxu0 0.0
    %4553 = vmatprep.subr.mxu0 0.0
    %4554 = vmatpush2.msra.mxu0 0.0
    %4555 = vmatprep.subr.mxu0 0.0
    %4556 = vmatpush2.msra.mxu0 0.0
    %4557 = vmatprep.subr.mxu0 0.0
    %4558 = vmatpush2.msra.mxu0 0.0
    %4559 = vmatprep.subr.mxu0 0.0
    %4560 = vmatpush2.msra.mxu0 0.0
    %4561 = vmatprep.mubr.f32.mxu0 0.0
    %4562 = vmatmul.mubr.f32.gmra.mxu0 %v4492
    %v4563 = vpop.f32.mrf.mxu0
    %v4564 = vadd.f32 0.0, %v4563
    %v4565 = vpop.f32.mrf.mxu0
    %4566 = vmatprep.mubr.f32.mxu0 0.0
    %4567 = vmatmul.mubr.f32.gmra.mxu0 %v4495
    %v4568 = vpop.f32.mrf.mxu0
    %v4569 = vadd.f32 0.0, %v4568
    %v4570 = vpop.f32.mrf.mxu0
    %4571 = vdwg.mxu0
    %4572 = vrot.lane.b32.xlu0 %v242, 48
    %v4573 = vpop.permute.xlu0 %4572
    %4574 = vrot.lane.b32.xlu0 %v247, 48
    %v4575 = vpop.permute.xlu0 %4574
    %v4579 = vsel %vm1021, %v4386, 0
    %v4582 = vsel %vm1021, %v4387, 0
    %4584 = vmatprep.subr.mxu0 0.0
    %4585 = vmatpush1.msra.mxu0 0.0
    %4586 = vmatprep.subr.mxu0 0.0
    %4587 = vmatpush1.msra.mxu0 0.0
    %4588 = vmatprep.subr.mxu0 0.0
    %4589 = vmatpush1.msra.mxu0 0.0
    %4590 = vmatprep.subr.mxu0 0.0
    %4591 = vmatpush1.msra.mxu0 0.0
    %4592 = vmatprep.subr.mxu0 0.0
    %4593 = vmatpush1.msra.mxu0 0.0
    %4594 = vmatprep.subr.mxu0 0.0
    %4595 = vmatpush1.msra.mxu0 0.0
    %4596 = vmatprep.subr.mxu0 0.0
    %4597 = vmatpush1.msra.mxu0 0.0
    %4598 = vmatprep.subr.mxu0 0.0
    %4599 = vmatpush1.msra.mxu0 0.0
    %4600 = vmatprep.subr.mxu0 0.0
    %4601 = vmatpush1.msra.mxu0 0.0
    %4602 = vmatprep.subr.mxu0 0.0
    %4603 = vmatpush1.msra.mxu0 0.0
    %4604 = vmatprep.subr.mxu0 0.0
    %4605 = vmatpush1.msra.mxu0 0.0
    %4606 = vmatprep.subr.mxu0 0.0
    %4607 = vmatpush1.msra.mxu0 0.0
    %4608 = vmatprep.subr.mxu0 0.0
    %4609 = vmatpush1.msra.mxu0 0.0
    %4610 = vmatprep.subr.mxu0 0.0
    %4611 = vmatpush1.msra.mxu0 0.0
    %4612 = vmatprep.subr.mxu0 0.0
    %4613 = vmatpush1.msra.mxu0 %v4575
    %4614 = vmatprep.subr.mxu0 0.0
    %4615 = vmatpush1.msra.mxu0 %v4573
    %4616 = vmatprep.subr.mxu0 0.0
    %4617 = vmatpush2.msra.mxu0 0.0
    %4618 = vmatprep.subr.mxu0 0.0
    %4619 = vmatpush2.msra.mxu0 0.0
    %4620 = vmatprep.subr.mxu0 0.0
    %4621 = vmatpush2.msra.mxu0 0.0
    %4622 = vmatprep.subr.mxu0 0.0
    %4623 = vmatpush2.msra.mxu0 0.0
    %4624 = vmatprep.subr.mxu0 0.0
    %4625 = vmatpush2.msra.mxu0 0.0
    %4626 = vmatprep.subr.mxu0 0.0
    %4627 = vmatpush2.msra.mxu0 0.0
    %4628 = vmatprep.subr.mxu0 0.0
    %4629 = vmatpush2.msra.mxu0 0.0
    %4630 = vmatprep.subr.mxu0 0.0
    %4631 = vmatpush2.msra.mxu0 0.0
    %4632 = vmatprep.subr.mxu0 0.0
    %4633 = vmatpush2.msra.mxu0 0.0
    %4634 = vmatprep.subr.mxu0 0.0
    %4635 = vmatpush2.msra.mxu0 0.0
    %4636 = vmatprep.subr.mxu0 0.0
    %4637 = vmatpush2.msra.mxu0 0.0
    %4638 = vmatprep.subr.mxu0 0.0
    %4639 = vmatpush2.msra.mxu0 0.0
    %4640 = vmatprep.subr.mxu0 0.0
    %4641 = vmatpush2.msra.mxu0 0.0
    %4642 = vmatprep.subr.mxu0 0.0
    %4643 = vmatpush2.msra.mxu0 0.0
    %4644 = vmatprep.subr.mxu0 0.0
    %4645 = vmatpush2.msra.mxu0 0.0
    %4646 = vmatprep.subr.mxu0 0.0
    %4647 = vmatpush2.msra.mxu0 0.0
    %4648 = vmatprep.mubr.f32.mxu0 0.0
    %4649 = vmatmul.mubr.f32.gmra.mxu0 %v4579
    %v4650 = vpop.f32.mrf.mxu0
    %v4651 = vadd.f32 0.0, %v4650
    %v4652 = vpop.f32.mrf.mxu0
    %4653 = vmatprep.mubr.f32.mxu0 0.0
    %4654 = vmatmul.mubr.f32.gmra.mxu0 %v4582
    %v4655 = vpop.f32.mrf.mxu0
    %v4656 = vadd.f32 0.0, %v4655
    %v4657 = vpop.f32.mrf.mxu0
    %4658 = vdwg.mxu0
    %4659 = vrot.lane.b32.xlu0 %v252, 48
    %v4660 = vpop.permute.xlu0 %4659
    %4661 = vrot.lane.b32.xlu0 %v257, 48
    %v4662 = vpop.permute.xlu0 %4661
    %v4666 = vsel %vm1021, %v4388, 0
    %v4669 = vsel %vm1021, %v4389, 0
    %4671 = vmatprep.subr.mxu0 0.0
    %4672 = vmatpush1.msra.mxu0 0.0
    %4673 = vmatprep.subr.mxu0 0.0
    %4674 = vmatpush1.msra.mxu0 0.0
    %4675 = vmatprep.subr.mxu0 0.0
    %4676 = vmatpush1.msra.mxu0 0.0
    %4677 = vmatprep.subr.mxu0 0.0
    %4678 = vmatpush1.msra.mxu0 0.0
    %4679 = vmatprep.subr.mxu0 0.0
    %4680 = vmatpush1.msra.mxu0 0.0
    %4681 = vmatprep.subr.mxu0 0.0
    %4682 = vmatpush1.msra.mxu0 0.0
    %4683 = vmatprep.subr.mxu0 0.0
    %4684 = vmatpush1.msra.mxu0 0.0
    %4685 = vmatprep.subr.mxu0 0.0
    %4686 = vmatpush1.msra.mxu0 0.0
    %4687 = vmatprep.subr.mxu0 0.0
    %4688 = vmatpush1.msra.mxu0 0.0
    %4689 = vmatprep.subr.mxu0 0.0
    %4690 = vmatpush1.msra.mxu0 0.0
    %4691 = vmatprep.subr.mxu0 0.0
    %4692 = vmatpush1.msra.mxu0 0.0
    %4693 = vmatprep.subr.mxu0 0.0
    %4694 = vmatpush1.msra.mxu0 0.0
    %4695 = vmatprep.subr.mxu0 0.0
    %4696 = vmatpush1.msra.mxu0 0.0
    %4697 = vmatprep.subr.mxu0 0.0
    %4698 = vmatpush1.msra.mxu0 0.0
    %4699 = vmatprep.subr.mxu0 0.0
    %4700 = vmatpush1.msra.mxu0 %v4662
    %4701 = vmatprep.subr.mxu0 0.0
    %4702 = vmatpush1.msra.mxu0 %v4660
    %4703 = vmatprep.subr.mxu0 0.0
    %4704 = vmatpush2.msra.mxu0 0.0
    %4705 = vmatprep.subr.mxu0 0.0
    %4706 = vmatpush2.msra.mxu0 0.0
    %4707 = vmatprep.subr.mxu0 0.0
    %4708 = vmatpush2.msra.mxu0 0.0
    %4709 = vmatprep.subr.mxu0 0.0
    %4710 = vmatpush2.msra.mxu0 0.0
    %4711 = vmatprep.subr.mxu0 0.0
    %4712 = vmatpush2.msra.mxu0 0.0
    %4713 = vmatprep.subr.mxu0 0.0
    %4714 = vmatpush2.msra.mxu0 0.0
    %4715 = vmatprep.subr.mxu0 0.0
    %4716 = vmatpush2.msra.mxu0 0.0
    %4717 = vmatprep.subr.mxu0 0.0
    %4718 = vmatpush2.msra.mxu0 0.0
    %4719 = vmatprep.subr.mxu0 0.0
    %4720 = vmatpush2.msra.mxu0 0.0
    %4721 = vmatprep.subr.mxu0 0.0
    %4722 = vmatpush2.msra.mxu0 0.0
    %4723 = vmatprep.subr.mxu0 0.0
    %4724 = vmatpush2.msra.mxu0 0.0
    %4725 = vmatprep.subr.mxu0 0.0
    %4726 = vmatpush2.msra.mxu0 0.0
    %4727 = vmatprep.subr.mxu0 0.0
    %4728 = vmatpush2.msra.mxu0 0.0
    %4729 = vmatprep.subr.mxu0 0.0
    %4730 = vmatpush2.msra.mxu0 0.0
    %4731 = vmatprep.subr.mxu0 0.0
    %4732 = vmatpush2.msra.mxu0 0.0
    %4733 = vmatprep.subr.mxu0 0.0
    %4734 = vmatpush2.msra.mxu0 0.0
    %4735 = vmatprep.mubr.f32.mxu0 0.0
    %4736 = vmatmul.mubr.f32.gmra.mxu0 %v4666
    %v4737 = vpop.f32.mrf.mxu0
    %v4738 = vadd.f32 0.0, %v4737
    %v4739 = vpop.f32.mrf.mxu0
    %4740 = vmatprep.mubr.f32.mxu0 0.0
    %4741 = vmatmul.mubr.f32.gmra.mxu0 %v4669
    %v4742 = vpop.f32.mrf.mxu0
    %v4743 = vadd.f32 0.0, %v4742
    %v4744 = vpop.f32.mrf.mxu0
    %4745 = vdwg.mxu0
    %4746 = vrot.lane.b32.xlu0 %v262, 48
    %v4747 = vpop.permute.xlu0 %4746
    %4748 = vrot.lane.b32.xlu0 %v267, 48
    %v4749 = vpop.permute.xlu0 %4748
    %v4753 = vsel %vm1021, %v4390, 0
    %v4756 = vsel %vm1021, %v4391, 0
    %4758 = vmatprep.subr.mxu0 0.0
    %4759 = vmatpush1.msra.mxu0 0.0
    %4760 = vmatprep.subr.mxu0 0.0
    %4761 = vmatpush1.msra.mxu0 0.0
    %4762 = vmatprep.subr.mxu0 0.0
    %4763 = vmatpush1.msra.mxu0 0.0
    %4764 = vmatprep.subr.mxu0 0.0
    %4765 = vmatpush1.msra.mxu0 0.0
    %4766 = vmatprep.subr.mxu0 0.0
    %4767 = vmatpush1.msra.mxu0 0.0
    %4768 = vmatprep.subr.mxu0 0.0
    %4769 = vmatpush1.msra.mxu0 0.0
    %4770 = vmatprep.subr.mxu0 0.0
    %4771 = vmatpush1.msra.mxu0 0.0
    %4772 = vmatprep.subr.mxu0 0.0
    %4773 = vmatpush1.msra.mxu0 0.0
    %4774 = vmatprep.subr.mxu0 0.0
    %4775 = vmatpush1.msra.mxu0 0.0
    %4776 = vmatprep.subr.mxu0 0.0
    %4777 = vmatpush1.msra.mxu0 0.0
    %4778 = vmatprep.subr.mxu0 0.0
    %4779 = vmatpush1.msra.mxu0 0.0
    %4780 = vmatprep.subr.mxu0 0.0
    %4781 = vmatpush1.msra.mxu0 0.0
    %4782 = vmatprep.subr.mxu0 0.0
    %4783 = vmatpush1.msra.mxu0 0.0
    %4784 = vmatprep.subr.mxu0 0.0
    %4785 = vmatpush1.msra.mxu0 0.0
    %4786 = vmatprep.subr.mxu0 0.0
    %4787 = vmatpush1.msra.mxu0 %v4749
    %4788 = vmatprep.subr.mxu0 0.0
    %4789 = vmatpush1.msra.mxu0 %v4747
    %4790 = vmatprep.subr.mxu0 0.0
    %4791 = vmatpush2.msra.mxu0 0.0
    %4792 = vmatprep.subr.mxu0 0.0
    %4793 = vmatpush2.msra.mxu0 0.0
    %4794 = vmatprep.subr.mxu0 0.0
    %4795 = vmatpush2.msra.mxu0 0.0
    %4796 = vmatprep.subr.mxu0 0.0
    %4797 = vmatpush2.msra.mxu0 0.0
    %4798 = vmatprep.subr.mxu0 0.0
    %4799 = vmatpush2.msra.mxu0 0.0
    %4800 = vmatprep.subr.mxu0 0.0
    %4801 = vmatpush2.msra.mxu0 0.0
    %4802 = vmatprep.subr.mxu0 0.0
    %4803 = vmatpush2.msra.mxu0 0.0
    %4804 = vmatprep.subr.mxu0 0.0
    %4805 = vmatpush2.msra.mxu0 0.0
    %4806 = vmatprep.subr.mxu0 0.0
    %4807 = vmatpush2.msra.mxu0 0.0
    %4808 = vmatprep.subr.mxu0 0.0
    %4809 = vmatpush2.msra.mxu0 0.0
    %4810 = vmatprep.subr.mxu0 0.0
    %4811 = vmatpush2.msra.mxu0 0.0
    %4812 = vmatprep.subr.mxu0 0.0
    %4813 = vmatpush2.msra.mxu0 0.0
    %4814 = vmatprep.subr.mxu0 0.0
    %4815 = vmatpush2.msra.mxu0 0.0
    %4816 = vmatprep.subr.mxu0 0.0
    %4817 = vmatpush2.msra.mxu0 0.0
    %4818 = vmatprep.subr.mxu0 0.0
    %4819 = vmatpush2.msra.mxu0 0.0
    %4820 = vmatprep.subr.mxu0 0.0
    %4821 = vmatpush2.msra.mxu0 0.0
    %4822 = vmatprep.mubr.f32.mxu0 0.0
    %4823 = vmatmul.mubr.f32.gmra.mxu0 %v4753
    %v4824 = vpop.f32.mrf.mxu0
    %v4825 = vadd.f32 0.0, %v4824
    %v4826 = vpop.f32.mrf.mxu0
    %4827 = vmatprep.mubr.f32.mxu0 0.0
    %4828 = vmatmul.mubr.f32.gmra.mxu0 %v4756
    %v4829 = vpop.f32.mrf.mxu0
    %v4830 = vadd.f32 0.0, %v4829
    %v4831 = vpop.f32.mrf.mxu0
    %4832 = vdwg.mxu0
    %4833 = vrot.lane.b32.xlu0 %v272, 48
    %v4834 = vpop.permute.xlu0 %4833
    %4835 = vrot.lane.b32.xlu0 %v277, 48
    %v4836 = vpop.permute.xlu0 %4835
    %v4840 = vsel %vm1021, %v4392, 0
    %v4843 = vsel %vm1021, %v4393, 0
    %4845 = vmatprep.subr.mxu0 0.0
    %4846 = vmatpush1.msra.mxu0 0.0
    %4847 = vmatprep.subr.mxu0 0.0
    %4848 = vmatpush1.msra.mxu0 0.0
    %4849 = vmatprep.subr.mxu0 0.0
    %4850 = vmatpush1.msra.mxu0 0.0
    %4851 = vmatprep.subr.mxu0 0.0
    %4852 = vmatpush1.msra.mxu0 0.0
    %4853 = vmatprep.subr.mxu0 0.0
    %4854 = vmatpush1.msra.mxu0 0.0
    %4855 = vmatprep.subr.mxu0 0.0
    %4856 = vmatpush1.msra.mxu0 0.0
    %4857 = vmatprep.subr.mxu0 0.0
    %4858 = vmatpush1.msra.mxu0 0.0
    %4859 = vmatprep.subr.mxu0 0.0
    %4860 = vmatpush1.msra.mxu0 0.0
    %4861 = vmatprep.subr.mxu0 0.0
    %4862 = vmatpush1.msra.mxu0 0.0
    %4863 = vmatprep.subr.mxu0 0.0
    %4864 = vmatpush1.msra.mxu0 0.0
    %4865 = vmatprep.subr.mxu0 0.0
    %4866 = vmatpush1.msra.mxu0 0.0
    %4867 = vmatprep.subr.mxu0 0.0
    %4868 = vmatpush1.msra.mxu0 0.0
    %4869 = vmatprep.subr.mxu0 0.0
    %4870 = vmatpush1.msra.mxu0 0.0
    %4871 = vmatprep.subr.mxu0 0.0
    %4872 = vmatpush1.msra.mxu0 0.0
    %4873 = vmatprep.subr.mxu0 0.0
    %4874 = vmatpush1.msra.mxu0 %v4836
    %4875 = vmatprep.subr.mxu0 0.0
    %4876 = vmatpush1.msra.mxu0 %v4834
    %4877 = vmatprep.subr.mxu0 0.0
    %4878 = vmatpush2.msra.mxu0 0.0
    %4879 = vmatprep.subr.mxu0 0.0
    %4880 = vmatpush2.msra.mxu0 0.0
    %4881 = vmatprep.subr.mxu0 0.0
    %4882 = vmatpush2.msra.mxu0 0.0
    %4883 = vmatprep.subr.mxu0 0.0
    %4884 = vmatpush2.msra.mxu0 0.0
    %4885 = vmatprep.subr.mxu0 0.0
    %4886 = vmatpush2.msra.mxu0 0.0
    %4887 = vmatprep.subr.mxu0 0.0
    %4888 = vmatpush2.msra.mxu0 0.0
    %4889 = vmatprep.subr.mxu0 0.0
    %4890 = vmatpush2.msra.mxu0 0.0
    %4891 = vmatprep.subr.mxu0 0.0
    %4892 = vmatpush2.msra.mxu0 0.0
    %4893 = vmatprep.subr.mxu0 0.0
    %4894 = vmatpush2.msra.mxu0 0.0
    %4895 = vmatprep.subr.mxu0 0.0
    %4896 = vmatpush2.msra.mxu0 0.0
    %4897 = vmatprep.subr.mxu0 0.0
    %4898 = vmatpush2.msra.mxu0 0.0
    %4899 = vmatprep.subr.mxu0 0.0
    %4900 = vmatpush2.msra.mxu0 0.0
    %4901 = vmatprep.subr.mxu0 0.0
    %4902 = vmatpush2.msra.mxu0 0.0
    %4903 = vmatprep.subr.mxu0 0.0
    %4904 = vmatpush2.msra.mxu0 0.0
    %4905 = vmatprep.subr.mxu0 0.0
    %4906 = vmatpush2.msra.mxu0 0.0
    %4907 = vmatprep.subr.mxu0 0.0
    %4908 = vmatpush2.msra.mxu0 0.0
    %4909 = vmatprep.mubr.f32.mxu0 0.0
    %4910 = vmatmul.mubr.f32.gmra.mxu0 %v4840
    %v4911 = vpop.f32.mrf.mxu0
    %v4912 = vadd.f32 0.0, %v4911
    %v4913 = vpop.f32.mrf.mxu0
    %4914 = vmatprep.mubr.f32.mxu0 0.0
    %4915 = vmatmul.mubr.f32.gmra.mxu0 %v4843
    %v4916 = vpop.f32.mrf.mxu0
    %v4917 = vadd.f32 0.0, %v4916
    %v4918 = vpop.f32.mrf.mxu0
    %4919 = vdwg.mxu0
    %4920 = vrot.lane.b32.xlu0 %v282, 48
    %v4921 = vpop.permute.xlu0 %4920
    %4922 = vrot.lane.b32.xlu0 %v287, 48
    %v4923 = vpop.permute.xlu0 %4922
    %v4927 = vsel %vm1021, %v4394, 0
    %v4930 = vsel %vm1021, %v4395, 0
    %4932 = vmatprep.subr.mxu0 0.0
    %4933 = vmatpush1.msra.mxu0 0.0
    %4934 = vmatprep.subr.mxu0 0.0
    %4935 = vmatpush1.msra.mxu0 0.0
    %4936 = vmatprep.subr.mxu0 0.0
    %4937 = vmatpush1.msra.mxu0 0.0
    %4938 = vmatprep.subr.mxu0 0.0
    %4939 = vmatpush1.msra.mxu0 0.0
    %4940 = vmatprep.subr.mxu0 0.0
    %4941 = vmatpush1.msra.mxu0 0.0
    %4942 = vmatprep.subr.mxu0 0.0
    %4943 = vmatpush1.msra.mxu0 0.0
    %4944 = vmatprep.subr.mxu0 0.0
    %4945 = vmatpush1.msra.mxu0 0.0
    %4946 = vmatprep.subr.mxu0 0.0
    %4947 = vmatpush1.msra.mxu0 0.0
    %4948 = vmatprep.subr.mxu0 0.0
    %4949 = vmatpush1.msra.mxu0 0.0
    %4950 = vmatprep.subr.mxu0 0.0
    %4951 = vmatpush1.msra.mxu0 0.0
    %4952 = vmatprep.subr.mxu0 0.0
    %4953 = vmatpush1.msra.mxu0 0.0
    %4954 = vmatprep.subr.mxu0 0.0
    %4955 = vmatpush1.msra.mxu0 0.0
    %4956 = vmatprep.subr.mxu0 0.0
    %4957 = vmatpush1.msra.mxu0 0.0
    %4958 = vmatprep.subr.mxu0 0.0
    %4959 = vmatpush1.msra.mxu0 0.0
    %4960 = vmatprep.subr.mxu0 0.0
    %4961 = vmatpush1.msra.mxu0 %v4923
    %4962 = vmatprep.subr.mxu0 0.0
    %4963 = vmatpush1.msra.mxu0 %v4921
    %4964 = vmatprep.subr.mxu0 0.0
    %4965 = vmatpush2.msra.mxu0 0.0
    %4966 = vmatprep.subr.mxu0 0.0
    %4967 = vmatpush2.msra.mxu0 0.0
    %4968 = vmatprep.subr.mxu0 0.0
    %4969 = vmatpush2.msra.mxu0 0.0
    %4970 = vmatprep.subr.mxu0 0.0
    %4971 = vmatpush2.msra.mxu0 0.0
    %4972 = vmatprep.subr.mxu0 0.0
    %4973 = vmatpush2.msra.mxu0 0.0
    %4974 = vmatprep.subr.mxu0 0.0
    %4975 = vmatpush2.msra.mxu0 0.0
    %4976 = vmatprep.subr.mxu0 0.0
    %4977 = vmatpush2.msra.mxu0 0.0
    %4978 = vmatprep.subr.mxu0 0.0
    %4979 = vmatpush2.msra.mxu0 0.0
    %4980 = vmatprep.subr.mxu0 0.0
    %4981 = vmatpush2.msra.mxu0 0.0
    %4982 = vmatprep.subr.mxu0 0.0
    %4983 = vmatpush2.msra.mxu0 0.0
    %4984 = vmatprep.subr.mxu0 0.0
    %4985 = vmatpush2.msra.mxu0 0.0
    %4986 = vmatprep.subr.mxu0 0.0
    %4987 = vmatpush2.msra.mxu0 0.0
    %4988 = vmatprep.subr.mxu0 0.0
    %4989 = vmatpush2.msra.mxu0 0.0
    %4990 = vmatprep.subr.mxu0 0.0
    %4991 = vmatpush2.msra.mxu0 0.0
    %4992 = vmatprep.subr.mxu0 0.0
    %4993 = vmatpush2.msra.mxu0 0.0
    %4994 = vmatprep.subr.mxu0 0.0
    %4995 = vmatpush2.msra.mxu0 0.0
    %4996 = vmatprep.mubr.f32.mxu0 0.0
    %4997 = vmatmul.mubr.f32.gmra.mxu0 %v4927
    %v4998 = vpop.f32.mrf.mxu0
    %v4999 = vadd.f32 0.0, %v4998
    %v5000 = vpop.f32.mrf.mxu0
    %5001 = vmatprep.mubr.f32.mxu0 0.0
    %5002 = vmatmul.mubr.f32.gmra.mxu0 %v4930
    %v5003 = vpop.f32.mrf.mxu0
    %v5004 = vadd.f32 0.0, %v5003
    %v5005 = vpop.f32.mrf.mxu0
    %5006 = vdwg.mxu0
    %5007 = vrot.lane.b32.xlu0 %v292, 48
    %v5008 = vpop.permute.xlu0 %5007
    %5009 = vrot.lane.b32.xlu0 %v297, 48
    %v5010 = vpop.permute.xlu0 %5009
    %v5014 = vsel %vm1021, %v4396, 0
    %v5017 = vsel %vm1021, %v4397, 0
    %5019 = vmatprep.subr.mxu0 0.0
    %5020 = vmatpush1.msra.mxu0 0.0
    %5021 = vmatprep.subr.mxu0 0.0
    %5022 = vmatpush1.msra.mxu0 0.0
    %5023 = vmatprep.subr.mxu0 0.0
    %5024 = vmatpush1.msra.mxu0 0.0
    %5025 = vmatprep.subr.mxu0 0.0
    %5026 = vmatpush1.msra.mxu0 0.0
    %5027 = vmatprep.subr.mxu0 0.0
    %5028 = vmatpush1.msra.mxu0 0.0
    %5029 = vmatprep.subr.mxu0 0.0
    %5030 = vmatpush1.msra.mxu0 0.0
    %5031 = vmatprep.subr.mxu0 0.0
    %5032 = vmatpush1.msra.mxu0 0.0
    %5033 = vmatprep.subr.mxu0 0.0
    %5034 = vmatpush1.msra.mxu0 0.0
    %5035 = vmatprep.subr.mxu0 0.0
    %5036 = vmatpush1.msra.mxu0 0.0
    %5037 = vmatprep.subr.mxu0 0.0
    %5038 = vmatpush1.msra.mxu0 0.0
    %5039 = vmatprep.subr.mxu0 0.0
    %5040 = vmatpush1.msra.mxu0 0.0
    %5041 = vmatprep.subr.mxu0 0.0
    %5042 = vmatpush1.msra.mxu0 0.0
    %5043 = vmatprep.subr.mxu0 0.0
    %5044 = vmatpush1.msra.mxu0 0.0
    %5045 = vmatprep.subr.mxu0 0.0
    %5046 = vmatpush1.msra.mxu0 0.0
    %5047 = vmatprep.subr.mxu0 0.0
    %5048 = vmatpush1.msra.mxu0 %v5010
    %5049 = vmatprep.subr.mxu0 0.0
    %5050 = vmatpush1.msra.mxu0 %v5008
    %5051 = vmatprep.subr.mxu0 0.0
    %5052 = vmatpush2.msra.mxu0 0.0
    %5053 = vmatprep.subr.mxu0 0.0
    %5054 = vmatpush2.msra.mxu0 0.0
    %5055 = vmatprep.subr.mxu0 0.0
    %5056 = vmatpush2.msra.mxu0 0.0
    %5057 = vmatprep.subr.mxu0 0.0
    %5058 = vmatpush2.msra.mxu0 0.0
    %5059 = vmatprep.subr.mxu0 0.0
    %5060 = vmatpush2.msra.mxu0 0.0
    %5061 = vmatprep.subr.mxu0 0.0
    %5062 = vmatpush2.msra.mxu0 0.0
    %5063 = vmatprep.subr.mxu0 0.0
    %5064 = vmatpush2.msra.mxu0 0.0
    %5065 = vmatprep.subr.mxu0 0.0
    %5066 = vmatpush2.msra.mxu0 0.0
    %5067 = vmatprep.subr.mxu0 0.0
    %5068 = vmatpush2.msra.mxu0 0.0
    %5069 = vmatprep.subr.mxu0 0.0
    %5070 = vmatpush2.msra.mxu0 0.0
    %5071 = vmatprep.subr.mxu0 0.0
    %5072 = vmatpush2.msra.mxu0 0.0
    %5073 = vmatprep.subr.mxu0 0.0
    %5074 = vmatpush2.msra.mxu0 0.0
    %5075 = vmatprep.subr.mxu0 0.0
    %5076 = vmatpush2.msra.mxu0 0.0
    %5077 = vmatprep.subr.mxu0 0.0
    %5078 = vmatpush2.msra.mxu0 0.0
    %5079 = vmatprep.subr.mxu0 0.0
    %5080 = vmatpush2.msra.mxu0 0.0
    %5081 = vmatprep.subr.mxu0 0.0
    %5082 = vmatpush2.msra.mxu0 0.0
    %5083 = vmatprep.mubr.f32.mxu0 0.0
    %5084 = vmatmul.mubr.f32.gmra.mxu0 %v5014
    %v5085 = vpop.f32.mrf.mxu0
    %v5086 = vadd.f32 0.0, %v5085
    %v5087 = vpop.f32.mrf.mxu0
    %5088 = vmatprep.mubr.f32.mxu0 0.0
    %5089 = vmatmul.mubr.f32.gmra.mxu0 %v5017
    %v5090 = vpop.f32.mrf.mxu0
    %v5091 = vadd.f32 0.0, %v5090
    %v5092 = vpop.f32.mrf.mxu0
    %5093 = vdwg.mxu0
    %5094 = vrot.lane.b32.xlu0 %v222, 104
    %v5095 = vpop.permute.xlu0 %5094
    %5096 = vrot.lane.b32.xlu0 %v227, 104
    %v5097 = vpop.permute.xlu0 %5096
    %5098 = vrot.lane.b32.xlu0 %v222, 72
    %v5099 = vpop.permute.xlu0 %5098
    %5100 = vrot.lane.b32.xlu0 %v227, 72
    %v5101 = vpop.permute.xlu0 %5100
    %v5102 = vsel %vm314, %v5095, 0
    %v5104 = vsel %vm314, %v5097, 0
    %v5106 = vsel %vm314, %v5099, 0
    %v5108 = vsel %vm314, %v5101, 0
    %5110 = vmatprep.subr.mxu0 0.0
    %5111 = vmatpush1.xpose.msra.mxu0 0.0
    %5112 = vmatprep.subr.mxu0 0.0
    %5113 = vmatpush1.xpose.msra.mxu0 0.0
    %5114 = vmatprep.subr.mxu0 0.0
    %5115 = vmatpush1.xpose.msra.mxu0 0.0
    %5116 = vmatprep.subr.mxu0 0.0
    %5117 = vmatpush1.xpose.msra.mxu0 0.0
    %5118 = vmatprep.subr.mxu0 0.0
    %5119 = vmatpush1.xpose.msra.mxu0 0.0
    %5120 = vmatprep.subr.mxu0 0.0
    %5121 = vmatpush1.xpose.msra.mxu0 0.0
    %5122 = vmatprep.subr.mxu0 0.0
    %5123 = vmatpush1.xpose.msra.mxu0 0.0
    %5124 = vmatprep.subr.mxu0 0.0
    %5125 = vmatpush1.xpose.msra.mxu0 0.0
    %5126 = vmatprep.subr.mxu0 0.0
    %5127 = vmatpush1.xpose.msra.mxu0 0.0
    %5128 = vmatprep.subr.mxu0 0.0
    %5129 = vmatpush1.xpose.msra.mxu0 0.0
    %5130 = vmatprep.subr.mxu0 0.0
    %5131 = vmatpush1.xpose.msra.mxu0 0.0
    %5132 = vmatprep.subr.mxu0 0.0
    %5133 = vmatpush1.xpose.msra.mxu0 0.0
    %5134 = vmatprep.subr.mxu0 0.0
    %5135 = vmatpush1.xpose.msra.mxu0 0.0
    %5136 = vmatprep.subr.mxu0 0.0
    %5137 = vmatpush1.xpose.msra.mxu0 0.0
    %5138 = vmatprep.subr.mxu0 0.0
    %5139 = vmatpush1.xpose.msra.mxu0 %v5108
    %5140 = vmatprep.subr.mxu0 0.0
    %5141 = vmatpush1.xpose.msra.mxu0 %v5106
    %5142 = vmatprep.subr.mxu0 0.0
    %5143 = vmatpush2.xpose.msra.mxu0 0.0
    %5144 = vmatprep.subr.mxu0 0.0
    %5145 = vmatpush2.xpose.msra.mxu0 0.0
    %5146 = vmatprep.subr.mxu0 0.0
    %5147 = vmatpush2.xpose.msra.mxu0 0.0
    %5148 = vmatprep.subr.mxu0 0.0
    %5149 = vmatpush2.xpose.msra.mxu0 0.0
    %5150 = vmatprep.subr.mxu0 0.0
    %5151 = vmatpush2.xpose.msra.mxu0 0.0
    %5152 = vmatprep.subr.mxu0 0.0
    %5153 = vmatpush2.xpose.msra.mxu0 0.0
    %5154 = vmatprep.subr.mxu0 0.0
    %5155 = vmatpush2.xpose.msra.mxu0 0.0
    %5156 = vmatprep.subr.mxu0 0.0
    %5157 = vmatpush2.xpose.msra.mxu0 0.0
    %5158 = vmatprep.subr.mxu0 0.0
    %5159 = vmatpush2.xpose.msra.mxu0 0.0
    %5160 = vmatprep.subr.mxu0 0.0
    %5161 = vmatpush2.xpose.msra.mxu0 0.0
    %5162 = vmatprep.subr.mxu0 0.0
    %5163 = vmatpush2.xpose.msra.mxu0 0.0
    %5164 = vmatprep.subr.mxu0 0.0
    %5165 = vmatpush2.xpose.msra.mxu0 0.0
    %5166 = vmatprep.subr.mxu0 0.0
    %5167 = vmatpush2.xpose.msra.mxu0 0.0
    %5168 = vmatprep.subr.mxu0 0.0
    %5169 = vmatpush2.xpose.msra.mxu0 0.0
    %5170 = vmatprep.subr.mxu0 0.0
    %5171 = vmatpush2.xpose.msra.mxu0 0.0
    %5172 = vmatprep.subr.mxu0 0.0
    %5173 = vmatpush2.xpose.msra.mxu0 0.0
    %5174 = vmatprep.mubr.f32.mxu0 0.0
    %5175 = vmatmul.mubr.f32.gmra.mxu0 %v5102
    %v5176 = vpop.f32.mrf.mxu0
    %v5177 = vadd.f32 %v306, %v5176
    %v5178 = vpop.f32.mrf.mxu0
    %5179 = vmatprep.mubr.f32.mxu0 0.0
    %5180 = vmatmul.mubr.f32.gmra.mxu0 %v5104
    %v5181 = vpop.f32.mrf.mxu0
    %v5182 = vadd.f32 %v307, %v5181
    %v5183 = vpop.f32.mrf.mxu0
    %5184 = vdwg.mxu0
    %5185 = vrot.lane.b32.xlu0 %v232, 104
    %v5186 = vpop.permute.xlu0 %5185
    %5187 = vrot.lane.b32.xlu0 %v237, 104
    %v5188 = vpop.permute.xlu0 %5187
    %5189 = vrot.lane.b32.xlu0 %v232, 72
    %v5190 = vpop.permute.xlu0 %5189
    %5191 = vrot.lane.b32.xlu0 %v237, 72
    %v5192 = vpop.permute.xlu0 %5191
    %v5193 = vsel %vm314, %v5186, 0
    %v5195 = vsel %vm314, %v5188, 0
    %v5197 = vsel %vm314, %v5190, 0
    %v5199 = vsel %vm314, %v5192, 0
    %5201 = vmatprep.subr.mxu0 0.0
    %5202 = vmatpush1.xpose.msra.mxu0 0.0
    %5203 = vmatprep.subr.mxu0 0.0
    %5204 = vmatpush1.xpose.msra.mxu0 0.0
    %5205 = vmatprep.subr.mxu0 0.0
    %5206 = vmatpush1.xpose.msra.mxu0 0.0
    %5207 = vmatprep.subr.mxu0 0.0
    %5208 = vmatpush1.xpose.msra.mxu0 0.0
    %5209 = vmatprep.subr.mxu0 0.0
    %5210 = vmatpush1.xpose.msra.mxu0 0.0
    %5211 = vmatprep.subr.mxu0 0.0
    %5212 = vmatpush1.xpose.msra.mxu0 0.0
    %5213 = vmatprep.subr.mxu0 0.0
    %5214 = vmatpush1.xpose.msra.mxu0 0.0
    %5215 = vmatprep.subr.mxu0 0.0
    %5216 = vmatpush1.xpose.msra.mxu0 0.0
    %5217 = vmatprep.subr.mxu0 0.0
    %5218 = vmatpush1.xpose.msra.mxu0 0.0
    %5219 = vmatprep.subr.mxu0 0.0
    %5220 = vmatpush1.xpose.msra.mxu0 0.0
    %5221 = vmatprep.subr.mxu0 0.0
    %5222 = vmatpush1.xpose.msra.mxu0 0.0
    %5223 = vmatprep.subr.mxu0 0.0
    %5224 = vmatpush1.xpose.msra.mxu0 0.0
    %5225 = vmatprep.subr.mxu0 0.0
    %5226 = vmatpush1.xpose.msra.mxu0 0.0
    %5227 = vmatprep.subr.mxu0 0.0
    %5228 = vmatpush1.xpose.msra.mxu0 0.0
    %5229 = vmatprep.subr.mxu0 0.0
    %5230 = vmatpush1.xpose.msra.mxu0 %v5199
    %5231 = vmatprep.subr.mxu0 0.0
    %5232 = vmatpush1.xpose.msra.mxu0 %v5197
    %5233 = vmatprep.subr.mxu0 0.0
    %5234 = vmatpush2.xpose.msra.mxu0 0.0
    %5235 = vmatprep.subr.mxu0 0.0
    %5236 = vmatpush2.xpose.msra.mxu0 0.0
    %5237 = vmatprep.subr.mxu0 0.0
    %5238 = vmatpush2.xpose.msra.mxu0 0.0
    %5239 = vmatprep.subr.mxu0 0.0
    %5240 = vmatpush2.xpose.msra.mxu0 0.0
    %5241 = vmatprep.subr.mxu0 0.0
    %5242 = vmatpush2.xpose.msra.mxu0 0.0
    %5243 = vmatprep.subr.mxu0 0.0
    %5244 = vmatpush2.xpose.msra.mxu0 0.0
    %5245 = vmatprep.subr.mxu0 0.0
    %5246 = vmatpush2.xpose.msra.mxu0 0.0
    %5247 = vmatprep.subr.mxu0 0.0
    %5248 = vmatpush2.xpose.msra.mxu0 0.0
    %5249 = vmatprep.subr.mxu0 0.0
    %5250 = vmatpush2.xpose.msra.mxu0 0.0
    %5251 = vmatprep.subr.mxu0 0.0
    %5252 = vmatpush2.xpose.msra.mxu0 0.0
    %5253 = vmatprep.subr.mxu0 0.0
    %5254 = vmatpush2.xpose.msra.mxu0 0.0
    %5255 = vmatprep.subr.mxu0 0.0
    %5256 = vmatpush2.xpose.msra.mxu0 0.0
    %5257 = vmatprep.subr.mxu0 0.0
    %5258 = vmatpush2.xpose.msra.mxu0 0.0
    %5259 = vmatprep.subr.mxu0 0.0
    %5260 = vmatpush2.xpose.msra.mxu0 0.0
    %5261 = vmatprep.subr.mxu0 0.0
    %5262 = vmatpush2.xpose.msra.mxu0 0.0
    %5263 = vmatprep.subr.mxu0 0.0
    %5264 = vmatpush2.xpose.msra.mxu0 0.0
    %5265 = vmatprep.mubr.f32.mxu0 0.0
    %5266 = vmatmul.mubr.f32.gmra.mxu0 %v5193
    %v5267 = vpop.f32.mrf.mxu0
    %v5268 = vadd.f32 %v306, %v5267
    %v5269 = vpop.f32.mrf.mxu0
    %5270 = vmatprep.mubr.f32.mxu0 0.0
    %5271 = vmatmul.mubr.f32.gmra.mxu0 %v5195
    %v5272 = vpop.f32.mrf.mxu0
    %v5273 = vadd.f32 %v307, %v5272
    %v5274 = vpop.f32.mrf.mxu0
    %5275 = vdwg.mxu0
    %5276 = vrot.lane.b32.xlu0 %v242, 104
    %v5277 = vpop.permute.xlu0 %5276
    %5278 = vrot.lane.b32.xlu0 %v247, 104
    %v5279 = vpop.permute.xlu0 %5278
    %5280 = vrot.lane.b32.xlu0 %v242, 72
    %v5281 = vpop.permute.xlu0 %5280
    %5282 = vrot.lane.b32.xlu0 %v247, 72
    %v5283 = vpop.permute.xlu0 %5282
    %v5284 = vsel %vm314, %v5277, 0
    %v5286 = vsel %vm314, %v5279, 0
    %v5288 = vsel %vm314, %v5281, 0
    %v5290 = vsel %vm314, %v5283, 0
    %5292 = vmatprep.subr.mxu0 0.0
    %5293 = vmatpush1.xpose.msra.mxu0 0.0
    %5294 = vmatprep.subr.mxu0 0.0
    %5295 = vmatpush1.xpose.msra.mxu0 0.0
    %5296 = vmatprep.subr.mxu0 0.0
    %5297 = vmatpush1.xpose.msra.mxu0 0.0
    %5298 = vmatprep.subr.mxu0 0.0
    %5299 = vmatpush1.xpose.msra.mxu0 0.0
    %5300 = vmatprep.subr.mxu0 0.0
    %5301 = vmatpush1.xpose.msra.mxu0 0.0
    %5302 = vmatprep.subr.mxu0 0.0
    %5303 = vmatpush1.xpose.msra.mxu0 0.0
    %5304 = vmatprep.subr.mxu0 0.0
    %5305 = vmatpush1.xpose.msra.mxu0 0.0
    %5306 = vmatprep.subr.mxu0 0.0
    %5307 = vmatpush1.xpose.msra.mxu0 0.0
    %5308 = vmatprep.subr.mxu0 0.0
    %5309 = vmatpush1.xpose.msra.mxu0 0.0
    %5310 = vmatprep.subr.mxu0 0.0
    %5311 = vmatpush1.xpose.msra.mxu0 0.0
    %5312 = vmatprep.subr.mxu0 0.0
    %5313 = vmatpush1.xpose.msra.mxu0 0.0
    %5314 = vmatprep.subr.mxu0 0.0
    %5315 = vmatpush1.xpose.msra.mxu0 0.0
    %5316 = vmatprep.subr.mxu0 0.0
    %5317 = vmatpush1.xpose.msra.mxu0 0.0
    %5318 = vmatprep.subr.mxu0 0.0
    %5319 = vmatpush1.xpose.msra.mxu0 0.0
    %5320 = vmatprep.subr.mxu0 0.0
    %5321 = vmatpush1.xpose.msra.mxu0 %v5290
    %5322 = vmatprep.subr.mxu0 0.0
    %5323 = vmatpush1.xpose.msra.mxu0 %v5288
    %5324 = vmatprep.subr.mxu0 0.0
    %5325 = vmatpush2.xpose.msra.mxu0 0.0
    %5326 = vmatprep.subr.mxu0 0.0
    %5327 = vmatpush2.xpose.msra.mxu0 0.0
    %5328 = vmatprep.subr.mxu0 0.0
    %5329 = vmatpush2.xpose.msra.mxu0 0.0
    %5330 = vmatprep.subr.mxu0 0.0
    %5331 = vmatpush2.xpose.msra.mxu0 0.0
    %5332 = vmatprep.subr.mxu0 0.0
    %5333 = vmatpush2.xpose.msra.mxu0 0.0
    %5334 = vmatprep.subr.mxu0 0.0
    %5335 = vmatpush2.xpose.msra.mxu0 0.0
    %5336 = vmatprep.subr.mxu0 0.0
    %5337 = vmatpush2.xpose.msra.mxu0 0.0
    %5338 = vmatprep.subr.mxu0 0.0
    %5339 = vmatpush2.xpose.msra.mxu0 0.0
    %5340 = vmatprep.subr.mxu0 0.0
    %5341 = vmatpush2.xpose.msra.mxu0 0.0
    %5342 = vmatprep.subr.mxu0 0.0
    %5343 = vmatpush2.xpose.msra.mxu0 0.0
    %5344 = vmatprep.subr.mxu0 0.0
    %5345 = vmatpush2.xpose.msra.mxu0 0.0
    %5346 = vmatprep.subr.mxu0 0.0
    %5347 = vmatpush2.xpose.msra.mxu0 0.0
    %5348 = vmatprep.subr.mxu0 0.0
    %5349 = vmatpush2.xpose.msra.mxu0 0.0
    %5350 = vmatprep.subr.mxu0 0.0
    %5351 = vmatpush2.xpose.msra.mxu0 0.0
    %5352 = vmatprep.subr.mxu0 0.0
    %5353 = vmatpush2.xpose.msra.mxu0 0.0
    %5354 = vmatprep.subr.mxu0 0.0
    %5355 = vmatpush2.xpose.msra.mxu0 0.0
    %5356 = vmatprep.mubr.f32.mxu0 0.0
    %5357 = vmatmul.mubr.f32.gmra.mxu0 %v5284
    %v5358 = vpop.f32.mrf.mxu0
    %v5359 = vadd.f32 %v306, %v5358
    %v5360 = vpop.f32.mrf.mxu0
    %5361 = vmatprep.mubr.f32.mxu0 0.0
    %5362 = vmatmul.mubr.f32.gmra.mxu0 %v5286
    %v5363 = vpop.f32.mrf.mxu0
    %v5364 = vadd.f32 %v307, %v5363
    %v5365 = vpop.f32.mrf.mxu0
    %5366 = vdwg.mxu0
    %5367 = vrot.lane.b32.xlu0 %v252, 104
    %v5368 = vpop.permute.xlu0 %5367
    %5369 = vrot.lane.b32.xlu0 %v257, 104
    %v5370 = vpop.permute.xlu0 %5369
    %5371 = vrot.lane.b32.xlu0 %v252, 72
    %v5372 = vpop.permute.xlu0 %5371
    %5373 = vrot.lane.b32.xlu0 %v257, 72
    %v5374 = vpop.permute.xlu0 %5373
    %v5375 = vsel %vm314, %v5368, 0
    %v5377 = vsel %vm314, %v5370, 0
    %v5379 = vsel %vm314, %v5372, 0
    %v5381 = vsel %vm314, %v5374, 0
    %5383 = vmatprep.subr.mxu0 0.0
    %5384 = vmatpush1.xpose.msra.mxu0 0.0
    %5385 = vmatprep.subr.mxu0 0.0
    %5386 = vmatpush1.xpose.msra.mxu0 0.0
    %5387 = vmatprep.subr.mxu0 0.0
    %5388 = vmatpush1.xpose.msra.mxu0 0.0
    %5389 = vmatprep.subr.mxu0 0.0
    %5390 = vmatpush1.xpose.msra.mxu0 0.0
    %5391 = vmatprep.subr.mxu0 0.0
    %5392 = vmatpush1.xpose.msra.mxu0 0.0
    %5393 = vmatprep.subr.mxu0 0.0
    %5394 = vmatpush1.xpose.msra.mxu0 0.0
    %5395 = vmatprep.subr.mxu0 0.0
    %5396 = vmatpush1.xpose.msra.mxu0 0.0
    %5397 = vmatprep.subr.mxu0 0.0
    %5398 = vmatpush1.xpose.msra.mxu0 0.0
    %5399 = vmatprep.subr.mxu0 0.0
    %5400 = vmatpush1.xpose.msra.mxu0 0.0
    %5401 = vmatprep.subr.mxu0 0.0
    %5402 = vmatpush1.xpose.msra.mxu0 0.0
    %5403 = vmatprep.subr.mxu0 0.0
    %5404 = vmatpush1.xpose.msra.mxu0 0.0
    %5405 = vmatprep.subr.mxu0 0.0
    %5406 = vmatpush1.xpose.msra.mxu0 0.0
    %5407 = vmatprep.subr.mxu0 0.0
    %5408 = vmatpush1.xpose.msra.mxu0 0.0
    %5409 = vmatprep.subr.mxu0 0.0
    %5410 = vmatpush1.xpose.msra.mxu0 0.0
    %5411 = vmatprep.subr.mxu0 0.0
    %5412 = vmatpush1.xpose.msra.mxu0 %v5381
    %5413 = vmatprep.subr.mxu0 0.0
    %5414 = vmatpush1.xpose.msra.mxu0 %v5379
    %5415 = vmatprep.subr.mxu0 0.0
    %5416 = vmatpush2.xpose.msra.mxu0 0.0
    %5417 = vmatprep.subr.mxu0 0.0
    %5418 = vmatpush2.xpose.msra.mxu0 0.0
    %5419 = vmatprep.subr.mxu0 0.0
    %5420 = vmatpush2.xpose.msra.mxu0 0.0
    %5421 = vmatprep.subr.mxu0 0.0
    %5422 = vmatpush2.xpose.msra.mxu0 0.0
    %5423 = vmatprep.subr.mxu0 0.0
    %5424 = vmatpush2.xpose.msra.mxu0 0.0
    %5425 = vmatprep.subr.mxu0 0.0
    %5426 = vmatpush2.xpose.msra.mxu0 0.0
    %5427 = vmatprep.subr.mxu0 0.0
    %5428 = vmatpush2.xpose.msra.mxu0 0.0
    %5429 = vmatprep.subr.mxu0 0.0
    %5430 = vmatpush2.xpose.msra.mxu0 0.0
    %5431 = vmatprep.subr.mxu0 0.0
    %5432 = vmatpush2.xpose.msra.mxu0 0.0
    %5433 = vmatprep.subr.mxu0 0.0
    %5434 = vmatpush2.xpose.msra.mxu0 0.0
    %5435 = vmatprep.subr.mxu0 0.0
    %5436 = vmatpush2.xpose.msra.mxu0 0.0
    %5437 = vmatprep.subr.mxu0 0.0
    %5438 = vmatpush2.xpose.msra.mxu0 0.0
    %5439 = vmatprep.subr.mxu0 0.0
    %5440 = vmatpush2.xpose.msra.mxu0 0.0
    %5441 = vmatprep.subr.mxu0 0.0
    %5442 = vmatpush2.xpose.msra.mxu0 0.0
    %5443 = vmatprep.subr.mxu0 0.0
    %5444 = vmatpush2.xpose.msra.mxu0 0.0
    %5445 = vmatprep.subr.mxu0 0.0
    %5446 = vmatpush2.xpose.msra.mxu0 0.0
    %5447 = vmatprep.mubr.f32.mxu0 0.0
    %5448 = vmatmul.mubr.f32.gmra.mxu0 %v5375
    %v5449 = vpop.f32.mrf.mxu0
    %v5450 = vadd.f32 %v306, %v5449
    %v5451 = vpop.f32.mrf.mxu0
    %5452 = vmatprep.mubr.f32.mxu0 0.0
    %5453 = vmatmul.mubr.f32.gmra.mxu0 %v5377
    %v5454 = vpop.f32.mrf.mxu0
    %v5455 = vadd.f32 %v307, %v5454
    %v5456 = vpop.f32.mrf.mxu0
    %5457 = vdwg.mxu0
    %5458 = vrot.lane.b32.xlu0 %v262, 104
    %v5459 = vpop.permute.xlu0 %5458
    %5460 = vrot.lane.b32.xlu0 %v267, 104
    %v5461 = vpop.permute.xlu0 %5460
    %5462 = vrot.lane.b32.xlu0 %v262, 72
    %v5463 = vpop.permute.xlu0 %5462
    %5464 = vrot.lane.b32.xlu0 %v267, 72
    %v5465 = vpop.permute.xlu0 %5464
    %v5466 = vsel %vm314, %v5459, 0
    %v5468 = vsel %vm314, %v5461, 0
    %v5470 = vsel %vm314, %v5463, 0
    %v5472 = vsel %vm314, %v5465, 0
    %5474 = vmatprep.subr.mxu0 0.0
    %5475 = vmatpush1.xpose.msra.mxu0 0.0
    %5476 = vmatprep.subr.mxu0 0.0
    %5477 = vmatpush1.xpose.msra.mxu0 0.0
    %5478 = vmatprep.subr.mxu0 0.0
    %5479 = vmatpush1.xpose.msra.mxu0 0.0
    %5480 = vmatprep.subr.mxu0 0.0
    %5481 = vmatpush1.xpose.msra.mxu0 0.0
    %5482 = vmatprep.subr.mxu0 0.0
    %5483 = vmatpush1.xpose.msra.mxu0 0.0
    %5484 = vmatprep.subr.mxu0 0.0
    %5485 = vmatpush1.xpose.msra.mxu0 0.0
    %5486 = vmatprep.subr.mxu0 0.0
    %5487 = vmatpush1.xpose.msra.mxu0 0.0
    %5488 = vmatprep.subr.mxu0 0.0
    %5489 = vmatpush1.xpose.msra.mxu0 0.0
    %5490 = vmatprep.subr.mxu0 0.0
    %5491 = vmatpush1.xpose.msra.mxu0 0.0
    %5492 = vmatprep.subr.mxu0 0.0
    %5493 = vmatpush1.xpose.msra.mxu0 0.0
    %5494 = vmatprep.subr.mxu0 0.0
    %5495 = vmatpush1.xpose.msra.mxu0 0.0
    %5496 = vmatprep.subr.mxu0 0.0
    %5497 = vmatpush1.xpose.msra.mxu0 0.0
    %5498 = vmatprep.subr.mxu0 0.0
    %5499 = vmatpush1.xpose.msra.mxu0 0.0
    %5500 = vmatprep.subr.mxu0 0.0
    %5501 = vmatpush1.xpose.msra.mxu0 0.0
    %5502 = vmatprep.subr.mxu0 0.0
    %5503 = vmatpush1.xpose.msra.mxu0 %v5472
    %5504 = vmatprep.subr.mxu0 0.0
    %5505 = vmatpush1.xpose.msra.mxu0 %v5470
    %5506 = vmatprep.subr.mxu0 0.0
    %5507 = vmatpush2.xpose.msra.mxu0 0.0
    %5508 = vmatprep.subr.mxu0 0.0
    %5509 = vmatpush2.xpose.msra.mxu0 0.0
    %5510 = vmatprep.subr.mxu0 0.0
    %5511 = vmatpush2.xpose.msra.mxu0 0.0
    %5512 = vmatprep.subr.mxu0 0.0
    %5513 = vmatpush2.xpose.msra.mxu0 0.0
    %5514 = vmatprep.subr.mxu0 0.0
    %5515 = vmatpush2.xpose.msra.mxu0 0.0
    %5516 = vmatprep.subr.mxu0 0.0
    %5517 = vmatpush2.xpose.msra.mxu0 0.0
    %5518 = vmatprep.subr.mxu0 0.0
    %5519 = vmatpush2.xpose.msra.mxu0 0.0
    %5520 = vmatprep.subr.mxu0 0.0
    %5521 = vmatpush2.xpose.msra.mxu0 0.0
    %5522 = vmatprep.subr.mxu0 0.0
    %5523 = vmatpush2.xpose.msra.mxu0 0.0
    %5524 = vmatprep.subr.mxu0 0.0
    %5525 = vmatpush2.xpose.msra.mxu0 0.0
    %5526 = vmatprep.subr.mxu0 0.0
    %5527 = vmatpush2.xpose.msra.mxu0 0.0
    %5528 = vmatprep.subr.mxu0 0.0
    %5529 = vmatpush2.xpose.msra.mxu0 0.0
    %5530 = vmatprep.subr.mxu0 0.0
    %5531 = vmatpush2.xpose.msra.mxu0 0.0
    %5532 = vmatprep.subr.mxu0 0.0
    %5533 = vmatpush2.xpose.msra.mxu0 0.0
    %5534 = vmatprep.subr.mxu0 0.0
    %5535 = vmatpush2.xpose.msra.mxu0 0.0
    %5536 = vmatprep.subr.mxu0 0.0
    %5537 = vmatpush2.xpose.msra.mxu0 0.0
    %5538 = vmatprep.mubr.f32.mxu0 0.0
    %5539 = vmatmul.mubr.f32.gmra.mxu0 %v5466
    %v5540 = vpop.f32.mrf.mxu0
    %v5541 = vadd.f32 %v306, %v5540
    %v5542 = vpop.f32.mrf.mxu0
    %5543 = vmatprep.mubr.f32.mxu0 0.0
    %5544 = vmatmul.mubr.f32.gmra.mxu0 %v5468
    %v5545 = vpop.f32.mrf.mxu0
    %v5546 = vadd.f32 %v307, %v5545
    %v5547 = vpop.f32.mrf.mxu0
    %5548 = vdwg.mxu0
    %5549 = vrot.lane.b32.xlu0 %v272, 104
    %v5550 = vpop.permute.xlu0 %5549
    %5551 = vrot.lane.b32.xlu0 %v277, 104
    %v5552 = vpop.permute.xlu0 %5551
    %5553 = vrot.lane.b32.xlu0 %v272, 72
    %v5554 = vpop.permute.xlu0 %5553
    %5555 = vrot.lane.b32.xlu0 %v277, 72
    %v5556 = vpop.permute.xlu0 %5555
    %v5557 = vsel %vm314, %v5550, 0
    %v5559 = vsel %vm314, %v5552, 0
    %v5561 = vsel %vm314, %v5554, 0
    %v5563 = vsel %vm314, %v5556, 0
    %5565 = vmatprep.subr.mxu0 0.0
    %5566 = vmatpush1.xpose.msra.mxu0 0.0
    %5567 = vmatprep.subr.mxu0 0.0
    %5568 = vmatpush1.xpose.msra.mxu0 0.0
    %5569 = vmatprep.subr.mxu0 0.0
    %5570 = vmatpush1.xpose.msra.mxu0 0.0
    %5571 = vmatprep.subr.mxu0 0.0
    %5572 = vmatpush1.xpose.msra.mxu0 0.0
    %5573 = vmatprep.subr.mxu0 0.0
    %5574 = vmatpush1.xpose.msra.mxu0 0.0
    %5575 = vmatprep.subr.mxu0 0.0
    %5576 = vmatpush1.xpose.msra.mxu0 0.0
    %5577 = vmatprep.subr.mxu0 0.0
    %5578 = vmatpush1.xpose.msra.mxu0 0.0
    %5579 = vmatprep.subr.mxu0 0.0
    %5580 = vmatpush1.xpose.msra.mxu0 0.0
    %5581 = vmatprep.subr.mxu0 0.0
    %5582 = vmatpush1.xpose.msra.mxu0 0.0
    %5583 = vmatprep.subr.mxu0 0.0
    %5584 = vmatpush1.xpose.msra.mxu0 0.0
    %5585 = vmatprep.subr.mxu0 0.0
    %5586 = vmatpush1.xpose.msra.mxu0 0.0
    %5587 = vmatprep.subr.mxu0 0.0
    %5588 = vmatpush1.xpose.msra.mxu0 0.0
    %5589 = vmatprep.subr.mxu0 0.0
    %5590 = vmatpush1.xpose.msra.mxu0 0.0
    %5591 = vmatprep.subr.mxu0 0.0
    %5592 = vmatpush1.xpose.msra.mxu0 0.0
    %5593 = vmatprep.subr.mxu0 0.0
    %5594 = vmatpush1.xpose.msra.mxu0 %v5563
    %5595 = vmatprep.subr.mxu0 0.0
    %5596 = vmatpush1.xpose.msra.mxu0 %v5561
    %5597 = vmatprep.subr.mxu0 0.0
    %5598 = vmatpush2.xpose.msra.mxu0 0.0
    %5599 = vmatprep.subr.mxu0 0.0
    %5600 = vmatpush2.xpose.msra.mxu0 0.0
    %5601 = vmatprep.subr.mxu0 0.0
    %5602 = vmatpush2.xpose.msra.mxu0 0.0
    %5603 = vmatprep.subr.mxu0 0.0
    %5604 = vmatpush2.xpose.msra.mxu0 0.0
    %5605 = vmatprep.subr.mxu0 0.0
    %5606 = vmatpush2.xpose.msra.mxu0 0.0
    %5607 = vmatprep.subr.mxu0 0.0
    %5608 = vmatpush2.xpose.msra.mxu0 0.0
    %5609 = vmatprep.subr.mxu0 0.0
    %5610 = vmatpush2.xpose.msra.mxu0 0.0
    %5611 = vmatprep.subr.mxu0 0.0
    %5612 = vmatpush2.xpose.msra.mxu0 0.0
    %5613 = vmatprep.subr.mxu0 0.0
    %5614 = vmatpush2.xpose.msra.mxu0 0.0
    %5615 = vmatprep.subr.mxu0 0.0
    %5616 = vmatpush2.xpose.msra.mxu0 0.0
    %5617 = vmatprep.subr.mxu0 0.0
    %5618 = vmatpush2.xpose.msra.mxu0 0.0
    %5619 = vmatprep.subr.mxu0 0.0
    %5620 = vmatpush2.xpose.msra.mxu0 0.0
    %5621 = vmatprep.subr.mxu0 0.0
    %5622 = vmatpush2.xpose.msra.mxu0 0.0
    %5623 = vmatprep.subr.mxu0 0.0
    %5624 = vmatpush2.xpose.msra.mxu0 0.0
    %5625 = vmatprep.subr.mxu0 0.0
    %5626 = vmatpush2.xpose.msra.mxu0 0.0
    %5627 = vmatprep.subr.mxu0 0.0
    %5628 = vmatpush2.xpose.msra.mxu0 0.0
    %5629 = vmatprep.mubr.f32.mxu0 0.0
    %5630 = vmatmul.mubr.f32.gmra.mxu0 %v5557
    %v5631 = vpop.f32.mrf.mxu0
    %v5632 = vadd.f32 %v306, %v5631
    %v5633 = vpop.f32.mrf.mxu0
    %5634 = vmatprep.mubr.f32.mxu0 0.0
    %5635 = vmatmul.mubr.f32.gmra.mxu0 %v5559
    %v5636 = vpop.f32.mrf.mxu0
    %v5637 = vadd.f32 %v307, %v5636
    %v5638 = vpop.f32.mrf.mxu0
    %5639 = vdwg.mxu0
    %5640 = vrot.lane.b32.xlu0 %v282, 104
    %v5641 = vpop.permute.xlu0 %5640
    %5642 = vrot.lane.b32.xlu0 %v287, 104
    %v5643 = vpop.permute.xlu0 %5642
    %5644 = vrot.lane.b32.xlu0 %v282, 72
    %v5645 = vpop.permute.xlu0 %5644
    %5646 = vrot.lane.b32.xlu0 %v287, 72
    %v5647 = vpop.permute.xlu0 %5646
    %v5648 = vsel %vm314, %v5641, 0
    %v5650 = vsel %vm314, %v5643, 0
    %v5652 = vsel %vm314, %v5645, 0
    %v5654 = vsel %vm314, %v5647, 0
    %5656 = vmatprep.subr.mxu0 0.0
    %5657 = vmatpush1.xpose.msra.mxu0 0.0
    %5658 = vmatprep.subr.mxu0 0.0
    %5659 = vmatpush1.xpose.msra.mxu0 0.0
    %5660 = vmatprep.subr.mxu0 0.0
    %5661 = vmatpush1.xpose.msra.mxu0 0.0
    %5662 = vmatprep.subr.mxu0 0.0
    %5663 = vmatpush1.xpose.msra.mxu0 0.0
    %5664 = vmatprep.subr.mxu0 0.0
    %5665 = vmatpush1.xpose.msra.mxu0 0.0
    %5666 = vmatprep.subr.mxu0 0.0
    %5667 = vmatpush1.xpose.msra.mxu0 0.0
    %5668 = vmatprep.subr.mxu0 0.0
    %5669 = vmatpush1.xpose.msra.mxu0 0.0
    %5670 = vmatprep.subr.mxu0 0.0
    %5671 = vmatpush1.xpose.msra.mxu0 0.0
    %5672 = vmatprep.subr.mxu0 0.0
    %5673 = vmatpush1.xpose.msra.mxu0 0.0
    %5674 = vmatprep.subr.mxu0 0.0
    %5675 = vmatpush1.xpose.msra.mxu0 0.0
    %5676 = vmatprep.subr.mxu0 0.0
    %5677 = vmatpush1.xpose.msra.mxu0 0.0
    %5678 = vmatprep.subr.mxu0 0.0
    %5679 = vmatpush1.xpose.msra.mxu0 0.0
    %5680 = vmatprep.subr.mxu0 0.0
    %5681 = vmatpush1.xpose.msra.mxu0 0.0
    %5682 = vmatprep.subr.mxu0 0.0
    %5683 = vmatpush1.xpose.msra.mxu0 0.0
    %5684 = vmatprep.subr.mxu0 0.0
    %5685 = vmatpush1.xpose.msra.mxu0 %v5654
    %5686 = vmatprep.subr.mxu0 0.0
    %5687 = vmatpush1.xpose.msra.mxu0 %v5652
    %5688 = vmatprep.subr.mxu0 0.0
    %5689 = vmatpush2.xpose.msra.mxu0 0.0
    %5690 = vmatprep.subr.mxu0 0.0
    %5691 = vmatpush2.xpose.msra.mxu0 0.0
    %5692 = vmatprep.subr.mxu0 0.0
    %5693 = vmatpush2.xpose.msra.mxu0 0.0
    %5694 = vmatprep.subr.mxu0 0.0
    %5695 = vmatpush2.xpose.msra.mxu0 0.0
    %5696 = vmatprep.subr.mxu0 0.0
    %5697 = vmatpush2.xpose.msra.mxu0 0.0
    %5698 = vmatprep.subr.mxu0 0.0
    %5699 = vmatpush2.xpose.msra.mxu0 0.0
    %5700 = vmatprep.subr.mxu0 0.0
    %5701 = vmatpush2.xpose.msra.mxu0 0.0
    %5702 = vmatprep.subr.mxu0 0.0
    %5703 = vmatpush2.xpose.msra.mxu0 0.0
    %5704 = vmatprep.subr.mxu0 0.0
    %5705 = vmatpush2.xpose.msra.mxu0 0.0
    %5706 = vmatprep.subr.mxu0 0.0
    %5707 = vmatpush2.xpose.msra.mxu0 0.0
    %5708 = vmatprep.subr.mxu0 0.0
    %5709 = vmatpush2.xpose.msra.mxu0 0.0
    %5710 = vmatprep.subr.mxu0 0.0
    %5711 = vmatpush2.xpose.msra.mxu0 0.0
    %5712 = vmatprep.subr.mxu0 0.0
    %5713 = vmatpush2.xpose.msra.mxu0 0.0
    %5714 = vmatprep.subr.mxu0 0.0
    %5715 = vmatpush2.xpose.msra.mxu0 0.0
    %5716 = vmatprep.subr.mxu0 0.0
    %5717 = vmatpush2.xpose.msra.mxu0 0.0
    %5718 = vmatprep.subr.mxu0 0.0
    %5719 = vmatpush2.xpose.msra.mxu0 0.0
    %5720 = vmatprep.mubr.f32.mxu0 0.0
    %5721 = vmatmul.mubr.f32.gmra.mxu0 %v5648
    %v5722 = vpop.f32.mrf.mxu0
    %v5723 = vadd.f32 %v306, %v5722
    %v5724 = vpop.f32.mrf.mxu0
    %5725 = vmatprep.mubr.f32.mxu0 0.0
    %5726 = vmatmul.mubr.f32.gmra.mxu0 %v5650
    %v5727 = vpop.f32.mrf.mxu0
    %v5728 = vadd.f32 %v307, %v5727
    %v5729 = vpop.f32.mrf.mxu0
    %5730 = vdwg.mxu0
    %5731 = vrot.lane.b32.xlu0 %v292, 104
    %v5732 = vpop.permute.xlu0 %5731
    %5733 = vrot.lane.b32.xlu0 %v297, 104
    %v5734 = vpop.permute.xlu0 %5733
    %5735 = vrot.lane.b32.xlu0 %v292, 72
    %v5736 = vpop.permute.xlu0 %5735
    %5737 = vrot.lane.b32.xlu0 %v297, 72
    %v5738 = vpop.permute.xlu0 %5737
    %v5739 = vsel %vm314, %v5732, 0
    %v5741 = vsel %vm314, %v5734, 0
    %v5743 = vsel %vm314, %v5736, 0
    %v5745 = vsel %vm314, %v5738, 0
    %5747 = vmatprep.subr.mxu0 0.0
    %5748 = vmatpush1.xpose.msra.mxu0 0.0
    %5749 = vmatprep.subr.mxu0 0.0
    %5750 = vmatpush1.xpose.msra.mxu0 0.0
    %5751 = vmatprep.subr.mxu0 0.0
    %5752 = vmatpush1.xpose.msra.mxu0 0.0
    %5753 = vmatprep.subr.mxu0 0.0
    %5754 = vmatpush1.xpose.msra.mxu0 0.0
    %5755 = vmatprep.subr.mxu0 0.0
    %5756 = vmatpush1.xpose.msra.mxu0 0.0
    %5757 = vmatprep.subr.mxu0 0.0
    %5758 = vmatpush1.xpose.msra.mxu0 0.0
    %5759 = vmatprep.subr.mxu0 0.0
    %5760 = vmatpush1.xpose.msra.mxu0 0.0
    %5761 = vmatprep.subr.mxu0 0.0
    %5762 = vmatpush1.xpose.msra.mxu0 0.0
    %5763 = vmatprep.subr.mxu0 0.0
    %5764 = vmatpush1.xpose.msra.mxu0 0.0
    %5765 = vmatprep.subr.mxu0 0.0
    %5766 = vmatpush1.xpose.msra.mxu0 0.0
    %5767 = vmatprep.subr.mxu0 0.0
    %5768 = vmatpush1.xpose.msra.mxu0 0.0
    %5769 = vmatprep.subr.mxu0 0.0
    %5770 = vmatpush1.xpose.msra.mxu0 0.0
    %5771 = vmatprep.subr.mxu0 0.0
    %5772 = vmatpush1.xpose.msra.mxu0 0.0
    %5773 = vmatprep.subr.mxu0 0.0
    %5774 = vmatpush1.xpose.msra.mxu0 0.0
    %5775 = vmatprep.subr.mxu0 0.0
    %5776 = vmatpush1.xpose.msra.mxu0 %v5745
    %5777 = vmatprep.subr.mxu0 0.0
    %5778 = vmatpush1.xpose.msra.mxu0 %v5743
    %5779 = vmatprep.subr.mxu0 0.0
    %5780 = vmatpush2.xpose.msra.mxu0 0.0
    %5781 = vmatprep.subr.mxu0 0.0
    %5782 = vmatpush2.xpose.msra.mxu0 0.0
    %5783 = vmatprep.subr.mxu0 0.0
    %5784 = vmatpush2.xpose.msra.mxu0 0.0
    %5785 = vmatprep.subr.mxu0 0.0
    %5786 = vmatpush2.xpose.msra.mxu0 0.0
    %5787 = vmatprep.subr.mxu0 0.0
    %5788 = vmatpush2.xpose.msra.mxu0 0.0
    %5789 = vmatprep.subr.mxu0 0.0
    %5790 = vmatpush2.xpose.msra.mxu0 0.0
    %5791 = vmatprep.subr.mxu0 0.0
    %5792 = vmatpush2.xpose.msra.mxu0 0.0
    %5793 = vmatprep.subr.mxu0 0.0
    %5794 = vmatpush2.xpose.msra.mxu0 0.0
    %5795 = vmatprep.subr.mxu0 0.0
    %5796 = vmatpush2.xpose.msra.mxu0 0.0
    %5797 = vmatprep.subr.mxu0 0.0
    %5798 = vmatpush2.xpose.msra.mxu0 0.0
    %5799 = vmatprep.subr.mxu0 0.0
    %5800 = vmatpush2.xpose.msra.mxu0 0.0
    %5801 = vmatprep.subr.mxu0 0.0
    %5802 = vmatpush2.xpose.msra.mxu0 0.0
    %5803 = vmatprep.subr.mxu0 0.0
    %5804 = vmatpush2.xpose.msra.mxu0 0.0
    %5805 = vmatprep.subr.mxu0 0.0
    %5806 = vmatpush2.xpose.msra.mxu0 0.0
    %5807 = vmatprep.subr.mxu0 0.0
    %5808 = vmatpush2.xpose.msra.mxu0 0.0
    %5809 = vmatprep.subr.mxu0 0.0
    %5810 = vmatpush2.xpose.msra.mxu0 0.0
    %5811 = vmatprep.mubr.f32.mxu0 0.0
    %5812 = vmatmul.mubr.f32.gmra.mxu0 %v5739
    %v5813 = vpop.f32.mrf.mxu0
    %v5814 = vadd.f32 %v306, %v5813
    %v5815 = vpop.f32.mrf.mxu0
    %5816 = vmatprep.mubr.f32.mxu0 0.0
    %5817 = vmatmul.mubr.f32.gmra.mxu0 %v5741
    %v5818 = vpop.f32.mrf.mxu0
    %v5819 = vadd.f32 %v307, %v5818
    %v5820 = vpop.f32.mrf.mxu0
    %5821 = vdwg.mxu0
    %v5822 = vsel %vm1021, %v5177, -inf
    %5823 = vmax.xlane.f32.xlu0 %v5822
    %v5824 = vpop.xlane.xlu0 %5823
    %v5825 = vsel %vm1021, %v5182, -inf
    %5826 = vmax.xlane.f32.xlu0 %v5825
    %v5827 = vpop.xlane.xlu0 %5826
    %v5828 = vsel %vm1021, %v5268, -inf
    %5829 = vmax.xlane.f32.xlu0 %v5828
    %v5830 = vpop.xlane.xlu0 %5829
    %v5831 = vsel %vm1021, %v5273, -inf
    %5832 = vmax.xlane.f32.xlu0 %v5831
    %v5833 = vpop.xlane.xlu0 %5832
    %v5834 = vsel %vm1021, %v5359, -inf
    %5835 = vmax.xlane.f32.xlu0 %v5834
    %v5836 = vpop.xlane.xlu0 %5835
    %v5837 = vsel %vm1021, %v5364, -inf
    %5838 = vmax.xlane.f32.xlu0 %v5837
    %v5839 = vpop.xlane.xlu0 %5838
    %v5840 = vsel %vm1021, %v5450, -inf
    %5841 = vmax.xlane.f32.xlu0 %v5840
    %v5842 = vpop.xlane.xlu0 %5841
    %v5843 = vsel %vm1021, %v5455, -inf
    %5844 = vmax.xlane.f32.xlu0 %v5843
    %v5845 = vpop.xlane.xlu0 %5844
    %v5846 = vsel %vm1021, %v5541, -inf
    %5847 = vmax.xlane.f32.xlu0 %v5846
    %v5848 = vpop.xlane.xlu0 %5847
    %v5849 = vsel %vm1021, %v5546, -inf
    %5850 = vmax.xlane.f32.xlu0 %v5849
    %v5851 = vpop.xlane.xlu0 %5850
    %v5852 = vsel %vm1021, %v5632, -inf
    %5853 = vmax.xlane.f32.xlu0 %v5852
    %v5854 = vpop.xlane.xlu0 %5853
    %v5855 = vsel %vm1021, %v5637, -inf
    %5856 = vmax.xlane.f32.xlu0 %v5855
    %v5857 = vpop.xlane.xlu0 %5856
    %v5858 = vsel %vm1021, %v5723, -inf
    %5859 = vmax.xlane.f32.xlu0 %v5858
    %v5860 = vpop.xlane.xlu0 %5859
    %v5861 = vsel %vm1021, %v5728, -inf
    %5862 = vmax.xlane.f32.xlu0 %v5861
    %v5863 = vpop.xlane.xlu0 %5862
    %v5864 = vsel %vm1021, %v5814, -inf
    %5865 = vmax.xlane.f32.xlu0 %v5864
    %v5866 = vpop.xlane.xlu0 %5865
    %v5867 = vsel %vm1021, %v5819, -inf
    %5868 = vmax.xlane.f32.xlu0 %v5867
    %v5869 = vpop.xlane.xlu0 %5868
    %v5870 = vsub.f32 %v5177, %v5824
    %v5871 = vsub.f32 %v5182, %v5827
    %v5872 = vsub.f32 %v5268, %v5830
    %v5873 = vsub.f32 %v5273, %v5833
    %v5874 = vsub.f32 %v5359, %v5836
    %v5875 = vsub.f32 %v5364, %v5839
    %v5876 = vsub.f32 %v5450, %v5842
    %v5877 = vsub.f32 %v5455, %v5845
    %v5878 = vsub.f32 %v5541, %v5848
    %v5879 = vsub.f32 %v5546, %v5851
    %v5880 = vsub.f32 %v5632, %v5854
    %v5881 = vsub.f32 %v5637, %v5857
    %v5882 = vsub.f32 %v5723, %v5860
    %v5883 = vsub.f32 %v5728, %v5863
    %v5884 = vsub.f32 %v5814, %v5866
    %v5885 = vsub.f32 %v5819, %v5869
    %v5886 = vmul.f32 %v5870, 1.442695
    %v5887 = vpow.pop %v5886
    %v5888 = vmul.f32 %v5871, 1.442695
    %v5889 = vpow.pop %v5888
    %v5890 = vmul.f32 %v5872, 1.442695
    %v5891 = vpow.pop %v5890
    %v5892 = vmul.f32 %v5873, 1.442695
    %v5893 = vpow.pop %v5892
    %v5894 = vmul.f32 %v5874, 1.442695
    %v5895 = vpow.pop %v5894
    %v5896 = vmul.f32 %v5875, 1.442695
    %v5897 = vpow.pop %v5896
    %v5898 = vmul.f32 %v5876, 1.442695
    %v5899 = vpow.pop %v5898
    %v5900 = vmul.f32 %v5877, 1.442695
    %v5901 = vpow.pop %v5900
    %v5902 = vmul.f32 %v5878, 1.442695
    %v5903 = vpow.pop %v5902
    %v5904 = vmul.f32 %v5879, 1.442695
    %v5905 = vpow.pop %v5904
    %v5906 = vmul.f32 %v5880, 1.442695
    %v5907 = vpow.pop %v5906
    %v5908 = vmul.f32 %v5881, 1.442695
    %v5909 = vpow.pop %v5908
    %v5910 = vmul.f32 %v5882, 1.442695
    %v5911 = vpow.pop %v5910
    %v5912 = vmul.f32 %v5883, 1.442695
    %v5913 = vpow.pop %v5912
    %v5914 = vmul.f32 %v5884, 1.442695
    %v5915 = vpow.pop %v5914
    %v5916 = vmul.f32 %v5885, 1.442695
    %v5917 = vpow.pop %v5916
    %v5918 = vsel %vm1021, %v5887, 0.0
    %5919 = vadd.xlane.f32.xlu0 %v5918
    %v5920 = vpop.xlane.xlu0 %5919
    %v5921 = vsel %vm1021, %v5889, 0.0
    %5922 = vadd.xlane.f32.xlu0 %v5921
    %v5923 = vpop.xlane.xlu0 %5922
    %v5924 = vsel %vm1021, %v5891, 0.0
    %5925 = vadd.xlane.f32.xlu0 %v5924
    %v5926 = vpop.xlane.xlu0 %5925
    %v5927 = vsel %vm1021, %v5893, 0.0
    %5928 = vadd.xlane.f32.xlu0 %v5927
    %v5929 = vpop.xlane.xlu0 %5928
    %v5930 = vsel %vm1021, %v5895, 0.0
    %5931 = vadd.xlane.f32.xlu0 %v5930
    %v5932 = vpop.xlane.xlu0 %5931
    %v5933 = vsel %vm1021, %v5897, 0.0
    %5934 = vadd.xlane.f32.xlu0 %v5933
    %v5935 = vpop.xlane.xlu0 %5934
    %v5936 = vsel %vm1021, %v5899, 0.0
    %5937 = vadd.xlane.f32.xlu0 %v5936
    %v5938 = vpop.xlane.xlu0 %5937
    %v5939 = vsel %vm1021, %v5901, 0.0
    %5940 = vadd.xlane.f32.xlu0 %v5939
    %v5941 = vpop.xlane.xlu0 %5940
    %v5942 = vsel %vm1021, %v5903, 0.0
    %5943 = vadd.xlane.f32.xlu0 %v5942
    %v5944 = vpop.xlane.xlu0 %5943
    %v5945 = vsel %vm1021, %v5905, 0.0
    %5946 = vadd.xlane.f32.xlu0 %v5945
    %v5947 = vpop.xlane.xlu0 %5946
    %v5948 = vsel %vm1021, %v5907, 0.0
    %5949 = vadd.xlane.f32.xlu0 %v5948
    %v5950 = vpop.xlane.xlu0 %5949
    %v5951 = vsel %vm1021, %v5909, 0.0
    %5952 = vadd.xlane.f32.xlu0 %v5951
    %v5953 = vpop.xlane.xlu0 %5952
    %v5954 = vsel %vm1021, %v5911, 0.0
    %5955 = vadd.xlane.f32.xlu0 %v5954
    %v5956 = vpop.xlane.xlu0 %5955
    %v5957 = vsel %vm1021, %v5913, 0.0
    %5958 = vadd.xlane.f32.xlu0 %v5957
    %v5959 = vpop.xlane.xlu0 %5958
    %v5960 = vsel %vm1021, %v5915, 0.0
    %5961 = vadd.xlane.f32.xlu0 %v5960
    %v5962 = vpop.xlane.xlu0 %5961
    %v5963 = vsel %vm1021, %v5917, 0.0
    %5964 = vadd.xlane.f32.xlu0 %v5963
    %v5965 = vpop.xlane.xlu0 %5964
    %v5966 = vrcp.pop %v5920
    %v5967 = vrcp.pop %v5923
    %v5968 = vrcp.pop %v5926
    %v5969 = vrcp.pop %v5929
    %v5970 = vrcp.pop %v5932
    %v5971 = vrcp.pop %v5935
    %v5972 = vrcp.pop %v5938
    %v5973 = vrcp.pop %v5941
    %v5974 = vrcp.pop %v5944
    %v5975 = vrcp.pop %v5947
    %v5976 = vrcp.pop %v5950
    %v5977 = vrcp.pop %v5953
    %v5978 = vrcp.pop %v5956
    %v5979 = vrcp.pop %v5959
    %v5980 = vrcp.pop %v5962
    %v5981 = vrcp.pop %v5965
    %v5982 = vmul.f32 %v5887, %v5966
    %v5983 = vmul.f32 %v5889, %v5967
    %v5984 = vmul.f32 %v5891, %v5968
    %v5985 = vmul.f32 %v5893, %v5969
    %v5986 = vmul.f32 %v5895, %v5970
    %v5987 = vmul.f32 %v5897, %v5971
    %v5988 = vmul.f32 %v5899, %v5972
    %v5989 = vmul.f32 %v5901, %v5973
    %v5990 = vmul.f32 %v5903, %v5974
    %v5991 = vmul.f32 %v5905, %v5975
    %v5992 = vmul.f32 %v5907, %v5976
    %v5993 = vmul.f32 %v5909, %v5977
    %v5994 = vmul.f32 %v5911, %v5978
    %v5995 = vmul.f32 %v5913, %v5979
    %v5996 = vmul.f32 %v5915, %v5980
    %v5997 = vmul.f32 %v5917, %v5981
    %5998 = vrot.lane.b32.xlu0 %v222, 40
    %v5999 = vpop.permute.xlu0 %5998
    %6000 = vrot.lane.b32.xlu0 %v227, 40
    %v6001 = vpop.permute.xlu0 %6000
    %v6005 = vsel %vm1021, %v5982, 0
    %v6008 = vsel %vm1021, %v5983, 0
    %6010 = vmatprep.subr.mxu0 0.0
    %6011 = vmatpush1.msra.mxu0 0.0
    %6012 = vmatprep.subr.mxu0 0.0
    %6013 = vmatpush1.msra.mxu0 0.0
    %6014 = vmatprep.subr.mxu0 0.0
    %6015 = vmatpush1.msra.mxu0 0.0
    %6016 = vmatprep.subr.mxu0 0.0
    %6017 = vmatpush1.msra.mxu0 0.0
    %6018 = vmatprep.subr.mxu0 0.0
    %6019 = vmatpush1.msra.mxu0 0.0
    %6020 = vmatprep.subr.mxu0 0.0
    %6021 = vmatpush1.msra.mxu0 0.0
    %6022 = vmatprep.subr.mxu0 0.0
    %6023 = vmatpush1.msra.mxu0 0.0
    %6024 = vmatprep.subr.mxu0 0.0
    %6025 = vmatpush1.msra.mxu0 0.0
    %6026 = vmatprep.subr.mxu0 0.0
    %6027 = vmatpush1.msra.mxu0 0.0
    %6028 = vmatprep.subr.mxu0 0.0
    %6029 = vmatpush1.msra.mxu0 0.0
    %6030 = vmatprep.subr.mxu0 0.0
    %6031 = vmatpush1.msra.mxu0 0.0
    %6032 = vmatprep.subr.mxu0 0.0
    %6033 = vmatpush1.msra.mxu0 0.0
    %6034 = vmatprep.subr.mxu0 0.0
    %6035 = vmatpush1.msra.mxu0 0.0
    %6036 = vmatprep.subr.mxu0 0.0
    %6037 = vmatpush1.msra.mxu0 0.0
    %6038 = vmatprep.subr.mxu0 0.0
    %6039 = vmatpush1.msra.mxu0 %v6001
    %6040 = vmatprep.subr.mxu0 0.0
    %6041 = vmatpush1.msra.mxu0 %v5999
    %6042 = vmatprep.subr.mxu0 0.0
    %6043 = vmatpush2.msra.mxu0 0.0
    %6044 = vmatprep.subr.mxu0 0.0
    %6045 = vmatpush2.msra.mxu0 0.0
    %6046 = vmatprep.subr.mxu0 0.0
    %6047 = vmatpush2.msra.mxu0 0.0
    %6048 = vmatprep.subr.mxu0 0.0
    %6049 = vmatpush2.msra.mxu0 0.0
    %6050 = vmatprep.subr.mxu0 0.0
    %6051 = vmatpush2.msra.mxu0 0.0
    %6052 = vmatprep.subr.mxu0 0.0
    %6053 = vmatpush2.msra.mxu0 0.0
    %6054 = vmatprep.subr.mxu0 0.0
    %6055 = vmatpush2.msra.mxu0 0.0
    %6056 = vmatprep.subr.mxu0 0.0
    %6057 = vmatpush2.msra.mxu0 0.0
    %6058 = vmatprep.subr.mxu0 0.0
    %6059 = vmatpush2.msra.mxu0 0.0
    %6060 = vmatprep.subr.mxu0 0.0
    %6061 = vmatpush2.msra.mxu0 0.0
    %6062 = vmatprep.subr.mxu0 0.0
    %6063 = vmatpush2.msra.mxu0 0.0
    %6064 = vmatprep.subr.mxu0 0.0
    %6065 = vmatpush2.msra.mxu0 0.0
    %6066 = vmatprep.subr.mxu0 0.0
    %6067 = vmatpush2.msra.mxu0 0.0
    %6068 = vmatprep.subr.mxu0 0.0
    %6069 = vmatpush2.msra.mxu0 0.0
    %6070 = vmatprep.subr.mxu0 0.0
    %6071 = vmatpush2.msra.mxu0 0.0
    %6072 = vmatprep.subr.mxu0 0.0
    %6073 = vmatpush2.msra.mxu0 0.0
    %6074 = vmatprep.mubr.f32.mxu0 0.0
    %6075 = vmatmul.mubr.f32.gmra.mxu0 %v6005
    %v6076 = vpop.f32.mrf.mxu0
    %v6077 = vadd.f32 0.0, %v6076
    %v6078 = vpop.f32.mrf.mxu0
    %6079 = vmatprep.mubr.f32.mxu0 0.0
    %6080 = vmatmul.mubr.f32.gmra.mxu0 %v6008
    %v6081 = vpop.f32.mrf.mxu0
    %v6082 = vadd.f32 0.0, %v6081
    %v6083 = vpop.f32.mrf.mxu0
    %6084 = vdwg.mxu0
    %6085 = vrot.lane.b32.xlu0 %v232, 40
    %v6086 = vpop.permute.xlu0 %6085
    %6087 = vrot.lane.b32.xlu0 %v237, 40
    %v6088 = vpop.permute.xlu0 %6087
    %v6092 = vsel %vm1021, %v5984, 0
    %v6095 = vsel %vm1021, %v5985, 0
    %6097 = vmatprep.subr.mxu0 0.0
    %6098 = vmatpush1.msra.mxu0 0.0
    %6099 = vmatprep.subr.mxu0 0.0
    %6100 = vmatpush1.msra.mxu0 0.0
    %6101 = vmatprep.subr.mxu0 0.0
    %6102 = vmatpush1.msra.mxu0 0.0
    %6103 = vmatprep.subr.mxu0 0.0
    %6104 = vmatpush1.msra.mxu0 0.0
    %6105 = vmatprep.subr.mxu0 0.0
    %6106 = vmatpush1.msra.mxu0 0.0
    %6107 = vmatprep.subr.mxu0 0.0
    %6108 = vmatpush1.msra.mxu0 0.0
    %6109 = vmatprep.subr.mxu0 0.0
    %6110 = vmatpush1.msra.mxu0 0.0
    %6111 = vmatprep.subr.mxu0 0.0
    %6112 = vmatpush1.msra.mxu0 0.0
    %6113 = vmatprep.subr.mxu0 0.0
    %6114 = vmatpush1.msra.mxu0 0.0
    %6115 = vmatprep.subr.mxu0 0.0
    %6116 = vmatpush1.msra.mxu0 0.0
    %6117 = vmatprep.subr.mxu0 0.0
    %6118 = vmatpush1.msra.mxu0 0.0
    %6119 = vmatprep.subr.mxu0 0.0
    %6120 = vmatpush1.msra.mxu0 0.0
    %6121 = vmatprep.subr.mxu0 0.0
    %6122 = vmatpush1.msra.mxu0 0.0
    %6123 = vmatprep.subr.mxu0 0.0
    %6124 = vmatpush1.msra.mxu0 0.0
    %6125 = vmatprep.subr.mxu0 0.0
    %6126 = vmatpush1.msra.mxu0 %v6088
    %6127 = vmatprep.subr.mxu0 0.0
    %6128 = vmatpush1.msra.mxu0 %v6086
    %6129 = vmatprep.subr.mxu0 0.0
    %6130 = vmatpush2.msra.mxu0 0.0
    %6131 = vmatprep.subr.mxu0 0.0
    %6132 = vmatpush2.msra.mxu0 0.0
    %6133 = vmatprep.subr.mxu0 0.0
    %6134 = vmatpush2.msra.mxu0 0.0
    %6135 = vmatprep.subr.mxu0 0.0
    %6136 = vmatpush2.msra.mxu0 0.0
    %6137 = vmatprep.subr.mxu0 0.0
    %6138 = vmatpush2.msra.mxu0 0.0
    %6139 = vmatprep.subr.mxu0 0.0
    %6140 = vmatpush2.msra.mxu0 0.0
    %6141 = vmatprep.subr.mxu0 0.0
    %6142 = vmatpush2.msra.mxu0 0.0
    %6143 = vmatprep.subr.mxu0 0.0
    %6144 = vmatpush2.msra.mxu0 0.0
    %6145 = vmatprep.subr.mxu0 0.0
    %6146 = vmatpush2.msra.mxu0 0.0
    %6147 = vmatprep.subr.mxu0 0.0
    %6148 = vmatpush2.msra.mxu0 0.0
    %6149 = vmatprep.subr.mxu0 0.0
    %6150 = vmatpush2.msra.mxu0 0.0
    %6151 = vmatprep.subr.mxu0 0.0
    %6152 = vmatpush2.msra.mxu0 0.0
    %6153 = vmatprep.subr.mxu0 0.0
    %6154 = vmatpush2.msra.mxu0 0.0
    %6155 = vmatprep.subr.mxu0 0.0
    %6156 = vmatpush2.msra.mxu0 0.0
    %6157 = vmatprep.subr.mxu0 0.0
    %6158 = vmatpush2.msra.mxu0 0.0
    %6159 = vmatprep.subr.mxu0 0.0
    %6160 = vmatpush2.msra.mxu0 0.0
    %6161 = vmatprep.mubr.f32.mxu0 0.0
    %6162 = vmatmul.mubr.f32.gmra.mxu0 %v6092
    %v6163 = vpop.f32.mrf.mxu0
    %v6164 = vadd.f32 0.0, %v6163
    %v6165 = vpop.f32.mrf.mxu0
    %6166 = vmatprep.mubr.f32.mxu0 0.0
    %6167 = vmatmul.mubr.f32.gmra.mxu0 %v6095
    %v6168 = vpop.f32.mrf.mxu0
    %v6169 = vadd.f32 0.0, %v6168
    %v6170 = vpop.f32.mrf.mxu0
    %6171 = vdwg.mxu0
    %6172 = vrot.lane.b32.xlu0 %v242, 40
    %v6173 = vpop.permute.xlu0 %6172
    %6174 = vrot.lane.b32.xlu0 %v247, 40
    %v6175 = vpop.permute.xlu0 %6174
    %v6179 = vsel %vm1021, %v5986, 0
    %v6182 = vsel %vm1021, %v5987, 0
    %6184 = vmatprep.subr.mxu0 0.0
    %6185 = vmatpush1.msra.mxu0 0.0
    %6186 = vmatprep.subr.mxu0 0.0
    %6187 = vmatpush1.msra.mxu0 0.0
    %6188 = vmatprep.subr.mxu0 0.0
    %6189 = vmatpush1.msra.mxu0 0.0
    %6190 = vmatprep.subr.mxu0 0.0
    %6191 = vmatpush1.msra.mxu0 0.0
    %6192 = vmatprep.subr.mxu0 0.0
    %6193 = vmatpush1.msra.mxu0 0.0
    %6194 = vmatprep.subr.mxu0 0.0
    %6195 = vmatpush1.msra.mxu0 0.0
    %6196 = vmatprep.subr.mxu0 0.0
    %6197 = vmatpush1.msra.mxu0 0.0
    %6198 = vmatprep.subr.mxu0 0.0
    %6199 = vmatpush1.msra.mxu0 0.0
    %6200 = vmatprep.subr.mxu0 0.0
    %6201 = vmatpush1.msra.mxu0 0.0
    %6202 = vmatprep.subr.mxu0 0.0
    %6203 = vmatpush1.msra.mxu0 0.0
    %6204 = vmatprep.subr.mxu0 0.0
    %6205 = vmatpush1.msra.mxu0 0.0
    %6206 = vmatprep.subr.mxu0 0.0
    %6207 = vmatpush1.msra.mxu0 0.0
    %6208 = vmatprep.subr.mxu0 0.0
    %6209 = vmatpush1.msra.mxu0 0.0
    %6210 = vmatprep.subr.mxu0 0.0
    %6211 = vmatpush1.msra.mxu0 0.0
    %6212 = vmatprep.subr.mxu0 0.0
    %6213 = vmatpush1.msra.mxu0 %v6175
    %6214 = vmatprep.subr.mxu0 0.0
    %6215 = vmatpush1.msra.mxu0 %v6173
    %6216 = vmatprep.subr.mxu0 0.0
    %6217 = vmatpush2.msra.mxu0 0.0
    %6218 = vmatprep.subr.mxu0 0.0
    %6219 = vmatpush2.msra.mxu0 0.0
    %6220 = vmatprep.subr.mxu0 0.0
    %6221 = vmatpush2.msra.mxu0 0.0
    %6222 = vmatprep.subr.mxu0 0.0
    %6223 = vmatpush2.msra.mxu0 0.0
    %6224 = vmatprep.subr.mxu0 0.0
    %6225 = vmatpush2.msra.mxu0 0.0
    %6226 = vmatprep.subr.mxu0 0.0
    %6227 = vmatpush2.msra.mxu0 0.0
    %6228 = vmatprep.subr.mxu0 0.0
    %6229 = vmatpush2.msra.mxu0 0.0
    %6230 = vmatprep.subr.mxu0 0.0
    %6231 = vmatpush2.msra.mxu0 0.0
    %6232 = vmatprep.subr.mxu0 0.0
    %6233 = vmatpush2.msra.mxu0 0.0
    %6234 = vmatprep.subr.mxu0 0.0
    %6235 = vmatpush2.msra.mxu0 0.0
    %6236 = vmatprep.subr.mxu0 0.0
    %6237 = vmatpush2.msra.mxu0 0.0
    %6238 = vmatprep.subr.mxu0 0.0
    %6239 = vmatpush2.msra.mxu0 0.0
    %6240 = vmatprep.subr.mxu0 0.0
    %6241 = vmatpush2.msra.mxu0 0.0
    %6242 = vmatprep.subr.mxu0 0.0
    %6243 = vmatpush2.msra.mxu0 0.0
    %6244 = vmatprep.subr.mxu0 0.0
    %6245 = vmatpush2.msra.mxu0 0.0
    %6246 = vmatprep.subr.mxu0 0.0
    %6247 = vmatpush2.msra.mxu0 0.0
    %6248 = vmatprep.mubr.f32.mxu0 0.0
    %6249 = vmatmul.mubr.f32.gmra.mxu0 %v6179
    %v6250 = vpop.f32.mrf.mxu0
    %v6251 = vadd.f32 0.0, %v6250
    %v6252 = vpop.f32.mrf.mxu0
    %6253 = vmatprep.mubr.f32.mxu0 0.0
    %6254 = vmatmul.mubr.f32.gmra.mxu0 %v6182
    %v6255 = vpop.f32.mrf.mxu0
    %v6256 = vadd.f32 0.0, %v6255
    %v6257 = vpop.f32.mrf.mxu0
    %6258 = vdwg.mxu0
    %6259 = vrot.lane.b32.xlu0 %v252, 40
    %v6260 = vpop.permute.xlu0 %6259
    %6261 = vrot.lane.b32.xlu0 %v257, 40
    %v6262 = vpop.permute.xlu0 %6261
    %v6266 = vsel %vm1021, %v5988, 0
    %v6269 = vsel %vm1021, %v5989, 0
    %6271 = vmatprep.subr.mxu0 0.0
    %6272 = vmatpush1.msra.mxu0 0.0
    %6273 = vmatprep.subr.mxu0 0.0
    %6274 = vmatpush1.msra.mxu0 0.0
    %6275 = vmatprep.subr.mxu0 0.0
    %6276 = vmatpush1.msra.mxu0 0.0
    %6277 = vmatprep.subr.mxu0 0.0
    %6278 = vmatpush1.msra.mxu0 0.0
    %6279 = vmatprep.subr.mxu0 0.0
    %6280 = vmatpush1.msra.mxu0 0.0
    %6281 = vmatprep.subr.mxu0 0.0
    %6282 = vmatpush1.msra.mxu0 0.0
    %6283 = vmatprep.subr.mxu0 0.0
    %6284 = vmatpush1.msra.mxu0 0.0
    %6285 = vmatprep.subr.mxu0 0.0
    %6286 = vmatpush1.msra.mxu0 0.0
    %6287 = vmatprep.subr.mxu0 0.0
    %6288 = vmatpush1.msra.mxu0 0.0
    %6289 = vmatprep.subr.mxu0 0.0
    %6290 = vmatpush1.msra.mxu0 0.0
    %6291 = vmatprep.subr.mxu0 0.0
    %6292 = vmatpush1.msra.mxu0 0.0
    %6293 = vmatprep.subr.mxu0 0.0
    %6294 = vmatpush1.msra.mxu0 0.0
    %6295 = vmatprep.subr.mxu0 0.0
    %6296 = vmatpush1.msra.mxu0 0.0
    %6297 = vmatprep.subr.mxu0 0.0
    %6298 = vmatpush1.msra.mxu0 0.0
    %6299 = vmatprep.subr.mxu0 0.0
    %6300 = vmatpush1.msra.mxu0 %v6262
    %6301 = vmatprep.subr.mxu0 0.0
    %6302 = vmatpush1.msra.mxu0 %v6260
    %6303 = vmatprep.subr.mxu0 0.0
    %6304 = vmatpush2.msra.mxu0 0.0
    %6305 = vmatprep.subr.mxu0 0.0
    %6306 = vmatpush2.msra.mxu0 0.0
    %6307 = vmatprep.subr.mxu0 0.0
    %6308 = vmatpush2.msra.mxu0 0.0
    %6309 = vmatprep.subr.mxu0 0.0
    %6310 = vmatpush2.msra.mxu0 0.0
    %6311 = vmatprep.subr.mxu0 0.0
    %6312 = vmatpush2.msra.mxu0 0.0
    %6313 = vmatprep.subr.mxu0 0.0
    %6314 = vmatpush2.msra.mxu0 0.0
    %6315 = vmatprep.subr.mxu0 0.0
    %6316 = vmatpush2.msra.mxu0 0.0
    %6317 = vmatprep.subr.mxu0 0.0
    %6318 = vmatpush2.msra.mxu0 0.0
    %6319 = vmatprep.subr.mxu0 0.0
    %6320 = vmatpush2.msra.mxu0 0.0
    %6321 = vmatprep.subr.mxu0 0.0
    %6322 = vmatpush2.msra.mxu0 0.0
    %6323 = vmatprep.subr.mxu0 0.0
    %6324 = vmatpush2.msra.mxu0 0.0
    %6325 = vmatprep.subr.mxu0 0.0
    %6326 = vmatpush2.msra.mxu0 0.0
    %6327 = vmatprep.subr.mxu0 0.0
    %6328 = vmatpush2.msra.mxu0 0.0
    %6329 = vmatprep.subr.mxu0 0.0
    %6330 = vmatpush2.msra.mxu0 0.0
    %6331 = vmatprep.subr.mxu0 0.0
    %6332 = vmatpush2.msra.mxu0 0.0
    %6333 = vmatprep.subr.mxu0 0.0
    %6334 = vmatpush2.msra.mxu0 0.0
    %6335 = vmatprep.mubr.f32.mxu0 0.0
    %6336 = vmatmul.mubr.f32.gmra.mxu0 %v6266
    %v6337 = vpop.f32.mrf.mxu0
    %v6338 = vadd.f32 0.0, %v6337
    %v6339 = vpop.f32.mrf.mxu0
    %6340 = vmatprep.mubr.f32.mxu0 0.0
    %6341 = vmatmul.mubr.f32.gmra.mxu0 %v6269
    %v6342 = vpop.f32.mrf.mxu0
    %v6343 = vadd.f32 0.0, %v6342
    %v6344 = vpop.f32.mrf.mxu0
    %6345 = vdwg.mxu0
    %6346 = vrot.lane.b32.xlu0 %v262, 40
    %v6347 = vpop.permute.xlu0 %6346
    %6348 = vrot.lane.b32.xlu0 %v267, 40
    %v6349 = vpop.permute.xlu0 %6348
    %v6353 = vsel %vm1021, %v5990, 0
    %v6356 = vsel %vm1021, %v5991, 0
    %6358 = vmatprep.subr.mxu0 0.0
    %6359 = vmatpush1.msra.mxu0 0.0
    %6360 = vmatprep.subr.mxu0 0.0
    %6361 = vmatpush1.msra.mxu0 0.0
    %6362 = vmatprep.subr.mxu0 0.0
    %6363 = vmatpush1.msra.mxu0 0.0
    %6364 = vmatprep.subr.mxu0 0.0
    %6365 = vmatpush1.msra.mxu0 0.0
    %6366 = vmatprep.subr.mxu0 0.0
    %6367 = vmatpush1.msra.mxu0 0.0
    %6368 = vmatprep.subr.mxu0 0.0
    %6369 = vmatpush1.msra.mxu0 0.0
    %6370 = vmatprep.subr.mxu0 0.0
    %6371 = vmatpush1.msra.mxu0 0.0
    %6372 = vmatprep.subr.mxu0 0.0
    %6373 = vmatpush1.msra.mxu0 0.0
    %6374 = vmatprep.subr.mxu0 0.0
    %6375 = vmatpush1.msra.mxu0 0.0
    %6376 = vmatprep.subr.mxu0 0.0
    %6377 = vmatpush1.msra.mxu0 0.0
    %6378 = vmatprep.subr.mxu0 0.0
    %6379 = vmatpush1.msra.mxu0 0.0
    %6380 = vmatprep.subr.mxu0 0.0
    %6381 = vmatpush1.msra.mxu0 0.0
    %6382 = vmatprep.subr.mxu0 0.0
    %6383 = vmatpush1.msra.mxu0 0.0
    %6384 = vmatprep.subr.mxu0 0.0
    %6385 = vmatpush1.msra.mxu0 0.0
    %6386 = vmatprep.subr.mxu0 0.0
    %6387 = vmatpush1.msra.mxu0 %v6349
    %6388 = vmatprep.subr.mxu0 0.0
    %6389 = vmatpush1.msra.mxu0 %v6347
    %6390 = vmatprep.subr.mxu0 0.0
    %6391 = vmatpush2.msra.mxu0 0.0
    %6392 = vmatprep.subr.mxu0 0.0
    %6393 = vmatpush2.msra.mxu0 0.0
    %6394 = vmatprep.subr.mxu0 0.0
    %6395 = vmatpush2.msra.mxu0 0.0
    %6396 = vmatprep.subr.mxu0 0.0
    %6397 = vmatpush2.msra.mxu0 0.0
    %6398 = vmatprep.subr.mxu0 0.0
    %6399 = vmatpush2.msra.mxu0 0.0
    %6400 = vmatprep.subr.mxu0 0.0
    %6401 = vmatpush2.msra.mxu0 0.0
    %6402 = vmatprep.subr.mxu0 0.0
    %6403 = vmatpush2.msra.mxu0 0.0
    %6404 = vmatprep.subr.mxu0 0.0
    %6405 = vmatpush2.msra.mxu0 0.0
    %6406 = vmatprep.subr.mxu0 0.0
    %6407 = vmatpush2.msra.mxu0 0.0
    %6408 = vmatprep.subr.mxu0 0.0
    %6409 = vmatpush2.msra.mxu0 0.0
    %6410 = vmatprep.subr.mxu0 0.0
    %6411 = vmatpush2.msra.mxu0 0.0
    %6412 = vmatprep.subr.mxu0 0.0
    %6413 = vmatpush2.msra.mxu0 0.0
    %6414 = vmatprep.subr.mxu0 0.0
    %6415 = vmatpush2.msra.mxu0 0.0
    %6416 = vmatprep.subr.mxu0 0.0
    %6417 = vmatpush2.msra.mxu0 0.0
    %6418 = vmatprep.subr.mxu0 0.0
    %6419 = vmatpush2.msra.mxu0 0.0
    %6420 = vmatprep.subr.mxu0 0.0
    %6421 = vmatpush2.msra.mxu0 0.0
    %6422 = vmatprep.mubr.f32.mxu0 0.0
    %6423 = vmatmul.mubr.f32.gmra.mxu0 %v6353
    %v6424 = vpop.f32.mrf.mxu0
    %v6425 = vadd.f32 0.0, %v6424
    %v6426 = vpop.f32.mrf.mxu0
    %6427 = vmatprep.mubr.f32.mxu0 0.0
    %6428 = vmatmul.mubr.f32.gmra.mxu0 %v6356
    %v6429 = vpop.f32.mrf.mxu0
    %v6430 = vadd.f32 0.0, %v6429
    %v6431 = vpop.f32.mrf.mxu0
    %6432 = vdwg.mxu0
    %6433 = vrot.lane.b32.xlu0 %v272, 40
    %v6434 = vpop.permute.xlu0 %6433
    %6435 = vrot.lane.b32.xlu0 %v277, 40
    %v6436 = vpop.permute.xlu0 %6435
    %v6440 = vsel %vm1021, %v5992, 0
    %v6443 = vsel %vm1021, %v5993, 0
    %6445 = vmatprep.subr.mxu0 0.0
    %6446 = vmatpush1.msra.mxu0 0.0
    %6447 = vmatprep.subr.mxu0 0.0
    %6448 = vmatpush1.msra.mxu0 0.0
    %6449 = vmatprep.subr.mxu0 0.0
    %6450 = vmatpush1.msra.mxu0 0.0
    %6451 = vmatprep.subr.mxu0 0.0
    %6452 = vmatpush1.msra.mxu0 0.0
    %6453 = vmatprep.subr.mxu0 0.0
    %6454 = vmatpush1.msra.mxu0 0.0
    %6455 = vmatprep.subr.mxu0 0.0
    %6456 = vmatpush1.msra.mxu0 0.0
    %6457 = vmatprep.subr.mxu0 0.0
    %6458 = vmatpush1.msra.mxu0 0.0
    %6459 = vmatprep.subr.mxu0 0.0
    %6460 = vmatpush1.msra.mxu0 0.0
    %6461 = vmatprep.subr.mxu0 0.0
    %6462 = vmatpush1.msra.mxu0 0.0
    %6463 = vmatprep.subr.mxu0 0.0
    %6464 = vmatpush1.msra.mxu0 0.0
    %6465 = vmatprep.subr.mxu0 0.0
    %6466 = vmatpush1.msra.mxu0 0.0
    %6467 = vmatprep.subr.mxu0 0.0
    %6468 = vmatpush1.msra.mxu0 0.0
    %6469 = vmatprep.subr.mxu0 0.0
    %6470 = vmatpush1.msra.mxu0 0.0
    %6471 = vmatprep.subr.mxu0 0.0
    %6472 = vmatpush1.msra.mxu0 0.0
    %6473 = vmatprep.subr.mxu0 0.0
    %6474 = vmatpush1.msra.mxu0 %v6436
    %6475 = vmatprep.subr.mxu0 0.0
    %6476 = vmatpush1.msra.mxu0 %v6434
    %6477 = vmatprep.subr.mxu0 0.0
    %6478 = vmatpush2.msra.mxu0 0.0
    %6479 = vmatprep.subr.mxu0 0.0
    %6480 = vmatpush2.msra.mxu0 0.0
    %6481 = vmatprep.subr.mxu0 0.0
    %6482 = vmatpush2.msra.mxu0 0.0
    %6483 = vmatprep.subr.mxu0 0.0
    %6484 = vmatpush2.msra.mxu0 0.0
    %6485 = vmatprep.subr.mxu0 0.0
    %6486 = vmatpush2.msra.mxu0 0.0
    %6487 = vmatprep.subr.mxu0 0.0
    %6488 = vmatpush2.msra.mxu0 0.0
    %6489 = vmatprep.subr.mxu0 0.0
    %6490 = vmatpush2.msra.mxu0 0.0
    %6491 = vmatprep.subr.mxu0 0.0
    %6492 = vmatpush2.msra.mxu0 0.0
    %6493 = vmatprep.subr.mxu0 0.0
    %6494 = vmatpush2.msra.mxu0 0.0
    %6495 = vmatprep.subr.mxu0 0.0
    %6496 = vmatpush2.msra.mxu0 0.0
    %6497 = vmatprep.subr.mxu0 0.0
    %6498 = vmatpush2.msra.mxu0 0.0
    %6499 = vmatprep.subr.mxu0 0.0
    %6500 = vmatpush2.msra.mxu0 0.0
    %6501 = vmatprep.subr.mxu0 0.0
    %6502 = vmatpush2.msra.mxu0 0.0
    %6503 = vmatprep.subr.mxu0 0.0
    %6504 = vmatpush2.msra.mxu0 0.0
    %6505 = vmatprep.subr.mxu0 0.0
    %6506 = vmatpush2.msra.mxu0 0.0
    %6507 = vmatprep.subr.mxu0 0.0
    %6508 = vmatpush2.msra.mxu0 0.0
    %6509 = vmatprep.mubr.f32.mxu0 0.0
    %6510 = vmatmul.mubr.f32.gmra.mxu0 %v6440
    %v6511 = vpop.f32.mrf.mxu0
    %v6512 = vadd.f32 0.0, %v6511
    %v6513 = vpop.f32.mrf.mxu0
    %6514 = vmatprep.mubr.f32.mxu0 0.0
    %6515 = vmatmul.mubr.f32.gmra.mxu0 %v6443
    %v6516 = vpop.f32.mrf.mxu0
    %v6517 = vadd.f32 0.0, %v6516
    %v6518 = vpop.f32.mrf.mxu0
    %6519 = vdwg.mxu0
    %6520 = vrot.lane.b32.xlu0 %v282, 40
    %v6521 = vpop.permute.xlu0 %6520
    %6522 = vrot.lane.b32.xlu0 %v287, 40
    %v6523 = vpop.permute.xlu0 %6522
    %v6527 = vsel %vm1021, %v5994, 0
    %v6530 = vsel %vm1021, %v5995, 0
    %6532 = vmatprep.subr.mxu0 0.0
    %6533 = vmatpush1.msra.mxu0 0.0
    %6534 = vmatprep.subr.mxu0 0.0
    %6535 = vmatpush1.msra.mxu0 0.0
    %6536 = vmatprep.subr.mxu0 0.0
    %6537 = vmatpush1.msra.mxu0 0.0
    %6538 = vmatprep.subr.mxu0 0.0
    %6539 = vmatpush1.msra.mxu0 0.0
    %6540 = vmatprep.subr.mxu0 0.0
    %6541 = vmatpush1.msra.mxu0 0.0
    %6542 = vmatprep.subr.mxu0 0.0
    %6543 = vmatpush1.msra.mxu0 0.0
    %6544 = vmatprep.subr.mxu0 0.0
    %6545 = vmatpush1.msra.mxu0 0.0
    %6546 = vmatprep.subr.mxu0 0.0
    %6547 = vmatpush1.msra.mxu0 0.0
    %6548 = vmatprep.subr.mxu0 0.0
    %6549 = vmatpush1.msra.mxu0 0.0
    %6550 = vmatprep.subr.mxu0 0.0
    %6551 = vmatpush1.msra.mxu0 0.0
    %6552 = vmatprep.subr.mxu0 0.0
    %6553 = vmatpush1.msra.mxu0 0.0
    %6554 = vmatprep.subr.mxu0 0.0
    %6555 = vmatpush1.msra.mxu0 0.0
    %6556 = vmatprep.subr.mxu0 0.0
    %6557 = vmatpush1.msra.mxu0 0.0
    %6558 = vmatprep.subr.mxu0 0.0
    %6559 = vmatpush1.msra.mxu0 0.0
    %6560 = vmatprep.subr.mxu0 0.0
    %6561 = vmatpush1.msra.mxu0 %v6523
    %6562 = vmatprep.subr.mxu0 0.0
    %6563 = vmatpush1.msra.mxu0 %v6521
    %6564 = vmatprep.subr.mxu0 0.0
    %6565 = vmatpush2.msra.mxu0 0.0
    %6566 = vmatprep.subr.mxu0 0.0
    %6567 = vmatpush2.msra.mxu0 0.0
    %6568 = vmatprep.subr.mxu0 0.0
    %6569 = vmatpush2.msra.mxu0 0.0
    %6570 = vmatprep.subr.mxu0 0.0
    %6571 = vmatpush2.msra.mxu0 0.0
    %6572 = vmatprep.subr.mxu0 0.0
    %6573 = vmatpush2.msra.mxu0 0.0
    %6574 = vmatprep.subr.mxu0 0.0
    %6575 = vmatpush2.msra.mxu0 0.0
    %6576 = vmatprep.subr.mxu0 0.0
    %6577 = vmatpush2.msra.mxu0 0.0
    %6578 = vmatprep.subr.mxu0 0.0
    %6579 = vmatpush2.msra.mxu0 0.0
    %6580 = vmatprep.subr.mxu0 0.0
    %6581 = vmatpush2.msra.mxu0 0.0
    %6582 = vmatprep.subr.mxu0 0.0
    %6583 = vmatpush2.msra.mxu0 0.0
    %6584 = vmatprep.subr.mxu0 0.0
    %6585 = vmatpush2.msra.mxu0 0.0
    %6586 = vmatprep.subr.mxu0 0.0
    %6587 = vmatpush2.msra.mxu0 0.0
    %6588 = vmatprep.subr.mxu0 0.0
    %6589 = vmatpush2.msra.mxu0 0.0
    %6590 = vmatprep.subr.mxu0 0.0
    %6591 = vmatpush2.msra.mxu0 0.0
    %6592 = vmatprep.subr.mxu0 0.0
    %6593 = vmatpush2.msra.mxu0 0.0
    %6594 = vmatprep.subr.mxu0 0.0
    %6595 = vmatpush2.msra.mxu0 0.0
    %6596 = vmatprep.mubr.f32.mxu0 0.0
    %6597 = vmatmul.mubr.f32.gmra.mxu0 %v6527
    %v6598 = vpop.f32.mrf.mxu0
    %v6599 = vadd.f32 0.0, %v6598
    %v6600 = vpop.f32.mrf.mxu0
    %6601 = vmatprep.mubr.f32.mxu0 0.0
    %6602 = vmatmul.mubr.f32.gmra.mxu0 %v6530
    %v6603 = vpop.f32.mrf.mxu0
    %v6604 = vadd.f32 0.0, %v6603
    %v6605 = vpop.f32.mrf.mxu0
    %6606 = vdwg.mxu0
    %6607 = vrot.lane.b32.xlu0 %v292, 40
    %v6608 = vpop.permute.xlu0 %6607
    %6609 = vrot.lane.b32.xlu0 %v297, 40
    %v6610 = vpop.permute.xlu0 %6609
    %v6614 = vsel %vm1021, %v5996, 0
    %v6617 = vsel %vm1021, %v5997, 0
    %6619 = vmatprep.subr.mxu0 0.0
    %6620 = vmatpush1.msra.mxu0 0.0
    %6621 = vmatprep.subr.mxu0 0.0
    %6622 = vmatpush1.msra.mxu0 0.0
    %6623 = vmatprep.subr.mxu0 0.0
    %6624 = vmatpush1.msra.mxu0 0.0
    %6625 = vmatprep.subr.mxu0 0.0
    %6626 = vmatpush1.msra.mxu0 0.0
    %6627 = vmatprep.subr.mxu0 0.0
    %6628 = vmatpush1.msra.mxu0 0.0
    %6629 = vmatprep.subr.mxu0 0.0
    %6630 = vmatpush1.msra.mxu0 0.0
    %6631 = vmatprep.subr.mxu0 0.0
    %6632 = vmatpush1.msra.mxu0 0.0
    %6633 = vmatprep.subr.mxu0 0.0
    %6634 = vmatpush1.msra.mxu0 0.0
    %6635 = vmatprep.subr.mxu0 0.0
    %6636 = vmatpush1.msra.mxu0 0.0
    %6637 = vmatprep.subr.mxu0 0.0
    %6638 = vmatpush1.msra.mxu0 0.0
    %6639 = vmatprep.subr.mxu0 0.0
    %6640 = vmatpush1.msra.mxu0 0.0
    %6641 = vmatprep.subr.mxu0 0.0
    %6642 = vmatpush1.msra.mxu0 0.0
    %6643 = vmatprep.subr.mxu0 0.0
    %6644 = vmatpush1.msra.mxu0 0.0
    %6645 = vmatprep.subr.mxu0 0.0
    %6646 = vmatpush1.msra.mxu0 0.0
    %6647 = vmatprep.subr.mxu0 0.0
    %6648 = vmatpush1.msra.mxu0 %v6610
    %6649 = vmatprep.subr.mxu0 0.0
    %6650 = vmatpush1.msra.mxu0 %v6608
    %6651 = vmatprep.subr.mxu0 0.0
    %6652 = vmatpush2.msra.mxu0 0.0
    %6653 = vmatprep.subr.mxu0 0.0
    %6654 = vmatpush2.msra.mxu0 0.0
    %6655 = vmatprep.subr.mxu0 0.0
    %6656 = vmatpush2.msra.mxu0 0.0
    %6657 = vmatprep.subr.mxu0 0.0
    %6658 = vmatpush2.msra.mxu0 0.0
    %6659 = vmatprep.subr.mxu0 0.0
    %6660 = vmatpush2.msra.mxu0 0.0
    %6661 = vmatprep.subr.mxu0 0.0
    %6662 = vmatpush2.msra.mxu0 0.0
    %6663 = vmatprep.subr.mxu0 0.0
    %6664 = vmatpush2.msra.mxu0 0.0
    %6665 = vmatprep.subr.mxu0 0.0
    %6666 = vmatpush2.msra.mxu0 0.0
    %6667 = vmatprep.subr.mxu0 0.0
    %6668 = vmatpush2.msra.mxu0 0.0
    %6669 = vmatprep.subr.mxu0 0.0
    %6670 = vmatpush2.msra.mxu0 0.0
    %6671 = vmatprep.subr.mxu0 0.0
    %6672 = vmatpush2.msra.mxu0 0.0
    %6673 = vmatprep.subr.mxu0 0.0
    %6674 = vmatpush2.msra.mxu0 0.0
    %6675 = vmatprep.subr.mxu0 0.0
    %6676 = vmatpush2.msra.mxu0 0.0
    %6677 = vmatprep.subr.mxu0 0.0
    %6678 = vmatpush2.msra.mxu0 0.0
    %6679 = vmatprep.subr.mxu0 0.0
    %6680 = vmatpush2.msra.mxu0 0.0
    %6681 = vmatprep.subr.mxu0 0.0
    %6682 = vmatpush2.msra.mxu0 0.0
    %6683 = vmatprep.mubr.f32.mxu0 0.0
    %6684 = vmatmul.mubr.f32.gmra.mxu0 %v6614
    %v6685 = vpop.f32.mrf.mxu0
    %v6686 = vadd.f32 0.0, %v6685
    %v6687 = vpop.f32.mrf.mxu0
    %6688 = vmatprep.mubr.f32.mxu0 0.0
    %6689 = vmatmul.mubr.f32.gmra.mxu0 %v6617
    %v6690 = vpop.f32.mrf.mxu0
    %v6691 = vadd.f32 0.0, %v6690
    %v6692 = vpop.f32.mrf.mxu0
    %6693 = vdwg.mxu0
    %6710 = vrot.lane.b32.xlu0 %v2877, 8
    %v6711 = vpop.permute.xlu0 %6710
    %6712 = vrot.lane.b32.xlu0 %v2882, 8
    %v6713 = vpop.permute.xlu0 %6712
    %6714 = vrot.lane.b32.xlu0 %v2964, 8
    %v6715 = vpop.permute.xlu0 %6714
    %6716 = vrot.lane.b32.xlu0 %v2969, 8
    %v6717 = vpop.permute.xlu0 %6716
    %6718 = vrot.lane.b32.xlu0 %v3051, 8
    %v6719 = vpop.permute.xlu0 %6718
    %6720 = vrot.lane.b32.xlu0 %v3056, 8
    %v6721 = vpop.permute.xlu0 %6720
    %6722 = vrot.lane.b32.xlu0 %v3138, 8
    %v6723 = vpop.permute.xlu0 %6722
    %6724 = vrot.lane.b32.xlu0 %v3143, 8
    %v6725 = vpop.permute.xlu0 %6724
    %6726 = vrot.lane.b32.xlu0 %v3225, 8
    %v6727 = vpop.permute.xlu0 %6726
    %6728 = vrot.lane.b32.xlu0 %v3230, 8
    %v6729 = vpop.permute.xlu0 %6728
    %6730 = vrot.lane.b32.xlu0 %v3312, 8
    %v6731 = vpop.permute.xlu0 %6730
    %6732 = vrot.lane.b32.xlu0 %v3317, 8
    %v6733 = vpop.permute.xlu0 %6732
    %6734 = vrot.lane.b32.xlu0 %v3399, 8
    %v6735 = vpop.permute.xlu0 %6734
    %6736 = vrot.lane.b32.xlu0 %v3404, 8
    %v6737 = vpop.permute.xlu0 %6736
    %6738 = vrot.lane.b32.xlu0 %v3486, 8
    %v6739 = vpop.permute.xlu0 %6738
    %6740 = vrot.lane.b32.xlu0 %v3491, 8
    %v6741 = vpop.permute.xlu0 %6740
    %6774 = vrot.lane.b32.xlu0 %v4477, 16
    %v6775 = vpop.permute.xlu0 %6774
    %6776 = vrot.lane.b32.xlu0 %v4482, 16
    %v6777 = vpop.permute.xlu0 %6776
    %6778 = vrot.lane.b32.xlu0 %v4564, 16
    %v6779 = vpop.permute.xlu0 %6778
    %6780 = vrot.lane.b32.xlu0 %v4569, 16
    %v6781 = vpop.permute.xlu0 %6780
    %6782 = vrot.lane.b32.xlu0 %v4651, 16
    %v6783 = vpop.permute.xlu0 %6782
    %6784 = vrot.lane.b32.xlu0 %v4656, 16
    %v6785 = vpop.permute.xlu0 %6784
    %6786 = vrot.lane.b32.xlu0 %v4738, 16
    %v6787 = vpop.permute.xlu0 %6786
    %6788 = vrot.lane.b32.xlu0 %v4743, 16
    %v6789 = vpop.permute.xlu0 %6788
    %6790 = vrot.lane.b32.xlu0 %v4825, 16
    %v6791 = vpop.permute.xlu0 %6790
    %6792 = vrot.lane.b32.xlu0 %v4830, 16
    %v6793 = vpop.permute.xlu0 %6792
    %6794 = vrot.lane.b32.xlu0 %v4912, 16
    %v6795 = vpop.permute.xlu0 %6794
    %6796 = vrot.lane.b32.xlu0 %v4917, 16
    %v6797 = vpop.permute.xlu0 %6796
    %6798 = vrot.lane.b32.xlu0 %v4999, 16
    %v6799 = vpop.permute.xlu0 %6798
    %6800 = vrot.lane.b32.xlu0 %v5004, 16
    %v6801 = vpop.permute.xlu0 %6800
    %6802 = vrot.lane.b32.xlu0 %v5086, 16
    %v6803 = vpop.permute.xlu0 %6802
    %6804 = vrot.lane.b32.xlu0 %v5091, 16
    %v6805 = vpop.permute.xlu0 %6804
    %6838 = vrot.lane.b32.xlu0 %v6077, 24
    %v6839 = vpop.permute.xlu0 %6838
    %6840 = vrot.lane.b32.xlu0 %v6082, 24
    %v6841 = vpop.permute.xlu0 %6840
    %6842 = vrot.lane.b32.xlu0 %v6164, 24
    %v6843 = vpop.permute.xlu0 %6842
    %6844 = vrot.lane.b32.xlu0 %v6169, 24
    %v6845 = vpop.permute.xlu0 %6844
    %6846 = vrot.lane.b32.xlu0 %v6251, 24
    %v6847 = vpop.permute.xlu0 %6846
    %6848 = vrot.lane.b32.xlu0 %v6256, 24
    %v6849 = vpop.permute.xlu0 %6848
    %6850 = vrot.lane.b32.xlu0 %v6338, 24
    %v6851 = vpop.permute.xlu0 %6850
    %6852 = vrot.lane.b32.xlu0 %v6343, 24
    %v6853 = vpop.permute.xlu0 %6852
    %6854 = vrot.lane.b32.xlu0 %v6425, 24
    %v6855 = vpop.permute.xlu0 %6854
    %6856 = vrot.lane.b32.xlu0 %v6430, 24
    %v6857 = vpop.permute.xlu0 %6856
    %6858 = vrot.lane.b32.xlu0 %v6512, 24
    %v6859 = vpop.permute.xlu0 %6858
    %6860 = vrot.lane.b32.xlu0 %v6517, 24
    %v6861 = vpop.permute.xlu0 %6860
    %6862 = vrot.lane.b32.xlu0 %v6599, 24
    %v6863 = vpop.permute.xlu0 %6862
    %6864 = vrot.lane.b32.xlu0 %v6604, 24
    %v6865 = vpop.permute.xlu0 %6864
    %6866 = vrot.lane.b32.xlu0 %v6686, 24
    %v6867 = vpop.permute.xlu0 %6866
    %6868 = vrot.lane.b32.xlu0 %v6691, 24
    %v6869 = vpop.permute.xlu0 %6868
    %v6886 = vsel %vm314, %v1277, %v6711
    %v6887 = vsel %vm314, %v1282, %v6713
    %v6888 = vsel %vm314, %v1364, %v6715
    %v6889 = vsel %vm314, %v1369, %v6717
    %v6890 = vsel %vm314, %v1451, %v6719
    %v6891 = vsel %vm314, %v1456, %v6721
    %v6892 = vsel %vm314, %v1538, %v6723
    %v6893 = vsel %vm314, %v1543, %v6725
    %v6894 = vsel %vm314, %v1625, %v6727
    %v6895 = vsel %vm314, %v1630, %v6729
    %v6896 = vsel %vm314, %v1712, %v6731
    %v6897 = vsel %vm314, %v1717, %v6733
    %v6898 = vsel %vm314, %v1799, %v6735
    %v6899 = vsel %vm314, %v1804, %v6737
    %v6900 = vsel %vm314, %v1886, %v6739
    %v6901 = vsel %vm314, %v1891, %v6741
    %v6902 = vsel %vm1021, %v6886, %v6775
    %v6903 = vsel %vm1021, %v6887, %v6777
    %v6904 = vsel %vm1021, %v6888, %v6779
    %v6905 = vsel %vm1021, %v6889, %v6781
    %v6906 = vsel %vm1021, %v6890, %v6783
    %v6907 = vsel %vm1021, %v6891, %v6785
    %v6908 = vsel %vm1021, %v6892, %v6787
    %v6909 = vsel %vm1021, %v6893, %v6789
    %v6910 = vsel %vm1021, %v6894, %v6791
    %v6911 = vsel %vm1021, %v6895, %v6793
    %v6912 = vsel %vm1021, %v6896, %v6795
    %v6913 = vsel %vm1021, %v6897, %v6797
    %v6914 = vsel %vm1021, %v6898, %v6799
    %v6915 = vsel %vm1021, %v6899, %v6801
    %v6916 = vsel %vm1021, %v6900, %v6803
    %v6917 = vsel %vm1021, %v6901, %v6805
    %vm6918 = vcmask 195584
    %v6919 = vsel %vm6918, %v6902, %v6839
    %v6920 = vsel %vm6918, %v6903, %v6841
    %v6921 = vsel %vm6918, %v6904, %v6843
    %v6922 = vsel %vm6918, %v6905, %v6845
    %v6923 = vsel %vm6918, %v6906, %v6847
    %v6924 = vsel %vm6918, %v6907, %v6849
    %v6925 = vsel %vm6918, %v6908, %v6851
    %v6926 = vsel %vm6918, %v6909, %v6853
    %v6927 = vsel %vm6918, %v6910, %v6855
    %v6928 = vsel %vm6918, %v6911, %v6857
    %v6929 = vsel %vm6918, %v6912, %v6859
    %v6930 = vsel %vm6918, %v6913, %v6861
    %v6931 = vsel %vm6918, %v6914, %v6863
    %v6932 = vsel %vm6918, %v6915, %v6865
    %v6933 = vsel %vm6918, %v6916, %v6867
    %v6934 = vsel %vm6918, %v6917, %v6869
    %v6935 = vld [vmem:[#allocation7] sm:$0xff]
    %v6936 = vld [vmem:[#allocation7 + $0x8] sm:$0xff]
    %v6937 = vld [vmem:[#allocation7 + $0x10] sm:$0xff]
    %v6938 = vld [vmem:[#allocation7 + $0x18] sm:$0xff]
    %v6939 = vld [vmem:[%s4] sm:$0x1]
    %v6941 = vlaneseq
    %v6942 = vshrl.u32 %v6941, 7
    %v6943 = vsub.s32 0, %v6942
    %v6944 = vrot.slane %v6939, %v6943
    %v6947 = vsel %vm106, %v6919, 0
    %v6950 = vsel %vm106, %v6920, 0
    %v6953 = vsel %vm106, %v6921, 0
    %v6956 = vsel %vm106, %v6922, 0
    %v6959 = vsel %vm106, %v6923, 0
    %v6962 = vsel %vm106, %v6924, 0
    %v6965 = vsel %vm106, %v6925, 0
    %v6968 = vsel %vm106, %v6926, 0
    %v6971 = vsel %vm106, %v6927, 0
    %v6974 = vsel %vm106, %v6928, 0
    %v6977 = vsel %vm106, %v6929, 0
    %v6980 = vsel %vm106, %v6930, 0
    %v6983 = vsel %vm106, %v6931, 0
    %v6986 = vsel %vm106, %v6932, 0
    %v6989 = vsel %vm106, %v6933, 0
    %v6992 = vsel %vm106, %v6934, 0
    %6994 = vmatprep.subr.mxu0 0.0
    %6995 = vmatpush1.msra.mxu0 0.0
    %6996 = vmatprep.subr.mxu0 0.0
    %6997 = vmatpush1.msra.mxu0 0.0
    %6998 = vmatprep.subr.mxu0 0.0
    %6999 = vmatpush1.msra.mxu0 0.0
    %7000 = vmatprep.subr.mxu0 0.0
    %7001 = vmatpush1.msra.mxu0 0.0
    %7002 = vmatprep.subr.mxu0 0.0
    %7003 = vmatpush1.msra.mxu0 0.0
    %7004 = vmatprep.subr.mxu0 0.0
    %7005 = vmatpush1.msra.mxu0 0.0
    %7006 = vmatprep.subr.mxu0 0.0
    %7007 = vmatpush1.msra.mxu0 0.0
    %7008 = vmatprep.subr.mxu0 0.0
    %7009 = vmatpush1.msra.mxu0 0.0
    %7010 = vmatprep.subr.mxu0 0.0
    %7011 = vmatpush1.msra.mxu0 0.0
    %7012 = vmatprep.subr.mxu0 0.0
    %7013 = vmatpush1.msra.mxu0 0.0
    %7014 = vmatprep.subr.mxu0 0.0
    %7015 = vmatpush1.msra.mxu0 0.0
    %7016 = vmatprep.subr.mxu0 0.0
    %7017 = vmatpush1.msra.mxu0 0.0
    %7018 = vmatprep.subr.mxu0 0.0
    %7019 = vmatpush1.msra.mxu0 %v6938
    %7020 = vmatprep.subr.mxu0 0.0
    %7021 = vmatpush1.msra.mxu0 %v6937
    %7022 = vmatprep.subr.mxu0 0.0
    %7023 = vmatpush1.msra.mxu0 %v6936
    %7024 = vmatprep.subr.mxu0 0.0
    %7025 = vmatpush1.msra.mxu0 %v6935
    %7026 = vmatprep.subr.mxu0 0.0
    %7027 = vmatpush2.msra.mxu0 0.0
    %7028 = vmatprep.subr.mxu0 0.0
    %7029 = vmatpush2.msra.mxu0 0.0
    %7030 = vmatprep.subr.mxu0 0.0
    %7031 = vmatpush2.msra.mxu0 0.0
    %7032 = vmatprep.subr.mxu0 0.0
    %7033 = vmatpush2.msra.mxu0 0.0
    %7034 = vmatprep.subr.mxu0 0.0
    %7035 = vmatpush2.msra.mxu0 0.0
    %7036 = vmatprep.subr.mxu0 0.0
    %7037 = vmatpush2.msra.mxu0 0.0
    %7038 = vmatprep.subr.mxu0 0.0
    %7039 = vmatpush2.msra.mxu0 0.0
    %7040 = vmatprep.subr.mxu0 0.0
    %7041 = vmatpush2.msra.mxu0 0.0
    %7042 = vmatprep.subr.mxu0 0.0
    %7043 = vmatpush2.msra.mxu0 0.0
    %7044 = vmatprep.subr.mxu0 0.0
    %7045 = vmatpush2.msra.mxu0 0.0
    %7046 = vmatprep.subr.mxu0 0.0
    %7047 = vmatpush2.msra.mxu0 0.0
    %7048 = vmatprep.subr.mxu0 0.0
    %7049 = vmatpush2.msra.mxu0 0.0
    %7050 = vmatprep.subr.mxu0 0.0
    %7051 = vmatpush2.msra.mxu0 0.0
    %7052 = vmatprep.subr.mxu0 0.0
    %7053 = vmatpush2.msra.mxu0 0.0
    %7054 = vmatprep.subr.mxu0 0.0
    %7055 = vmatpush2.msra.mxu0 0.0
    %7056 = vmatprep.subr.mxu0 0.0
    %7057 = vmatpush2.msra.mxu0 0.0
    %7058 = vmatprep.mubr.f32.mxu0 0.0
    %7059 = vmatmul.mubr.f32.gmra.mxu0 %v6947
    %v7060 = vpop.f32.mrf.mxu0
    %v7061 = vadd.f32 %v6944, %v7060
    %v7062 = vpop.f32.mrf.mxu0
    %7063 = vmatprep.mubr.f32.mxu0 0.0
    %7064 = vmatmul.mubr.f32.gmra.mxu0 %v6950
    %v7065 = vpop.f32.mrf.mxu0
    %v7066 = vadd.f32 %v6944, %v7065
    %v7067 = vpop.f32.mrf.mxu0
    %7068 = vmatprep.mubr.f32.mxu0 0.0
    %7069 = vmatmul.mubr.f32.gmra.mxu0 %v6953
    %v7070 = vpop.f32.mrf.mxu0
    %v7071 = vadd.f32 %v6944, %v7070
    %v7072 = vpop.f32.mrf.mxu0
    %7073 = vmatprep.mubr.f32.mxu0 0.0
    %7074 = vmatmul.mubr.f32.gmra.mxu0 %v6956
    %v7075 = vpop.f32.mrf.mxu0
    %v7076 = vadd.f32 %v6944, %v7075
    %v7077 = vpop.f32.mrf.mxu0
    %7078 = vmatprep.mubr.f32.mxu0 0.0
    %7079 = vmatmul.mubr.f32.gmra.mxu0 %v6959
    %v7080 = vpop.f32.mrf.mxu0
    %v7081 = vadd.f32 %v6944, %v7080
    %v7082 = vpop.f32.mrf.mxu0
    %7083 = vmatprep.mubr.f32.mxu0 0.0
    %7084 = vmatmul.mubr.f32.gmra.mxu0 %v6962
    %v7085 = vpop.f32.mrf.mxu0
    %v7086 = vadd.f32 %v6944, %v7085
    %v7087 = vpop.f32.mrf.mxu0
    %7088 = vmatprep.mubr.f32.mxu0 0.0
    %7089 = vmatmul.mubr.f32.gmra.mxu0 %v6965
    %v7090 = vpop.f32.mrf.mxu0
    %v7091 = vadd.f32 %v6944, %v7090
    %v7092 = vpop.f32.mrf.mxu0
    %7093 = vmatprep.mubr.f32.mxu0 0.0
    %7094 = vmatmul.mubr.f32.gmra.mxu0 %v6968
    %v7095 = vpop.f32.mrf.mxu0
    %v7096 = vadd.f32 %v6944, %v7095
    %v7097 = vpop.f32.mrf.mxu0
    %7098 = vmatprep.mubr.f32.mxu0 0.0
    %7099 = vmatmul.mubr.f32.gmra.mxu0 %v6971
    %v7100 = vpop.f32.mrf.mxu0
    %v7101 = vadd.f32 %v6944, %v7100
    %v7102 = vpop.f32.mrf.mxu0
    %7103 = vmatprep.mubr.f32.mxu0 0.0
    %7104 = vmatmul.mubr.f32.gmra.mxu0 %v6974
    %v7105 = vpop.f32.mrf.mxu0
    %v7106 = vadd.f32 %v6944, %v7105
    %v7107 = vpop.f32.mrf.mxu0
    %7108 = vmatprep.mubr.f32.mxu0 0.0
    %7109 = vmatmul.mubr.f32.gmra.mxu0 %v6977
    %v7110 = vpop.f32.mrf.mxu0
    %v7111 = vadd.f32 %v6944, %v7110
    %v7112 = vpop.f32.mrf.mxu0
    %7113 = vmatprep.mubr.f32.mxu0 0.0
    %7114 = vmatmul.mubr.f32.gmra.mxu0 %v6980
    %v7115 = vpop.f32.mrf.mxu0
    %v7116 = vadd.f32 %v6944, %v7115
    %v7117 = vpop.f32.mrf.mxu0
    %7118 = vmatprep.mubr.f32.mxu0 0.0
    %7119 = vmatmul.mubr.f32.gmra.mxu0 %v6983
    %v7120 = vpop.f32.mrf.mxu0
    %v7121 = vadd.f32 %v6944, %v7120
    %v7122 = vpop.f32.mrf.mxu0
    %7123 = vmatprep.mubr.f32.mxu0 0.0
    %7124 = vmatmul.mubr.f32.gmra.mxu0 %v6986
    %v7125 = vpop.f32.mrf.mxu0
    %v7126 = vadd.f32 %v6944, %v7125
    %v7127 = vpop.f32.mrf.mxu0
    %7128 = vmatprep.mubr.f32.mxu0 0.0
    %7129 = vmatmul.mubr.f32.gmra.mxu0 %v6989
    %v7130 = vpop.f32.mrf.mxu0
    %v7131 = vadd.f32 %v6944, %v7130
    %v7132 = vpop.f32.mrf.mxu0
    %7133 = vmatprep.mubr.f32.mxu0 0.0
    %7134 = vmatmul.mubr.f32.gmra.mxu0 %v6992
    %v7135 = vpop.f32.mrf.mxu0
    %v7136 = vadd.f32 %v6944, %v7135
    %v7137 = vpop.f32.mrf.mxu0
    %7138 = vdwg.mxu0
    %7139 = vst.msk [vmem:[#allocation10] sm:$0xff] %vm106, %v7061
    %7140 = vst.msk [vmem:[#allocation10 + $0x8] sm:$0xff] %vm106, %v7066
    %7141 = vst.msk [vmem:[#allocation10 + $0x10] sm:$0xff] %vm106, %v7071
    %7142 = vst.msk [vmem:[#allocation10 + $0x18] sm:$0xff] %vm106, %v7076
    %7143 = vst.msk [vmem:[#allocation10 + $0x20] sm:$0xff] %vm106, %v7081
    %7144 = vst.msk [vmem:[#allocation10 + $0x28] sm:$0xff] %vm106, %v7086
    %7145 = vst.msk [vmem:[#allocation10 + $0x30] sm:$0xff] %vm106, %v7091
    %7146 = vst.msk [vmem:[#allocation10 + $0x38] sm:$0xff] %vm106, %v7096
    %7147 = vst.msk [vmem:[#allocation10 + $0x40] sm:$0xff] %vm106, %v7101
    %7148 = vst.msk [vmem:[#allocation10 + $0x48] sm:$0xff] %vm106, %v7106
    %7149 = vst.msk [vmem:[#allocation10 + $0x50] sm:$0xff] %vm106, %v7111
    %7150 = vst.msk [vmem:[#allocation10 + $0x58] sm:$0xff] %vm106, %v7116
    %7151 = vst.msk [vmem:[#allocation10 + $0x60] sm:$0xff] %vm106, %v7121
    %7152 = vst.msk [vmem:[#allocation10 + $0x68] sm:$0xff] %vm106, %v7126
    %7153 = vst.msk [vmem:[#allocation10 + $0x70] sm:$0xff] %vm106, %v7131
    %7154 = vst.msk [vmem:[#allocation10 + $0x78] sm:$0xff] %vm106, %v7136
    // Predicated region
    $region42: #{tpu_custom_call.1} parent=1 // pred_check
      _
    $region43: #{tpu_custom_call.1} parent=1 // pred_check_branch
      %7156 = sbr.rel (0) target = $region45
    $region44: #{tpu_custom_call.1} parent=1 // pred_region
      %s7158 = ssub.s32 2048, 2048
      %7159 = vsyncadd [#allocation4], %s7158
      %s7160 = sshll.u32 [#allocation10], 4
      %s7161 = int_to_ptr.vmem [resolvable:$true] %s7160
      %7166 = dma.vmem_to_hbm [thread:$0]  %s7161, 2048, %s6, [#allocation4], 128, 128, 8
    $region45: #{tpu_custom_call.1} parent=1 // pred_fallthru
      _
    // Predicated region
    $region46: #{tpu_custom_call.1} parent=1 // pred_check
      _
    $region47: #{tpu_custom_call.1} parent=1 // pred_check_branch
      %7168 = sbr.rel (0) target = $region49
    $region48: #{tpu_custom_call.1} parent=1 // pred_region
      %7169 = dma.done [#allocation4], 2048
    $region49: #{tpu_custom_call.1} parent=1 // pred_fallthru
      _
    %7170 = vsyncpa [#allocation3], 1
    %7171 = vsyncpa [#allocation6], 1
    %7172 = vsyncpa [#allocation9], 1
    %7173 = vsyncpa [#allocation4], 1

</llo_original>
